<compile_context>
chip_gen: v7x
topology: tpu7x:2x2x1
jax: 0.10.0
libtpu: 0.0.40
codegen_flags: <defaults>
</compile_context>

<pallas_src>
import jax
import jax.numpy as jnp
from jax.experimental import pallas as pl
from jax.experimental.pallas import tpu as pltpu

_EPS = 1e-5
_TAPS = tuple((dp, dj) for dp in range(3) for dj in range(3))


# --------------------------------------------------------------------------
# Kernels
# --------------------------------------------------------------------------

def _up_concat_conv1_kernel(x_ref, skip_ref, wup_ref, bup_ref, w1_ref, b1_ref,
                            y1_ref, s1_ref, q1_ref, zpad_ref):
    """Per-sample: ConvTranspose2d(k=2,s=2) + channel concat + Conv2d(3x3,pad=1).

    Emits the pre-BN conv1 output (bf16) plus per-sample channel sum / sum-of-squares
    (f32) for the global BN1 statistics."""
    _, H, W, Cin = x_ref.shape
    H2 = 2 * H
    Co2 = bup_ref.shape[-1]          # 2 * out_c  (q2 lanes of upsample / conv out)
    Cz2 = zpad_ref.shape[-1]         # 4 * out_c  (q2 lanes of the concat tensor)

    # Zero the 1-wide halo of the padded scratch (tiny strips, done every step so
    # correctness is independent of how the "parallel" batch axis splits across TCs).
    zr = jnp.zeros((1, W + 2, Cz2), zpad_ref.dtype)
    zc = jnp.zeros((H2 + 2, 1, Cz2), zpad_ref.dtype)
    zpad_ref[0:1, :, :] = zr
    zpad_ref[H2 + 1:H2 + 2, :, :] = zr
    zpad_ref[:, 0:1, :] = zc
    zpad_ref[:, W + 1:W + 2, :] = zc

    # Transposed conv: one matmul per output-row parity; the row interleave is a
    # leading-dim merge.  Result goes straight into the bf16 padded scratch.
    xf = x_ref[0].reshape(H * W, Cin)                               # bf16
    u0 = jnp.dot(xf, wup_ref[0], preferred_element_type=jnp.float32)
    u1 = jnp.dot(xf, wup_ref[1], preferred_element_type=jnp.float32)
    up = jnp.concatenate([u0.reshape(H, 1, W, Co2), u1.reshape(H, 1, W, Co2)],
                         axis=1).reshape(H2, W, Co2) + bup_ref[...]
    zpad_ref[1:H2 + 1, 1:W + 1, 0:Co2] = up.astype(zpad_ref.dtype)
    zpad_ref[1:H2 + 1, 1:W + 1, Co2:Cz2] = skip_ref[0]              # already bf16

    # Conv1 as 9 per-tap matmuls accumulated in f32 (no 9x im2col intermediate).
    acc = jnp.zeros((H2 * W, Co2), jnp.float32)
    for t, (dp, dj) in enumerate(_TAPS):
        tap = zpad_ref[dp:dp + H2, dj:dj + W, :].reshape(H2 * W, Cz2)
        acc = acc + jnp.dot(tap, w1_ref[t], preferred_element_type=jnp.float32)
    y = acc + b1_ref[...]

    y1_ref[0] = y.reshape(H2, W, Co2).astype(y1_ref.dtype)
    s1_ref[0] = jnp.sum(y, axis=0, keepdims=True)
    q1_ref[0] = jnp.sum(y * y, axis=0, keepdims=True)


def _bn_relu_conv2_kernel(y1_ref, sc_ref, sh_ref, w2_ref, b2_ref,
                          y2_ref, s2_ref, q2_ref, apad_ref):
    """Per-sample: BN1 (precomputed global scale/shift) + ReLU + Conv2d(3x3,pad=1)."""
    _, H2, W, Co2 = y1_ref.shape

    zr = jnp.zeros((1, W + 2, Co2), apad_ref.dtype)
    zc = jnp.zeros((H2 + 2, 1, Co2), apad_ref.dtype)
    apad_ref[0:1, :, :] = zr
    apad_ref[H2 + 1:H2 + 2, :, :] = zr
    apad_ref[:, 0:1, :] = zc
    apad_ref[:, W + 1:W + 2, :] = zc

    # BN1 + ReLU in f32, written once (as bf16) into the padded scratch.
    a = jnp.maximum(y1_ref[0].astype(jnp.float32) * sc_ref[...] + sh_ref[...], 0.0)
    apad_ref[1:H2 + 1, 1:W + 1, :] = a.astype(apad_ref.dtype)

    acc = jnp.zeros((H2 * W, Co2), jnp.float32)
    for t, (dp, dj) in enumerate(_TAPS):
        tap = apad_ref[dp:dp + H2, dj:dj + W, :].reshape(H2 * W, Co2)
        acc = acc + jnp.dot(tap, w2_ref[t], preferred_element_type=jnp.float32)
    y = acc + b2_ref[...]

    y2_ref[0] = y.reshape(H2, W, Co2).astype(y2_ref.dtype)
    s2_ref[0] = jnp.sum(y, axis=0, keepdims=True)
    q2_ref[0] = jnp.sum(y * y, axis=0, keepdims=True)


# --------------------------------------------------------------------------
# Wrapper-side parameter folding (one-time, tiny)
# --------------------------------------------------------------------------

def _fold_up(w_up, b_up):
    """PyTorch ConvTranspose2d weight (in_c, out_c, 2, 2) -> (2[dy], in_c, 2*out_c)
    bf16 with output lane = dx*out_c + co (q2 lane order)."""
    in_c, out_c = w_up.shape[0], w_up.shape[1]
    w = jnp.transpose(w_up, (2, 3, 0, 1))                      # (dy, dx, ci, co)
    wq = jnp.transpose(w, (0, 2, 1, 3)).reshape(2, in_c, 2 * out_c)
    bq = jnp.tile(b_up, 2).reshape(1, 2 * out_c).astype(jnp.float32)
    return wq.astype(jnp.bfloat16), bq


def _fold_conv3x3_q2_taps(w_oihw, lane_blocks, out_c):
    """PyTorch Conv2d weight (out_c, in_c, 3, 3) -> (9, L, 2*out_c) bf16 per-tap
    matrices consumed by the q2 padded-scratch taps.  `lane_blocks` is the ordered
    list of (column-parity px, ci_lo, ci_hi) blocks describing the scratch lanes;
    taps whose effective kw falls outside the 3x3 window are zero."""
    w = jnp.transpose(w_oihw, (2, 3, 1, 0))                    # HWIO
    L = sum(hi - lo for _, lo, hi in lane_blocks)
    taps = jnp.zeros((9, L, 2 * out_c), jnp.float32)
    for t, (dp, dj) in enumerate(_TAPS):
        off = 0
        for px, lo, hi in lane_blocks:
            n = hi - lo
            for dx in range(2):
                kw = 2 * dj + px - dx - 1
                if 0 <= kw <= 2:
                    taps = taps.at[t, off:off + n,
                                   dx * out_c:(dx + 1) * out_c].set(w[dp, kw, lo:hi, :])
            off += n
    return taps.astype(jnp.bfloat16)


# --------------------------------------------------------------------------
# Pipeline
# --------------------------------------------------------------------------

@jax.jit
def _decoder_block_impl(x, skip_q2, wupq, bupq, w1t, b1q, g1, be1,
                        w2t, b2q, g2, be2):
    N, H, W, Cin = x.shape
    H2 = 2 * H
    C = g1.shape[0]
    Co2 = 2 * C
    Cz2 = 4 * C

    cparams = pltpu.CompilerParams(
        dimension_semantics=("parallel",))      # batch axis splits across TCs on v7x

    def full_spec(shape):
        nd = len(shape)
        return pl.BlockSpec(shape, lambda n, _nd=nd: (0,) * _nd)

    def batch_spec(shape):
        nz = len(shape)
        return pl.BlockSpec((1,) + shape, lambda n, _nz=nz: (n,) + (0,) * _nz)

    stat_spec = pl.BlockSpec((1, 1, Co2), lambda n: (n, 0, 0))
    stat_shape = jax.ShapeDtypeStruct((N, 1, Co2), jnp.float32)
    cnt = jnp.float32(N * H2 * 2 * W)

    # ---- pass 1: upsample + concat + conv1 (+ per-sample BN1 partial stats) ----
    y1, s1, q1 = pl.pallas_call(
        _up_concat_conv1_kernel,
        grid=(N,),
        in_specs=[batch_spec((H, W, Cin)),
                  batch_spec((H2, W, Co2)),
                  full_spec((2, Cin, Co2)),
                  full_spec((1, Co2)),
                  full_spec((9, Cz2, Co2)),
                  full_spec((1, Co2))],
        out_specs=(batch_spec((H2, W, Co2)), stat_spec, stat_spec),
        out_shape=(jax.ShapeDtypeStruct((N, H2, W, Co2), jnp.bfloat16),
                   stat_shape, stat_shape),
        scratch_shapes=[pltpu.VMEM((H2 + 2, W + 2, Cz2), jnp.bfloat16)],
        compiler_params=cparams,
    )(x, skip_q2, wupq, bupq, w1t, b1q)

    # ---- global BN1 statistics (exact over (N, 2H, 2W); biased variance) ----
    sum1 = jnp.sum(s1, axis=(0, 1)).reshape(2, C).sum(axis=0)
    ssq1 = jnp.sum(q1, axis=(0, 1)).reshape(2, C).sum(axis=0)
    mean1 = sum1 / cnt
    var1 = ssq1 / cnt - mean1 * mean1
    inv1 = g1 * jax.lax.rsqrt(var1 + _EPS)
    sc1 = jnp.tile(inv1, 2).reshape(1, Co2)
    sh1 = jnp.tile(be1 - mean1 * inv1, 2).reshape(1, Co2)

    # ---- pass 2: BN1 + ReLU + conv2 (+ per-sample BN2 partial stats) ----
    y2, s2, q2 = pl.pallas_call(
        _bn_relu_conv2_kernel,
        grid=(N,),
        in_specs=[batch_spec((H2, W, Co2)),
                  full_spec((1, Co2)),
                  full_spec((1, Co2)),
                  full_spec((9, Co2, Co2)),
                  full_spec((1, Co2))],
        out_specs=(batch_spec((H2, W, Co2)), stat_spec, stat_spec),
        out_shape=(jax.ShapeDtypeStruct((N, H2, W, Co2), jnp.bfloat16),
                   stat_shape, stat_shape),
        scratch_shapes=[pltpu.VMEM((H2 + 2, W + 2, Co2), jnp.bfloat16)],
        compiler_params=cparams,
    )(y1, sc1, sh1, w2t, b2q)

    # ---- global BN2 stats; BN2 + ReLU is pure elementwise -> plain jnp (XLA fuses
    # it with the un-q2 reshape and the NCHW transpose). ----
    sum2 = jnp.sum(s2, axis=(0, 1)).reshape(2, C).sum(axis=0)
    ssq2 = jnp.sum(q2, axis=(0, 1)).reshape(2, C).sum(axis=0)
    mean2 = sum2 / cnt
    var2 = ssq2 / cnt - mean2 * mean2
    inv2 = g2 * jax.lax.rsqrt(var2 + _EPS)
    sh2 = be2 - mean2 * inv2

    y2f = y2.astype(jnp.float32).reshape(N, H2, 2 * W, C)      # un-q2 (free)
    out = jnp.maximum(y2f * inv2 + sh2, 0.0)
    return jnp.transpose(out, (0, 3, 1, 2))                    # NHWC -> NCHW


def decoder_block(inputs_nchw, skip_nchw, params):
    """inputs: (N, in_c, H, W); skip: (N, out_c, 2H, 2W).  Returns (N, out_c, 2H, 2W)."""
    w_up, b_up, w1, b1, g1, be1, w2, b2, g2, be2 = params
    out_c = w_up.shape[1]

    x = jnp.transpose(inputs_nchw, (0, 2, 3, 1))               # NCHW -> NHWC
    skip = jnp.transpose(skip_nchw, (0, 2, 3, 1))
    N, H, W, _ = x.shape
    H2, W2 = skip.shape[1], skip.shape[2]
    assert (H2, W2, skip.shape[3]) == (2 * H, 2 * W, out_c)

    skip_q2 = skip.reshape(N, H2, W, 2 * out_c)                # free q2 view of (2W, C)

    # Conv operands are consumed in bf16 by the MXU anyway -> pre-cast inputs so
    # only bf16 activations move through HBM (numerically identical).
    x_bf = x.astype(jnp.bfloat16)
    skip_bf = skip_q2.astype(jnp.bfloat16)

    # One-time parameter folding (wrapper side).
    wupq, bupq = _fold_up(w_up, b_up)
    w1t = _fold_conv3x3_q2_taps(
        w1, [(0, 0, out_c), (1, 0, out_c),                     # up channels
             (0, out_c, 2 * out_c), (1, out_c, 2 * out_c)],    # skip channels
        out_c)
    w2t = _fold_conv3x3_q2_taps(w2, [(0, 0, out_c), (1, 0, out_c)], out_c)
    b1q = jnp.tile(b1, 2).reshape(1, 2 * out_c).astype(jnp.float32)
    b2q = jnp.tile(b2, 2).reshape(1, 2 * out_c).astype(jnp.float32)

    return _decoder_block_impl(x_bf, skip_bf, wupq, bupq, w1t, b1q,
                               g1, be1, w2t, b2q, g2, be2)


# --------------------------------------------------------------------------
# Pure-JAX f32 reference (PyTorch DecoderBlock forward, training-mode BN)
# --------------------------------------------------------------------------

def _reference(inputs_nchw, skip_nchw, params):
    w_up, b_up, w1, b1, g1, be1, w2, b2, g2, be2 = params
    x = jnp.transpose(inputs_nchw, (0, 2, 3, 1))
    skip = jnp.transpose(skip_nchw, (0, 2, 3, 1))

    # ConvTranspose2d(k=2, s=2, p=0): out[n, 2i+dy, 2j+dx, co] = sum_ci x*w + b
    wt = jnp.transpose(w_up, (2, 3, 0, 1))                     # (dy, dx, ci, co)
    u = jnp.einsum('nijc,yxcd->niyjxd', x, wt,
                   precision=jax.lax.Precision.HIGHEST)
    N, H, _, W, _, C = u.shape
    u = u.reshape(N, 2 * H, 2 * W, C) + b_up
    z = jnp.concatenate([u, skip], axis=-1)

    def conv3x3(a, w_oihw, b):
        w = jnp.transpose(w_oihw, (2, 3, 1, 0))                # HWIO
        y = jax.lax.conv_general_dilated(
            a, w, (1, 1), ((1, 1), (1, 1)),
            dimension_numbers=('NHWC', 'HWIO', 'NHWC'),
            precision=jax.lax.Precision.HIGHEST)
        return y + b

    def bn_relu(a, g, be):
        mean = jnp.mean(a, axis=(0, 1, 2))
        var = jnp.mean(jnp.square(a - mean), axis=(0, 1, 2))
        return jnp.maximum((a - mean) * jax.lax.rsqrt(var + _EPS) * g + be, 0.0)

    y = bn_relu(conv3x3(z, w1, b1), g1, be1)
    y = bn_relu(conv3x3(y, w2, b2), g2, be2)
    return jnp.transpose(y, (0, 3, 1, 2))


def init_params(key, in_c, out_c):
    """Deterministic synthetic parameters in PyTorch-native layouts:
    ConvTranspose2d weight (in_c, out_c, 2, 2); Conv2d weight (out_c, in_c, 3, 3)."""
    ks = jax.random.split(key, 10)
    w_up = 0.1 * jax.random.normal(ks[0], (in_c, out_c, 2, 2), jnp.float32)
    b_up = 0.1 * jax.random.normal(ks[1], (out_c,), jnp.float32)
    w1 = 0.1 * jax.random.normal(ks[2], (out_c, 2 * out_c, 3, 3), jnp.float32)
    b1 = 0.1 * jax.random.normal(ks[3], (out_c,), jnp.float32)
    g1 = 1.0 + 0.1 * jax.random.normal(ks[4], (out_c,), jnp.float32)
    be1 = 0.1 * jax.random.normal(ks[5], (out_c,), jnp.float32)
    w2 = 0.1 * jax.random.normal(ks[6], (out_c, out_c, 3, 3), jnp.float32)
    b2 = 0.1 * jax.random.normal(ks[7], (out_c,), jnp.float32)
    g2 = 1.0 + 0.1 * jax.random.normal(ks[8], (out_c,), jnp.float32)
    be2 = 0.1 * jax.random.normal(ks[9], (out_c,), jnp.float32)
    return (w_up, b_up, w1, b1, g1, be1, w2, b2, g2, be2)


if __name__ == "__main__":
    key = jax.random.PRNGKey(0)
    k_x, k_s, k_p = jax.random.split(key, 3)

    N, IN_C, OUT_C, H, W = 2, 16, 8, 8, 8
    inputs = jax.random.normal(k_x, (N, IN_C, H, W), jnp.float32)          # NCHW
    skip = jax.random.normal(k_s, (N, OUT_C, 2 * H, 2 * W), jnp.float32)   # NCHW
    params = init_params(k_p, IN_C, OUT_C)

    out = decoder_block(inputs, skip, params)
    out = jax.block_until_ready(out)
    assert out.shape == (N, OUT_C, 2 * H, 2 * W)

    ref = _reference(inputs, skip, params)
    rel_rms = float(jnp.linalg.norm(out - ref) / (jnp.linalg.norm(ref) + 1e-9))
    max_abs = float(jnp.max(jnp.abs(out - ref)))
    assert rel_rms < 5e-2 and max_abs < 0.25, (rel_rms, max_abs)

    print("KERNEL_OK")
</pallas_src>

<mosaic_0001>
module attributes {stable_mosaic.version = 11 : i64} {
  func.func @_up_concat_conv1_kernel(%arg0: i32, %arg1: memref<1x8x8x16xbf16, #tpu.memory_space<vmem>>, %arg2: memref<1x16x8x16xbf16, #tpu.memory_space<vmem>>, %arg3: memref<2x16x16xbf16, #tpu.memory_space<vmem>>, %arg4: memref<1x16xf32, #tpu.memory_space<vmem>>, %arg5: memref<9x32x16xbf16, #tpu.memory_space<vmem>>, %arg6: memref<1x16xf32, #tpu.memory_space<vmem>>, %arg7: memref<1x16x8x16xbf16, #tpu.memory_space<vmem>>, %arg8: memref<1x1x16xf32, #tpu.memory_space<vmem>>, %arg9: memref<1x1x16xf32, #tpu.memory_space<vmem>>, %arg10: memref<18x10x32xbf16, #tpu.memory_space<vmem>>) attributes {dimension_semantics = [#tpu.dimension_semantics<parallel>], iteration_bounds = array<i64: 2>, scalar_prefetch = 0 : i64, scratch_operands = 1 : i64, tpu.core_type = #tpu.core_type<tc>, window_params = [{transform_indices = @transform_0, window_bounds = array<i64: 1, 8, 8, 16>}, {transform_indices = @transform_1, window_bounds = array<i64: 1, 16, 8, 16>}, {pipeline_mode = #tpu.pipeline_mode<synchronous>, transform_indices = @transform_2, window_bounds = array<i64: 2, 16, 16>}, {pipeline_mode = #tpu.pipeline_mode<synchronous>, transform_indices = @transform_3, window_bounds = array<i64: 1, 16>}, {pipeline_mode = #tpu.pipeline_mode<synchronous>, transform_indices = @transform_4, window_bounds = array<i64: 9, 32, 16>}, {pipeline_mode = #tpu.pipeline_mode<synchronous>, transform_indices = @transform_5, window_bounds = array<i64: 1, 16>}, {transform_indices = @transform_6, window_bounds = array<i64: 1, 16, 8, 16>}, {transform_indices = @transform_7, window_bounds = array<i64: 1, 1, 16>}, {transform_indices = @transform_8, window_bounds = array<i64: 1, 1, 16>}]} {
    %cst = arith.constant 0.000000e+00 : bf16
    %0 = vector.broadcast %cst : bf16 to vector<1x10x32xbf16>
    %cst_0 = arith.constant 0.000000e+00 : bf16
    %1 = vector.broadcast %cst_0 : bf16 to vector<18x1x32xbf16>
    %c0 = arith.constant 0 : index
    %c0_1 = arith.constant 0 : index
    %c0_2 = arith.constant 0 : index
    %2 = vector.load %arg10[%c0, %c0_1, %c0_2] : memref<18x10x32xbf16, #tpu.memory_space<vmem>>, vector<1x10x32xbf16>
    tpu.vector_store %arg10[%c0, %c0_1, %c0_2], %0 {strides = array<i32>} : memref<18x10x32xbf16, #tpu.memory_space<vmem>>, vector<1x10x32xbf16>,
    %c17 = arith.constant 17 : index
    %c0_3 = arith.constant 0 : index
    %c0_4 = arith.constant 0 : index
    %3 = vector.load %arg10[%c17, %c0_3, %c0_4] : memref<18x10x32xbf16, #tpu.memory_space<vmem>>, vector<1x10x32xbf16>
    tpu.vector_store %arg10[%c17, %c0_3, %c0_4], %0 {strides = array<i32>} : memref<18x10x32xbf16, #tpu.memory_space<vmem>>, vector<1x10x32xbf16>,
    %c0_5 = arith.constant 0 : index
    %c0_6 = arith.constant 0 : index
    %c0_7 = arith.constant 0 : index
    %4 = vector.load %arg10[%c0_5, %c0_6, %c0_7] : memref<18x10x32xbf16, #tpu.memory_space<vmem>>, vector<18x1x32xbf16>
    tpu.vector_store %arg10[%c0_5, %c0_6, %c0_7], %1 {strides = array<i32>} : memref<18x10x32xbf16, #tpu.memory_space<vmem>>, vector<18x1x32xbf16>,
    %c0_8 = arith.constant 0 : index
    %c9 = arith.constant 9 : index
    %c0_9 = arith.constant 0 : index
    %5 = vector.load %arg10[%c0_8, %c9, %c0_9] : memref<18x10x32xbf16, #tpu.memory_space<vmem>>, vector<18x1x32xbf16>
    tpu.vector_store %arg10[%c0_8, %c9, %c0_9], %1 {strides = array<i32>} : memref<18x10x32xbf16, #tpu.memory_space<vmem>>, vector<18x1x32xbf16>,
    %c0_10 = arith.constant 0 : index
    %c0_11 = arith.constant 0 : index
    %c0_12 = arith.constant 0 : index
    %c0_13 = arith.constant 0 : index
    %6 = vector.load %arg1[%c0_10, %c0_11, %c0_12, %c0_13] : memref<1x8x8x16xbf16, #tpu.memory_space<vmem>>, vector<1x8x8x16xbf16>
    %7 = vector.shape_cast %6 : vector<1x8x8x16xbf16> to vector<8x8x16xbf16>
    %8 = vector.shape_cast %7 : vector<8x8x16xbf16> to vector<64x16xbf16>
    %c0_14 = arith.constant 0 : index
    %c0_15 = arith.constant 0 : index
    %c0_16 = arith.constant 0 : index
    %9 = vector.load %arg3[%c0_14, %c0_15, %c0_16] : memref<2x16x16xbf16, #tpu.memory_space<vmem>>, vector<1x16x16xbf16>
    %10 = vector.shape_cast %9 : vector<1x16x16xbf16> to vector<16x16xbf16>
    %cst_17 = arith.constant dense<0.000000e+00> : vector<64x16xf32>
    %11 = tpu.matmul %8, %10, %cst_17 {dimension_numbers = #tpu.dot_dimension_numbers<[1], [0], [0], [1], [0, 0, 1, 1], [], []>} : vector<64x16xbf16>, vector<16x16xbf16>, vector<64x16xf32> -> vector<64x16xf32>
    %c1 = arith.constant 1 : index
    %c0_18 = arith.constant 0 : index
    %c0_19 = arith.constant 0 : index
    %12 = vector.load %arg3[%c1, %c0_18, %c0_19] : memref<2x16x16xbf16, #tpu.memory_space<vmem>>, vector<1x16x16xbf16>
    %13 = vector.shape_cast %12 : vector<1x16x16xbf16> to vector<16x16xbf16>
    %cst_20 = arith.constant dense<0.000000e+00> : vector<64x16xf32>
    %14 = tpu.matmul %8, %13, %cst_20 {dimension_numbers = #tpu.dot_dimension_numbers<[1], [0], [0], [1], [0, 0, 1, 1], [], []>} : vector<64x16xbf16>, vector<16x16xbf16>, vector<64x16xf32> -> vector<64x16xf32>
    %15 = vector.shape_cast %11 : vector<64x16xf32> to vector<8x1x8x16xf32>
    %16 = vector.shape_cast %14 : vector<64x16xf32> to vector<8x1x8x16xf32>
    %17 = tpu.concatenate %15, %16 in 1 : vector<8x1x8x16xf32>, vector<8x1x8x16xf32> -> vector<8x2x8x16xf32>
    %18 = vector.shape_cast %17 : vector<8x2x8x16xf32> to vector<16x8x16xf32>
    %c0_21 = arith.constant 0 : index
    %c0_22 = arith.constant 0 : index
    %19 = vector.load %arg4[%c0_21, %c0_22] : memref<1x16xf32, #tpu.memory_space<vmem>>, vector<1x16xf32>
    %20 = vector.shape_cast %19 : vector<1x16xf32> to vector<1x1x16xf32>
    %21 = vector.broadcast %20 : vector<1x1x16xf32> to vector<16x8x16xf32>
    %22 = arith.addf %18, %21 : vector<16x8x16xf32>
    %23 = arith.truncf %22 : vector<16x8x16xf32> to vector<16x8x16xbf16>
    %c1_23 = arith.constant 1 : index
    %c1_24 = arith.constant 1 : index
    %c0_25 = arith.constant 0 : index
    %24 = vector.load %arg10[%c1_23, %c1_24, %c0_25] : memref<18x10x32xbf16, #tpu.memory_space<vmem>>, vector<16x8x16xbf16>
    tpu.vector_store %arg10[%c1_23, %c1_24, %c0_25], %23 {strides = array<i32>} : memref<18x10x32xbf16, #tpu.memory_space<vmem>>, vector<16x8x16xbf16>,
    %c0_26 = arith.constant 0 : index
    %c0_27 = arith.constant 0 : index
    %c0_28 = arith.constant 0 : index
    %c0_29 = arith.constant 0 : index
    %25 = vector.load %arg2[%c0_26, %c0_27, %c0_28, %c0_29] : memref<1x16x8x16xbf16, #tpu.memory_space<vmem>>, vector<1x16x8x16xbf16>
    %26 = vector.shape_cast %25 : vector<1x16x8x16xbf16> to vector<16x8x16xbf16>
    %c1_30 = arith.constant 1 : index
    %c1_31 = arith.constant 1 : index
    %c16 = arith.constant 16 : index
    %27 = vector.load %arg10[%c1_30, %c1_31, %c16] : memref<18x10x32xbf16, #tpu.memory_space<vmem>>, vector<16x8x16xbf16>
    tpu.vector_store %arg10[%c1_30, %c1_31, %c16], %26 {strides = array<i32>} : memref<18x10x32xbf16, #tpu.memory_space<vmem>>, vector<16x8x16xbf16>,
    %cst_32 = arith.constant 0.000000e+00 : f32
    %28 = vector.broadcast %cst_32 : f32 to vector<128x16xf32>
    %c0_33 = arith.constant 0 : index
    %c0_34 = arith.constant 0 : index
    %c0_35 = arith.constant 0 : index
    %29 = vector.load %arg10[%c0_33, %c0_34, %c0_35] : memref<18x10x32xbf16, #tpu.memory_space<vmem>>, vector<16x8x32xbf16>
    %30 = vector.shape_cast %29 : vector<16x8x32xbf16> to vector<128x32xbf16>
    %c0_36 = arith.constant 0 : index
    %c0_37 = arith.constant 0 : index
    %c0_38 = arith.constant 0 : index
    %31 = vector.load %arg5[%c0_36, %c0_37, %c0_38] : memref<9x32x16xbf16, #tpu.memory_space<vmem>>, vector<1x32x16xbf16>
    %32 = vector.shape_cast %31 : vector<1x32x16xbf16> to vector<32x16xbf16>
    %cst_39 = arith.constant dense<0.000000e+00> : vector<128x16xf32>
    %33 = tpu.matmul %30, %32, %cst_39 {dimension_numbers = #tpu.dot_dimension_numbers<[1], [0], [0], [1], [0, 0, 1, 1], [], []>} : vector<128x32xbf16>, vector<32x16xbf16>, vector<128x16xf32> -> vector<128x16xf32>
    %34 = arith.addf %28, %33 : vector<128x16xf32>
    %c0_40 = arith.constant 0 : index
    %c1_41 = arith.constant 1 : index
    %c0_42 = arith.constant 0 : index
    %35 = vector.load %arg10[%c0_40, %c1_41, %c0_42] : memref<18x10x32xbf16, #tpu.memory_space<vmem>>, vector<16x8x32xbf16>
    %36 = vector.shape_cast %35 : vector<16x8x32xbf16> to vector<128x32xbf16>
    %c1_43 = arith.constant 1 : index
    %c0_44 = arith.constant 0 : index
    %c0_45 = arith.constant 0 : index
    %37 = vector.load %arg5[%c1_43, %c0_44, %c0_45] : memref<9x32x16xbf16, #tpu.memory_space<vmem>>, vector<1x32x16xbf16>
    %38 = vector.shape_cast %37 : vector<1x32x16xbf16> to vector<32x16xbf16>
    %cst_46 = arith.constant dense<0.000000e+00> : vector<128x16xf32>
    %39 = tpu.matmul %36, %38, %cst_46 {dimension_numbers = #tpu.dot_dimension_numbers<[1], [0], [0], [1], [0, 0, 1, 1], [], []>} : vector<128x32xbf16>, vector<32x16xbf16>, vector<128x16xf32> -> vector<128x16xf32>
    %40 = arith.addf %34, %39 : vector<128x16xf32>
    %c0_47 = arith.constant 0 : index
    %c2 = arith.constant 2 : index
    %c0_48 = arith.constant 0 : index
    %41 = vector.load %arg10[%c0_47, %c2, %c0_48] : memref<18x10x32xbf16, #tpu.memory_space<vmem>>, vector<16x8x32xbf16>
    %42 = vector.shape_cast %41 : vector<16x8x32xbf16> to vector<128x32xbf16>
    %c2_49 = arith.constant 2 : index
    %c0_50 = arith.constant 0 : index
    %c0_51 = arith.constant 0 : index
    %43 = vector.load %arg5[%c2_49, %c0_50, %c0_51] : memref<9x32x16xbf16, #tpu.memory_space<vmem>>, vector<1x32x16xbf16>
    %44 = vector.shape_cast %43 : vector<1x32x16xbf16> to vector<32x16xbf16>
    %cst_52 = arith.constant dense<0.000000e+00> : vector<128x16xf32>
    %45 = tpu.matmul %42, %44, %cst_52 {dimension_numbers = #tpu.dot_dimension_numbers<[1], [0], [0], [1], [0, 0, 1, 1], [], []>} : vector<128x32xbf16>, vector<32x16xbf16>, vector<128x16xf32> -> vector<128x16xf32>
    %46 = arith.addf %40, %45 : vector<128x16xf32>
    %c1_53 = arith.constant 1 : index
    %c0_54 = arith.constant 0 : index
    %c0_55 = arith.constant 0 : index
    %47 = vector.load %arg10[%c1_53, %c0_54, %c0_55] : memref<18x10x32xbf16, #tpu.memory_space<vmem>>, vector<16x8x32xbf16>
    %48 = vector.shape_cast %47 : vector<16x8x32xbf16> to vector<128x32xbf16>
    %c3 = arith.constant 3 : index
    %c0_56 = arith.constant 0 : index
    %c0_57 = arith.constant 0 : index
    %49 = vector.load %arg5[%c3, %c0_56, %c0_57] : memref<9x32x16xbf16, #tpu.memory_space<vmem>>, vector<1x32x16xbf16>
    %50 = vector.shape_cast %49 : vector<1x32x16xbf16> to vector<32x16xbf16>
    %cst_58 = arith.constant dense<0.000000e+00> : vector<128x16xf32>
    %51 = tpu.matmul %48, %50, %cst_58 {dimension_numbers = #tpu.dot_dimension_numbers<[1], [0], [0], [1], [0, 0, 1, 1], [], []>} : vector<128x32xbf16>, vector<32x16xbf16>, vector<128x16xf32> -> vector<128x16xf32>
    %52 = arith.addf %46, %51 : vector<128x16xf32>
    %c1_59 = arith.constant 1 : index
    %c1_60 = arith.constant 1 : index
    %c0_61 = arith.constant 0 : index
    %53 = vector.load %arg10[%c1_59, %c1_60, %c0_61] : memref<18x10x32xbf16, #tpu.memory_space<vmem>>, vector<16x8x32xbf16>
    %54 = vector.shape_cast %53 : vector<16x8x32xbf16> to vector<128x32xbf16>
    %c4 = arith.constant 4 : index
    %c0_62 = arith.constant 0 : index
    %c0_63 = arith.constant 0 : index
    %55 = vector.load %arg5[%c4, %c0_62, %c0_63] : memref<9x32x16xbf16, #tpu.memory_space<vmem>>, vector<1x32x16xbf16>
    %56 = vector.shape_cast %55 : vector<1x32x16xbf16> to vector<32x16xbf16>
    %cst_64 = arith.constant dense<0.000000e+00> : vector<128x16xf32>
    %57 = tpu.matmul %54, %56, %cst_64 {dimension_numbers = #tpu.dot_dimension_numbers<[1], [0], [0], [1], [0, 0, 1, 1], [], []>} : vector<128x32xbf16>, vector<32x16xbf16>, vector<128x16xf32> -> vector<128x16xf32>
    %58 = arith.addf %52, %57 : vector<128x16xf32>
    %c1_65 = arith.constant 1 : index
    %c2_66 = arith.constant 2 : index
    %c0_67 = arith.constant 0 : index
    %59 = vector.load %arg10[%c1_65, %c2_66, %c0_67] : memref<18x10x32xbf16, #tpu.memory_space<vmem>>, vector<16x8x32xbf16>
    %60 = vector.shape_cast %59 : vector<16x8x32xbf16> to vector<128x32xbf16>
    %c5 = arith.constant 5 : index
    %c0_68 = arith.constant 0 : index
    %c0_69 = arith.constant 0 : index
    %61 = vector.load %arg5[%c5, %c0_68, %c0_69] : memref<9x32x16xbf16, #tpu.memory_space<vmem>>, vector<1x32x16xbf16>
    %62 = vector.shape_cast %61 : vector<1x32x16xbf16> to vector<32x16xbf16>
    %cst_70 = arith.constant dense<0.000000e+00> : vector<128x16xf32>
    %63 = tpu.matmul %60, %62, %cst_70 {dimension_numbers = #tpu.dot_dimension_numbers<[1], [0], [0], [1], [0, 0, 1, 1], [], []>} : vector<128x32xbf16>, vector<32x16xbf16>, vector<128x16xf32> -> vector<128x16xf32>
    %64 = arith.addf %58, %63 : vector<128x16xf32>
    %c2_71 = arith.constant 2 : index
    %c0_72 = arith.constant 0 : index
    %c0_73 = arith.constant 0 : index
    %65 = vector.load %arg10[%c2_71, %c0_72, %c0_73] : memref<18x10x32xbf16, #tpu.memory_space<vmem>>, vector<16x8x32xbf16>
    %66 = vector.shape_cast %65 : vector<16x8x32xbf16> to vector<128x32xbf16>
    %c6 = arith.constant 6 : index
    %c0_74 = arith.constant 0 : index
    %c0_75 = arith.constant 0 : index
    %67 = vector.load %arg5[%c6, %c0_74, %c0_75] : memref<9x32x16xbf16, #tpu.memory_space<vmem>>, vector<1x32x16xbf16>
    %68 = vector.shape_cast %67 : vector<1x32x16xbf16> to vector<32x16xbf16>
    %cst_76 = arith.constant dense<0.000000e+00> : vector<128x16xf32>
    %69 = tpu.matmul %66, %68, %cst_76 {dimension_numbers = #tpu.dot_dimension_numbers<[1], [0], [0], [1], [0, 0, 1, 1], [], []>} : vector<128x32xbf16>, vector<32x16xbf16>, vector<128x16xf32> -> vector<128x16xf32>
    %70 = arith.addf %64, %69 : vector<128x16xf32>
    %c2_77 = arith.constant 2 : index
    %c1_78 = arith.constant 1 : index
    %c0_79 = arith.constant 0 : index
    %71 = vector.load %arg10[%c2_77, %c1_78, %c0_79] : memref<18x10x32xbf16, #tpu.memory_space<vmem>>, vector<16x8x32xbf16>
    %72 = vector.shape_cast %71 : vector<16x8x32xbf16> to vector<128x32xbf16>
    %c7 = arith.constant 7 : index
    %c0_80 = arith.constant 0 : index
    %c0_81 = arith.constant 0 : index
    %73 = vector.load %arg5[%c7, %c0_80, %c0_81] : memref<9x32x16xbf16, #tpu.memory_space<vmem>>, vector<1x32x16xbf16>
    %74 = vector.shape_cast %73 : vector<1x32x16xbf16> to vector<32x16xbf16>
    %cst_82 = arith.constant dense<0.000000e+00> : vector<128x16xf32>
    %75 = tpu.matmul %72, %74, %cst_82 {dimension_numbers = #tpu.dot_dimension_numbers<[1], [0], [0], [1], [0, 0, 1, 1], [], []>} : vector<128x32xbf16>, vector<32x16xbf16>, vector<128x16xf32> -> vector<128x16xf32>
    %76 = arith.addf %70, %75 : vector<128x16xf32>
    %c2_83 = arith.constant 2 : index
    %c2_84 = arith.constant 2 : index
    %c0_85 = arith.constant 0 : index
    %77 = vector.load %arg10[%c2_83, %c2_84, %c0_85] : memref<18x10x32xbf16, #tpu.memory_space<vmem>>, vector<16x8x32xbf16>
    %78 = vector.shape_cast %77 : vector<16x8x32xbf16> to vector<128x32xbf16>
    %c8 = arith.constant 8 : index
    %c0_86 = arith.constant 0 : index
    %c0_87 = arith.constant 0 : index
    %79 = vector.load %arg5[%c8, %c0_86, %c0_87] : memref<9x32x16xbf16, #tpu.memory_space<vmem>>, vector<1x32x16xbf16>
    %80 = vector.shape_cast %79 : vector<1x32x16xbf16> to vector<32x16xbf16>
    %cst_88 = arith.constant dense<0.000000e+00> : vector<128x16xf32>
    %81 = tpu.matmul %78, %80, %cst_88 {dimension_numbers = #tpu.dot_dimension_numbers<[1], [0], [0], [1], [0, 0, 1, 1], [], []>} : vector<128x32xbf16>, vector<32x16xbf16>, vector<128x16xf32> -> vector<128x16xf32>
    %82 = arith.addf %76, %81 : vector<128x16xf32>
    %c0_89 = arith.constant 0 : index
    %c0_90 = arith.constant 0 : index
    %83 = vector.load %arg6[%c0_89, %c0_90] : memref<1x16xf32, #tpu.memory_space<vmem>>, vector<1x16xf32>
    %84 = vector.broadcast %83 : vector<1x16xf32> to vector<128x16xf32>
    %85 = arith.addf %82, %84 : vector<128x16xf32>
    %86 = vector.shape_cast %85 : vector<128x16xf32> to vector<16x8x16xf32>
    %87 = arith.truncf %86 : vector<16x8x16xf32> to vector<16x8x16xbf16>
    %c0_91 = arith.constant 0 : index
    %c0_92 = arith.constant 0 : index
    %c0_93 = arith.constant 0 : index
    %c0_94 = arith.constant 0 : index
    %88 = vector.load %arg7[%c0_91, %c0_92, %c0_93, %c0_94] : memref<1x16x8x16xbf16, #tpu.memory_space<vmem>>, vector<1x16x8x16xbf16>
    %89 = vector.shape_cast %88 : vector<1x16x8x16xbf16> to vector<16x8x16xbf16>
    %90 = vector.shape_cast %87 : vector<16x8x16xbf16> to vector<1x16x8x16xbf16>
    tpu.vector_store %arg7[%c0_91, %c0_92, %c0_93, %c0_94], %90 {strides = array<i32>} : memref<1x16x8x16xbf16, #tpu.memory_space<vmem>>, vector<1x16x8x16xbf16>,
    %cst_95 = arith.constant dense<0.000000e+00> : vector<16xf32>
    %91 = vector.multi_reduction <add>, %85, %cst_95 [0] : vector<128x16xf32> to vector<16xf32>
    %92 = vector.shape_cast %91 : vector<16xf32> to vector<1x16xf32>
    %c0_96 = arith.constant 0 : index
    %c0_97 = arith.constant 0 : index
    %c0_98 = arith.constant 0 : index
    %93 = vector.load %arg8[%c0_96, %c0_97, %c0_98] : memref<1x1x16xf32, #tpu.memory_space<vmem>>, vector<1x1x16xf32>
    %94 = vector.shape_cast %93 : vector<1x1x16xf32> to vector<1x16xf32>
    %95 = vector.shape_cast %92 : vector<1x16xf32> to vector<1x1x16xf32>
    tpu.vector_store %arg8[%c0_96, %c0_97, %c0_98], %95 {strides = array<i32>} : memref<1x1x16xf32, #tpu.memory_space<vmem>>, vector<1x1x16xf32>,
    %96 = arith.mulf %85, %85 : vector<128x16xf32>
    %cst_99 = arith.constant dense<0.000000e+00> : vector<16xf32>
    %97 = vector.multi_reduction <add>, %96, %cst_99 [0] : vector<128x16xf32> to vector<16xf32>
    %98 = vector.shape_cast %97 : vector<16xf32> to vector<1x16xf32>
    %c0_100 = arith.constant 0 : index
    %c0_101 = arith.constant 0 : index
    %c0_102 = arith.constant 0 : index
    %99 = vector.load %arg9[%c0_100, %c0_101, %c0_102] : memref<1x1x16xf32, #tpu.memory_space<vmem>>, vector<1x1x16xf32>
    %100 = vector.shape_cast %99 : vector<1x1x16xf32> to vector<1x16xf32>
    %101 = vector.shape_cast %98 : vector<1x16xf32> to vector<1x1x16xf32>
    tpu.vector_store %arg9[%c0_100, %c0_101, %c0_102], %101 {strides = array<i32>} : memref<1x1x16xf32, #tpu.memory_space<vmem>>, vector<1x1x16xf32>,
    return
  }
  func.func @transform_0(%arg0: i32) -> (i32, i32, i32, i32) {
    %c0_i32 = arith.constant 0 : i32
    %c0_i32_0 = arith.constant 0 : i32
    %c0_i32_1 = arith.constant 0 : i32
    %c0_i32_2 = arith.constant 0 : i32
    return %arg0, %c0_i32, %c0_i32_0, %c0_i32_1 : i32, i32, i32, i32
  }
  func.func @transform_1(%arg0: i32) -> (i32, i32, i32, i32) {
    %c0_i32 = arith.constant 0 : i32
    %c0_i32_0 = arith.constant 0 : i32
    %c0_i32_1 = arith.constant 0 : i32
    %c0_i32_2 = arith.constant 0 : i32
    return %arg0, %c0_i32, %c0_i32_0, %c0_i32_1 : i32, i32, i32, i32
  }
  func.func @transform_2(%arg0: i32) -> (i32, i32, i32) {
    %c0_i32 = arith.constant 0 : i32
    %c0_i32_0 = arith.constant 0 : i32
    %c0_i32_1 = arith.constant 0 : i32
    %c0_i32_2 = arith.constant 0 : i32
    return %c0_i32, %c0_i32_0, %c0_i32_1 : i32, i32, i32
  }
  func.func @transform_3(%arg0: i32) -> (i32, i32) {
    %c0_i32 = arith.constant 0 : i32
    %c0_i32_0 = arith.constant 0 : i32
    %c0_i32_1 = arith.constant 0 : i32
    return %c0_i32, %c0_i32_0 : i32, i32
  }
  func.func @transform_4(%arg0: i32) -> (i32, i32, i32) {
    %c0_i32 = arith.constant 0 : i32
    %c0_i32_0 = arith.constant 0 : i32
    %c0_i32_1 = arith.constant 0 : i32
    %c0_i32_2 = arith.constant 0 : i32
    return %c0_i32, %c0_i32_0, %c0_i32_1 : i32, i32, i32
  }
  func.func @transform_5(%arg0: i32) -> (i32, i32) {
    %c0_i32 = arith.constant 0 : i32
    %c0_i32_0 = arith.constant 0 : i32
    %c0_i32_1 = arith.constant 0 : i32
    return %c0_i32, %c0_i32_0 : i32, i32
  }
  func.func @transform_6(%arg0: i32) -> (i32, i32, i32, i32) {
    %c0_i32 = arith.constant 0 : i32
    %c0_i32_0 = arith.constant 0 : i32
    %c0_i32_1 = arith.constant 0 : i32
    %c0_i32_2 = arith.constant 0 : i32
    return %arg0, %c0_i32, %c0_i32_0, %c0_i32_1 : i32, i32, i32, i32
  }
  func.func @transform_7(%arg0: i32) -> (i32, i32, i32) {
    %c0_i32 = arith.constant 0 : i32
    %c0_i32_0 = arith.constant 0 : i32
    %c0_i32_1 = arith.constant 0 : i32
    return %arg0, %c0_i32, %c0_i32_0 : i32, i32, i32
  }
  func.func @transform_8(%arg0: i32) -> (i32, i32, i32) {
    %c0_i32 = arith.constant 0 : i32
    %c0_i32_0 = arith.constant 0 : i32
    %c0_i32_1 = arith.constant 0 : i32
    return %arg0, %c0_i32, %c0_i32_0 : i32, i32, i32
  }
}

module attributes {stable_mosaic.version = 11 : i64} {
  func.func @_bn_relu_conv2_kernel(%arg0: i32, %arg1: memref<1x16x8x16xbf16, #tpu.memory_space<vmem>>, %arg2: memref<1x16xf32, #tpu.memory_space<vmem>>, %arg3: memref<1x16xf32, #tpu.memory_space<vmem>>, %arg4: memref<9x16x16xbf16, #tpu.memory_space<vmem>>, %arg5: memref<1x16xf32, #tpu.memory_space<vmem>>, %arg6: memref<1x16x8x16xbf16, #tpu.memory_space<vmem>>, %arg7: memref<1x1x16xf32, #tpu.memory_space<vmem>>, %arg8: memref<1x1x16xf32, #tpu.memory_space<vmem>>, %arg9: memref<18x10x16xbf16, #tpu.memory_space<vmem>>) attributes {dimension_semantics = [#tpu.dimension_semantics<parallel>], iteration_bounds = array<i64: 2>, scalar_prefetch = 0 : i64, scratch_operands = 1 : i64, tpu.core_type = #tpu.core_type<tc>, window_params = [{transform_indices = @transform_0, window_bounds = array<i64: 1, 16, 8, 16>}, {pipeline_mode = #tpu.pipeline_mode<synchronous>, transform_indices = @transform_1, window_bounds = array<i64: 1, 16>}, {pipeline_mode = #tpu.pipeline_mode<synchronous>, transform_indices = @transform_2, window_bounds = array<i64: 1, 16>}, {pipeline_mode = #tpu.pipeline_mode<synchronous>, transform_indices = @transform_3, window_bounds = array<i64: 9, 16, 16>}, {pipeline_mode = #tpu.pipeline_mode<synchronous>, transform_indices = @transform_4, window_bounds = array<i64: 1, 16>}, {transform_indices = @transform_5, window_bounds = array<i64: 1, 16, 8, 16>}, {transform_indices = @transform_6, window_bounds = array<i64: 1, 1, 16>}, {transform_indices = @transform_7, window_bounds = array<i64: 1, 1, 16>}]} {
    %cst = arith.constant 0.000000e+00 : bf16
    %0 = vector.broadcast %cst : bf16 to vector<1x10x16xbf16>
    %cst_0 = arith.constant 0.000000e+00 : bf16
    %1 = vector.broadcast %cst_0 : bf16 to vector<18x1x16xbf16>
    %c0 = arith.constant 0 : index
    %c0_1 = arith.constant 0 : index
    %c0_2 = arith.constant 0 : index
    %2 = vector.load %arg9[%c0, %c0_1, %c0_2] : memref<18x10x16xbf16, #tpu.memory_space<vmem>>, vector<1x10x16xbf16>
    tpu.vector_store %arg9[%c0, %c0_1, %c0_2], %0 {strides = array<i32>} : memref<18x10x16xbf16, #tpu.memory_space<vmem>>, vector<1x10x16xbf16>,
    %c17 = arith.constant 17 : index
    %c0_3 = arith.constant 0 : index
    %c0_4 = arith.constant 0 : index
    %3 = vector.load %arg9[%c17, %c0_3, %c0_4] : memref<18x10x16xbf16, #tpu.memory_space<vmem>>, vector<1x10x16xbf16>
    tpu.vector_store %arg9[%c17, %c0_3, %c0_4], %0 {strides = array<i32>} : memref<18x10x16xbf16, #tpu.memory_space<vmem>>, vector<1x10x16xbf16>,
    %c0_5 = arith.constant 0 : index
    %c0_6 = arith.constant 0 : index
    %c0_7 = arith.constant 0 : index
    %4 = vector.load %arg9[%c0_5, %c0_6, %c0_7] : memref<18x10x16xbf16, #tpu.memory_space<vmem>>, vector<18x1x16xbf16>
    tpu.vector_store %arg9[%c0_5, %c0_6, %c0_7], %1 {strides = array<i32>} : memref<18x10x16xbf16, #tpu.memory_space<vmem>>, vector<18x1x16xbf16>,
    %c0_8 = arith.constant 0 : index
    %c9 = arith.constant 9 : index
    %c0_9 = arith.constant 0 : index
    %5 = vector.load %arg9[%c0_8, %c9, %c0_9] : memref<18x10x16xbf16, #tpu.memory_space<vmem>>, vector<18x1x16xbf16>
    tpu.vector_store %arg9[%c0_8, %c9, %c0_9], %1 {strides = array<i32>} : memref<18x10x16xbf16, #tpu.memory_space<vmem>>, vector<18x1x16xbf16>,
    %c0_10 = arith.constant 0 : index
    %c0_11 = arith.constant 0 : index
    %c0_12 = arith.constant 0 : index
    %c0_13 = arith.constant 0 : index
    %6 = vector.load %arg1[%c0_10, %c0_11, %c0_12, %c0_13] : memref<1x16x8x16xbf16, #tpu.memory_space<vmem>>, vector<1x16x8x16xbf16>
    %7 = vector.shape_cast %6 : vector<1x16x8x16xbf16> to vector<16x8x16xbf16>
    %8 = arith.extf %7 : vector<16x8x16xbf16> to vector<16x8x16xf32>
    %c0_14 = arith.constant 0 : index
    %c0_15 = arith.constant 0 : index
    %9 = vector.load %arg2[%c0_14, %c0_15] : memref<1x16xf32, #tpu.memory_space<vmem>>, vector<1x16xf32>
    %10 = vector.shape_cast %9 : vector<1x16xf32> to vector<1x1x16xf32>
    %11 = vector.broadcast %10 : vector<1x1x16xf32> to vector<16x8x16xf32>
    %12 = arith.mulf %8, %11 : vector<16x8x16xf32>
    %c0_16 = arith.constant 0 : index
    %c0_17 = arith.constant 0 : index
    %13 = vector.load %arg3[%c0_16, %c0_17] : memref<1x16xf32, #tpu.memory_space<vmem>>, vector<1x16xf32>
    %14 = vector.shape_cast %13 : vector<1x16xf32> to vector<1x1x16xf32>
    %15 = vector.broadcast %14 : vector<1x1x16xf32> to vector<16x8x16xf32>
    %16 = arith.addf %12, %15 : vector<16x8x16xf32>
    %cst_18 = arith.constant 0.000000e+00 : f32
    %17 = vector.broadcast %cst_18 : f32 to vector<16x8x16xf32>
    %18 = arith.maximumf %16, %17 : vector<16x8x16xf32>
    %19 = arith.truncf %18 : vector<16x8x16xf32> to vector<16x8x16xbf16>
    %c1 = arith.constant 1 : index
    %c1_19 = arith.constant 1 : index
    %c0_20 = arith.constant 0 : index
    %20 = vector.load %arg9[%c1, %c1_19, %c0_20] : memref<18x10x16xbf16, #tpu.memory_space<vmem>>, vector<16x8x16xbf16>
    tpu.vector_store %arg9[%c1, %c1_19, %c0_20], %19 {strides = array<i32>} : memref<18x10x16xbf16, #tpu.memory_space<vmem>>, vector<16x8x16xbf16>,
    %cst_21 = arith.constant 0.000000e+00 : f32
    %21 = vector.broadcast %cst_21 : f32 to vector<128x16xf32>
    %c0_22 = arith.constant 0 : index
    %c0_23 = arith.constant 0 : index
    %c0_24 = arith.constant 0 : index
    %22 = vector.load %arg9[%c0_22, %c0_23, %c0_24] : memref<18x10x16xbf16, #tpu.memory_space<vmem>>, vector<16x8x16xbf16>
    %23 = vector.shape_cast %22 : vector<16x8x16xbf16> to vector<128x16xbf16>
    %c0_25 = arith.constant 0 : index
    %c0_26 = arith.constant 0 : index
    %c0_27 = arith.constant 0 : index
    %24 = vector.load %arg4[%c0_25, %c0_26, %c0_27] : memref<9x16x16xbf16, #tpu.memory_space<vmem>>, vector<1x16x16xbf16>
    %25 = vector.shape_cast %24 : vector<1x16x16xbf16> to vector<16x16xbf16>
    %cst_28 = arith.constant dense<0.000000e+00> : vector<128x16xf32>
    %26 = tpu.matmul %23, %25, %cst_28 {dimension_numbers = #tpu.dot_dimension_numbers<[1], [0], [0], [1], [0, 0, 1, 1], [], []>} : vector<128x16xbf16>, vector<16x16xbf16>, vector<128x16xf32> -> vector<128x16xf32>
    %27 = arith.addf %21, %26 : vector<128x16xf32>
    %c0_29 = arith.constant 0 : index
    %c1_30 = arith.constant 1 : index
    %c0_31 = arith.constant 0 : index
    %28 = vector.load %arg9[%c0_29, %c1_30, %c0_31] : memref<18x10x16xbf16, #tpu.memory_space<vmem>>, vector<16x8x16xbf16>
    %29 = vector.shape_cast %28 : vector<16x8x16xbf16> to vector<128x16xbf16>
    %c1_32 = arith.constant 1 : index
    %c0_33 = arith.constant 0 : index
    %c0_34 = arith.constant 0 : index
    %30 = vector.load %arg4[%c1_32, %c0_33, %c0_34] : memref<9x16x16xbf16, #tpu.memory_space<vmem>>, vector<1x16x16xbf16>
    %31 = vector.shape_cast %30 : vector<1x16x16xbf16> to vector<16x16xbf16>
    %cst_35 = arith.constant dense<0.000000e+00> : vector<128x16xf32>
    %32 = tpu.matmul %29, %31, %cst_35 {dimension_numbers = #tpu.dot_dimension_numbers<[1], [0], [0], [1], [0, 0, 1, 1], [], []>} : vector<128x16xbf16>, vector<16x16xbf16>, vector<128x16xf32> -> vector<128x16xf32>
    %33 = arith.addf %27, %32 : vector<128x16xf32>
    %c0_36 = arith.constant 0 : index
    %c2 = arith.constant 2 : index
    %c0_37 = arith.constant 0 : index
    %34 = vector.load %arg9[%c0_36, %c2, %c0_37] : memref<18x10x16xbf16, #tpu.memory_space<vmem>>, vector<16x8x16xbf16>
    %35 = vector.shape_cast %34 : vector<16x8x16xbf16> to vector<128x16xbf16>
    %c2_38 = arith.constant 2 : index
    %c0_39 = arith.constant 0 : index
    %c0_40 = arith.constant 0 : index
    %36 = vector.load %arg4[%c2_38, %c0_39, %c0_40] : memref<9x16x16xbf16, #tpu.memory_space<vmem>>, vector<1x16x16xbf16>
    %37 = vector.shape_cast %36 : vector<1x16x16xbf16> to vector<16x16xbf16>
    %cst_41 = arith.constant dense<0.000000e+00> : vector<128x16xf32>
    %38 = tpu.matmul %35, %37, %cst_41 {dimension_numbers = #tpu.dot_dimension_numbers<[1], [0], [0], [1], [0, 0, 1, 1], [], []>} : vector<128x16xbf16>, vector<16x16xbf16>, vector<128x16xf32> -> vector<128x16xf32>
    %39 = arith.addf %33, %38 : vector<128x16xf32>
    %c1_42 = arith.constant 1 : index
    %c0_43 = arith.constant 0 : index
    %c0_44 = arith.constant 0 : index
    %40 = vector.load %arg9[%c1_42, %c0_43, %c0_44] : memref<18x10x16xbf16, #tpu.memory_space<vmem>>, vector<16x8x16xbf16>
    %41 = vector.shape_cast %40 : vector<16x8x16xbf16> to vector<128x16xbf16>
    %c3 = arith.constant 3 : index
    %c0_45 = arith.constant 0 : index
    %c0_46 = arith.constant 0 : index
    %42 = vector.load %arg4[%c3, %c0_45, %c0_46] : memref<9x16x16xbf16, #tpu.memory_space<vmem>>, vector<1x16x16xbf16>
    %43 = vector.shape_cast %42 : vector<1x16x16xbf16> to vector<16x16xbf16>
    %cst_47 = arith.constant dense<0.000000e+00> : vector<128x16xf32>
    %44 = tpu.matmul %41, %43, %cst_47 {dimension_numbers = #tpu.dot_dimension_numbers<[1], [0], [0], [1], [0, 0, 1, 1], [], []>} : vector<128x16xbf16>, vector<16x16xbf16>, vector<128x16xf32> -> vector<128x16xf32>
    %45 = arith.addf %39, %44 : vector<128x16xf32>
    %c1_48 = arith.constant 1 : index
    %c1_49 = arith.constant 1 : index
    %c0_50 = arith.constant 0 : index
    %46 = vector.load %arg9[%c1_48, %c1_49, %c0_50] : memref<18x10x16xbf16, #tpu.memory_space<vmem>>, vector<16x8x16xbf16>
    %47 = vector.shape_cast %46 : vector<16x8x16xbf16> to vector<128x16xbf16>
    %c4 = arith.constant 4 : index
    %c0_51 = arith.constant 0 : index
    %c0_52 = arith.constant 0 : index
    %48 = vector.load %arg4[%c4, %c0_51, %c0_52] : memref<9x16x16xbf16, #tpu.memory_space<vmem>>, vector<1x16x16xbf16>
    %49 = vector.shape_cast %48 : vector<1x16x16xbf16> to vector<16x16xbf16>
    %cst_53 = arith.constant dense<0.000000e+00> : vector<128x16xf32>
    %50 = tpu.matmul %47, %49, %cst_53 {dimension_numbers = #tpu.dot_dimension_numbers<[1], [0], [0], [1], [0, 0, 1, 1], [], []>} : vector<128x16xbf16>, vector<16x16xbf16>, vector<128x16xf32> -> vector<128x16xf32>
    %51 = arith.addf %45, %50 : vector<128x16xf32>
    %c1_54 = arith.constant 1 : index
    %c2_55 = arith.constant 2 : index
    %c0_56 = arith.constant 0 : index
    %52 = vector.load %arg9[%c1_54, %c2_55, %c0_56] : memref<18x10x16xbf16, #tpu.memory_space<vmem>>, vector<16x8x16xbf16>
    %53 = vector.shape_cast %52 : vector<16x8x16xbf16> to vector<128x16xbf16>
    %c5 = arith.constant 5 : index
    %c0_57 = arith.constant 0 : index
    %c0_58 = arith.constant 0 : index
    %54 = vector.load %arg4[%c5, %c0_57, %c0_58] : memref<9x16x16xbf16, #tpu.memory_space<vmem>>, vector<1x16x16xbf16>
    %55 = vector.shape_cast %54 : vector<1x16x16xbf16> to vector<16x16xbf16>
    %cst_59 = arith.constant dense<0.000000e+00> : vector<128x16xf32>
    %56 = tpu.matmul %53, %55, %cst_59 {dimension_numbers = #tpu.dot_dimension_numbers<[1], [0], [0], [1], [0, 0, 1, 1], [], []>} : vector<128x16xbf16>, vector<16x16xbf16>, vector<128x16xf32> -> vector<128x16xf32>
    %57 = arith.addf %51, %56 : vector<128x16xf32>
    %c2_60 = arith.constant 2 : index
    %c0_61 = arith.constant 0 : index
    %c0_62 = arith.constant 0 : index
    %58 = vector.load %arg9[%c2_60, %c0_61, %c0_62] : memref<18x10x16xbf16, #tpu.memory_space<vmem>>, vector<16x8x16xbf16>
    %59 = vector.shape_cast %58 : vector<16x8x16xbf16> to vector<128x16xbf16>
    %c6 = arith.constant 6 : index
    %c0_63 = arith.constant 0 : index
    %c0_64 = arith.constant 0 : index
    %60 = vector.load %arg4[%c6, %c0_63, %c0_64] : memref<9x16x16xbf16, #tpu.memory_space<vmem>>, vector<1x16x16xbf16>
    %61 = vector.shape_cast %60 : vector<1x16x16xbf16> to vector<16x16xbf16>
    %cst_65 = arith.constant dense<0.000000e+00> : vector<128x16xf32>
    %62 = tpu.matmul %59, %61, %cst_65 {dimension_numbers = #tpu.dot_dimension_numbers<[1], [0], [0], [1], [0, 0, 1, 1], [], []>} : vector<128x16xbf16>, vector<16x16xbf16>, vector<128x16xf32> -> vector<128x16xf32>
    %63 = arith.addf %57, %62 : vector<128x16xf32>
    %c2_66 = arith.constant 2 : index
    %c1_67 = arith.constant 1 : index
    %c0_68 = arith.constant 0 : index
    %64 = vector.load %arg9[%c2_66, %c1_67, %c0_68] : memref<18x10x16xbf16, #tpu.memory_space<vmem>>, vector<16x8x16xbf16>
    %65 = vector.shape_cast %64 : vector<16x8x16xbf16> to vector<128x16xbf16>
    %c7 = arith.constant 7 : index
    %c0_69 = arith.constant 0 : index
    %c0_70 = arith.constant 0 : index
    %66 = vector.load %arg4[%c7, %c0_69, %c0_70] : memref<9x16x16xbf16, #tpu.memory_space<vmem>>, vector<1x16x16xbf16>
    %67 = vector.shape_cast %66 : vector<1x16x16xbf16> to vector<16x16xbf16>
    %cst_71 = arith.constant dense<0.000000e+00> : vector<128x16xf32>
    %68 = tpu.matmul %65, %67, %cst_71 {dimension_numbers = #tpu.dot_dimension_numbers<[1], [0], [0], [1], [0, 0, 1, 1], [], []>} : vector<128x16xbf16>, vector<16x16xbf16>, vector<128x16xf32> -> vector<128x16xf32>
    %69 = arith.addf %63, %68 : vector<128x16xf32>
    %c2_72 = arith.constant 2 : index
    %c2_73 = arith.constant 2 : index
    %c0_74 = arith.constant 0 : index
    %70 = vector.load %arg9[%c2_72, %c2_73, %c0_74] : memref<18x10x16xbf16, #tpu.memory_space<vmem>>, vector<16x8x16xbf16>
    %71 = vector.shape_cast %70 : vector<16x8x16xbf16> to vector<128x16xbf16>
    %c8 = arith.constant 8 : index
    %c0_75 = arith.constant 0 : index
    %c0_76 = arith.constant 0 : index
    %72 = vector.load %arg4[%c8, %c0_75, %c0_76] : memref<9x16x16xbf16, #tpu.memory_space<vmem>>, vector<1x16x16xbf16>
    %73 = vector.shape_cast %72 : vector<1x16x16xbf16> to vector<16x16xbf16>
    %cst_77 = arith.constant dense<0.000000e+00> : vector<128x16xf32>
    %74 = tpu.matmul %71, %73, %cst_77 {dimension_numbers = #tpu.dot_dimension_numbers<[1], [0], [0], [1], [0, 0, 1, 1], [], []>} : vector<128x16xbf16>, vector<16x16xbf16>, vector<128x16xf32> -> vector<128x16xf32>
    %75 = arith.addf %69, %74 : vector<128x16xf32>
    %c0_78 = arith.constant 0 : index
    %c0_79 = arith.constant 0 : index
    %76 = vector.load %arg5[%c0_78, %c0_79] : memref<1x16xf32, #tpu.memory_space<vmem>>, vector<1x16xf32>
    %77 = vector.broadcast %76 : vector<1x16xf32> to vector<128x16xf32>
    %78 = arith.addf %75, %77 : vector<128x16xf32>
    %79 = vector.shape_cast %78 : vector<128x16xf32> to vector<16x8x16xf32>
    %80 = arith.truncf %79 : vector<16x8x16xf32> to vector<16x8x16xbf16>
    %c0_80 = arith.constant 0 : index
    %c0_81 = arith.constant 0 : index
    %c0_82 = arith.constant 0 : index
    %c0_83 = arith.constant 0 : index
    %81 = vector.load %arg6[%c0_80, %c0_81, %c0_82, %c0_83] : memref<1x16x8x16xbf16, #tpu.memory_space<vmem>>, vector<1x16x8x16xbf16>
    %82 = vector.shape_cast %81 : vector<1x16x8x16xbf16> to vector<16x8x16xbf16>
    %83 = vector.shape_cast %80 : vector<16x8x16xbf16> to vector<1x16x8x16xbf16>
    tpu.vector_store %arg6[%c0_80, %c0_81, %c0_82, %c0_83], %83 {strides = array<i32>} : memref<1x16x8x16xbf16, #tpu.memory_space<vmem>>, vector<1x16x8x16xbf16>,
    %cst_84 = arith.constant dense<0.000000e+00> : vector<16xf32>
    %84 = vector.multi_reduction <add>, %78, %cst_84 [0] : vector<128x16xf32> to vector<16xf32>
    %85 = vector.shape_cast %84 : vector<16xf32> to vector<1x16xf32>
    %c0_85 = arith.constant 0 : index
    %c0_86 = arith.constant 0 : index
    %c0_87 = arith.constant 0 : index
    %86 = vector.load %arg7[%c0_85, %c0_86, %c0_87] : memref<1x1x16xf32, #tpu.memory_space<vmem>>, vector<1x1x16xf32>
    %87 = vector.shape_cast %86 : vector<1x1x16xf32> to vector<1x16xf32>
    %88 = vector.shape_cast %85 : vector<1x16xf32> to vector<1x1x16xf32>
    tpu.vector_store %arg7[%c0_85, %c0_86, %c0_87], %88 {strides = array<i32>} : memref<1x1x16xf32, #tpu.memory_space<vmem>>, vector<1x1x16xf32>,
    %89 = arith.mulf %78, %78 : vector<128x16xf32>
    %cst_88 = arith.constant dense<0.000000e+00> : vector<16xf32>
    %90 = vector.multi_reduction <add>, %89, %cst_88 [0] : vector<128x16xf32> to vector<16xf32>
    %91 = vector.shape_cast %90 : vector<16xf32> to vector<1x16xf32>
    %c0_89 = arith.constant 0 : index
    %c0_90 = arith.constant 0 : index
    %c0_91 = arith.constant 0 : index
    %92 = vector.load %arg8[%c0_89, %c0_90, %c0_91] : memref<1x1x16xf32, #tpu.memory_space<vmem>>, vector<1x1x16xf32>
    %93 = vector.shape_cast %92 : vector<1x1x16xf32> to vector<1x16xf32>
    %94 = vector.shape_cast %91 : vector<1x16xf32> to vector<1x1x16xf32>
    tpu.vector_store %arg8[%c0_89, %c0_90, %c0_91], %94 {strides = array<i32>} : memref<1x1x16xf32, #tpu.memory_space<vmem>>, vector<1x1x16xf32>,
    return
  }
  func.func @transform_0(%arg0: i32) -> (i32, i32, i32, i32) {
    %c0_i32 = arith.constant 0 : i32
    %c0_i32_0 = arith.constant 0 : i32
    %c0_i32_1 = arith.constant 0 : i32
    %c0_i32_2 = arith.constant 0 : i32
    return %arg0, %c0_i32, %c0_i32_0, %c0_i32_1 : i32, i32, i32, i32
  }
  func.func @transform_1(%arg0: i32) -> (i32, i32) {
    %c0_i32 = arith.constant 0 : i32
    %c0_i32_0 = arith.constant 0 : i32
    %c0_i32_1 = arith.constant 0 : i32
    return %c0_i32, %c0_i32_0 : i32, i32
  }
  func.func @transform_2(%arg0: i32) -> (i32, i32) {
    %c0_i32 = arith.constant 0 : i32
    %c0_i32_0 = arith.constant 0 : i32
    %c0_i32_1 = arith.constant 0 : i32
    return %c0_i32, %c0_i32_0 : i32, i32
  }
  func.func @transform_3(%arg0: i32) -> (i32, i32, i32) {
    %c0_i32 = arith.constant 0 : i32
    %c0_i32_0 = arith.constant 0 : i32
    %c0_i32_1 = arith.constant 0 : i32
    %c0_i32_2 = arith.constant 0 : i32
    return %c0_i32, %c0_i32_0, %c0_i32_1 : i32, i32, i32
  }
  func.func @transform_4(%arg0: i32) -> (i32, i32) {
    %c0_i32 = arith.constant 0 : i32
    %c0_i32_0 = arith.constant 0 : i32
    %c0_i32_1 = arith.constant 0 : i32
    return %c0_i32, %c0_i32_0 : i32, i32
  }
  func.func @transform_5(%arg0: i32) -> (i32, i32, i32, i32) {
    %c0_i32 = arith.constant 0 : i32
    %c0_i32_0 = arith.constant 0 : i32
    %c0_i32_1 = arith.constant 0 : i32
    %c0_i32_2 = arith.constant 0 : i32
    return %arg0, %c0_i32, %c0_i32_0, %c0_i32_1 : i32, i32, i32, i32
  }
  func.func @transform_6(%arg0: i32) -> (i32, i32, i32) {
    %c0_i32 = arith.constant 0 : i32
    %c0_i32_0 = arith.constant 0 : i32
    %c0_i32_1 = arith.constant 0 : i32
    return %arg0, %c0_i32, %c0_i32_0 : i32, i32, i32
  }
  func.func @transform_7(%arg0: i32) -> (i32, i32, i32) {
    %c0_i32 = arith.constant 0 : i32
    %c0_i32_0 = arith.constant 0 : i32
    %c0_i32_1 = arith.constant 0 : i32
    return %arg0, %c0_i32, %c0_i32_0 : i32, i32, i32
  }
}

</mosaic_0001>

<llo_original>
// kernel: tile.18
$region0: #{tile.18}
  #allocation0 [shape = 's32[1]{0}', space=sflag, size = 0x4, scoped, tag = 'scoped memory for tile.18']
  %s0 = inlined_call_operand.vmem [shape: f32[8], index: 0, kind: input, shape index: {}]
  %s1 = inlined_call_operand.vmem [shape: f32[2,8], index: 1, kind: output, shape index: {}]
  // Predicated region
  $region2: #{tile.18} parent=0 // pred_check
    _
  $region3: #{tile.18} parent=0 // pred_check_branch
    %3 = sbr.rel (0) target = $region5
  $region4: #{tile.18} parent=0 // pred_region
    _
  $region5: #{tile.18} parent=0 // pred_fallthru
    _
  %v4 = vld [vmem:[%s0] ss:$0 sm:$0xff]
  %5 = vst [vmem:[%s1] sm:$0x3] %v4

// kernel: tile.19
$region0: #{tile.19}
  %s0 = inlined_call_operand.vmem [shape: f32[2,8], index: 0, kind: input, shape index: {}]
  %s1 = inlined_call_operand.vmem [shape: f32[1,16], index: 1, kind: output, shape index: {}]
  $region1: #{tile.19} parent=0
    #allocation0 [shape = 'u8[4096]{0}', space=vmem, size = 0x1000, scoped, tag = 'scoped mem for output reshape']
    #allocation1 [shape = 'u8[4096]{0}', space=vmem, size = 0x1000, scoped, tag = 'scoped mem for input reshape']
    %s3 = sshllo.u32 0, 2
    %v4 = vld [vmem:[%s0] sm:%s3]
    %5 = vst [vmem:[#allocation1] sm:%s3] %v4
    %v6 = vld [vmem:[#allocation1] sm:$0x1]
    %vm7 = vcmask 64512
    %8 = vst.msk [vmem:[#allocation0] sm:$0x1] %vm7, %v6
    %s9 = scalar_lea.vmem [#allocation1], 1
    %v10 = vld [vmem:[%s9] sm:$0x1]
    %11 = vrot.lane.b32.xlu0 %v10, 8
    %v12 = vpop.permute.xlu0 %11
    %vm13 = vcmask 130112
    %14 = vst.msk [vmem:[#allocation0] sm:$0x1] %vm13, %v12
    %s16 = sshllo.u32 0, 1
    %v18 = vld [vmem:[#allocation0] sm:%s16]
    %s19 = sshllo.u32 0, 1
    %20 = vst [vmem:[%s1] sm:%s19] %v18

// kernel: _decoder_block_impl.2
$region0: #{_decoder_block_impl.2}
  #allocation0 [shape = 'u32[]', space=smem, size = 0x4, offset = 0x4, fixed_abs, tag = 'smem constant byte address 0x4 - core index']
  #allocation1 [shape = 'u32[144,128]{1,0:T(1,128)}', space=vmem, size = 0x12000, scoped, tag = 'internal scratch']
  #allocation2 [shape = 'bf16[18,10,32]{2,1,0:T(8,128)(2,1)}', space=vmem, size = 0x12000, scoped, tag = 'scratch operand']
  %s0 = inlined_call_operand.vmem [shape: bf16[2,8,8,16], index: 0, kind: input, shape index: {}]
  %s1 = inlined_call_operand.vmem [shape: bf16[2,16,8,16], index: 1, kind: input, shape index: {}]
  %s2 = inlined_call_operand.vmem [shape: bf16[2,16,16], index: 2, kind: input, shape index: {}]
  %s3 = inlined_call_operand.vmem [shape: f32[1,16], index: 3, kind: input, shape index: {}]
  %s4 = inlined_call_operand.vmem [shape: bf16[9,32,16], index: 4, kind: input, shape index: {}]
  %s5 = inlined_call_operand.vmem [shape: f32[1,16], index: 5, kind: input, shape index: {}]
  %s6 = inlined_call_operand.vmem [shape: bf16[2,16,8,16], index: 6, kind: output, shape index: {0}]
  %s7 = inlined_call_operand.vmem [shape: f32[2,1,16], index: 7, kind: output, shape index: {1}]
  %s8 = inlined_call_operand.vmem [shape: f32[2,1,16], index: 8, kind: output, shape index: {2}]
  %9 = xla_tuple %s6, %s7, %s8
  %s10 = sld [smem:[#allocation0]]
  $region73: #{_decoder_block_impl.2} parent=0
    _
  %s12 = ssub.s32 1, %s10
  %s13 = scalar_select 0, %s12, %s10
  loop: start=0, step=1, limit=4
  $region2: #{_decoder_block_impl.2} parent=0 // loop_pre_header
    _
  $region3: #{_decoder_block_impl.2} parent=0 // loop_header
    %s15 = sphi 0, %s19
    %p16 = scmp.ge.s32.totalorder %s15, 4
    %s25 = sphi 0, %s27
    %s28 = sphi 0, %s25
    %s29 = sphi 0, %s28
    %s45 = sphi 0, %s29
    %s51 = sphi 0, %s53
    %s54 = sphi 0, %s51
    %s55 = sphi 0, %s54
    %s71 = sphi 0, %s55
    %s75 = sphi 0, %s75
    %s77 = sphi 0, %s75
    %s78 = sphi 0, %s77
    %s92 = sphi 0, %s78
    %s96 = sphi 0, %s96
    %s98 = sphi 0, %s96
    %s99 = sphi 0, %s98
    %s113 = sphi 0, %s99
    %s117 = sphi 0, %s117
    %s119 = sphi 0, %s117
    %s120 = sphi 0, %s119
    %s134 = sphi 0, %s120
    %s138 = sphi 0, %s138
    %s140 = sphi 0, %s138
    %s141 = sphi 0, %s140
    %s155 = sphi 0, %s141
    %s161 = sphi 0, %s163
    %s164 = sphi 0, %s161
    %s165 = sphi 0, %s164
    %s181 = sphi 0, %s165
    %s187 = sphi 0, %s189
    %s190 = sphi 0, %s187
    %s191 = sphi 0, %s190
    %s207 = sphi 0, %s191
    %s213 = sphi 0, %s215
    %s216 = sphi 0, %s213
    %s217 = sphi 0, %s216
    %s233 = sphi 0, %s217
  $region4: #{_decoder_block_impl.2} parent=0 // loop_header_branch
    %18 = sbr.rel (%p16) target = $region8
  $region5: #{_decoder_block_impl.2} parent=0 // loop_body
    %s20 = ssub.s32 %s15, 1
    %s21 = ssub.s32 %s15, 2
    %s22 = sadd.s32 %s15, 1
    %s23 = ssub.s32 %s15, %s22
    %p24 = scmp.eq.s32.totalorder %s23, 0
    %s26 = sadd.s32 %s25, 1
    %s27 = scalar_select %p24, %s25, %s26
    %p30 = pneg %p24
    %p31 = scmp.eq.s32.totalorder %s15, 1
    %p32 = por %p30, %p31
    %p33 = scmp.ne.s32.totalorder %s25, %s28
    %p34 = scmp.eq.s32.totalorder %s15, 0
    %p35 = por %p33, %p34
    %p36 = scmp.ne.s32.totalorder %s25, %s28
    %p37 = scmp.eq.s32.totalorder %s20, 1
    %p38 = por %p36, %p37
    %p39 = scmp.ne.s32.totalorder %s28, %s29
    %p40 = scmp.eq.s32.totalorder %s20, 0
    %p41 = por %p39, %p40
    %p42 = scmp.ne.s32.totalorder %s28, %s29
    %p43 = scmp.eq.s32.totalorder %s21, 1
    %p44 = por %p42, %p43
    %p46 = scmp.ne.s32.totalorder %s29, %s45
    %p47 = scmp.eq.s32.totalorder %s21, 0
    %p48 = por %p46, %p47
    %s49 = ssub.s32 %s15, %s22
    %p50 = scmp.eq.s32.totalorder %s49, 0
    %s52 = sadd.s32 %s51, 1
    %s53 = scalar_select %p50, %s51, %s52
    %p56 = pneg %p50
    %p57 = scmp.eq.s32.totalorder %s15, 1
    %p58 = por %p56, %p57
    %p59 = scmp.ne.s32.totalorder %s51, %s54
    %p60 = scmp.eq.s32.totalorder %s15, 0
    %p61 = por %p59, %p60
    %p62 = scmp.ne.s32.totalorder %s51, %s54
    %p63 = scmp.eq.s32.totalorder %s20, 1
    %p64 = por %p62, %p63
    %p65 = scmp.ne.s32.totalorder %s54, %s55
    %p66 = scmp.eq.s32.totalorder %s20, 0
    %p67 = por %p65, %p66
    %p68 = scmp.ne.s32.totalorder %s54, %s55
    %p69 = scmp.eq.s32.totalorder %s21, 1
    %p70 = por %p68, %p69
    %p72 = scmp.ne.s32.totalorder %s55, %s71
    %p73 = scmp.eq.s32.totalorder %s21, 0
    %p74 = por %p72, %p73
    %s76 = sadd.s32 %s75, 1
    %p79 = scmp.eq.s32.totalorder %s15, 1
    %p80 = scmp.ne.s32.totalorder %s75, %s77
    %p81 = scmp.eq.s32.totalorder %s15, 0
    %p82 = por %p80, %p81
    %p83 = scmp.ne.s32.totalorder %s75, %s77
    %p84 = scmp.eq.s32.totalorder %s20, 1
    %p85 = por %p83, %p84
    %p86 = scmp.ne.s32.totalorder %s77, %s78
    %p87 = scmp.eq.s32.totalorder %s20, 0
    %p88 = por %p86, %p87
    %p89 = scmp.ne.s32.totalorder %s77, %s78
    %p90 = scmp.eq.s32.totalorder %s21, 1
    %p91 = por %p89, %p90
    %p93 = scmp.ne.s32.totalorder %s78, %s92
    %p94 = scmp.eq.s32.totalorder %s21, 0
    %p95 = por %p93, %p94
    %s97 = sadd.s32 %s96, 1
    %p100 = scmp.eq.s32.totalorder %s15, 1
    %p101 = scmp.ne.s32.totalorder %s96, %s98
    %p102 = scmp.eq.s32.totalorder %s15, 0
    %p103 = por %p101, %p102
    %p104 = scmp.ne.s32.totalorder %s96, %s98
    %p105 = scmp.eq.s32.totalorder %s20, 1
    %p106 = por %p104, %p105
    %p107 = scmp.ne.s32.totalorder %s98, %s99
    %p108 = scmp.eq.s32.totalorder %s20, 0
    %p109 = por %p107, %p108
    %p110 = scmp.ne.s32.totalorder %s98, %s99
    %p111 = scmp.eq.s32.totalorder %s21, 1
    %p112 = por %p110, %p111
    %p114 = scmp.ne.s32.totalorder %s99, %s113
    %p115 = scmp.eq.s32.totalorder %s21, 0
    %p116 = por %p114, %p115
    %s118 = sadd.s32 %s117, 1
    %p121 = scmp.eq.s32.totalorder %s15, 1
    %p122 = scmp.ne.s32.totalorder %s117, %s119
    %p123 = scmp.eq.s32.totalorder %s15, 0
    %p124 = por %p122, %p123
    %p125 = scmp.ne.s32.totalorder %s117, %s119
    %p126 = scmp.eq.s32.totalorder %s20, 1
    %p127 = por %p125, %p126
    %p128 = scmp.ne.s32.totalorder %s119, %s120
    %p129 = scmp.eq.s32.totalorder %s20, 0
    %p130 = por %p128, %p129
    %p131 = scmp.ne.s32.totalorder %s119, %s120
    %p132 = scmp.eq.s32.totalorder %s21, 1
    %p133 = por %p131, %p132
    %p135 = scmp.ne.s32.totalorder %s120, %s134
    %p136 = scmp.eq.s32.totalorder %s21, 0
    %p137 = por %p135, %p136
    %s139 = sadd.s32 %s138, 1
    %p142 = scmp.eq.s32.totalorder %s15, 1
    %p143 = scmp.ne.s32.totalorder %s138, %s140
    %p144 = scmp.eq.s32.totalorder %s15, 0
    %p145 = por %p143, %p144
    %p146 = scmp.ne.s32.totalorder %s138, %s140
    %p147 = scmp.eq.s32.totalorder %s20, 1
    %p148 = por %p146, %p147
    %p149 = scmp.ne.s32.totalorder %s140, %s141
    %p150 = scmp.eq.s32.totalorder %s20, 0
    %p151 = por %p149, %p150
    %p152 = scmp.ne.s32.totalorder %s140, %s141
    %p153 = scmp.eq.s32.totalorder %s21, 1
    %p154 = por %p152, %p153
    %p156 = scmp.ne.s32.totalorder %s141, %s155
    %p157 = scmp.eq.s32.totalorder %s21, 0
    %p158 = por %p156, %p157
    %s159 = ssub.s32 %s15, %s22
    %p160 = scmp.eq.s32.totalorder %s159, 0
    %s162 = sadd.s32 %s161, 1
    %s163 = scalar_select %p160, %s161, %s162
    %p166 = pneg %p160
    %p167 = scmp.eq.s32.totalorder %s15, 1
    %p168 = por %p166, %p167
    %p169 = scmp.ne.s32.totalorder %s161, %s164
    %p170 = scmp.eq.s32.totalorder %s15, 0
    %p171 = por %p169, %p170
    %p172 = scmp.ne.s32.totalorder %s161, %s164
    %p173 = scmp.eq.s32.totalorder %s20, 1
    %p174 = por %p172, %p173
    %p175 = scmp.ne.s32.totalorder %s164, %s165
    %p176 = scmp.eq.s32.totalorder %s20, 0
    %p177 = por %p175, %p176
    %p178 = scmp.ne.s32.totalorder %s164, %s165
    %p179 = scmp.eq.s32.totalorder %s21, 1
    %p180 = por %p178, %p179
    %p182 = scmp.ne.s32.totalorder %s165, %s181
    %p183 = scmp.eq.s32.totalorder %s21, 0
    %p184 = por %p182, %p183
    %s185 = ssub.s32 %s15, %s22
    %p186 = scmp.eq.s32.totalorder %s185, 0
    %s188 = sadd.s32 %s187, 1
    %s189 = scalar_select %p186, %s187, %s188
    %p192 = pneg %p186
    %p193 = scmp.eq.s32.totalorder %s15, 1
    %p194 = por %p192, %p193
    %p195 = scmp.ne.s32.totalorder %s187, %s190
    %p196 = scmp.eq.s32.totalorder %s15, 0
    %p197 = por %p195, %p196
    %p198 = scmp.ne.s32.totalorder %s187, %s190
    %p199 = scmp.eq.s32.totalorder %s20, 1
    %p200 = por %p198, %p199
    %p201 = scmp.ne.s32.totalorder %s190, %s191
    %p202 = scmp.eq.s32.totalorder %s20, 0
    %p203 = por %p201, %p202
    %p204 = scmp.ne.s32.totalorder %s190, %s191
    %p205 = scmp.eq.s32.totalorder %s21, 1
    %p206 = por %p204, %p205
    %p208 = scmp.ne.s32.totalorder %s191, %s207
    %p209 = scmp.eq.s32.totalorder %s21, 0
    %p210 = por %p208, %p209
    %s211 = ssub.s32 %s15, %s22
    %p212 = scmp.eq.s32.totalorder %s211, 0
    %s214 = sadd.s32 %s213, 1
    %s215 = scalar_select %p212, %s213, %s214
    %p218 = pneg %p212
    %p219 = scmp.eq.s32.totalorder %s15, 1
    %p220 = por %p218, %p219
    %p221 = scmp.ne.s32.totalorder %s213, %s216
    %p222 = scmp.eq.s32.totalorder %s15, 0
    %p223 = por %p221, %p222
    %p224 = scmp.ne.s32.totalorder %s213, %s216
    %p225 = scmp.eq.s32.totalorder %s20, 1
    %p226 = por %p224, %p225
    %p227 = scmp.ne.s32.totalorder %s216, %s217
    %p228 = scmp.eq.s32.totalorder %s20, 0
    %p229 = por %p227, %p228
    %p230 = scmp.ne.s32.totalorder %s216, %s217
    %p231 = scmp.eq.s32.totalorder %s21, 1
    %p232 = por %p230, %p231
    %p234 = scmp.ne.s32.totalorder %s217, %s233
    %p235 = scmp.eq.s32.totalorder %s21, 0
    %p236 = por %p234, %p235
    %p237 = scmp.le.s32.totalorder 1, %s15
    %p238 = scmp.lt.s32.totalorder %s15, 3
    %p239 = pnand %p237, %p238
    %p240 = pneg %p239
    // Predicated region
    $region9: #{_decoder_block_impl.2} parent=5 // pred_check
      _
    $region10: #{_decoder_block_impl.2} parent=5 // pred_check_branch
      %242 = sbr.rel (%p239) target = $region12
    $region11: #{_decoder_block_impl.2} parent=5 // pred_region
      %s243 = ssub.s32 %s15, 1
      // Predicated region
      $region13: #{_decoder_block_impl.2} parent=11 // pred_check
        %p244 = pneg %p88
      $region14: #{_decoder_block_impl.2} parent=11 // pred_check_branch
        %246 = sbr.rel (%p244) target = $region16
      $region15: #{_decoder_block_impl.2} parent=11 // pred_region
        _
      $region16: #{_decoder_block_impl.2} parent=11 // pred_fallthru
        _
      // Predicated region
      $region17: #{_decoder_block_impl.2} parent=11 // pred_check
        %p247 = pneg %p109
      $region18: #{_decoder_block_impl.2} parent=11 // pred_check_branch
        %249 = sbr.rel (%p247) target = $region20
      $region19: #{_decoder_block_impl.2} parent=11 // pred_region
        _
      $region20: #{_decoder_block_impl.2} parent=11 // pred_fallthru
        _
      // Predicated region
      $region21: #{_decoder_block_impl.2} parent=11 // pred_check
        %p250 = pneg %p130
      $region22: #{_decoder_block_impl.2} parent=11 // pred_check_branch
        %252 = sbr.rel (%p250) target = $region24
      $region23: #{_decoder_block_impl.2} parent=11 // pred_region
        _
      $region24: #{_decoder_block_impl.2} parent=11 // pred_fallthru
        _
      // Predicated region
      $region25: #{_decoder_block_impl.2} parent=11 // pred_check
        %p253 = pneg %p151
      $region26: #{_decoder_block_impl.2} parent=11 // pred_check_branch
        %255 = sbr.rel (%p253) target = $region28
      $region27: #{_decoder_block_impl.2} parent=11 // pred_region
        _
      $region28: #{_decoder_block_impl.2} parent=11 // pred_fallthru
        _
    $region12: #{_decoder_block_impl.2} parent=5 // pred_fallthru
      _
    %p256 = scmp.lt.s32.totalorder %s15, 2
    // Predicated region
    $region29: #{_decoder_block_impl.2} parent=5 // pred_check
      %p257 = pneg %p256
    $region30: #{_decoder_block_impl.2} parent=5 // pred_check_branch
      %259 = sbr.rel (%p257) target = $region32
    $region31: #{_decoder_block_impl.2} parent=5 // pred_region
      // Predicated region
      $region33: #{_decoder_block_impl.2} parent=31 // pred_check
        %p260 = pneg %p35
      $region34: #{_decoder_block_impl.2} parent=31 // pred_check_branch
        %262 = sbr.rel (%p260) target = $region36
      $region35: #{_decoder_block_impl.2} parent=31 // pred_region
        %p263 = scmp.lt.s32.totalorder %s15, 1
        %s264 = scalar_select %p263, %s15, 1
        %s265 = smul.addr %s264, 8
        %s266 = smul.addr %s265, 4
        %s267 = scalar_lea.vmem %s0, %s266
      $region36: #{_decoder_block_impl.2} parent=31 // pred_fallthru
        _
      // Predicated region
      $region37: #{_decoder_block_impl.2} parent=31 // pred_check
        %p268 = pneg %p61
      $region38: #{_decoder_block_impl.2} parent=31 // pred_check_branch
        %270 = sbr.rel (%p268) target = $region40
      $region39: #{_decoder_block_impl.2} parent=31 // pred_region
        %p271 = scmp.lt.s32.totalorder %s15, 1
        %s272 = scalar_select %p271, %s15, 1
        %s273 = smul.addr %s272, 16
        %s274 = smul.addr %s273, 4
        %s275 = scalar_lea.vmem %s1, %s274
      $region40: #{_decoder_block_impl.2} parent=31 // pred_fallthru
        _
    $region32: #{_decoder_block_impl.2} parent=5 // pred_fallthru
      _
    %p276 = scmp.le.s32.totalorder 1, %s15
    %p277 = scmp.lt.s32.totalorder %s15, 3
    %p278 = pnand %p276, %p277
    %p279 = pneg %p278
    // Predicated region
    $region41: #{_decoder_block_impl.2} parent=5 // pred_check
      _
    $region42: #{_decoder_block_impl.2} parent=5 // pred_check_branch
      %281 = sbr.rel (%p278) target = $region44
    $region43: #{_decoder_block_impl.2} parent=5 // pred_region
      %s282 = ssub.s32 %s15, 1
      %p283 = scmp.lt.s32.totalorder %s20, 1
      %s284 = scalar_select %p283, %s20, 1
      %s285 = smul.addr %s284, 8
      %s286 = smul.addr %s285, 4
      %s287 = scalar_lea.vmem %s0, %s286
      %p288 = pneg %p41
      %p289 = pneg %p38
      %p290 = scmp.lt.s32.totalorder %s20, 1
      %s291 = scalar_select %p290, %s20, 1
      %s292 = smul.addr %s291, 16
      %s293 = smul.addr %s292, 4
      %s294 = scalar_lea.vmem %s1, %s293
      %p295 = pneg %p67
      %p296 = pneg %p64
      %p297 = pneg %p88
      %p298 = pneg %p85
      %p299 = pneg %p109
      %p300 = pneg %p106
      %p301 = pneg %p130
      %p302 = pneg %p127
      %p303 = pneg %p151
      %p304 = pneg %p148
      %p305 = pneg %p177
      %p306 = pneg %p174
      %p307 = scmp.lt.s32.totalorder %s20, 1
      %s308 = scalar_select %p307, %s20, 1
      %s309 = smul.addr %s308, 16
      %s310 = smul.addr %s309, 4
      %s311 = scalar_lea.vmem %s6, %s310
      %p312 = pneg %p203
      %p313 = pneg %p200
      %p314 = scmp.lt.s32.totalorder %s20, 1
      %s315 = scalar_select %p314, %s20, 1
      %s316 = scalar_lea.vmem %s7, %s315
      %p317 = pneg %p229
      %p318 = pneg %p226
      %p319 = scmp.lt.s32.totalorder %s20, 1
      %s320 = scalar_select %p319, %s20, 1
      %s321 = scalar_lea.vmem %s8, %s320
      %p322 = scmp.lt.s32.totalorder %s20, 1
      %s323 = scalar_select %p322, %s20, 1
      %s324 = smul.addr %s323, 8
      %s325 = smul.addr %s324, 4
      %s326 = scalar_lea.vmem %s0, %s325
      %p327 = scmp.lt.s32.totalorder %s20, 1
      %s328 = scalar_select %p327, %s20, 1
      %s329 = smul.addr %s328, 16
      %s330 = smul.addr %s329, 4
      %s331 = scalar_lea.vmem %s1, %s330
      %p332 = scmp.lt.s32.totalorder %s20, 1
      %s333 = scalar_select %p332, %s20, 1
      %s334 = smul.addr %s333, 16
      %s335 = smul.addr %s334, 4
      %s336 = scalar_lea.vmem %s6, %s335
      %p337 = scmp.lt.s32.totalorder %s20, 1
      %s338 = scalar_select %p337, %s20, 1
      %s339 = scalar_lea.vmem %s7, %s338
      %p340 = scmp.lt.s32.totalorder %s20, 1
      %s341 = scalar_select %p340, %s20, 1
      %s342 = scalar_lea.vmem %s8, %s341
      %vm344 = vcmask 257024
      %345 = vst.msk [vmem:[#allocation2] sm:$0xf] %vm344, 0
      %vm346 = vcmask 253952
      %347 = vst.msk [vmem:[#allocation2 + $0x4] sm:$0x1] %vm346, 0
      %s348 = scalar_lea.vmem [#allocation2], 136
      %349 = vst.msk [vmem:[%s348] sm:$0xf] %vm344, 0
      %350 = vst.msk [vmem:[%s348 + $0x4] sm:$0x1] %vm346, 0
      %vm351 = vcmask 253952
      %vm352 = vsmask.f32 256
      %vm353 = vmand %vm351, %vm352
      %v354 = vld [vmem:[#allocation2] sm:$0x1]
      %v355 = vsel %vm353, 0, %v354
      %356 = vst [vmem:[#allocation2] sm:$0x1] %v355
      %v357 = vld [vmem:[#allocation2 + $0x8] sm:$0x1]
      %v358 = vsel %vm353, 0, %v357
      %359 = vst [vmem:[#allocation2 + $0x8] sm:$0x1] %v358
      %v360 = vld [vmem:[#allocation2 + $0x10] sm:$0x1]
      %v361 = vsel %vm353, 0, %v360
      %362 = vst [vmem:[#allocation2 + $0x10] sm:$0x1] %v361
      %v363 = vld [vmem:[#allocation2 + $0x18] sm:$0x1]
      %v364 = vsel %vm353, 0, %v363
      %365 = vst [vmem:[#allocation2 + $0x18] sm:$0x1] %v364
      %v366 = vld [vmem:[#allocation2 + $0x20] sm:$0x1]
      %v367 = vsel %vm353, 0, %v366
      %368 = vst [vmem:[#allocation2 + $0x20] sm:$0x1] %v367
      %v369 = vld [vmem:[#allocation2 + $0x28] sm:$0x1]
      %v370 = vsel %vm353, 0, %v369
      %371 = vst [vmem:[#allocation2 + $0x28] sm:$0x1] %v370
      %v372 = vld [vmem:[#allocation2 + $0x30] sm:$0x1]
      %v373 = vsel %vm353, 0, %v372
      %374 = vst [vmem:[#allocation2 + $0x30] sm:$0x1] %v373
      %v375 = vld [vmem:[#allocation2 + $0x38] sm:$0x1]
      %v376 = vsel %vm353, 0, %v375
      %377 = vst [vmem:[#allocation2 + $0x38] sm:$0x1] %v376
      %v378 = vld [vmem:[#allocation2 + $0x40] sm:$0x1]
      %v379 = vsel %vm353, 0, %v378
      %380 = vst [vmem:[#allocation2 + $0x40] sm:$0x1] %v379
      %v381 = vld [vmem:[#allocation2 + $0x48] sm:$0x1]
      %v382 = vsel %vm353, 0, %v381
      %383 = vst [vmem:[#allocation2 + $0x48] sm:$0x1] %v382
      %v384 = vld [vmem:[#allocation2 + $0x50] sm:$0x1]
      %v385 = vsel %vm353, 0, %v384
      %386 = vst [vmem:[#allocation2 + $0x50] sm:$0x1] %v385
      %v387 = vld [vmem:[#allocation2 + $0x58] sm:$0x1]
      %v388 = vsel %vm353, 0, %v387
      %389 = vst [vmem:[#allocation2 + $0x58] sm:$0x1] %v388
      %v390 = vld [vmem:[#allocation2 + $0x60] sm:$0x1]
      %v391 = vsel %vm353, 0, %v390
      %392 = vst [vmem:[#allocation2 + $0x60] sm:$0x1] %v391
      %v393 = vld [vmem:[#allocation2 + $0x68] sm:$0x1]
      %v394 = vsel %vm353, 0, %v393
      %395 = vst [vmem:[#allocation2 + $0x68] sm:$0x1] %v394
      %v396 = vld [vmem:[#allocation2 + $0x70] sm:$0x1]
      %v397 = vsel %vm353, 0, %v396
      %398 = vst [vmem:[#allocation2 + $0x70] sm:$0x1] %v397
      %v399 = vld [vmem:[#allocation2 + $0x78] sm:$0x1]
      %v400 = vsel %vm353, 0, %v399
      %401 = vst [vmem:[#allocation2 + $0x78] sm:$0x1] %v400
      %v402 = vld [vmem:[#allocation2 + $0x80] sm:$0x1]
      %v403 = vsel %vm353, 0, %v402
      %404 = vst [vmem:[#allocation2 + $0x80] sm:$0x1] %v403
      %v405 = vld [vmem:[#allocation2 + $0x88] sm:$0x1]
      %v406 = vsel %vm353, 0, %v405
      %407 = vst [vmem:[#allocation2 + $0x88] sm:$0x1] %v406
      %vm408 = vsmask.f32 7938
      %vm409 = vmand %vm351, %vm408
      %v410 = vld [vmem:[#allocation2 + $0x4] sm:$0x1]
      %v411 = vsel %vm409, 0, %v410
      %412 = vst [vmem:[#allocation2 + $0x4] sm:$0x1] %v411
      %v413 = vld [vmem:[#allocation2 + $0xc] sm:$0x1]
      %v414 = vsel %vm409, 0, %v413
      %415 = vst [vmem:[#allocation2 + $0xc] sm:$0x1] %v414
      %v416 = vld [vmem:[#allocation2 + $0x14] sm:$0x1]
      %v417 = vsel %vm409, 0, %v416
      %418 = vst [vmem:[#allocation2 + $0x14] sm:$0x1] %v417
      %v419 = vld [vmem:[#allocation2 + $0x1c] sm:$0x1]
      %v420 = vsel %vm409, 0, %v419
      %421 = vst [vmem:[#allocation2 + $0x1c] sm:$0x1] %v420
      %v422 = vld [vmem:[#allocation2 + $0x24] sm:$0x1]
      %v423 = vsel %vm409, 0, %v422
      %424 = vst [vmem:[#allocation2 + $0x24] sm:$0x1] %v423
      %v425 = vld [vmem:[#allocation2 + $0x2c] sm:$0x1]
      %v426 = vsel %vm409, 0, %v425
      %427 = vst [vmem:[#allocation2 + $0x2c] sm:$0x1] %v426
      %v428 = vld [vmem:[#allocation2 + $0x34] sm:$0x1]
      %v429 = vsel %vm409, 0, %v428
      %430 = vst [vmem:[#allocation2 + $0x34] sm:$0x1] %v429
      %v431 = vld [vmem:[#allocation2 + $0x3c] sm:$0x1]
      %v432 = vsel %vm409, 0, %v431
      %433 = vst [vmem:[#allocation2 + $0x3c] sm:$0x1] %v432
      %v434 = vld [vmem:[#allocation2 + $0x44] sm:$0x1]
      %v435 = vsel %vm409, 0, %v434
      %436 = vst [vmem:[#allocation2 + $0x44] sm:$0x1] %v435
      %v437 = vld [vmem:[#allocation2 + $0x4c] sm:$0x1]
      %v438 = vsel %vm409, 0, %v437
      %439 = vst [vmem:[#allocation2 + $0x4c] sm:$0x1] %v438
      %v440 = vld [vmem:[#allocation2 + $0x54] sm:$0x1]
      %v441 = vsel %vm409, 0, %v440
      %442 = vst [vmem:[#allocation2 + $0x54] sm:$0x1] %v441
      %v443 = vld [vmem:[#allocation2 + $0x5c] sm:$0x1]
      %v444 = vsel %vm409, 0, %v443
      %445 = vst [vmem:[#allocation2 + $0x5c] sm:$0x1] %v444
      %v446 = vld [vmem:[#allocation2 + $0x64] sm:$0x1]
      %v447 = vsel %vm409, 0, %v446
      %448 = vst [vmem:[#allocation2 + $0x64] sm:$0x1] %v447
      %v449 = vld [vmem:[#allocation2 + $0x6c] sm:$0x1]
      %v450 = vsel %vm409, 0, %v449
      %451 = vst [vmem:[#allocation2 + $0x6c] sm:$0x1] %v450
      %v452 = vld [vmem:[#allocation2 + $0x74] sm:$0x1]
      %v453 = vsel %vm409, 0, %v452
      %454 = vst [vmem:[#allocation2 + $0x74] sm:$0x1] %v453
      %v455 = vld [vmem:[#allocation2 + $0x7c] sm:$0x1]
      %v456 = vsel %vm409, 0, %v455
      %457 = vst [vmem:[#allocation2 + $0x7c] sm:$0x1] %v456
      %v458 = vld [vmem:[#allocation2 + $0x84] sm:$0x1]
      %v459 = vsel %vm409, 0, %v458
      %460 = vst [vmem:[#allocation2 + $0x84] sm:$0x1] %v459
      %v461 = vld [vmem:[#allocation2 + $0x8c] sm:$0x1]
      %v462 = vsel %vm409, 0, %v461
      %463 = vst [vmem:[#allocation2 + $0x8c] sm:$0x1] %v462
      %v464 = vld [vmem:[%s326] sm:$0xf]
      %v465 = vld [vmem:[%s326 + $0x4] sm:$0xf]
      %v466 = vld [vmem:[%s326 + $0x8] sm:$0xf]
      %v467 = vld [vmem:[%s326 + $0xc] sm:$0xf]
      %v468 = vld [vmem:[%s326 + $0x10] sm:$0xf]
      %v469 = vld [vmem:[%s326 + $0x14] sm:$0xf]
      %v470 = vld [vmem:[%s326 + $0x18] sm:$0xf]
      %v471 = vld [vmem:[%s326 + $0x1c] sm:$0xf]
      %v472 = vld [vmem:[%s2] sm:$0xf]
      %v473 = vld [vmem:[%s2 + $0x4] sm:$0xf]
      %v482 = vunpack.c.l.b16 %v464
      %v483 = vunpack.c.l.b16 %v465
      %v484 = vunpack.c.l.b16 %v466
      %v485 = vunpack.c.l.b16 %v467
      %v486 = vunpack.c.l.b16 %v468
      %v487 = vunpack.c.l.b16 %v469
      %v488 = vunpack.c.l.b16 %v470
      %v489 = vunpack.c.l.b16 %v471
      %v490 = vpack.c.b16 %v483, %v482
      %v491 = vpack.c.b16 %v485, %v484
      %v492 = vpack.c.b16 %v487, %v486
      %v493 = vpack.c.b16 %v489, %v488
      %v496 = vunpack.c.l.b16 %v472
      %v497 = vunpack.c.l.b16 %v473
      %v498 = vpack.c.b16 %v497, %v496
      %vm500 = vcmask 130048
      %v502 = vsel %vm500, %v490, 0
      %v505 = vsel %vm500, %v491, 0
      %v508 = vsel %vm500, %v492, 0
      %v511 = vsel %vm500, %v493, 0
      %513 = vmatprep.subr.bf16.mxu0 0
      %514 = vmatpush1.bf16.msra.mxu0 %v498
      %515 = vmatprep.subr.bf16.mxu0 0
      %516 = vmatpush1.bf16.msra.mxu0 0
      %517 = vmatprep.subr.bf16.mxu0 0
      %518 = vmatpush1.bf16.msra.mxu0 0
      %519 = vmatprep.subr.bf16.mxu0 0
      %520 = vmatpush1.bf16.msra.mxu0 0
      %521 = vmatprep.subr.bf16.mxu0 0
      %522 = vmatpush1.bf16.msra.mxu0 0
      %523 = vmatprep.subr.bf16.mxu0 0
      %524 = vmatpush1.bf16.msra.mxu0 0
      %525 = vmatprep.subr.bf16.mxu0 0
      %526 = vmatpush1.bf16.msra.mxu0 0
      %527 = vmatprep.subr.bf16.mxu0 0
      %528 = vmatpush1.bf16.msra.mxu0 0
      %529 = vmatprep.subr.bf16.mxu0 0
      %530 = vmatpush1.bf16.msra.mxu0 0
      %531 = vmatprep.subr.bf16.mxu0 0
      %532 = vmatpush1.bf16.msra.mxu0 0
      %533 = vmatprep.subr.bf16.mxu0 0
      %534 = vmatpush1.bf16.msra.mxu0 0
      %535 = vmatprep.subr.bf16.mxu0 0
      %536 = vmatpush1.bf16.msra.mxu0 0
      %537 = vmatprep.subr.bf16.mxu0 0
      %538 = vmatpush1.bf16.msra.mxu0 0
      %539 = vmatprep.subr.bf16.mxu0 0
      %540 = vmatpush1.bf16.msra.mxu0 0
      %541 = vmatprep.subr.bf16.mxu0 0
      %542 = vmatpush1.bf16.msra.mxu0 0
      %543 = vmatprep.subr.bf16.mxu0 0
      %544 = vmatpush1.bf16.msra.mxu0 0
      %545 = vmatprep.mubr.bf16.mxu0 0
      %546 = vmatmul.mubr.bf16.gmra.mrb[0].mxu0 %v502
      %v547 = vpop.f32.mrb[0].mxu0
      %v548 = vadd.f32 0.0, %v547
      %v549 = vpop.f32.mrb[0].mxu0
      %v550 = vpop.f32.mrb[0].mxu0
      %v551 = vadd.f32 0.0, %v550
      %v552 = vpop.f32.mrb[0].mxu0
      %553 = vmatprep.mubr.bf16.mxu0 0
      %554 = vmatmul.mubr.bf16.gmra.mrb[0].mxu0 %v505
      %v555 = vpop.f32.mrb[0].mxu0
      %v556 = vadd.f32 0.0, %v555
      %v557 = vpop.f32.mrb[0].mxu0
      %v558 = vpop.f32.mrb[0].mxu0
      %v559 = vadd.f32 0.0, %v558
      %v560 = vpop.f32.mrb[0].mxu0
      %561 = vmatprep.mubr.bf16.mxu0 0
      %562 = vmatmul.mubr.bf16.gmra.mrb[0].mxu0 %v508
      %v563 = vpop.f32.mrb[0].mxu0
      %v564 = vadd.f32 0.0, %v563
      %v565 = vpop.f32.mrb[0].mxu0
      %v566 = vpop.f32.mrb[0].mxu0
      %v567 = vadd.f32 0.0, %v566
      %v568 = vpop.f32.mrb[0].mxu0
      %569 = vmatprep.mubr.bf16.mxu0 0
      %570 = vmatmul.mubr.bf16.gmra.mrb[0].mxu0 %v511
      %v571 = vpop.f32.mrb[0].mxu0
      %v572 = vadd.f32 0.0, %v571
      %v573 = vpop.f32.mrb[0].mxu0
      %v574 = vpop.f32.mrb[0].mxu0
      %v575 = vadd.f32 0.0, %v574
      %v576 = vpop.f32.mrb[0].mxu0
      %577 = vdwg.mxu0
      %s578 = scalar_lea.vmem %s2, 8
      %v579 = vld [vmem:[%s578] sm:$0xf]
      %v580 = vld [vmem:[%s578 + $0x4] sm:$0xf]
      %v583 = vunpack.c.l.b16 %v579
      %v584 = vunpack.c.l.b16 %v580
      %v585 = vpack.c.b16 %v584, %v583
      %587 = vmatprep.subr.bf16.mxu0 0
      %588 = vmatpush1.bf16.msra.mxu0 %v585
      %589 = vmatprep.subr.bf16.mxu0 0
      %590 = vmatpush1.bf16.msra.mxu0 0
      %591 = vmatprep.subr.bf16.mxu0 0
      %592 = vmatpush1.bf16.msra.mxu0 0
      %593 = vmatprep.subr.bf16.mxu0 0
      %594 = vmatpush1.bf16.msra.mxu0 0
      %595 = vmatprep.subr.bf16.mxu0 0
      %596 = vmatpush1.bf16.msra.mxu0 0
      %597 = vmatprep.subr.bf16.mxu0 0
      %598 = vmatpush1.bf16.msra.mxu0 0
      %599 = vmatprep.subr.bf16.mxu0 0
      %600 = vmatpush1.bf16.msra.mxu0 0
      %601 = vmatprep.subr.bf16.mxu0 0
      %602 = vmatpush1.bf16.msra.mxu0 0
      %603 = vmatprep.subr.bf16.mxu0 0
      %604 = vmatpush1.bf16.msra.mxu0 0
      %605 = vmatprep.subr.bf16.mxu0 0
      %606 = vmatpush1.bf16.msra.mxu0 0
      %607 = vmatprep.subr.bf16.mxu0 0
      %608 = vmatpush1.bf16.msra.mxu0 0
      %609 = vmatprep.subr.bf16.mxu0 0
      %610 = vmatpush1.bf16.msra.mxu0 0
      %611 = vmatprep.subr.bf16.mxu0 0
      %612 = vmatpush1.bf16.msra.mxu0 0
      %613 = vmatprep.subr.bf16.mxu0 0
      %614 = vmatpush1.bf16.msra.mxu0 0
      %615 = vmatprep.subr.bf16.mxu0 0
      %616 = vmatpush1.bf16.msra.mxu0 0
      %617 = vmatprep.subr.bf16.mxu0 0
      %618 = vmatpush1.bf16.msra.mxu0 0
      %619 = vmatprep.mubr.bf16.mxu0 0
      %620 = vmatmul.mubr.bf16.gmra.mrb[0].mxu0 %v502
      %v621 = vpop.f32.mrb[0].mxu0
      %v622 = vadd.f32 0.0, %v621
      %v623 = vpop.f32.mrb[0].mxu0
      %v624 = vpop.f32.mrb[0].mxu0
      %v625 = vadd.f32 0.0, %v624
      %v626 = vpop.f32.mrb[0].mxu0
      %627 = vmatprep.mubr.bf16.mxu0 0
      %628 = vmatmul.mubr.bf16.gmra.mrb[0].mxu0 %v505
      %v629 = vpop.f32.mrb[0].mxu0
      %v630 = vadd.f32 0.0, %v629
      %v631 = vpop.f32.mrb[0].mxu0
      %v632 = vpop.f32.mrb[0].mxu0
      %v633 = vadd.f32 0.0, %v632
      %v634 = vpop.f32.mrb[0].mxu0
      %635 = vmatprep.mubr.bf16.mxu0 0
      %636 = vmatmul.mubr.bf16.gmra.mrb[0].mxu0 %v508
      %v637 = vpop.f32.mrb[0].mxu0
      %v638 = vadd.f32 0.0, %v637
      %v639 = vpop.f32.mrb[0].mxu0
      %v640 = vpop.f32.mrb[0].mxu0
      %v641 = vadd.f32 0.0, %v640
      %v642 = vpop.f32.mrb[0].mxu0
      %643 = vmatprep.mubr.bf16.mxu0 0
      %644 = vmatmul.mubr.bf16.gmra.mrb[0].mxu0 %v511
      %v645 = vpop.f32.mrb[0].mxu0
      %v646 = vadd.f32 0.0, %v645
      %v647 = vpop.f32.mrb[0].mxu0
      %v648 = vpop.f32.mrb[0].mxu0
      %v649 = vadd.f32 0.0, %v648
      %v650 = vpop.f32.mrb[0].mxu0
      %651 = vdwg.mxu0
      %v652 = vld [vmem:[%s3] sm:$0x1]
      %v654 = vlaneseq
      %v655 = vshrl.u32 %v654, 7
      %v656 = vsub.s32 0, %v655
      %v657 = vrot.slane %v652, %v656
      %v659 = vadd.f32 %v548, %v657
      %v660 = vadd.f32 %v622, %v657
      %v661 = vadd.f32 %v551, %v657
      %v662 = vadd.f32 %v625, %v657
      %v663 = vadd.f32 %v556, %v657
      %v664 = vadd.f32 %v630, %v657
      %v665 = vadd.f32 %v559, %v657
      %v666 = vadd.f32 %v633, %v657
      %v667 = vadd.f32 %v564, %v657
      %v668 = vadd.f32 %v638, %v657
      %v669 = vadd.f32 %v567, %v657
      %v670 = vadd.f32 %v641, %v657
      %v671 = vadd.f32 %v572, %v657
      %v672 = vadd.f32 %v646, %v657
      %v673 = vadd.f32 %v575, %v657
      %v674 = vadd.f32 %v649, %v657
      %v675 = vpack.c.bf16 %v659, %v659
      %v676 = vpack.c.bf16 %v660, %v660
      %v677 = vpack.c.bf16 %v661, %v661
      %v678 = vpack.c.bf16 %v662, %v662
      %v679 = vpack.c.bf16 %v663, %v663
      %v680 = vpack.c.bf16 %v664, %v664
      %v681 = vpack.c.bf16 %v665, %v665
      %v682 = vpack.c.bf16 %v666, %v666
      %v683 = vpack.c.bf16 %v667, %v667
      %v684 = vpack.c.bf16 %v668, %v668
      %v685 = vpack.c.bf16 %v669, %v669
      %v686 = vpack.c.bf16 %v670, %v670
      %v687 = vpack.c.bf16 %v671, %v671
      %v688 = vpack.c.bf16 %v672, %v672
      %v689 = vpack.c.bf16 %v673, %v673
      %v690 = vpack.c.bf16 %v674, %v674
      %v707 = vunpack.c.l.b16 %v675
      %v708 = vunpack.c.l.b16 %v676
      %v709 = vunpack.c.l.b16 %v677
      %v710 = vunpack.c.l.b16 %v678
      %v711 = vunpack.c.l.b16 %v679
      %v712 = vunpack.c.l.b16 %v680
      %v713 = vunpack.c.l.b16 %v681
      %v714 = vunpack.c.l.b16 %v682
      %v715 = vunpack.c.l.b16 %v683
      %v716 = vunpack.c.l.b16 %v684
      %v717 = vunpack.c.l.b16 %v685
      %v718 = vunpack.c.l.b16 %v686
      %v719 = vunpack.c.l.b16 %v687
      %v720 = vunpack.c.l.b16 %v688
      %v721 = vunpack.c.l.b16 %v689
      %v722 = vunpack.c.l.b16 %v690
      %v723 = vpack.c.b16 %v707, %v707
      %v724 = vpack.c.b16 %v708, %v708
      %v725 = vpack.c.b16 %v709, %v709
      %v726 = vpack.c.b16 %v710, %v710
      %v727 = vpack.c.b16 %v711, %v711
      %v728 = vpack.c.b16 %v712, %v712
      %v729 = vpack.c.b16 %v713, %v713
      %v730 = vpack.c.b16 %v714, %v714
      %v731 = vpack.c.b16 %v715, %v715
      %v732 = vpack.c.b16 %v716, %v716
      %v733 = vpack.c.b16 %v717, %v717
      %v734 = vpack.c.b16 %v718, %v718
      %v735 = vpack.c.b16 %v719, %v719
      %v736 = vpack.c.b16 %v720, %v720
      %v737 = vpack.c.b16 %v721, %v721
      %v738 = vpack.c.b16 %v722, %v722
      %v740 = vshrl.u32 %v723, 16
      %v742 = vrot.slane %v740, 7
      %v743 = vshll.u32 %v723, 16
      %v745 = vor.u32 %v742, %v743
      %v746 = vrot.slane %v742, 4
      %v748 = vshrl.u32 %v724, 16
      %v750 = vrot.slane %v748, 7
      %v751 = vshll.u32 %v724, 16
      %v753 = vor.u32 %v750, %v751
      %v754 = vrot.slane %v750, 4
      %v756 = vshrl.u32 %v725, 16
      %v758 = vrot.slane %v756, 7
      %v759 = vshll.u32 %v725, 16
      %v761 = vor.u32 %v758, %v759
      %v762 = vrot.slane %v758, 4
      %v764 = vshrl.u32 %v726, 16
      %v766 = vrot.slane %v764, 7
      %v767 = vshll.u32 %v726, 16
      %v769 = vor.u32 %v766, %v767
      %v770 = vrot.slane %v766, 4
      %v772 = vshrl.u32 %v727, 16
      %v774 = vrot.slane %v772, 7
      %v775 = vshll.u32 %v727, 16
      %v777 = vor.u32 %v774, %v775
      %v778 = vrot.slane %v774, 4
      %v780 = vshrl.u32 %v728, 16
      %v782 = vrot.slane %v780, 7
      %v783 = vshll.u32 %v728, 16
      %v785 = vor.u32 %v782, %v783
      %v786 = vrot.slane %v782, 4
      %v788 = vshrl.u32 %v729, 16
      %v790 = vrot.slane %v788, 7
      %v791 = vshll.u32 %v729, 16
      %v793 = vor.u32 %v790, %v791
      %v794 = vrot.slane %v790, 4
      %v796 = vshrl.u32 %v730, 16
      %v798 = vrot.slane %v796, 7
      %v799 = vshll.u32 %v730, 16
      %v801 = vor.u32 %v798, %v799
      %v802 = vrot.slane %v798, 4
      %v804 = vshrl.u32 %v731, 16
      %v806 = vrot.slane %v804, 7
      %v807 = vshll.u32 %v731, 16
      %v809 = vor.u32 %v806, %v807
      %v810 = vrot.slane %v806, 4
      %v812 = vshrl.u32 %v732, 16
      %v814 = vrot.slane %v812, 7
      %v815 = vshll.u32 %v732, 16
      %v817 = vor.u32 %v814, %v815
      %v818 = vrot.slane %v814, 4
      %v820 = vshrl.u32 %v733, 16
      %v822 = vrot.slane %v820, 7
      %v823 = vshll.u32 %v733, 16
      %v825 = vor.u32 %v822, %v823
      %v826 = vrot.slane %v822, 4
      %v828 = vshrl.u32 %v734, 16
      %v830 = vrot.slane %v828, 7
      %v831 = vshll.u32 %v734, 16
      %v833 = vor.u32 %v830, %v831
      %v834 = vrot.slane %v830, 4
      %v836 = vshrl.u32 %v735, 16
      %v838 = vrot.slane %v836, 7
      %v839 = vshll.u32 %v735, 16
      %v841 = vor.u32 %v838, %v839
      %v842 = vrot.slane %v838, 4
      %v844 = vshrl.u32 %v736, 16
      %v846 = vrot.slane %v844, 7
      %v847 = vshll.u32 %v736, 16
      %v849 = vor.u32 %v846, %v847
      %v850 = vrot.slane %v846, 4
      %v852 = vshrl.u32 %v737, 16
      %v854 = vrot.slane %v852, 7
      %v855 = vshll.u32 %v737, 16
      %v857 = vor.u32 %v854, %v855
      %v858 = vrot.slane %v854, 4
      %v860 = vshrl.u32 %v738, 16
      %v862 = vrot.slane %v860, 7
      %v863 = vshll.u32 %v738, 16
      %v865 = vor.u32 %v862, %v863
      %v866 = vrot.slane %v862, 4
      %s899 = scalar_lea.vmem [#allocation2], 8
      %vm900 = vcmask 125952
      %vm901 = vmand %vm900, %vm408
      %v902 = vld [vmem:[%s899] sm:$0xf]
      %v903 = vsel %vm901, %v745, %v902
      %904 = vst [vmem:[%s899] sm:$0xf] %v903
      %vm905 = vcmask 122880
      %vm906 = vmand %vm905, %vm352
      %v907 = vld [vmem:[%s899 + $0x4] sm:$0x1]
      %v908 = vsel %vm906, %v746, %v907
      %909 = vst [vmem:[%s899 + $0x4] sm:$0x1] %v908
      %v910 = vld [vmem:[%s899 + $0x8] sm:$0xf]
      %v911 = vsel %vm901, %v753, %v910
      %912 = vst [vmem:[%s899 + $0x8] sm:$0xf] %v911
      %v913 = vld [vmem:[%s899 + $0xc] sm:$0x1]
      %v914 = vsel %vm906, %v754, %v913
      %915 = vst [vmem:[%s899 + $0xc] sm:$0x1] %v914
      %v916 = vld [vmem:[%s899 + $0x10] sm:$0xf]
      %v917 = vsel %vm901, %v761, %v916
      %918 = vst [vmem:[%s899 + $0x10] sm:$0xf] %v917
      %v919 = vld [vmem:[%s899 + $0x14] sm:$0x1]
      %v920 = vsel %vm906, %v762, %v919
      %921 = vst [vmem:[%s899 + $0x14] sm:$0x1] %v920
      %v922 = vld [vmem:[%s899 + $0x18] sm:$0xf]
      %v923 = vsel %vm901, %v769, %v922
      %924 = vst [vmem:[%s899 + $0x18] sm:$0xf] %v923
      %v925 = vld [vmem:[%s899 + $0x1c] sm:$0x1]
      %v926 = vsel %vm906, %v770, %v925
      %927 = vst [vmem:[%s899 + $0x1c] sm:$0x1] %v926
      %v928 = vld [vmem:[%s899 + $0x20] sm:$0xf]
      %v929 = vsel %vm901, %v777, %v928
      %930 = vst [vmem:[%s899 + $0x20] sm:$0xf] %v929
      %v931 = vld [vmem:[%s899 + $0x24] sm:$0x1]
      %v932 = vsel %vm906, %v778, %v931
      %933 = vst [vmem:[%s899 + $0x24] sm:$0x1] %v932
      %v934 = vld [vmem:[%s899 + $0x28] sm:$0xf]
      %v935 = vsel %vm901, %v785, %v934
      %936 = vst [vmem:[%s899 + $0x28] sm:$0xf] %v935
      %v937 = vld [vmem:[%s899 + $0x2c] sm:$0x1]
      %v938 = vsel %vm906, %v786, %v937
      %939 = vst [vmem:[%s899 + $0x2c] sm:$0x1] %v938
      %v940 = vld [vmem:[%s899 + $0x30] sm:$0xf]
      %v941 = vsel %vm901, %v793, %v940
      %942 = vst [vmem:[%s899 + $0x30] sm:$0xf] %v941
      %v943 = vld [vmem:[%s899 + $0x34] sm:$0x1]
      %v944 = vsel %vm906, %v794, %v943
      %945 = vst [vmem:[%s899 + $0x34] sm:$0x1] %v944
      %v946 = vld [vmem:[%s899 + $0x38] sm:$0xf]
      %v947 = vsel %vm901, %v801, %v946
      %948 = vst [vmem:[%s899 + $0x38] sm:$0xf] %v947
      %v949 = vld [vmem:[%s899 + $0x3c] sm:$0x1]
      %v950 = vsel %vm906, %v802, %v949
      %951 = vst [vmem:[%s899 + $0x3c] sm:$0x1] %v950
      %v952 = vld [vmem:[%s899 + $0x40] sm:$0xf]
      %v953 = vsel %vm901, %v809, %v952
      %954 = vst [vmem:[%s899 + $0x40] sm:$0xf] %v953
      %v955 = vld [vmem:[%s899 + $0x44] sm:$0x1]
      %v956 = vsel %vm906, %v810, %v955
      %957 = vst [vmem:[%s899 + $0x44] sm:$0x1] %v956
      %v958 = vld [vmem:[%s899 + $0x48] sm:$0xf]
      %v959 = vsel %vm901, %v817, %v958
      %960 = vst [vmem:[%s899 + $0x48] sm:$0xf] %v959
      %v961 = vld [vmem:[%s899 + $0x4c] sm:$0x1]
      %v962 = vsel %vm906, %v818, %v961
      %963 = vst [vmem:[%s899 + $0x4c] sm:$0x1] %v962
      %v964 = vld [vmem:[%s899 + $0x50] sm:$0xf]
      %v965 = vsel %vm901, %v825, %v964
      %966 = vst [vmem:[%s899 + $0x50] sm:$0xf] %v965
      %v967 = vld [vmem:[%s899 + $0x54] sm:$0x1]
      %v968 = vsel %vm906, %v826, %v967
      %969 = vst [vmem:[%s899 + $0x54] sm:$0x1] %v968
      %v970 = vld [vmem:[%s899 + $0x58] sm:$0xf]
      %v971 = vsel %vm901, %v833, %v970
      %972 = vst [vmem:[%s899 + $0x58] sm:$0xf] %v971
      %v973 = vld [vmem:[%s899 + $0x5c] sm:$0x1]
      %v974 = vsel %vm906, %v834, %v973
      %975 = vst [vmem:[%s899 + $0x5c] sm:$0x1] %v974
      %v976 = vld [vmem:[%s899 + $0x60] sm:$0xf]
      %v977 = vsel %vm901, %v841, %v976
      %978 = vst [vmem:[%s899 + $0x60] sm:$0xf] %v977
      %v979 = vld [vmem:[%s899 + $0x64] sm:$0x1]
      %v980 = vsel %vm906, %v842, %v979
      %981 = vst [vmem:[%s899 + $0x64] sm:$0x1] %v980
      %v982 = vld [vmem:[%s899 + $0x68] sm:$0xf]
      %v983 = vsel %vm901, %v849, %v982
      %984 = vst [vmem:[%s899 + $0x68] sm:$0xf] %v983
      %v985 = vld [vmem:[%s899 + $0x6c] sm:$0x1]
      %v986 = vsel %vm906, %v850, %v985
      %987 = vst [vmem:[%s899 + $0x6c] sm:$0x1] %v986
      %v988 = vld [vmem:[%s899 + $0x70] sm:$0xf]
      %v989 = vsel %vm901, %v857, %v988
      %990 = vst [vmem:[%s899 + $0x70] sm:$0xf] %v989
      %v991 = vld [vmem:[%s899 + $0x74] sm:$0x1]
      %v992 = vsel %vm906, %v858, %v991
      %993 = vst [vmem:[%s899 + $0x74] sm:$0x1] %v992
      %v994 = vld [vmem:[%s899 + $0x78] sm:$0xf]
      %v995 = vsel %vm901, %v865, %v994
      %996 = vst [vmem:[%s899 + $0x78] sm:$0xf] %v995
      %v997 = vld [vmem:[%s899 + $0x7c] sm:$0x1]
      %v998 = vsel %vm906, %v866, %v997
      %999 = vst [vmem:[%s899 + $0x7c] sm:$0x1] %v998
      %v1000 = vld [vmem:[%s331] sm:$0xf]
      %v1001 = vld [vmem:[%s331 + $0x4] sm:$0xf]
      %v1002 = vld [vmem:[%s331 + $0x8] sm:$0xf]
      %v1003 = vld [vmem:[%s331 + $0xc] sm:$0xf]
      %v1004 = vld [vmem:[%s331 + $0x10] sm:$0xf]
      %v1005 = vld [vmem:[%s331 + $0x14] sm:$0xf]
      %v1006 = vld [vmem:[%s331 + $0x18] sm:$0xf]
      %v1007 = vld [vmem:[%s331 + $0x1c] sm:$0xf]
      %v1008 = vld [vmem:[%s331 + $0x20] sm:$0xf]
      %v1009 = vld [vmem:[%s331 + $0x24] sm:$0xf]
      %v1010 = vld [vmem:[%s331 + $0x28] sm:$0xf]
      %v1011 = vld [vmem:[%s331 + $0x2c] sm:$0xf]
      %v1012 = vld [vmem:[%s331 + $0x30] sm:$0xf]
      %v1013 = vld [vmem:[%s331 + $0x34] sm:$0xf]
      %v1014 = vld [vmem:[%s331 + $0x38] sm:$0xf]
      %v1015 = vld [vmem:[%s331 + $0x3c] sm:$0xf]
      %v1017 = vshrl.u32 %v1000, 16
      %v1019 = vrot.slane %v1017, 7
      %v1020 = vshll.u32 %v1000, 16
      %v1022 = vor.u32 %v1019, %v1020
      %v1023 = vrot.slane %v1019, 4
      %v1025 = vshrl.u32 %v1001, 16
      %v1027 = vrot.slane %v1025, 7
      %v1028 = vshll.u32 %v1001, 16
      %v1030 = vor.u32 %v1027, %v1028
      %v1031 = vrot.slane %v1027, 4
      %v1033 = vshrl.u32 %v1002, 16
      %v1035 = vrot.slane %v1033, 7
      %v1036 = vshll.u32 %v1002, 16
      %v1038 = vor.u32 %v1035, %v1036
      %v1039 = vrot.slane %v1035, 4
      %v1041 = vshrl.u32 %v1003, 16
      %v1043 = vrot.slane %v1041, 7
      %v1044 = vshll.u32 %v1003, 16
      %v1046 = vor.u32 %v1043, %v1044
      %v1047 = vrot.slane %v1043, 4
      %v1049 = vshrl.u32 %v1004, 16
      %v1051 = vrot.slane %v1049, 7
      %v1052 = vshll.u32 %v1004, 16
      %v1054 = vor.u32 %v1051, %v1052
      %v1055 = vrot.slane %v1051, 4
      %v1057 = vshrl.u32 %v1005, 16
      %v1059 = vrot.slane %v1057, 7
      %v1060 = vshll.u32 %v1005, 16
      %v1062 = vor.u32 %v1059, %v1060
      %v1063 = vrot.slane %v1059, 4
      %v1065 = vshrl.u32 %v1006, 16
      %v1067 = vrot.slane %v1065, 7
      %v1068 = vshll.u32 %v1006, 16
      %v1070 = vor.u32 %v1067, %v1068
      %v1071 = vrot.slane %v1067, 4
      %v1073 = vshrl.u32 %v1007, 16
      %v1075 = vrot.slane %v1073, 7
      %v1076 = vshll.u32 %v1007, 16
      %v1078 = vor.u32 %v1075, %v1076
      %v1079 = vrot.slane %v1075, 4
      %v1081 = vshrl.u32 %v1008, 16
      %v1083 = vrot.slane %v1081, 7
      %v1084 = vshll.u32 %v1008, 16
      %v1086 = vor.u32 %v1083, %v1084
      %v1087 = vrot.slane %v1083, 4
      %v1089 = vshrl.u32 %v1009, 16
      %v1091 = vrot.slane %v1089, 7
      %v1092 = vshll.u32 %v1009, 16
      %v1094 = vor.u32 %v1091, %v1092
      %v1095 = vrot.slane %v1091, 4
      %v1097 = vshrl.u32 %v1010, 16
      %v1099 = vrot.slane %v1097, 7
      %v1100 = vshll.u32 %v1010, 16
      %v1102 = vor.u32 %v1099, %v1100
      %v1103 = vrot.slane %v1099, 4
      %v1105 = vshrl.u32 %v1011, 16
      %v1107 = vrot.slane %v1105, 7
      %v1108 = vshll.u32 %v1011, 16
      %v1110 = vor.u32 %v1107, %v1108
      %v1111 = vrot.slane %v1107, 4
      %v1113 = vshrl.u32 %v1012, 16
      %v1115 = vrot.slane %v1113, 7
      %v1116 = vshll.u32 %v1012, 16
      %v1118 = vor.u32 %v1115, %v1116
      %v1119 = vrot.slane %v1115, 4
      %v1121 = vshrl.u32 %v1013, 16
      %v1123 = vrot.slane %v1121, 7
      %v1124 = vshll.u32 %v1013, 16
      %v1126 = vor.u32 %v1123, %v1124
      %v1127 = vrot.slane %v1123, 4
      %v1129 = vshrl.u32 %v1014, 16
      %v1131 = vrot.slane %v1129, 7
      %v1132 = vshll.u32 %v1014, 16
      %v1134 = vor.u32 %v1131, %v1132
      %v1135 = vrot.slane %v1131, 4
      %v1137 = vshrl.u32 %v1015, 16
      %v1139 = vrot.slane %v1137, 7
      %v1140 = vshll.u32 %v1015, 16
      %v1142 = vor.u32 %v1139, %v1140
      %v1143 = vrot.slane %v1139, 4
      %1144 = vrot.lane.b32.xlu0 %v1022, 16
      %v1145 = vpop.permute.xlu0 %1144
      %1146 = vrot.lane.b32.xlu0 %v1023, 16
      %v1147 = vpop.permute.xlu0 %1146
      %1148 = vrot.lane.b32.xlu0 %v1030, 16
      %v1149 = vpop.permute.xlu0 %1148
      %1150 = vrot.lane.b32.xlu0 %v1031, 16
      %v1151 = vpop.permute.xlu0 %1150
      %1152 = vrot.lane.b32.xlu0 %v1038, 16
      %v1153 = vpop.permute.xlu0 %1152
      %1154 = vrot.lane.b32.xlu0 %v1039, 16
      %v1155 = vpop.permute.xlu0 %1154
      %1156 = vrot.lane.b32.xlu0 %v1046, 16
      %v1157 = vpop.permute.xlu0 %1156
      %1158 = vrot.lane.b32.xlu0 %v1047, 16
      %v1159 = vpop.permute.xlu0 %1158
      %1160 = vrot.lane.b32.xlu0 %v1054, 16
      %v1161 = vpop.permute.xlu0 %1160
      %1162 = vrot.lane.b32.xlu0 %v1055, 16
      %v1163 = vpop.permute.xlu0 %1162
      %1164 = vrot.lane.b32.xlu0 %v1062, 16
      %v1165 = vpop.permute.xlu0 %1164
      %1166 = vrot.lane.b32.xlu0 %v1063, 16
      %v1167 = vpop.permute.xlu0 %1166
      %1168 = vrot.lane.b32.xlu0 %v1070, 16
      %v1169 = vpop.permute.xlu0 %1168
      %1170 = vrot.lane.b32.xlu0 %v1071, 16
      %v1171 = vpop.permute.xlu0 %1170
      %1172 = vrot.lane.b32.xlu0 %v1078, 16
      %v1173 = vpop.permute.xlu0 %1172
      %1174 = vrot.lane.b32.xlu0 %v1079, 16
      %v1175 = vpop.permute.xlu0 %1174
      %1176 = vrot.lane.b32.xlu0 %v1086, 16
      %v1177 = vpop.permute.xlu0 %1176
      %1178 = vrot.lane.b32.xlu0 %v1087, 16
      %v1179 = vpop.permute.xlu0 %1178
      %1180 = vrot.lane.b32.xlu0 %v1094, 16
      %v1181 = vpop.permute.xlu0 %1180
      %1182 = vrot.lane.b32.xlu0 %v1095, 16
      %v1183 = vpop.permute.xlu0 %1182
      %1184 = vrot.lane.b32.xlu0 %v1102, 16
      %v1185 = vpop.permute.xlu0 %1184
      %1186 = vrot.lane.b32.xlu0 %v1103, 16
      %v1187 = vpop.permute.xlu0 %1186
      %1188 = vrot.lane.b32.xlu0 %v1110, 16
      %v1189 = vpop.permute.xlu0 %1188
      %1190 = vrot.lane.b32.xlu0 %v1111, 16
      %v1191 = vpop.permute.xlu0 %1190
      %1192 = vrot.lane.b32.xlu0 %v1118, 16
      %v1193 = vpop.permute.xlu0 %1192
      %1194 = vrot.lane.b32.xlu0 %v1119, 16
      %v1195 = vpop.permute.xlu0 %1194
      %1196 = vrot.lane.b32.xlu0 %v1126, 16
      %v1197 = vpop.permute.xlu0 %1196
      %1198 = vrot.lane.b32.xlu0 %v1127, 16
      %v1199 = vpop.permute.xlu0 %1198
      %1200 = vrot.lane.b32.xlu0 %v1134, 16
      %v1201 = vpop.permute.xlu0 %1200
      %1202 = vrot.lane.b32.xlu0 %v1135, 16
      %v1203 = vpop.permute.xlu0 %1202
      %1204 = vrot.lane.b32.xlu0 %v1142, 16
      %v1205 = vpop.permute.xlu0 %1204
      %1206 = vrot.lane.b32.xlu0 %v1143, 16
      %v1207 = vpop.permute.xlu0 %1206
      %vm1240 = vcmask 257152
      %vm1241 = vmand %vm1240, %vm408
      %v1242 = vld [vmem:[%s899] sm:$0xf]
      %v1243 = vsel %vm1241, %v1145, %v1242
      %1244 = vst [vmem:[%s899] sm:$0xf] %v1243
      %vm1245 = vcmask 254080
      %vm1246 = vmand %vm1245, %vm352
      %v1247 = vld [vmem:[%s899 + $0x4] sm:$0x1]
      %v1248 = vsel %vm1246, %v1147, %v1247
      %1249 = vst [vmem:[%s899 + $0x4] sm:$0x1] %v1248
      %v1250 = vld [vmem:[%s899 + $0x8] sm:$0xf]
      %v1251 = vsel %vm1241, %v1149, %v1250
      %1252 = vst [vmem:[%s899 + $0x8] sm:$0xf] %v1251
      %v1253 = vld [vmem:[%s899 + $0xc] sm:$0x1]
      %v1254 = vsel %vm1246, %v1151, %v1253
      %1255 = vst [vmem:[%s899 + $0xc] sm:$0x1] %v1254
      %v1256 = vld [vmem:[%s899 + $0x10] sm:$0xf]
      %v1257 = vsel %vm1241, %v1153, %v1256
      %1258 = vst [vmem:[%s899 + $0x10] sm:$0xf] %v1257
      %v1259 = vld [vmem:[%s899 + $0x14] sm:$0x1]
      %v1260 = vsel %vm1246, %v1155, %v1259
      %1261 = vst [vmem:[%s899 + $0x14] sm:$0x1] %v1260
      %v1262 = vld [vmem:[%s899 + $0x18] sm:$0xf]
      %v1263 = vsel %vm1241, %v1157, %v1262
      %1264 = vst [vmem:[%s899 + $0x18] sm:$0xf] %v1263
      %v1265 = vld [vmem:[%s899 + $0x1c] sm:$0x1]
      %v1266 = vsel %vm1246, %v1159, %v1265
      %1267 = vst [vmem:[%s899 + $0x1c] sm:$0x1] %v1266
      %v1268 = vld [vmem:[%s899 + $0x20] sm:$0xf]
      %v1269 = vsel %vm1241, %v1161, %v1268
      %1270 = vst [vmem:[%s899 + $0x20] sm:$0xf] %v1269
      %v1271 = vld [vmem:[%s899 + $0x24] sm:$0x1]
      %v1272 = vsel %vm1246, %v1163, %v1271
      %1273 = vst [vmem:[%s899 + $0x24] sm:$0x1] %v1272
      %v1274 = vld [vmem:[%s899 + $0x28] sm:$0xf]
      %v1275 = vsel %vm1241, %v1165, %v1274
      %1276 = vst [vmem:[%s899 + $0x28] sm:$0xf] %v1275
      %v1277 = vld [vmem:[%s899 + $0x2c] sm:$0x1]
      %v1278 = vsel %vm1246, %v1167, %v1277
      %1279 = vst [vmem:[%s899 + $0x2c] sm:$0x1] %v1278
      %v1280 = vld [vmem:[%s899 + $0x30] sm:$0xf]
      %v1281 = vsel %vm1241, %v1169, %v1280
      %1282 = vst [vmem:[%s899 + $0x30] sm:$0xf] %v1281
      %v1283 = vld [vmem:[%s899 + $0x34] sm:$0x1]
      %v1284 = vsel %vm1246, %v1171, %v1283
      %1285 = vst [vmem:[%s899 + $0x34] sm:$0x1] %v1284
      %v1286 = vld [vmem:[%s899 + $0x38] sm:$0xf]
      %v1287 = vsel %vm1241, %v1173, %v1286
      %1288 = vst [vmem:[%s899 + $0x38] sm:$0xf] %v1287
      %v1289 = vld [vmem:[%s899 + $0x3c] sm:$0x1]
      %v1290 = vsel %vm1246, %v1175, %v1289
      %1291 = vst [vmem:[%s899 + $0x3c] sm:$0x1] %v1290
      %v1292 = vld [vmem:[%s899 + $0x40] sm:$0xf]
      %v1293 = vsel %vm1241, %v1177, %v1292
      %1294 = vst [vmem:[%s899 + $0x40] sm:$0xf] %v1293
      %v1295 = vld [vmem:[%s899 + $0x44] sm:$0x1]
      %v1296 = vsel %vm1246, %v1179, %v1295
      %1297 = vst [vmem:[%s899 + $0x44] sm:$0x1] %v1296
      %v1298 = vld [vmem:[%s899 + $0x48] sm:$0xf]
      %v1299 = vsel %vm1241, %v1181, %v1298
      %1300 = vst [vmem:[%s899 + $0x48] sm:$0xf] %v1299
      %v1301 = vld [vmem:[%s899 + $0x4c] sm:$0x1]
      %v1302 = vsel %vm1246, %v1183, %v1301
      %1303 = vst [vmem:[%s899 + $0x4c] sm:$0x1] %v1302
      %v1304 = vld [vmem:[%s899 + $0x50] sm:$0xf]
      %v1305 = vsel %vm1241, %v1185, %v1304
      %1306 = vst [vmem:[%s899 + $0x50] sm:$0xf] %v1305
      %v1307 = vld [vmem:[%s899 + $0x54] sm:$0x1]
      %v1308 = vsel %vm1246, %v1187, %v1307
      %1309 = vst [vmem:[%s899 + $0x54] sm:$0x1] %v1308
      %v1310 = vld [vmem:[%s899 + $0x58] sm:$0xf]
      %v1311 = vsel %vm1241, %v1189, %v1310
      %1312 = vst [vmem:[%s899 + $0x58] sm:$0xf] %v1311
      %v1313 = vld [vmem:[%s899 + $0x5c] sm:$0x1]
      %v1314 = vsel %vm1246, %v1191, %v1313
      %1315 = vst [vmem:[%s899 + $0x5c] sm:$0x1] %v1314
      %v1316 = vld [vmem:[%s899 + $0x60] sm:$0xf]
      %v1317 = vsel %vm1241, %v1193, %v1316
      %1318 = vst [vmem:[%s899 + $0x60] sm:$0xf] %v1317
      %v1319 = vld [vmem:[%s899 + $0x64] sm:$0x1]
      %v1320 = vsel %vm1246, %v1195, %v1319
      %1321 = vst [vmem:[%s899 + $0x64] sm:$0x1] %v1320
      %v1322 = vld [vmem:[%s899 + $0x68] sm:$0xf]
      %v1323 = vsel %vm1241, %v1197, %v1322
      %1324 = vst [vmem:[%s899 + $0x68] sm:$0xf] %v1323
      %v1325 = vld [vmem:[%s899 + $0x6c] sm:$0x1]
      %v1326 = vsel %vm1246, %v1199, %v1325
      %1327 = vst [vmem:[%s899 + $0x6c] sm:$0x1] %v1326
      %v1328 = vld [vmem:[%s899 + $0x70] sm:$0xf]
      %v1329 = vsel %vm1241, %v1201, %v1328
      %1330 = vst [vmem:[%s899 + $0x70] sm:$0xf] %v1329
      %v1331 = vld [vmem:[%s899 + $0x74] sm:$0x1]
      %v1332 = vsel %vm1246, %v1203, %v1331
      %1333 = vst [vmem:[%s899 + $0x74] sm:$0x1] %v1332
      %v1334 = vld [vmem:[%s899 + $0x78] sm:$0xf]
      %v1335 = vsel %vm1241, %v1205, %v1334
      %1336 = vst [vmem:[%s899 + $0x78] sm:$0xf] %v1335
      %v1337 = vld [vmem:[%s899 + $0x7c] sm:$0x1]
      %v1338 = vsel %vm1246, %v1207, %v1337
      %1339 = vst [vmem:[%s899 + $0x7c] sm:$0x1] %v1338
      %v1340 = vld [vmem:[#allocation2] sm:$0xf]
      %v1341 = vld [vmem:[#allocation2 + $0x8] sm:$0xf]
      %v1342 = vld [vmem:[#allocation2 + $0x10] sm:$0xf]
      %v1343 = vld [vmem:[#allocation2 + $0x18] sm:$0xf]
      %v1344 = vld [vmem:[#allocation2 + $0x20] sm:$0xf]
      %v1345 = vld [vmem:[#allocation2 + $0x28] sm:$0xf]
      %v1346 = vld [vmem:[#allocation2 + $0x30] sm:$0xf]
      %v1347 = vld [vmem:[#allocation2 + $0x38] sm:$0xf]
      %v1348 = vld [vmem:[#allocation2 + $0x40] sm:$0xf]
      %v1349 = vld [vmem:[#allocation2 + $0x48] sm:$0xf]
      %v1350 = vld [vmem:[#allocation2 + $0x50] sm:$0xf]
      %v1351 = vld [vmem:[#allocation2 + $0x58] sm:$0xf]
      %v1352 = vld [vmem:[#allocation2 + $0x60] sm:$0xf]
      %v1353 = vld [vmem:[#allocation2 + $0x68] sm:$0xf]
      %v1354 = vld [vmem:[#allocation2 + $0x70] sm:$0xf]
      %v1355 = vld [vmem:[#allocation2 + $0x78] sm:$0xf]
      %v1356 = vld [vmem:[%s4] sm:$0xf]
      %v1357 = vld [vmem:[%s4 + $0x4] sm:$0xf]
      %v1358 = vld [vmem:[%s4 + $0x8] sm:$0xf]
      %v1359 = vld [vmem:[%s4 + $0xc] sm:$0xf]
      %v1360 = vld [vmem:[#allocation2 + $0x4] sm:$0x1]
      %v1361 = vld [vmem:[#allocation2 + $0xc] sm:$0x1]
      %v1362 = vld [vmem:[#allocation2 + $0x14] sm:$0x1]
      %v1363 = vld [vmem:[#allocation2 + $0x1c] sm:$0x1]
      %v1364 = vld [vmem:[#allocation2 + $0x24] sm:$0x1]
      %v1365 = vld [vmem:[#allocation2 + $0x2c] sm:$0x1]
      %v1366 = vld [vmem:[#allocation2 + $0x34] sm:$0x1]
      %v1367 = vld [vmem:[#allocation2 + $0x3c] sm:$0x1]
      %v1368 = vld [vmem:[#allocation2 + $0x44] sm:$0x1]
      %v1369 = vld [vmem:[#allocation2 + $0x4c] sm:$0x1]
      %v1370 = vld [vmem:[#allocation2 + $0x54] sm:$0x1]
      %v1371 = vld [vmem:[#allocation2 + $0x5c] sm:$0x1]
      %v1372 = vld [vmem:[#allocation2 + $0x64] sm:$0x1]
      %v1373 = vld [vmem:[#allocation2 + $0x6c] sm:$0x1]
      %v1374 = vld [vmem:[#allocation2 + $0x74] sm:$0x1]
      %v1375 = vld [vmem:[#allocation2 + $0x7c] sm:$0x1]
      %vm1376 = vsmask.f32 3328
      %vm1377 = vsmask.f32 7440
      %vm1378 = vmor %vm1376, %vm1377
      %v1380 = vshrl.u32 %v1340, 16
      %v1382 = vrot.slane %v1380, 4
      %v1383 = vshll.u32 %v1340, 16
      %v1385 = vrot.slane %v1383, 5
      %v1386 = vor.u32 %v1382, %v1385
      %v1387 = vrot.slane %v1386, 4
      %v1389 = vshll.u32 %v1360, 16
      %v1391 = vrot.slane %v1389, 5
      %v1392 = vsel %vm1378, %v1387, %v1391
      %v1394 = vshrl.u32 %v1341, 16
      %v1396 = vrot.slane %v1394, 4
      %v1397 = vshll.u32 %v1341, 16
      %v1399 = vrot.slane %v1397, 5
      %v1400 = vor.u32 %v1396, %v1399
      %v1401 = vrot.slane %v1400, 4
      %v1403 = vshll.u32 %v1361, 16
      %v1405 = vrot.slane %v1403, 5
      %v1406 = vsel %vm1378, %v1401, %v1405
      %v1408 = vshrl.u32 %v1342, 16
      %v1410 = vrot.slane %v1408, 4
      %v1411 = vshll.u32 %v1342, 16
      %v1413 = vrot.slane %v1411, 5
      %v1414 = vor.u32 %v1410, %v1413
      %v1415 = vrot.slane %v1414, 4
      %v1417 = vshll.u32 %v1362, 16
      %v1419 = vrot.slane %v1417, 5
      %v1420 = vsel %vm1378, %v1415, %v1419
      %v1422 = vshrl.u32 %v1343, 16
      %v1424 = vrot.slane %v1422, 4
      %v1425 = vshll.u32 %v1343, 16
      %v1427 = vrot.slane %v1425, 5
      %v1428 = vor.u32 %v1424, %v1427
      %v1429 = vrot.slane %v1428, 4
      %v1431 = vshll.u32 %v1363, 16
      %v1433 = vrot.slane %v1431, 5
      %v1434 = vsel %vm1378, %v1429, %v1433
      %v1436 = vshrl.u32 %v1344, 16
      %v1438 = vrot.slane %v1436, 4
      %v1439 = vshll.u32 %v1344, 16
      %v1441 = vrot.slane %v1439, 5
      %v1442 = vor.u32 %v1438, %v1441
      %v1443 = vrot.slane %v1442, 4
      %v1445 = vshll.u32 %v1364, 16
      %v1447 = vrot.slane %v1445, 5
      %v1448 = vsel %vm1378, %v1443, %v1447
      %v1450 = vshrl.u32 %v1345, 16
      %v1452 = vrot.slane %v1450, 4
      %v1453 = vshll.u32 %v1345, 16
      %v1455 = vrot.slane %v1453, 5
      %v1456 = vor.u32 %v1452, %v1455
      %v1457 = vrot.slane %v1456, 4
      %v1459 = vshll.u32 %v1365, 16
      %v1461 = vrot.slane %v1459, 5
      %v1462 = vsel %vm1378, %v1457, %v1461
      %v1464 = vshrl.u32 %v1346, 16
      %v1466 = vrot.slane %v1464, 4
      %v1467 = vshll.u32 %v1346, 16
      %v1469 = vrot.slane %v1467, 5
      %v1470 = vor.u32 %v1466, %v1469
      %v1471 = vrot.slane %v1470, 4
      %v1473 = vshll.u32 %v1366, 16
      %v1475 = vrot.slane %v1473, 5
      %v1476 = vsel %vm1378, %v1471, %v1475
      %v1478 = vshrl.u32 %v1347, 16
      %v1480 = vrot.slane %v1478, 4
      %v1481 = vshll.u32 %v1347, 16
      %v1483 = vrot.slane %v1481, 5
      %v1484 = vor.u32 %v1480, %v1483
      %v1485 = vrot.slane %v1484, 4
      %v1487 = vshll.u32 %v1367, 16
      %v1489 = vrot.slane %v1487, 5
      %v1490 = vsel %vm1378, %v1485, %v1489
      %v1492 = vshrl.u32 %v1348, 16
      %v1494 = vrot.slane %v1492, 4
      %v1495 = vshll.u32 %v1348, 16
      %v1497 = vrot.slane %v1495, 5
      %v1498 = vor.u32 %v1494, %v1497
      %v1499 = vrot.slane %v1498, 4
      %v1501 = vshll.u32 %v1368, 16
      %v1503 = vrot.slane %v1501, 5
      %v1504 = vsel %vm1378, %v1499, %v1503
      %v1506 = vshrl.u32 %v1349, 16
      %v1508 = vrot.slane %v1506, 4
      %v1509 = vshll.u32 %v1349, 16
      %v1511 = vrot.slane %v1509, 5
      %v1512 = vor.u32 %v1508, %v1511
      %v1513 = vrot.slane %v1512, 4
      %v1515 = vshll.u32 %v1369, 16
      %v1517 = vrot.slane %v1515, 5
      %v1518 = vsel %vm1378, %v1513, %v1517
      %v1520 = vshrl.u32 %v1350, 16
      %v1522 = vrot.slane %v1520, 4
      %v1523 = vshll.u32 %v1350, 16
      %v1525 = vrot.slane %v1523, 5
      %v1526 = vor.u32 %v1522, %v1525
      %v1527 = vrot.slane %v1526, 4
      %v1529 = vshll.u32 %v1370, 16
      %v1531 = vrot.slane %v1529, 5
      %v1532 = vsel %vm1378, %v1527, %v1531
      %v1534 = vshrl.u32 %v1351, 16
      %v1536 = vrot.slane %v1534, 4
      %v1537 = vshll.u32 %v1351, 16
      %v1539 = vrot.slane %v1537, 5
      %v1540 = vor.u32 %v1536, %v1539
      %v1541 = vrot.slane %v1540, 4
      %v1543 = vshll.u32 %v1371, 16
      %v1545 = vrot.slane %v1543, 5
      %v1546 = vsel %vm1378, %v1541, %v1545
      %v1548 = vshrl.u32 %v1352, 16
      %v1550 = vrot.slane %v1548, 4
      %v1551 = vshll.u32 %v1352, 16
      %v1553 = vrot.slane %v1551, 5
      %v1554 = vor.u32 %v1550, %v1553
      %v1555 = vrot.slane %v1554, 4
      %v1557 = vshll.u32 %v1372, 16
      %v1559 = vrot.slane %v1557, 5
      %v1560 = vsel %vm1378, %v1555, %v1559
      %v1562 = vshrl.u32 %v1353, 16
      %v1564 = vrot.slane %v1562, 4
      %v1565 = vshll.u32 %v1353, 16
      %v1567 = vrot.slane %v1565, 5
      %v1568 = vor.u32 %v1564, %v1567
      %v1569 = vrot.slane %v1568, 4
      %v1571 = vshll.u32 %v1373, 16
      %v1573 = vrot.slane %v1571, 5
      %v1574 = vsel %vm1378, %v1569, %v1573
      %v1576 = vshrl.u32 %v1354, 16
      %v1578 = vrot.slane %v1576, 4
      %v1579 = vshll.u32 %v1354, 16
      %v1581 = vrot.slane %v1579, 5
      %v1582 = vor.u32 %v1578, %v1581
      %v1583 = vrot.slane %v1582, 4
      %v1585 = vshll.u32 %v1374, 16
      %v1587 = vrot.slane %v1585, 5
      %v1588 = vsel %vm1378, %v1583, %v1587
      %v1590 = vshrl.u32 %v1355, 16
      %v1592 = vrot.slane %v1590, 4
      %v1593 = vshll.u32 %v1355, 16
      %v1595 = vrot.slane %v1593, 5
      %v1596 = vor.u32 %v1592, %v1595
      %v1597 = vrot.slane %v1596, 4
      %v1599 = vshll.u32 %v1375, 16
      %v1601 = vrot.slane %v1599, 5
      %v1602 = vsel %vm1378, %v1597, %v1601
      %s1603 = scalar_lea.vmem %s4, 16
      %v1604 = vld [vmem:[%s1603] sm:$0xf]
      %v1605 = vld [vmem:[%s1603 + $0x4] sm:$0xf]
      %v1606 = vld [vmem:[%s1603 + $0x8] sm:$0xf]
      %v1607 = vld [vmem:[%s1603 + $0xc] sm:$0xf]
      %v1608 = vunpack.c.l.b16 %v1392
      %v1609 = vunpack.c.l.b16 %v1406
      %v1610 = vunpack.c.l.b16 %v1420
      %v1611 = vunpack.c.l.b16 %v1434
      %v1612 = vunpack.c.l.b16 %v1448
      %v1613 = vunpack.c.l.b16 %v1462
      %v1614 = vunpack.c.l.b16 %v1476
      %v1615 = vunpack.c.l.b16 %v1490
      %v1616 = vunpack.c.l.b16 %v1504
      %v1617 = vunpack.c.l.b16 %v1518
      %v1618 = vunpack.c.l.b16 %v1532
      %v1619 = vunpack.c.l.b16 %v1546
      %v1620 = vunpack.c.l.b16 %v1560
      %v1621 = vunpack.c.l.b16 %v1574
      %v1622 = vunpack.c.l.b16 %v1588
      %v1623 = vunpack.c.l.b16 %v1602
      %v1624 = vpack.c.b16 %v1609, %v1608
      %v1625 = vpack.c.b16 %v1611, %v1610
      %v1626 = vpack.c.b16 %v1613, %v1612
      %v1627 = vpack.c.b16 %v1615, %v1614
      %v1628 = vpack.c.b16 %v1617, %v1616
      %v1629 = vpack.c.b16 %v1619, %v1618
      %v1630 = vpack.c.b16 %v1621, %v1620
      %v1631 = vpack.c.b16 %v1623, %v1622
      %v1636 = vunpack.c.l.b16 %v1604
      %v1637 = vunpack.c.l.b16 %v1605
      %v1638 = vunpack.c.l.b16 %v1606
      %v1639 = vunpack.c.l.b16 %v1607
      %v1640 = vpack.c.b16 %v1637, %v1636
      %v1641 = vpack.c.b16 %v1639, %v1638
      %vm1644 = vcmask 261120
      %v1646 = vsel %vm1644, %v1624, 0
      %v1649 = vsel %vm1644, %v1625, 0
      %v1652 = vsel %vm1644, %v1626, 0
      %v1655 = vsel %vm1644, %v1627, 0
      %v1658 = vsel %vm1644, %v1628, 0
      %v1661 = vsel %vm1644, %v1629, 0
      %v1664 = vsel %vm1644, %v1630, 0
      %v1667 = vsel %vm1644, %v1631, 0
      %1669 = vmatprep.subr.bf16.mxu0 0
      %1670 = vmatpush1.bf16.msra.mxu0 %v1640
      %1671 = vmatprep.subr.bf16.mxu0 0
      %1672 = vmatpush1.bf16.msra.mxu0 %v1641
      %1673 = vmatprep.subr.bf16.mxu0 0
      %1674 = vmatpush1.bf16.msra.mxu0 0
      %1675 = vmatprep.subr.bf16.mxu0 0
      %1676 = vmatpush1.bf16.msra.mxu0 0
      %1677 = vmatprep.subr.bf16.mxu0 0
      %1678 = vmatpush1.bf16.msra.mxu0 0
      %1679 = vmatprep.subr.bf16.mxu0 0
      %1680 = vmatpush1.bf16.msra.mxu0 0
      %1681 = vmatprep.subr.bf16.mxu0 0
      %1682 = vmatpush1.bf16.msra.mxu0 0
      %1683 = vmatprep.subr.bf16.mxu0 0
      %1684 = vmatpush1.bf16.msra.mxu0 0
      %1685 = vmatprep.subr.bf16.mxu0 0
      %1686 = vmatpush1.bf16.msra.mxu0 0
      %1687 = vmatprep.subr.bf16.mxu0 0
      %1688 = vmatpush1.bf16.msra.mxu0 0
      %1689 = vmatprep.subr.bf16.mxu0 0
      %1690 = vmatpush1.bf16.msra.mxu0 0
      %1691 = vmatprep.subr.bf16.mxu0 0
      %1692 = vmatpush1.bf16.msra.mxu0 0
      %1693 = vmatprep.subr.bf16.mxu0 0
      %1694 = vmatpush1.bf16.msra.mxu0 0
      %1695 = vmatprep.subr.bf16.mxu0 0
      %1696 = vmatpush1.bf16.msra.mxu0 0
      %1697 = vmatprep.subr.bf16.mxu0 0
      %1698 = vmatpush1.bf16.msra.mxu0 0
      %1699 = vmatprep.subr.bf16.mxu0 0
      %1700 = vmatpush1.bf16.msra.mxu0 0
      %1701 = vmatprep.mubr.bf16.mxu0 0
      %1702 = vmatmul.mubr.bf16.gmra.mrb[0].mxu0 %v1646
      %v1703 = vpop.f32.mrb[0].mxu0
      %v1704 = vadd.f32 0.0, %v1703
      %v1705 = vpop.f32.mrb[0].mxu0
      %v1706 = vpop.f32.mrb[0].mxu0
      %v1707 = vadd.f32 0.0, %v1706
      %v1708 = vpop.f32.mrb[0].mxu0
      %1709 = vmatprep.mubr.bf16.mxu0 0
      %1710 = vmatmul.mubr.bf16.gmra.mrb[0].mxu0 %v1649
      %v1711 = vpop.f32.mrb[0].mxu0
      %v1712 = vadd.f32 0.0, %v1711
      %v1713 = vpop.f32.mrb[0].mxu0
      %v1714 = vpop.f32.mrb[0].mxu0
      %v1715 = vadd.f32 0.0, %v1714
      %v1716 = vpop.f32.mrb[0].mxu0
      %1717 = vmatprep.mubr.bf16.mxu0 0
      %1718 = vmatmul.mubr.bf16.gmra.mrb[0].mxu0 %v1652
      %v1719 = vpop.f32.mrb[0].mxu0
      %v1720 = vadd.f32 0.0, %v1719
      %v1721 = vpop.f32.mrb[0].mxu0
      %v1722 = vpop.f32.mrb[0].mxu0
      %v1723 = vadd.f32 0.0, %v1722
      %v1724 = vpop.f32.mrb[0].mxu0
      %1725 = vmatprep.mubr.bf16.mxu0 0
      %1726 = vmatmul.mubr.bf16.gmra.mrb[0].mxu0 %v1655
      %v1727 = vpop.f32.mrb[0].mxu0
      %v1728 = vadd.f32 0.0, %v1727
      %v1729 = vpop.f32.mrb[0].mxu0
      %v1730 = vpop.f32.mrb[0].mxu0
      %v1731 = vadd.f32 0.0, %v1730
      %v1732 = vpop.f32.mrb[0].mxu0
      %1733 = vmatprep.mubr.bf16.mxu0 0
      %1734 = vmatmul.mubr.bf16.gmra.mrb[0].mxu0 %v1658
      %v1735 = vpop.f32.mrb[0].mxu0
      %v1736 = vadd.f32 0.0, %v1735
      %v1737 = vpop.f32.mrb[0].mxu0
      %v1738 = vpop.f32.mrb[0].mxu0
      %v1739 = vadd.f32 0.0, %v1738
      %v1740 = vpop.f32.mrb[0].mxu0
      %1741 = vmatprep.mubr.bf16.mxu0 0
      %1742 = vmatmul.mubr.bf16.gmra.mrb[0].mxu0 %v1661
      %v1743 = vpop.f32.mrb[0].mxu0
      %v1744 = vadd.f32 0.0, %v1743
      %v1745 = vpop.f32.mrb[0].mxu0
      %v1746 = vpop.f32.mrb[0].mxu0
      %v1747 = vadd.f32 0.0, %v1746
      %v1748 = vpop.f32.mrb[0].mxu0
      %1749 = vmatprep.mubr.bf16.mxu0 0
      %1750 = vmatmul.mubr.bf16.gmra.mrb[0].mxu0 %v1664
      %v1751 = vpop.f32.mrb[0].mxu0
      %v1752 = vadd.f32 0.0, %v1751
      %v1753 = vpop.f32.mrb[0].mxu0
      %v1754 = vpop.f32.mrb[0].mxu0
      %v1755 = vadd.f32 0.0, %v1754
      %v1756 = vpop.f32.mrb[0].mxu0
      %1757 = vmatprep.mubr.bf16.mxu0 0
      %1758 = vmatmul.mubr.bf16.gmra.mrb[0].mxu0 %v1667
      %v1759 = vpop.f32.mrb[0].mxu0
      %v1760 = vadd.f32 0.0, %v1759
      %v1761 = vpop.f32.mrb[0].mxu0
      %v1762 = vpop.f32.mrb[0].mxu0
      %v1763 = vadd.f32 0.0, %v1762
      %v1764 = vpop.f32.mrb[0].mxu0
      %1765 = vdwg.mxu0
      %v1782 = vunpack.c.l.b16 %v1340
      %v1783 = vunpack.c.l.b16 %v1341
      %v1784 = vunpack.c.l.b16 %v1342
      %v1785 = vunpack.c.l.b16 %v1343
      %v1786 = vunpack.c.l.b16 %v1344
      %v1787 = vunpack.c.l.b16 %v1345
      %v1788 = vunpack.c.l.b16 %v1346
      %v1789 = vunpack.c.l.b16 %v1347
      %v1790 = vunpack.c.l.b16 %v1348
      %v1791 = vunpack.c.l.b16 %v1349
      %v1792 = vunpack.c.l.b16 %v1350
      %v1793 = vunpack.c.l.b16 %v1351
      %v1794 = vunpack.c.l.b16 %v1352
      %v1795 = vunpack.c.l.b16 %v1353
      %v1796 = vunpack.c.l.b16 %v1354
      %v1797 = vunpack.c.l.b16 %v1355
      %v1798 = vpack.c.b16 %v1783, %v1782
      %v1799 = vpack.c.b16 %v1785, %v1784
      %v1800 = vpack.c.b16 %v1787, %v1786
      %v1801 = vpack.c.b16 %v1789, %v1788
      %v1802 = vpack.c.b16 %v1791, %v1790
      %v1803 = vpack.c.b16 %v1793, %v1792
      %v1804 = vpack.c.b16 %v1795, %v1794
      %v1805 = vpack.c.b16 %v1797, %v1796
      %v1810 = vunpack.c.l.b16 %v1356
      %v1811 = vunpack.c.l.b16 %v1357
      %v1812 = vunpack.c.l.b16 %v1358
      %v1813 = vunpack.c.l.b16 %v1359
      %v1814 = vpack.c.b16 %v1811, %v1810
      %v1815 = vpack.c.b16 %v1813, %v1812
      %v1819 = vsel %vm1644, %v1798, 0
      %v1822 = vsel %vm1644, %v1799, 0
      %v1825 = vsel %vm1644, %v1800, 0
      %v1828 = vsel %vm1644, %v1801, 0
      %v1831 = vsel %vm1644, %v1802, 0
      %v1834 = vsel %vm1644, %v1803, 0
      %v1837 = vsel %vm1644, %v1804, 0
      %v1840 = vsel %vm1644, %v1805, 0
      %1842 = vmatprep.subr.bf16.mxu0 0
      %1843 = vmatpush1.bf16.msra.mxu0 %v1814
      %1844 = vmatprep.subr.bf16.mxu0 0
      %1845 = vmatpush1.bf16.msra.mxu0 %v1815
      %1846 = vmatprep.subr.bf16.mxu0 0
      %1847 = vmatpush1.bf16.msra.mxu0 0
      %1848 = vmatprep.subr.bf16.mxu0 0
      %1849 = vmatpush1.bf16.msra.mxu0 0
      %1850 = vmatprep.subr.bf16.mxu0 0
      %1851 = vmatpush1.bf16.msra.mxu0 0
      %1852 = vmatprep.subr.bf16.mxu0 0
      %1853 = vmatpush1.bf16.msra.mxu0 0
      %1854 = vmatprep.subr.bf16.mxu0 0
      %1855 = vmatpush1.bf16.msra.mxu0 0
      %1856 = vmatprep.subr.bf16.mxu0 0
      %1857 = vmatpush1.bf16.msra.mxu0 0
      %1858 = vmatprep.subr.bf16.mxu0 0
      %1859 = vmatpush1.bf16.msra.mxu0 0
      %1860 = vmatprep.subr.bf16.mxu0 0
      %1861 = vmatpush1.bf16.msra.mxu0 0
      %1862 = vmatprep.subr.bf16.mxu0 0
      %1863 = vmatpush1.bf16.msra.mxu0 0
      %1864 = vmatprep.subr.bf16.mxu0 0
      %1865 = vmatpush1.bf16.msra.mxu0 0
      %1866 = vmatprep.subr.bf16.mxu0 0
      %1867 = vmatpush1.bf16.msra.mxu0 0
      %1868 = vmatprep.subr.bf16.mxu0 0
      %1869 = vmatpush1.bf16.msra.mxu0 0
      %1870 = vmatprep.subr.bf16.mxu0 0
      %1871 = vmatpush1.bf16.msra.mxu0 0
      %1872 = vmatprep.subr.bf16.mxu0 0
      %1873 = vmatpush1.bf16.msra.mxu0 0
      %1874 = vmatprep.mubr.bf16.mxu0 0
      %1875 = vmatmul.mubr.bf16.gmra.mrb[0].mxu0 %v1819
      %v1876 = vpop.f32.mrb[0].mxu0
      %v1877 = vadd.f32 %v1704, %v1876
      %v1878 = vpop.f32.mrb[0].mxu0
      %v1879 = vpop.f32.mrb[0].mxu0
      %v1880 = vadd.f32 %v1707, %v1879
      %v1881 = vpop.f32.mrb[0].mxu0
      %1882 = vmatprep.mubr.bf16.mxu0 0
      %1883 = vmatmul.mubr.bf16.gmra.mrb[0].mxu0 %v1822
      %v1884 = vpop.f32.mrb[0].mxu0
      %v1885 = vadd.f32 %v1712, %v1884
      %v1886 = vpop.f32.mrb[0].mxu0
      %v1887 = vpop.f32.mrb[0].mxu0
      %v1888 = vadd.f32 %v1715, %v1887
      %v1889 = vpop.f32.mrb[0].mxu0
      %1890 = vmatprep.mubr.bf16.mxu0 0
      %1891 = vmatmul.mubr.bf16.gmra.mrb[0].mxu0 %v1825
      %v1892 = vpop.f32.mrb[0].mxu0
      %v1893 = vadd.f32 %v1720, %v1892
      %v1894 = vpop.f32.mrb[0].mxu0
      %v1895 = vpop.f32.mrb[0].mxu0
      %v1896 = vadd.f32 %v1723, %v1895
      %v1897 = vpop.f32.mrb[0].mxu0
      %1898 = vmatprep.mubr.bf16.mxu0 0
      %1899 = vmatmul.mubr.bf16.gmra.mrb[0].mxu0 %v1828
      %v1900 = vpop.f32.mrb[0].mxu0
      %v1901 = vadd.f32 %v1728, %v1900
      %v1902 = vpop.f32.mrb[0].mxu0
      %v1903 = vpop.f32.mrb[0].mxu0
      %v1904 = vadd.f32 %v1731, %v1903
      %v1905 = vpop.f32.mrb[0].mxu0
      %1906 = vmatprep.mubr.bf16.mxu0 0
      %1907 = vmatmul.mubr.bf16.gmra.mrb[0].mxu0 %v1831
      %v1908 = vpop.f32.mrb[0].mxu0
      %v1909 = vadd.f32 %v1736, %v1908
      %v1910 = vpop.f32.mrb[0].mxu0
      %v1911 = vpop.f32.mrb[0].mxu0
      %v1912 = vadd.f32 %v1739, %v1911
      %v1913 = vpop.f32.mrb[0].mxu0
      %1914 = vmatprep.mubr.bf16.mxu0 0
      %1915 = vmatmul.mubr.bf16.gmra.mrb[0].mxu0 %v1834
      %v1916 = vpop.f32.mrb[0].mxu0
      %v1917 = vadd.f32 %v1744, %v1916
      %v1918 = vpop.f32.mrb[0].mxu0
      %v1919 = vpop.f32.mrb[0].mxu0
      %v1920 = vadd.f32 %v1747, %v1919
      %v1921 = vpop.f32.mrb[0].mxu0
      %1922 = vmatprep.mubr.bf16.mxu0 0
      %1923 = vmatmul.mubr.bf16.gmra.mrb[0].mxu0 %v1837
      %v1924 = vpop.f32.mrb[0].mxu0
      %v1925 = vadd.f32 %v1752, %v1924
      %v1926 = vpop.f32.mrb[0].mxu0
      %v1927 = vpop.f32.mrb[0].mxu0
      %v1928 = vadd.f32 %v1755, %v1927
      %v1929 = vpop.f32.mrb[0].mxu0
      %1930 = vmatprep.mubr.bf16.mxu0 0
      %1931 = vmatmul.mubr.bf16.gmra.mrb[0].mxu0 %v1840
      %v1932 = vpop.f32.mrb[0].mxu0
      %v1933 = vadd.f32 %v1760, %v1932
      %v1934 = vpop.f32.mrb[0].mxu0
      %v1935 = vpop.f32.mrb[0].mxu0
      %v1936 = vadd.f32 %v1763, %v1935
      %v1937 = vpop.f32.mrb[0].mxu0
      %1938 = vdwg.mxu0
      %v1939 = vld [vmem:[#allocation2] sm:$0xe]
      %v1940 = vld [vmem:[#allocation2 + $0x8] sm:$0xe]
      %v1941 = vld [vmem:[#allocation2 + $0x10] sm:$0xe]
      %v1942 = vld [vmem:[#allocation2 + $0x18] sm:$0xe]
      %v1943 = vld [vmem:[#allocation2 + $0x20] sm:$0xe]
      %v1944 = vld [vmem:[#allocation2 + $0x28] sm:$0xe]
      %v1945 = vld [vmem:[#allocation2 + $0x30] sm:$0xe]
      %v1946 = vld [vmem:[#allocation2 + $0x38] sm:$0xe]
      %v1947 = vld [vmem:[#allocation2 + $0x40] sm:$0xe]
      %v1948 = vld [vmem:[#allocation2 + $0x48] sm:$0xe]
      %v1949 = vld [vmem:[#allocation2 + $0x50] sm:$0xe]
      %v1950 = vld [vmem:[#allocation2 + $0x58] sm:$0xe]
      %v1951 = vld [vmem:[#allocation2 + $0x60] sm:$0xe]
      %v1952 = vld [vmem:[#allocation2 + $0x68] sm:$0xe]
      %v1953 = vld [vmem:[#allocation2 + $0x70] sm:$0xe]
      %v1954 = vld [vmem:[#allocation2 + $0x78] sm:$0xe]
      %vm1987 = vcmask 1042432
      %vm1988 = vcmask 1046532
      %vm1989 = vmor %vm1987, %vm1988
      %v1990 = vrot.slane %v1939, 5
      %v1991 = vrot.slane %v1990, 4
      %v1992 = vrot.slane %v1360, 5
      %v1993 = vsel %vm1989, %v1991, %v1992
      %v1994 = vrot.slane %v1940, 5
      %v1995 = vrot.slane %v1994, 4
      %v1996 = vrot.slane %v1361, 5
      %v1997 = vsel %vm1989, %v1995, %v1996
      %v1998 = vrot.slane %v1941, 5
      %v1999 = vrot.slane %v1998, 4
      %v2000 = vrot.slane %v1362, 5
      %v2001 = vsel %vm1989, %v1999, %v2000
      %v2002 = vrot.slane %v1942, 5
      %v2003 = vrot.slane %v2002, 4
      %v2004 = vrot.slane %v1363, 5
      %v2005 = vsel %vm1989, %v2003, %v2004
      %v2006 = vrot.slane %v1943, 5
      %v2007 = vrot.slane %v2006, 4
      %v2008 = vrot.slane %v1364, 5
      %v2009 = vsel %vm1989, %v2007, %v2008
      %v2010 = vrot.slane %v1944, 5
      %v2011 = vrot.slane %v2010, 4
      %v2012 = vrot.slane %v1365, 5
      %v2013 = vsel %vm1989, %v2011, %v2012
      %v2014 = vrot.slane %v1945, 5
      %v2015 = vrot.slane %v2014, 4
      %v2016 = vrot.slane %v1366, 5
      %v2017 = vsel %vm1989, %v2015, %v2016
      %v2018 = vrot.slane %v1946, 5
      %v2019 = vrot.slane %v2018, 4
      %v2020 = vrot.slane %v1367, 5
      %v2021 = vsel %vm1989, %v2019, %v2020
      %v2022 = vrot.slane %v1947, 5
      %v2023 = vrot.slane %v2022, 4
      %v2024 = vrot.slane %v1368, 5
      %v2025 = vsel %vm1989, %v2023, %v2024
      %v2026 = vrot.slane %v1948, 5
      %v2027 = vrot.slane %v2026, 4
      %v2028 = vrot.slane %v1369, 5
      %v2029 = vsel %vm1989, %v2027, %v2028
      %v2030 = vrot.slane %v1949, 5
      %v2031 = vrot.slane %v2030, 4
      %v2032 = vrot.slane %v1370, 5
      %v2033 = vsel %vm1989, %v2031, %v2032
      %v2034 = vrot.slane %v1950, 5
      %v2035 = vrot.slane %v2034, 4
      %v2036 = vrot.slane %v1371, 5
      %v2037 = vsel %vm1989, %v2035, %v2036
      %v2038 = vrot.slane %v1951, 5
      %v2039 = vrot.slane %v2038, 4
      %v2040 = vrot.slane %v1372, 5
      %v2041 = vsel %vm1989, %v2039, %v2040
      %v2042 = vrot.slane %v1952, 5
      %v2043 = vrot.slane %v2042, 4
      %v2044 = vrot.slane %v1373, 5
      %v2045 = vsel %vm1989, %v2043, %v2044
      %v2046 = vrot.slane %v1953, 5
      %v2047 = vrot.slane %v2046, 4
      %v2048 = vrot.slane %v1374, 5
      %v2049 = vsel %vm1989, %v2047, %v2048
      %v2050 = vrot.slane %v1954, 5
      %v2051 = vrot.slane %v2050, 4
      %v2052 = vrot.slane %v1375, 5
      %v2053 = vsel %vm1989, %v2051, %v2052
      %s2054 = scalar_lea.vmem %s4, 32
      %v2055 = vld [vmem:[%s2054] sm:$0xf]
      %v2056 = vld [vmem:[%s2054 + $0x4] sm:$0xf]
      %v2057 = vld [vmem:[%s2054 + $0x8] sm:$0xf]
      %v2058 = vld [vmem:[%s2054 + $0xc] sm:$0xf]
      %v2059 = vunpack.c.l.b16 %v1993
      %v2060 = vunpack.c.l.b16 %v1997
      %v2061 = vunpack.c.l.b16 %v2001
      %v2062 = vunpack.c.l.b16 %v2005
      %v2063 = vunpack.c.l.b16 %v2009
      %v2064 = vunpack.c.l.b16 %v2013
      %v2065 = vunpack.c.l.b16 %v2017
      %v2066 = vunpack.c.l.b16 %v2021
      %v2067 = vunpack.c.l.b16 %v2025
      %v2068 = vunpack.c.l.b16 %v2029
      %v2069 = vunpack.c.l.b16 %v2033
      %v2070 = vunpack.c.l.b16 %v2037
      %v2071 = vunpack.c.l.b16 %v2041
      %v2072 = vunpack.c.l.b16 %v2045
      %v2073 = vunpack.c.l.b16 %v2049
      %v2074 = vunpack.c.l.b16 %v2053
      %v2075 = vpack.c.b16 %v2060, %v2059
      %v2076 = vpack.c.b16 %v2062, %v2061
      %v2077 = vpack.c.b16 %v2064, %v2063
      %v2078 = vpack.c.b16 %v2066, %v2065
      %v2079 = vpack.c.b16 %v2068, %v2067
      %v2080 = vpack.c.b16 %v2070, %v2069
      %v2081 = vpack.c.b16 %v2072, %v2071
      %v2082 = vpack.c.b16 %v2074, %v2073
      %v2087 = vunpack.c.l.b16 %v2055
      %v2088 = vunpack.c.l.b16 %v2056
      %v2089 = vunpack.c.l.b16 %v2057
      %v2090 = vunpack.c.l.b16 %v2058
      %v2091 = vpack.c.b16 %v2088, %v2087
      %v2092 = vpack.c.b16 %v2090, %v2089
      %v2096 = vsel %vm1644, %v2075, 0
      %v2099 = vsel %vm1644, %v2076, 0
      %v2102 = vsel %vm1644, %v2077, 0
      %v2105 = vsel %vm1644, %v2078, 0
      %v2108 = vsel %vm1644, %v2079, 0
      %v2111 = vsel %vm1644, %v2080, 0
      %v2114 = vsel %vm1644, %v2081, 0
      %v2117 = vsel %vm1644, %v2082, 0
      %2119 = vmatprep.subr.bf16.mxu0 0
      %2120 = vmatpush1.bf16.msra.mxu0 %v2091
      %2121 = vmatprep.subr.bf16.mxu0 0
      %2122 = vmatpush1.bf16.msra.mxu0 %v2092
      %2123 = vmatprep.subr.bf16.mxu0 0
      %2124 = vmatpush1.bf16.msra.mxu0 0
      %2125 = vmatprep.subr.bf16.mxu0 0
      %2126 = vmatpush1.bf16.msra.mxu0 0
      %2127 = vmatprep.subr.bf16.mxu0 0
      %2128 = vmatpush1.bf16.msra.mxu0 0
      %2129 = vmatprep.subr.bf16.mxu0 0
      %2130 = vmatpush1.bf16.msra.mxu0 0
      %2131 = vmatprep.subr.bf16.mxu0 0
      %2132 = vmatpush1.bf16.msra.mxu0 0
      %2133 = vmatprep.subr.bf16.mxu0 0
      %2134 = vmatpush1.bf16.msra.mxu0 0
      %2135 = vmatprep.subr.bf16.mxu0 0
      %2136 = vmatpush1.bf16.msra.mxu0 0
      %2137 = vmatprep.subr.bf16.mxu0 0
      %2138 = vmatpush1.bf16.msra.mxu0 0
      %2139 = vmatprep.subr.bf16.mxu0 0
      %2140 = vmatpush1.bf16.msra.mxu0 0
      %2141 = vmatprep.subr.bf16.mxu0 0
      %2142 = vmatpush1.bf16.msra.mxu0 0
      %2143 = vmatprep.subr.bf16.mxu0 0
      %2144 = vmatpush1.bf16.msra.mxu0 0
      %2145 = vmatprep.subr.bf16.mxu0 0
      %2146 = vmatpush1.bf16.msra.mxu0 0
      %2147 = vmatprep.subr.bf16.mxu0 0
      %2148 = vmatpush1.bf16.msra.mxu0 0
      %2149 = vmatprep.subr.bf16.mxu0 0
      %2150 = vmatpush1.bf16.msra.mxu0 0
      %2151 = vmatprep.mubr.bf16.mxu0 0
      %2152 = vmatmul.mubr.bf16.gmra.mrb[0].mxu0 %v2096
      %v2153 = vpop.f32.mrb[0].mxu0
      %v2154 = vadd.f32 0.0, %v2153
      %v2155 = vpop.f32.mrb[0].mxu0
      %v2156 = vpop.f32.mrb[0].mxu0
      %v2157 = vadd.f32 0.0, %v2156
      %v2158 = vpop.f32.mrb[0].mxu0
      %2159 = vmatprep.mubr.bf16.mxu0 0
      %2160 = vmatmul.mubr.bf16.gmra.mrb[0].mxu0 %v2099
      %v2161 = vpop.f32.mrb[0].mxu0
      %v2162 = vadd.f32 0.0, %v2161
      %v2163 = vpop.f32.mrb[0].mxu0
      %v2164 = vpop.f32.mrb[0].mxu0
      %v2165 = vadd.f32 0.0, %v2164
      %v2166 = vpop.f32.mrb[0].mxu0
      %2167 = vmatprep.mubr.bf16.mxu0 0
      %2168 = vmatmul.mubr.bf16.gmra.mrb[0].mxu0 %v2102
      %v2169 = vpop.f32.mrb[0].mxu0
      %v2170 = vadd.f32 0.0, %v2169
      %v2171 = vpop.f32.mrb[0].mxu0
      %v2172 = vpop.f32.mrb[0].mxu0
      %v2173 = vadd.f32 0.0, %v2172
      %v2174 = vpop.f32.mrb[0].mxu0
      %2175 = vmatprep.mubr.bf16.mxu0 0
      %2176 = vmatmul.mubr.bf16.gmra.mrb[0].mxu0 %v2105
      %v2177 = vpop.f32.mrb[0].mxu0
      %v2178 = vadd.f32 0.0, %v2177
      %v2179 = vpop.f32.mrb[0].mxu0
      %v2180 = vpop.f32.mrb[0].mxu0
      %v2181 = vadd.f32 0.0, %v2180
      %v2182 = vpop.f32.mrb[0].mxu0
      %2183 = vmatprep.mubr.bf16.mxu0 0
      %2184 = vmatmul.mubr.bf16.gmra.mrb[0].mxu0 %v2108
      %v2185 = vpop.f32.mrb[0].mxu0
      %v2186 = vadd.f32 0.0, %v2185
      %v2187 = vpop.f32.mrb[0].mxu0
      %v2188 = vpop.f32.mrb[0].mxu0
      %v2189 = vadd.f32 0.0, %v2188
      %v2190 = vpop.f32.mrb[0].mxu0
      %2191 = vmatprep.mubr.bf16.mxu0 0
      %2192 = vmatmul.mubr.bf16.gmra.mrb[0].mxu0 %v2111
      %v2193 = vpop.f32.mrb[0].mxu0
      %v2194 = vadd.f32 0.0, %v2193
      %v2195 = vpop.f32.mrb[0].mxu0
      %v2196 = vpop.f32.mrb[0].mxu0
      %v2197 = vadd.f32 0.0, %v2196
      %v2198 = vpop.f32.mrb[0].mxu0
      %2199 = vmatprep.mubr.bf16.mxu0 0
      %2200 = vmatmul.mubr.bf16.gmra.mrb[0].mxu0 %v2114
      %v2201 = vpop.f32.mrb[0].mxu0
      %v2202 = vadd.f32 0.0, %v2201
      %v2203 = vpop.f32.mrb[0].mxu0
      %v2204 = vpop.f32.mrb[0].mxu0
      %v2205 = vadd.f32 0.0, %v2204
      %v2206 = vpop.f32.mrb[0].mxu0
      %2207 = vmatprep.mubr.bf16.mxu0 0
      %2208 = vmatmul.mubr.bf16.gmra.mrb[0].mxu0 %v2117
      %v2209 = vpop.f32.mrb[0].mxu0
      %v2210 = vadd.f32 0.0, %v2209
      %v2211 = vpop.f32.mrb[0].mxu0
      %v2212 = vpop.f32.mrb[0].mxu0
      %v2213 = vadd.f32 0.0, %v2212
      %v2214 = vpop.f32.mrb[0].mxu0
      %2215 = vdwg.mxu0
      %v2216 = vadd.f32 %v1877, %v2154
      %v2217 = vadd.f32 %v1880, %v2157
      %v2218 = vadd.f32 %v1885, %v2162
      %v2219 = vadd.f32 %v1888, %v2165
      %v2220 = vadd.f32 %v1893, %v2170
      %v2221 = vadd.f32 %v1896, %v2173
      %v2222 = vadd.f32 %v1901, %v2178
      %v2223 = vadd.f32 %v1904, %v2181
      %v2224 = vadd.f32 %v1909, %v2186
      %v2225 = vadd.f32 %v1912, %v2189
      %v2226 = vadd.f32 %v1917, %v2194
      %v2227 = vadd.f32 %v1920, %v2197
      %v2228 = vadd.f32 %v1925, %v2202
      %v2229 = vadd.f32 %v1928, %v2205
      %v2230 = vadd.f32 %v1933, %v2210
      %v2231 = vadd.f32 %v1936, %v2213
      %v2232 = vld [vmem:[%s899] sm:$0xf]
      %v2233 = vld [vmem:[%s899 + $0x8] sm:$0xf]
      %v2234 = vld [vmem:[%s899 + $0x10] sm:$0xf]
      %v2235 = vld [vmem:[%s899 + $0x18] sm:$0xf]
      %v2236 = vld [vmem:[%s899 + $0x20] sm:$0xf]
      %v2237 = vld [vmem:[%s899 + $0x28] sm:$0xf]
      %v2238 = vld [vmem:[%s899 + $0x30] sm:$0xf]
      %v2239 = vld [vmem:[%s899 + $0x38] sm:$0xf]
      %v2240 = vld [vmem:[%s899 + $0x40] sm:$0xf]
      %v2241 = vld [vmem:[%s899 + $0x48] sm:$0xf]
      %v2242 = vld [vmem:[%s899 + $0x50] sm:$0xf]
      %v2243 = vld [vmem:[%s899 + $0x58] sm:$0xf]
      %v2244 = vld [vmem:[%s899 + $0x60] sm:$0xf]
      %v2245 = vld [vmem:[%s899 + $0x68] sm:$0xf]
      %v2246 = vld [vmem:[%s899 + $0x70] sm:$0xf]
      %v2247 = vld [vmem:[%s899 + $0x78] sm:$0xf]
      %s2248 = scalar_lea.vmem %s4, 48
      %v2249 = vld [vmem:[%s2248] sm:$0xf]
      %v2250 = vld [vmem:[%s2248 + $0x4] sm:$0xf]
      %v2251 = vld [vmem:[%s2248 + $0x8] sm:$0xf]
      %v2252 = vld [vmem:[%s2248 + $0xc] sm:$0xf]
      %v2269 = vunpack.c.l.b16 %v2232
      %v2270 = vunpack.c.l.b16 %v2233
      %v2271 = vunpack.c.l.b16 %v2234
      %v2272 = vunpack.c.l.b16 %v2235
      %v2273 = vunpack.c.l.b16 %v2236
      %v2274 = vunpack.c.l.b16 %v2237
      %v2275 = vunpack.c.l.b16 %v2238
      %v2276 = vunpack.c.l.b16 %v2239
      %v2277 = vunpack.c.l.b16 %v2240
      %v2278 = vunpack.c.l.b16 %v2241
      %v2279 = vunpack.c.l.b16 %v2242
      %v2280 = vunpack.c.l.b16 %v2243
      %v2281 = vunpack.c.l.b16 %v2244
      %v2282 = vunpack.c.l.b16 %v2245
      %v2283 = vunpack.c.l.b16 %v2246
      %v2284 = vunpack.c.l.b16 %v2247
      %v2285 = vpack.c.b16 %v2270, %v2269
      %v2286 = vpack.c.b16 %v2272, %v2271
      %v2287 = vpack.c.b16 %v2274, %v2273
      %v2288 = vpack.c.b16 %v2276, %v2275
      %v2289 = vpack.c.b16 %v2278, %v2277
      %v2290 = vpack.c.b16 %v2280, %v2279
      %v2291 = vpack.c.b16 %v2282, %v2281
      %v2292 = vpack.c.b16 %v2284, %v2283
      %v2297 = vunpack.c.l.b16 %v2249
      %v2298 = vunpack.c.l.b16 %v2250
      %v2299 = vunpack.c.l.b16 %v2251
      %v2300 = vunpack.c.l.b16 %v2252
      %v2301 = vpack.c.b16 %v2298, %v2297
      %v2302 = vpack.c.b16 %v2300, %v2299
      %v2306 = vsel %vm1644, %v2285, 0
      %v2309 = vsel %vm1644, %v2286, 0
      %v2312 = vsel %vm1644, %v2287, 0
      %v2315 = vsel %vm1644, %v2288, 0
      %v2318 = vsel %vm1644, %v2289, 0
      %v2321 = vsel %vm1644, %v2290, 0
      %v2324 = vsel %vm1644, %v2291, 0
      %v2327 = vsel %vm1644, %v2292, 0
      %2329 = vmatprep.subr.bf16.mxu0 0
      %2330 = vmatpush1.bf16.msra.mxu0 %v2301
      %2331 = vmatprep.subr.bf16.mxu0 0
      %2332 = vmatpush1.bf16.msra.mxu0 %v2302
      %2333 = vmatprep.subr.bf16.mxu0 0
      %2334 = vmatpush1.bf16.msra.mxu0 0
      %2335 = vmatprep.subr.bf16.mxu0 0
      %2336 = vmatpush1.bf16.msra.mxu0 0
      %2337 = vmatprep.subr.bf16.mxu0 0
      %2338 = vmatpush1.bf16.msra.mxu0 0
      %2339 = vmatprep.subr.bf16.mxu0 0
      %2340 = vmatpush1.bf16.msra.mxu0 0
      %2341 = vmatprep.subr.bf16.mxu0 0
      %2342 = vmatpush1.bf16.msra.mxu0 0
      %2343 = vmatprep.subr.bf16.mxu0 0
      %2344 = vmatpush1.bf16.msra.mxu0 0
      %2345 = vmatprep.subr.bf16.mxu0 0
      %2346 = vmatpush1.bf16.msra.mxu0 0
      %2347 = vmatprep.subr.bf16.mxu0 0
      %2348 = vmatpush1.bf16.msra.mxu0 0
      %2349 = vmatprep.subr.bf16.mxu0 0
      %2350 = vmatpush1.bf16.msra.mxu0 0
      %2351 = vmatprep.subr.bf16.mxu0 0
      %2352 = vmatpush1.bf16.msra.mxu0 0
      %2353 = vmatprep.subr.bf16.mxu0 0
      %2354 = vmatpush1.bf16.msra.mxu0 0
      %2355 = vmatprep.subr.bf16.mxu0 0
      %2356 = vmatpush1.bf16.msra.mxu0 0
      %2357 = vmatprep.subr.bf16.mxu0 0
      %2358 = vmatpush1.bf16.msra.mxu0 0
      %2359 = vmatprep.subr.bf16.mxu0 0
      %2360 = vmatpush1.bf16.msra.mxu0 0
      %2361 = vmatprep.mubr.bf16.mxu0 0
      %2362 = vmatmul.mubr.bf16.gmra.mrb[0].mxu0 %v2306
      %v2363 = vpop.f32.mrb[0].mxu0
      %v2364 = vadd.f32 0.0, %v2363
      %v2365 = vpop.f32.mrb[0].mxu0
      %v2366 = vpop.f32.mrb[0].mxu0
      %v2367 = vadd.f32 0.0, %v2366
      %v2368 = vpop.f32.mrb[0].mxu0
      %2369 = vmatprep.mubr.bf16.mxu0 0
      %2370 = vmatmul.mubr.bf16.gmra.mrb[0].mxu0 %v2309
      %v2371 = vpop.f32.mrb[0].mxu0
      %v2372 = vadd.f32 0.0, %v2371
      %v2373 = vpop.f32.mrb[0].mxu0
      %v2374 = vpop.f32.mrb[0].mxu0
      %v2375 = vadd.f32 0.0, %v2374
      %v2376 = vpop.f32.mrb[0].mxu0
      %2377 = vmatprep.mubr.bf16.mxu0 0
      %2378 = vmatmul.mubr.bf16.gmra.mrb[0].mxu0 %v2312
      %v2379 = vpop.f32.mrb[0].mxu0
      %v2380 = vadd.f32 0.0, %v2379
      %v2381 = vpop.f32.mrb[0].mxu0
      %v2382 = vpop.f32.mrb[0].mxu0
      %v2383 = vadd.f32 0.0, %v2382
      %v2384 = vpop.f32.mrb[0].mxu0
      %2385 = vmatprep.mubr.bf16.mxu0 0
      %2386 = vmatmul.mubr.bf16.gmra.mrb[0].mxu0 %v2315
      %v2387 = vpop.f32.mrb[0].mxu0
      %v2388 = vadd.f32 0.0, %v2387
      %v2389 = vpop.f32.mrb[0].mxu0
      %v2390 = vpop.f32.mrb[0].mxu0
      %v2391 = vadd.f32 0.0, %v2390
      %v2392 = vpop.f32.mrb[0].mxu0
      %2393 = vmatprep.mubr.bf16.mxu0 0
      %2394 = vmatmul.mubr.bf16.gmra.mrb[0].mxu0 %v2318
      %v2395 = vpop.f32.mrb[0].mxu0
      %v2396 = vadd.f32 0.0, %v2395
      %v2397 = vpop.f32.mrb[0].mxu0
      %v2398 = vpop.f32.mrb[0].mxu0
      %v2399 = vadd.f32 0.0, %v2398
      %v2400 = vpop.f32.mrb[0].mxu0
      %2401 = vmatprep.mubr.bf16.mxu0 0
      %2402 = vmatmul.mubr.bf16.gmra.mrb[0].mxu0 %v2321
      %v2403 = vpop.f32.mrb[0].mxu0
      %v2404 = vadd.f32 0.0, %v2403
      %v2405 = vpop.f32.mrb[0].mxu0
      %v2406 = vpop.f32.mrb[0].mxu0
      %v2407 = vadd.f32 0.0, %v2406
      %v2408 = vpop.f32.mrb[0].mxu0
      %2409 = vmatprep.mubr.bf16.mxu0 0
      %2410 = vmatmul.mubr.bf16.gmra.mrb[0].mxu0 %v2324
      %v2411 = vpop.f32.mrb[0].mxu0
      %v2412 = vadd.f32 0.0, %v2411
      %v2413 = vpop.f32.mrb[0].mxu0
      %v2414 = vpop.f32.mrb[0].mxu0
      %v2415 = vadd.f32 0.0, %v2414
      %v2416 = vpop.f32.mrb[0].mxu0
      %2417 = vmatprep.mubr.bf16.mxu0 0
      %2418 = vmatmul.mubr.bf16.gmra.mrb[0].mxu0 %v2327
      %v2419 = vpop.f32.mrb[0].mxu0
      %v2420 = vadd.f32 0.0, %v2419
      %v2421 = vpop.f32.mrb[0].mxu0
      %v2422 = vpop.f32.mrb[0].mxu0
      %v2423 = vadd.f32 0.0, %v2422
      %v2424 = vpop.f32.mrb[0].mxu0
      %2425 = vdwg.mxu0
      %v2426 = vadd.f32 %v2216, %v2364
      %v2427 = vadd.f32 %v2217, %v2367
      %v2428 = vadd.f32 %v2218, %v2372
      %v2429 = vadd.f32 %v2219, %v2375
      %v2430 = vadd.f32 %v2220, %v2380
      %v2431 = vadd.f32 %v2221, %v2383
      %v2432 = vadd.f32 %v2222, %v2388
      %v2433 = vadd.f32 %v2223, %v2391
      %v2434 = vadd.f32 %v2224, %v2396
      %v2435 = vadd.f32 %v2225, %v2399
      %v2436 = vadd.f32 %v2226, %v2404
      %v2437 = vadd.f32 %v2227, %v2407
      %v2438 = vadd.f32 %v2228, %v2412
      %v2439 = vadd.f32 %v2229, %v2415
      %v2440 = vadd.f32 %v2230, %v2420
      %v2441 = vadd.f32 %v2231, %v2423
      %v2442 = vld [vmem:[%s899] sm:$0xf]
      %v2443 = vld [vmem:[%s899 + $0x4] sm:$0x1]
      %v2444 = vld [vmem:[%s899 + $0x8] sm:$0xf]
      %v2445 = vld [vmem:[%s899 + $0xc] sm:$0x1]
      %v2446 = vld [vmem:[%s899 + $0x10] sm:$0xf]
      %v2447 = vld [vmem:[%s899 + $0x14] sm:$0x1]
      %v2448 = vld [vmem:[%s899 + $0x18] sm:$0xf]
      %v2449 = vld [vmem:[%s899 + $0x1c] sm:$0x1]
      %v2450 = vld [vmem:[%s899 + $0x20] sm:$0xf]
      %v2451 = vld [vmem:[%s899 + $0x24] sm:$0x1]
      %v2452 = vld [vmem:[%s899 + $0x28] sm:$0xf]
      %v2453 = vld [vmem:[%s899 + $0x2c] sm:$0x1]
      %v2454 = vld [vmem:[%s899 + $0x30] sm:$0xf]
      %v2455 = vld [vmem:[%s899 + $0x34] sm:$0x1]
      %v2456 = vld [vmem:[%s899 + $0x38] sm:$0xf]
      %v2457 = vld [vmem:[%s899 + $0x3c] sm:$0x1]
      %v2458 = vld [vmem:[%s899 + $0x40] sm:$0xf]
      %v2459 = vld [vmem:[%s899 + $0x44] sm:$0x1]
      %v2460 = vld [vmem:[%s899 + $0x48] sm:$0xf]
      %v2461 = vld [vmem:[%s899 + $0x4c] sm:$0x1]
      %v2462 = vld [vmem:[%s899 + $0x50] sm:$0xf]
      %v2463 = vld [vmem:[%s899 + $0x54] sm:$0x1]
      %v2464 = vld [vmem:[%s899 + $0x58] sm:$0xf]
      %v2465 = vld [vmem:[%s899 + $0x5c] sm:$0x1]
      %v2466 = vld [vmem:[%s899 + $0x60] sm:$0xf]
      %v2467 = vld [vmem:[%s899 + $0x64] sm:$0x1]
      %v2468 = vld [vmem:[%s899 + $0x68] sm:$0xf]
      %v2469 = vld [vmem:[%s899 + $0x6c] sm:$0x1]
      %v2470 = vld [vmem:[%s899 + $0x70] sm:$0xf]
      %v2471 = vld [vmem:[%s899 + $0x74] sm:$0x1]
      %v2472 = vld [vmem:[%s899 + $0x78] sm:$0xf]
      %v2473 = vld [vmem:[%s899 + $0x7c] sm:$0x1]
      %v2475 = vshrl.u32 %v2442, 16
      %v2477 = vrot.slane %v2475, 4
      %v2478 = vshll.u32 %v2442, 16
      %v2480 = vrot.slane %v2478, 5
      %v2481 = vor.u32 %v2477, %v2480
      %v2482 = vrot.slane %v2481, 4
      %v2484 = vshll.u32 %v2443, 16
      %v2486 = vrot.slane %v2484, 5
      %v2487 = vsel %vm1378, %v2482, %v2486
      %v2489 = vshrl.u32 %v2444, 16
      %v2491 = vrot.slane %v2489, 4
      %v2492 = vshll.u32 %v2444, 16
      %v2494 = vrot.slane %v2492, 5
      %v2495 = vor.u32 %v2491, %v2494
      %v2496 = vrot.slane %v2495, 4
      %v2498 = vshll.u32 %v2445, 16
      %v2500 = vrot.slane %v2498, 5
      %v2501 = vsel %vm1378, %v2496, %v2500
      %v2503 = vshrl.u32 %v2446, 16
      %v2505 = vrot.slane %v2503, 4
      %v2506 = vshll.u32 %v2446, 16
      %v2508 = vrot.slane %v2506, 5
      %v2509 = vor.u32 %v2505, %v2508
      %v2510 = vrot.slane %v2509, 4
      %v2512 = vshll.u32 %v2447, 16
      %v2514 = vrot.slane %v2512, 5
      %v2515 = vsel %vm1378, %v2510, %v2514
      %v2517 = vshrl.u32 %v2448, 16
      %v2519 = vrot.slane %v2517, 4
      %v2520 = vshll.u32 %v2448, 16
      %v2522 = vrot.slane %v2520, 5
      %v2523 = vor.u32 %v2519, %v2522
      %v2524 = vrot.slane %v2523, 4
      %v2526 = vshll.u32 %v2449, 16
      %v2528 = vrot.slane %v2526, 5
      %v2529 = vsel %vm1378, %v2524, %v2528
      %v2531 = vshrl.u32 %v2450, 16
      %v2533 = vrot.slane %v2531, 4
      %v2534 = vshll.u32 %v2450, 16
      %v2536 = vrot.slane %v2534, 5
      %v2537 = vor.u32 %v2533, %v2536
      %v2538 = vrot.slane %v2537, 4
      %v2540 = vshll.u32 %v2451, 16
      %v2542 = vrot.slane %v2540, 5
      %v2543 = vsel %vm1378, %v2538, %v2542
      %v2545 = vshrl.u32 %v2452, 16
      %v2547 = vrot.slane %v2545, 4
      %v2548 = vshll.u32 %v2452, 16
      %v2550 = vrot.slane %v2548, 5
      %v2551 = vor.u32 %v2547, %v2550
      %v2552 = vrot.slane %v2551, 4
      %v2554 = vshll.u32 %v2453, 16
      %v2556 = vrot.slane %v2554, 5
      %v2557 = vsel %vm1378, %v2552, %v2556
      %v2559 = vshrl.u32 %v2454, 16
      %v2561 = vrot.slane %v2559, 4
      %v2562 = vshll.u32 %v2454, 16
      %v2564 = vrot.slane %v2562, 5
      %v2565 = vor.u32 %v2561, %v2564
      %v2566 = vrot.slane %v2565, 4
      %v2568 = vshll.u32 %v2455, 16
      %v2570 = vrot.slane %v2568, 5
      %v2571 = vsel %vm1378, %v2566, %v2570
      %v2573 = vshrl.u32 %v2456, 16
      %v2575 = vrot.slane %v2573, 4
      %v2576 = vshll.u32 %v2456, 16
      %v2578 = vrot.slane %v2576, 5
      %v2579 = vor.u32 %v2575, %v2578
      %v2580 = vrot.slane %v2579, 4
      %v2582 = vshll.u32 %v2457, 16
      %v2584 = vrot.slane %v2582, 5
      %v2585 = vsel %vm1378, %v2580, %v2584
      %v2587 = vshrl.u32 %v2458, 16
      %v2589 = vrot.slane %v2587, 4
      %v2590 = vshll.u32 %v2458, 16
      %v2592 = vrot.slane %v2590, 5
      %v2593 = vor.u32 %v2589, %v2592
      %v2594 = vrot.slane %v2593, 4
      %v2596 = vshll.u32 %v2459, 16
      %v2598 = vrot.slane %v2596, 5
      %v2599 = vsel %vm1378, %v2594, %v2598
      %v2601 = vshrl.u32 %v2460, 16
      %v2603 = vrot.slane %v2601, 4
      %v2604 = vshll.u32 %v2460, 16
      %v2606 = vrot.slane %v2604, 5
      %v2607 = vor.u32 %v2603, %v2606
      %v2608 = vrot.slane %v2607, 4
      %v2610 = vshll.u32 %v2461, 16
      %v2612 = vrot.slane %v2610, 5
      %v2613 = vsel %vm1378, %v2608, %v2612
      %v2615 = vshrl.u32 %v2462, 16
      %v2617 = vrot.slane %v2615, 4
      %v2618 = vshll.u32 %v2462, 16
      %v2620 = vrot.slane %v2618, 5
      %v2621 = vor.u32 %v2617, %v2620
      %v2622 = vrot.slane %v2621, 4
      %v2624 = vshll.u32 %v2463, 16
      %v2626 = vrot.slane %v2624, 5
      %v2627 = vsel %vm1378, %v2622, %v2626
      %v2629 = vshrl.u32 %v2464, 16
      %v2631 = vrot.slane %v2629, 4
      %v2632 = vshll.u32 %v2464, 16
      %v2634 = vrot.slane %v2632, 5
      %v2635 = vor.u32 %v2631, %v2634
      %v2636 = vrot.slane %v2635, 4
      %v2638 = vshll.u32 %v2465, 16
      %v2640 = vrot.slane %v2638, 5
      %v2641 = vsel %vm1378, %v2636, %v2640
      %v2643 = vshrl.u32 %v2466, 16
      %v2645 = vrot.slane %v2643, 4
      %v2646 = vshll.u32 %v2466, 16
      %v2648 = vrot.slane %v2646, 5
      %v2649 = vor.u32 %v2645, %v2648
      %v2650 = vrot.slane %v2649, 4
      %v2652 = vshll.u32 %v2467, 16
      %v2654 = vrot.slane %v2652, 5
      %v2655 = vsel %vm1378, %v2650, %v2654
      %v2657 = vshrl.u32 %v2468, 16
      %v2659 = vrot.slane %v2657, 4
      %v2660 = vshll.u32 %v2468, 16
      %v2662 = vrot.slane %v2660, 5
      %v2663 = vor.u32 %v2659, %v2662
      %v2664 = vrot.slane %v2663, 4
      %v2666 = vshll.u32 %v2469, 16
      %v2668 = vrot.slane %v2666, 5
      %v2669 = vsel %vm1378, %v2664, %v2668
      %v2671 = vshrl.u32 %v2470, 16
      %v2673 = vrot.slane %v2671, 4
      %v2674 = vshll.u32 %v2470, 16
      %v2676 = vrot.slane %v2674, 5
      %v2677 = vor.u32 %v2673, %v2676
      %v2678 = vrot.slane %v2677, 4
      %v2680 = vshll.u32 %v2471, 16
      %v2682 = vrot.slane %v2680, 5
      %v2683 = vsel %vm1378, %v2678, %v2682
      %v2685 = vshrl.u32 %v2472, 16
      %v2687 = vrot.slane %v2685, 4
      %v2688 = vshll.u32 %v2472, 16
      %v2690 = vrot.slane %v2688, 5
      %v2691 = vor.u32 %v2687, %v2690
      %v2692 = vrot.slane %v2691, 4
      %v2694 = vshll.u32 %v2473, 16
      %v2696 = vrot.slane %v2694, 5
      %v2697 = vsel %vm1378, %v2692, %v2696
      %s2698 = scalar_lea.vmem %s4, 64
      %v2699 = vld [vmem:[%s2698] sm:$0xf]
      %v2700 = vld [vmem:[%s2698 + $0x4] sm:$0xf]
      %v2701 = vld [vmem:[%s2698 + $0x8] sm:$0xf]
      %v2702 = vld [vmem:[%s2698 + $0xc] sm:$0xf]
      %v2703 = vunpack.c.l.b16 %v2487
      %v2704 = vunpack.c.l.b16 %v2501
      %v2705 = vunpack.c.l.b16 %v2515
      %v2706 = vunpack.c.l.b16 %v2529
      %v2707 = vunpack.c.l.b16 %v2543
      %v2708 = vunpack.c.l.b16 %v2557
      %v2709 = vunpack.c.l.b16 %v2571
      %v2710 = vunpack.c.l.b16 %v2585
      %v2711 = vunpack.c.l.b16 %v2599
      %v2712 = vunpack.c.l.b16 %v2613
      %v2713 = vunpack.c.l.b16 %v2627
      %v2714 = vunpack.c.l.b16 %v2641
      %v2715 = vunpack.c.l.b16 %v2655
      %v2716 = vunpack.c.l.b16 %v2669
      %v2717 = vunpack.c.l.b16 %v2683
      %v2718 = vunpack.c.l.b16 %v2697
      %v2719 = vpack.c.b16 %v2704, %v2703
      %v2720 = vpack.c.b16 %v2706, %v2705
      %v2721 = vpack.c.b16 %v2708, %v2707
      %v2722 = vpack.c.b16 %v2710, %v2709
      %v2723 = vpack.c.b16 %v2712, %v2711
      %v2724 = vpack.c.b16 %v2714, %v2713
      %v2725 = vpack.c.b16 %v2716, %v2715
      %v2726 = vpack.c.b16 %v2718, %v2717
      %v2731 = vunpack.c.l.b16 %v2699
      %v2732 = vunpack.c.l.b16 %v2700
      %v2733 = vunpack.c.l.b16 %v2701
      %v2734 = vunpack.c.l.b16 %v2702
      %v2735 = vpack.c.b16 %v2732, %v2731
      %v2736 = vpack.c.b16 %v2734, %v2733
      %v2740 = vsel %vm1644, %v2719, 0
      %v2743 = vsel %vm1644, %v2720, 0
      %v2746 = vsel %vm1644, %v2721, 0
      %v2749 = vsel %vm1644, %v2722, 0
      %v2752 = vsel %vm1644, %v2723, 0
      %v2755 = vsel %vm1644, %v2724, 0
      %v2758 = vsel %vm1644, %v2725, 0
      %v2761 = vsel %vm1644, %v2726, 0
      %2763 = vmatprep.subr.bf16.mxu0 0
      %2764 = vmatpush1.bf16.msra.mxu0 %v2735
      %2765 = vmatprep.subr.bf16.mxu0 0
      %2766 = vmatpush1.bf16.msra.mxu0 %v2736
      %2767 = vmatprep.subr.bf16.mxu0 0
      %2768 = vmatpush1.bf16.msra.mxu0 0
      %2769 = vmatprep.subr.bf16.mxu0 0
      %2770 = vmatpush1.bf16.msra.mxu0 0
      %2771 = vmatprep.subr.bf16.mxu0 0
      %2772 = vmatpush1.bf16.msra.mxu0 0
      %2773 = vmatprep.subr.bf16.mxu0 0
      %2774 = vmatpush1.bf16.msra.mxu0 0
      %2775 = vmatprep.subr.bf16.mxu0 0
      %2776 = vmatpush1.bf16.msra.mxu0 0
      %2777 = vmatprep.subr.bf16.mxu0 0
      %2778 = vmatpush1.bf16.msra.mxu0 0
      %2779 = vmatprep.subr.bf16.mxu0 0
      %2780 = vmatpush1.bf16.msra.mxu0 0
      %2781 = vmatprep.subr.bf16.mxu0 0
      %2782 = vmatpush1.bf16.msra.mxu0 0
      %2783 = vmatprep.subr.bf16.mxu0 0
      %2784 = vmatpush1.bf16.msra.mxu0 0
      %2785 = vmatprep.subr.bf16.mxu0 0
      %2786 = vmatpush1.bf16.msra.mxu0 0
      %2787 = vmatprep.subr.bf16.mxu0 0
      %2788 = vmatpush1.bf16.msra.mxu0 0
      %2789 = vmatprep.subr.bf16.mxu0 0
      %2790 = vmatpush1.bf16.msra.mxu0 0
      %2791 = vmatprep.subr.bf16.mxu0 0
      %2792 = vmatpush1.bf16.msra.mxu0 0
      %2793 = vmatprep.subr.bf16.mxu0 0
      %2794 = vmatpush1.bf16.msra.mxu0 0
      %2795 = vmatprep.mubr.bf16.mxu0 0
      %2796 = vmatmul.mubr.bf16.gmra.mrb[0].mxu0 %v2740
      %v2797 = vpop.f32.mrb[0].mxu0
      %v2798 = vadd.f32 0.0, %v2797
      %v2799 = vpop.f32.mrb[0].mxu0
      %v2800 = vpop.f32.mrb[0].mxu0
      %v2801 = vadd.f32 0.0, %v2800
      %v2802 = vpop.f32.mrb[0].mxu0
      %2803 = vmatprep.mubr.bf16.mxu0 0
      %2804 = vmatmul.mubr.bf16.gmra.mrb[0].mxu0 %v2743
      %v2805 = vpop.f32.mrb[0].mxu0
      %v2806 = vadd.f32 0.0, %v2805
      %v2807 = vpop.f32.mrb[0].mxu0
      %v2808 = vpop.f32.mrb[0].mxu0
      %v2809 = vadd.f32 0.0, %v2808
      %v2810 = vpop.f32.mrb[0].mxu0
      %2811 = vmatprep.mubr.bf16.mxu0 0
      %2812 = vmatmul.mubr.bf16.gmra.mrb[0].mxu0 %v2746
      %v2813 = vpop.f32.mrb[0].mxu0
      %v2814 = vadd.f32 0.0, %v2813
      %v2815 = vpop.f32.mrb[0].mxu0
      %v2816 = vpop.f32.mrb[0].mxu0
      %v2817 = vadd.f32 0.0, %v2816
      %v2818 = vpop.f32.mrb[0].mxu0
      %2819 = vmatprep.mubr.bf16.mxu0 0
      %2820 = vmatmul.mubr.bf16.gmra.mrb[0].mxu0 %v2749
      %v2821 = vpop.f32.mrb[0].mxu0
      %v2822 = vadd.f32 0.0, %v2821
      %v2823 = vpop.f32.mrb[0].mxu0
      %v2824 = vpop.f32.mrb[0].mxu0
      %v2825 = vadd.f32 0.0, %v2824
      %v2826 = vpop.f32.mrb[0].mxu0
      %2827 = vmatprep.mubr.bf16.mxu0 0
      %2828 = vmatmul.mubr.bf16.gmra.mrb[0].mxu0 %v2752
      %v2829 = vpop.f32.mrb[0].mxu0
      %v2830 = vadd.f32 0.0, %v2829
      %v2831 = vpop.f32.mrb[0].mxu0
      %v2832 = vpop.f32.mrb[0].mxu0
      %v2833 = vadd.f32 0.0, %v2832
      %v2834 = vpop.f32.mrb[0].mxu0
      %2835 = vmatprep.mubr.bf16.mxu0 0
      %2836 = vmatmul.mubr.bf16.gmra.mrb[0].mxu0 %v2755
      %v2837 = vpop.f32.mrb[0].mxu0
      %v2838 = vadd.f32 0.0, %v2837
      %v2839 = vpop.f32.mrb[0].mxu0
      %v2840 = vpop.f32.mrb[0].mxu0
      %v2841 = vadd.f32 0.0, %v2840
      %v2842 = vpop.f32.mrb[0].mxu0
      %2843 = vmatprep.mubr.bf16.mxu0 0
      %2844 = vmatmul.mubr.bf16.gmra.mrb[0].mxu0 %v2758
      %v2845 = vpop.f32.mrb[0].mxu0
      %v2846 = vadd.f32 0.0, %v2845
      %v2847 = vpop.f32.mrb[0].mxu0
      %v2848 = vpop.f32.mrb[0].mxu0
      %v2849 = vadd.f32 0.0, %v2848
      %v2850 = vpop.f32.mrb[0].mxu0
      %2851 = vmatprep.mubr.bf16.mxu0 0
      %2852 = vmatmul.mubr.bf16.gmra.mrb[0].mxu0 %v2761
      %v2853 = vpop.f32.mrb[0].mxu0
      %v2854 = vadd.f32 0.0, %v2853
      %v2855 = vpop.f32.mrb[0].mxu0
      %v2856 = vpop.f32.mrb[0].mxu0
      %v2857 = vadd.f32 0.0, %v2856
      %v2858 = vpop.f32.mrb[0].mxu0
      %2859 = vdwg.mxu0
      %v2860 = vadd.f32 %v2426, %v2798
      %v2861 = vadd.f32 %v2427, %v2801
      %v2862 = vadd.f32 %v2428, %v2806
      %v2863 = vadd.f32 %v2429, %v2809
      %v2864 = vadd.f32 %v2430, %v2814
      %v2865 = vadd.f32 %v2431, %v2817
      %v2866 = vadd.f32 %v2432, %v2822
      %v2867 = vadd.f32 %v2433, %v2825
      %v2868 = vadd.f32 %v2434, %v2830
      %v2869 = vadd.f32 %v2435, %v2833
      %v2870 = vadd.f32 %v2436, %v2838
      %v2871 = vadd.f32 %v2437, %v2841
      %v2872 = vadd.f32 %v2438, %v2846
      %v2873 = vadd.f32 %v2439, %v2849
      %v2874 = vadd.f32 %v2440, %v2854
      %v2875 = vadd.f32 %v2441, %v2857
      %v2876 = vld [vmem:[%s899] sm:$0xe]
      %v2877 = vld [vmem:[%s899 + $0x8] sm:$0xe]
      %v2878 = vld [vmem:[%s899 + $0x10] sm:$0xe]
      %v2879 = vld [vmem:[%s899 + $0x18] sm:$0xe]
      %v2880 = vld [vmem:[%s899 + $0x20] sm:$0xe]
      %v2881 = vld [vmem:[%s899 + $0x28] sm:$0xe]
      %v2882 = vld [vmem:[%s899 + $0x30] sm:$0xe]
      %v2883 = vld [vmem:[%s899 + $0x38] sm:$0xe]
      %v2884 = vld [vmem:[%s899 + $0x40] sm:$0xe]
      %v2885 = vld [vmem:[%s899 + $0x48] sm:$0xe]
      %v2886 = vld [vmem:[%s899 + $0x50] sm:$0xe]
      %v2887 = vld [vmem:[%s899 + $0x58] sm:$0xe]
      %v2888 = vld [vmem:[%s899 + $0x60] sm:$0xe]
      %v2889 = vld [vmem:[%s899 + $0x68] sm:$0xe]
      %v2890 = vld [vmem:[%s899 + $0x70] sm:$0xe]
      %v2891 = vld [vmem:[%s899 + $0x78] sm:$0xe]
      %v2924 = vrot.slane %v2876, 5
      %v2925 = vrot.slane %v2924, 4
      %v2926 = vrot.slane %v2443, 5
      %v2927 = vsel %vm1989, %v2925, %v2926
      %v2928 = vrot.slane %v2877, 5
      %v2929 = vrot.slane %v2928, 4
      %v2930 = vrot.slane %v2445, 5
      %v2931 = vsel %vm1989, %v2929, %v2930
      %v2932 = vrot.slane %v2878, 5
      %v2933 = vrot.slane %v2932, 4
      %v2934 = vrot.slane %v2447, 5
      %v2935 = vsel %vm1989, %v2933, %v2934
      %v2936 = vrot.slane %v2879, 5
      %v2937 = vrot.slane %v2936, 4
      %v2938 = vrot.slane %v2449, 5
      %v2939 = vsel %vm1989, %v2937, %v2938
      %v2940 = vrot.slane %v2880, 5
      %v2941 = vrot.slane %v2940, 4
      %v2942 = vrot.slane %v2451, 5
      %v2943 = vsel %vm1989, %v2941, %v2942
      %v2944 = vrot.slane %v2881, 5
      %v2945 = vrot.slane %v2944, 4
      %v2946 = vrot.slane %v2453, 5
      %v2947 = vsel %vm1989, %v2945, %v2946
      %v2948 = vrot.slane %v2882, 5
      %v2949 = vrot.slane %v2948, 4
      %v2950 = vrot.slane %v2455, 5
      %v2951 = vsel %vm1989, %v2949, %v2950
      %v2952 = vrot.slane %v2883, 5
      %v2953 = vrot.slane %v2952, 4
      %v2954 = vrot.slane %v2457, 5
      %v2955 = vsel %vm1989, %v2953, %v2954
      %v2956 = vrot.slane %v2884, 5
      %v2957 = vrot.slane %v2956, 4
      %v2958 = vrot.slane %v2459, 5
      %v2959 = vsel %vm1989, %v2957, %v2958
      %v2960 = vrot.slane %v2885, 5
      %v2961 = vrot.slane %v2960, 4
      %v2962 = vrot.slane %v2461, 5
      %v2963 = vsel %vm1989, %v2961, %v2962
      %v2964 = vrot.slane %v2886, 5
      %v2965 = vrot.slane %v2964, 4
      %v2966 = vrot.slane %v2463, 5
      %v2967 = vsel %vm1989, %v2965, %v2966
      %v2968 = vrot.slane %v2887, 5
      %v2969 = vrot.slane %v2968, 4
      %v2970 = vrot.slane %v2465, 5
      %v2971 = vsel %vm1989, %v2969, %v2970
      %v2972 = vrot.slane %v2888, 5
      %v2973 = vrot.slane %v2972, 4
      %v2974 = vrot.slane %v2467, 5
      %v2975 = vsel %vm1989, %v2973, %v2974
      %v2976 = vrot.slane %v2889, 5
      %v2977 = vrot.slane %v2976, 4
      %v2978 = vrot.slane %v2469, 5
      %v2979 = vsel %vm1989, %v2977, %v2978
      %v2980 = vrot.slane %v2890, 5
      %v2981 = vrot.slane %v2980, 4
      %v2982 = vrot.slane %v2471, 5
      %v2983 = vsel %vm1989, %v2981, %v2982
      %v2984 = vrot.slane %v2891, 5
      %v2985 = vrot.slane %v2984, 4
      %v2986 = vrot.slane %v2473, 5
      %v2987 = vsel %vm1989, %v2985, %v2986
      %s2988 = scalar_lea.vmem %s4, 80
      %v2989 = vld [vmem:[%s2988] sm:$0xf]
      %v2990 = vld [vmem:[%s2988 + $0x4] sm:$0xf]
      %v2991 = vld [vmem:[%s2988 + $0x8] sm:$0xf]
      %v2992 = vld [vmem:[%s2988 + $0xc] sm:$0xf]
      %v2993 = vunpack.c.l.b16 %v2927
      %v2994 = vunpack.c.l.b16 %v2931
      %v2995 = vunpack.c.l.b16 %v2935
      %v2996 = vunpack.c.l.b16 %v2939
      %v2997 = vunpack.c.l.b16 %v2943
      %v2998 = vunpack.c.l.b16 %v2947
      %v2999 = vunpack.c.l.b16 %v2951
      %v3000 = vunpack.c.l.b16 %v2955
      %v3001 = vunpack.c.l.b16 %v2959
      %v3002 = vunpack.c.l.b16 %v2963
      %v3003 = vunpack.c.l.b16 %v2967
      %v3004 = vunpack.c.l.b16 %v2971
      %v3005 = vunpack.c.l.b16 %v2975
      %v3006 = vunpack.c.l.b16 %v2979
      %v3007 = vunpack.c.l.b16 %v2983
      %v3008 = vunpack.c.l.b16 %v2987
      %v3009 = vpack.c.b16 %v2994, %v2993
      %v3010 = vpack.c.b16 %v2996, %v2995
      %v3011 = vpack.c.b16 %v2998, %v2997
      %v3012 = vpack.c.b16 %v3000, %v2999
      %v3013 = vpack.c.b16 %v3002, %v3001
      %v3014 = vpack.c.b16 %v3004, %v3003
      %v3015 = vpack.c.b16 %v3006, %v3005
      %v3016 = vpack.c.b16 %v3008, %v3007
      %v3021 = vunpack.c.l.b16 %v2989
      %v3022 = vunpack.c.l.b16 %v2990
      %v3023 = vunpack.c.l.b16 %v2991
      %v3024 = vunpack.c.l.b16 %v2992
      %v3025 = vpack.c.b16 %v3022, %v3021
      %v3026 = vpack.c.b16 %v3024, %v3023
      %v3030 = vsel %vm1644, %v3009, 0
      %v3033 = vsel %vm1644, %v3010, 0
      %v3036 = vsel %vm1644, %v3011, 0
      %v3039 = vsel %vm1644, %v3012, 0
      %v3042 = vsel %vm1644, %v3013, 0
      %v3045 = vsel %vm1644, %v3014, 0
      %v3048 = vsel %vm1644, %v3015, 0
      %v3051 = vsel %vm1644, %v3016, 0
      %3053 = vmatprep.subr.bf16.mxu0 0
      %3054 = vmatpush1.bf16.msra.mxu0 %v3025
      %3055 = vmatprep.subr.bf16.mxu0 0
      %3056 = vmatpush1.bf16.msra.mxu0 %v3026
      %3057 = vmatprep.subr.bf16.mxu0 0
      %3058 = vmatpush1.bf16.msra.mxu0 0
      %3059 = vmatprep.subr.bf16.mxu0 0
      %3060 = vmatpush1.bf16.msra.mxu0 0
      %3061 = vmatprep.subr.bf16.mxu0 0
      %3062 = vmatpush1.bf16.msra.mxu0 0
      %3063 = vmatprep.subr.bf16.mxu0 0
      %3064 = vmatpush1.bf16.msra.mxu0 0
      %3065 = vmatprep.subr.bf16.mxu0 0
      %3066 = vmatpush1.bf16.msra.mxu0 0
      %3067 = vmatprep.subr.bf16.mxu0 0
      %3068 = vmatpush1.bf16.msra.mxu0 0
      %3069 = vmatprep.subr.bf16.mxu0 0
      %3070 = vmatpush1.bf16.msra.mxu0 0
      %3071 = vmatprep.subr.bf16.mxu0 0
      %3072 = vmatpush1.bf16.msra.mxu0 0
      %3073 = vmatprep.subr.bf16.mxu0 0
      %3074 = vmatpush1.bf16.msra.mxu0 0
      %3075 = vmatprep.subr.bf16.mxu0 0
      %3076 = vmatpush1.bf16.msra.mxu0 0
      %3077 = vmatprep.subr.bf16.mxu0 0
      %3078 = vmatpush1.bf16.msra.mxu0 0
      %3079 = vmatprep.subr.bf16.mxu0 0
      %3080 = vmatpush1.bf16.msra.mxu0 0
      %3081 = vmatprep.subr.bf16.mxu0 0
      %3082 = vmatpush1.bf16.msra.mxu0 0
      %3083 = vmatprep.subr.bf16.mxu0 0
      %3084 = vmatpush1.bf16.msra.mxu0 0
      %3085 = vmatprep.mubr.bf16.mxu0 0
      %3086 = vmatmul.mubr.bf16.gmra.mrb[0].mxu0 %v3030
      %v3087 = vpop.f32.mrb[0].mxu0
      %v3088 = vadd.f32 0.0, %v3087
      %v3089 = vpop.f32.mrb[0].mxu0
      %v3090 = vpop.f32.mrb[0].mxu0
      %v3091 = vadd.f32 0.0, %v3090
      %v3092 = vpop.f32.mrb[0].mxu0
      %3093 = vmatprep.mubr.bf16.mxu0 0
      %3094 = vmatmul.mubr.bf16.gmra.mrb[0].mxu0 %v3033
      %v3095 = vpop.f32.mrb[0].mxu0
      %v3096 = vadd.f32 0.0, %v3095
      %v3097 = vpop.f32.mrb[0].mxu0
      %v3098 = vpop.f32.mrb[0].mxu0
      %v3099 = vadd.f32 0.0, %v3098
      %v3100 = vpop.f32.mrb[0].mxu0
      %3101 = vmatprep.mubr.bf16.mxu0 0
      %3102 = vmatmul.mubr.bf16.gmra.mrb[0].mxu0 %v3036
      %v3103 = vpop.f32.mrb[0].mxu0
      %v3104 = vadd.f32 0.0, %v3103
      %v3105 = vpop.f32.mrb[0].mxu0
      %v3106 = vpop.f32.mrb[0].mxu0
      %v3107 = vadd.f32 0.0, %v3106
      %v3108 = vpop.f32.mrb[0].mxu0
      %3109 = vmatprep.mubr.bf16.mxu0 0
      %3110 = vmatmul.mubr.bf16.gmra.mrb[0].mxu0 %v3039
      %v3111 = vpop.f32.mrb[0].mxu0
      %v3112 = vadd.f32 0.0, %v3111
      %v3113 = vpop.f32.mrb[0].mxu0
      %v3114 = vpop.f32.mrb[0].mxu0
      %v3115 = vadd.f32 0.0, %v3114
      %v3116 = vpop.f32.mrb[0].mxu0
      %3117 = vmatprep.mubr.bf16.mxu0 0
      %3118 = vmatmul.mubr.bf16.gmra.mrb[0].mxu0 %v3042
      %v3119 = vpop.f32.mrb[0].mxu0
      %v3120 = vadd.f32 0.0, %v3119
      %v3121 = vpop.f32.mrb[0].mxu0
      %v3122 = vpop.f32.mrb[0].mxu0
      %v3123 = vadd.f32 0.0, %v3122
      %v3124 = vpop.f32.mrb[0].mxu0
      %3125 = vmatprep.mubr.bf16.mxu0 0
      %3126 = vmatmul.mubr.bf16.gmra.mrb[0].mxu0 %v3045
      %v3127 = vpop.f32.mrb[0].mxu0
      %v3128 = vadd.f32 0.0, %v3127
      %v3129 = vpop.f32.mrb[0].mxu0
      %v3130 = vpop.f32.mrb[0].mxu0
      %v3131 = vadd.f32 0.0, %v3130
      %v3132 = vpop.f32.mrb[0].mxu0
      %3133 = vmatprep.mubr.bf16.mxu0 0
      %3134 = vmatmul.mubr.bf16.gmra.mrb[0].mxu0 %v3048
      %v3135 = vpop.f32.mrb[0].mxu0
      %v3136 = vadd.f32 0.0, %v3135
      %v3137 = vpop.f32.mrb[0].mxu0
      %v3138 = vpop.f32.mrb[0].mxu0
      %v3139 = vadd.f32 0.0, %v3138
      %v3140 = vpop.f32.mrb[0].mxu0
      %3141 = vmatprep.mubr.bf16.mxu0 0
      %3142 = vmatmul.mubr.bf16.gmra.mrb[0].mxu0 %v3051
      %v3143 = vpop.f32.mrb[0].mxu0
      %v3144 = vadd.f32 0.0, %v3143
      %v3145 = vpop.f32.mrb[0].mxu0
      %v3146 = vpop.f32.mrb[0].mxu0
      %v3147 = vadd.f32 0.0, %v3146
      %v3148 = vpop.f32.mrb[0].mxu0
      %3149 = vdwg.mxu0
      %v3150 = vadd.f32 %v2860, %v3088
      %v3151 = vadd.f32 %v2861, %v3091
      %v3152 = vadd.f32 %v2862, %v3096
      %v3153 = vadd.f32 %v2863, %v3099
      %v3154 = vadd.f32 %v2864, %v3104
      %v3155 = vadd.f32 %v2865, %v3107
      %v3156 = vadd.f32 %v2866, %v3112
      %v3157 = vadd.f32 %v2867, %v3115
      %v3158 = vadd.f32 %v2868, %v3120
      %v3159 = vadd.f32 %v2869, %v3123
      %v3160 = vadd.f32 %v2870, %v3128
      %v3161 = vadd.f32 %v2871, %v3131
      %v3162 = vadd.f32 %v2872, %v3136
      %v3163 = vadd.f32 %v2873, %v3139
      %v3164 = vadd.f32 %v2874, %v3144
      %v3165 = vadd.f32 %v2875, %v3147
      %s3166 = scalar_lea.vmem [#allocation2], 16
      %v3167 = vld [vmem:[%s3166] sm:$0xf]
      %v3168 = vld [vmem:[%s3166 + $0x8] sm:$0xf]
      %v3169 = vld [vmem:[%s3166 + $0x10] sm:$0xf]
      %v3170 = vld [vmem:[%s3166 + $0x18] sm:$0xf]
      %v3171 = vld [vmem:[%s3166 + $0x20] sm:$0xf]
      %v3172 = vld [vmem:[%s3166 + $0x28] sm:$0xf]
      %v3173 = vld [vmem:[%s3166 + $0x30] sm:$0xf]
      %v3174 = vld [vmem:[%s3166 + $0x38] sm:$0xf]
      %v3175 = vld [vmem:[%s3166 + $0x40] sm:$0xf]
      %v3176 = vld [vmem:[%s3166 + $0x48] sm:$0xf]
      %v3177 = vld [vmem:[%s3166 + $0x50] sm:$0xf]
      %v3178 = vld [vmem:[%s3166 + $0x58] sm:$0xf]
      %v3179 = vld [vmem:[%s3166 + $0x60] sm:$0xf]
      %v3180 = vld [vmem:[%s3166 + $0x68] sm:$0xf]
      %v3181 = vld [vmem:[%s3166 + $0x70] sm:$0xf]
      %v3182 = vld [vmem:[%s3166 + $0x78] sm:$0xf]
      %s3183 = scalar_lea.vmem %s4, 96
      %v3184 = vld [vmem:[%s3183] sm:$0xf]
      %v3185 = vld [vmem:[%s3183 + $0x4] sm:$0xf]
      %v3186 = vld [vmem:[%s3183 + $0x8] sm:$0xf]
      %v3187 = vld [vmem:[%s3183 + $0xc] sm:$0xf]
      %v3204 = vunpack.c.l.b16 %v3167
      %v3205 = vunpack.c.l.b16 %v3168
      %v3206 = vunpack.c.l.b16 %v3169
      %v3207 = vunpack.c.l.b16 %v3170
      %v3208 = vunpack.c.l.b16 %v3171
      %v3209 = vunpack.c.l.b16 %v3172
      %v3210 = vunpack.c.l.b16 %v3173
      %v3211 = vunpack.c.l.b16 %v3174
      %v3212 = vunpack.c.l.b16 %v3175
      %v3213 = vunpack.c.l.b16 %v3176
      %v3214 = vunpack.c.l.b16 %v3177
      %v3215 = vunpack.c.l.b16 %v3178
      %v3216 = vunpack.c.l.b16 %v3179
      %v3217 = vunpack.c.l.b16 %v3180
      %v3218 = vunpack.c.l.b16 %v3181
      %v3219 = vunpack.c.l.b16 %v3182
      %v3220 = vpack.c.b16 %v3205, %v3204
      %v3221 = vpack.c.b16 %v3207, %v3206
      %v3222 = vpack.c.b16 %v3209, %v3208
      %v3223 = vpack.c.b16 %v3211, %v3210
      %v3224 = vpack.c.b16 %v3213, %v3212
      %v3225 = vpack.c.b16 %v3215, %v3214
      %v3226 = vpack.c.b16 %v3217, %v3216
      %v3227 = vpack.c.b16 %v3219, %v3218
      %v3232 = vunpack.c.l.b16 %v3184
      %v3233 = vunpack.c.l.b16 %v3185
      %v3234 = vunpack.c.l.b16 %v3186
      %v3235 = vunpack.c.l.b16 %v3187
      %v3236 = vpack.c.b16 %v3233, %v3232
      %v3237 = vpack.c.b16 %v3235, %v3234
      %v3241 = vsel %vm1644, %v3220, 0
      %v3244 = vsel %vm1644, %v3221, 0
      %v3247 = vsel %vm1644, %v3222, 0
      %v3250 = vsel %vm1644, %v3223, 0
      %v3253 = vsel %vm1644, %v3224, 0
      %v3256 = vsel %vm1644, %v3225, 0
      %v3259 = vsel %vm1644, %v3226, 0
      %v3262 = vsel %vm1644, %v3227, 0
      %3264 = vmatprep.subr.bf16.mxu0 0
      %3265 = vmatpush1.bf16.msra.mxu0 %v3236
      %3266 = vmatprep.subr.bf16.mxu0 0
      %3267 = vmatpush1.bf16.msra.mxu0 %v3237
      %3268 = vmatprep.subr.bf16.mxu0 0
      %3269 = vmatpush1.bf16.msra.mxu0 0
      %3270 = vmatprep.subr.bf16.mxu0 0
      %3271 = vmatpush1.bf16.msra.mxu0 0
      %3272 = vmatprep.subr.bf16.mxu0 0
      %3273 = vmatpush1.bf16.msra.mxu0 0
      %3274 = vmatprep.subr.bf16.mxu0 0
      %3275 = vmatpush1.bf16.msra.mxu0 0
      %3276 = vmatprep.subr.bf16.mxu0 0
      %3277 = vmatpush1.bf16.msra.mxu0 0
      %3278 = vmatprep.subr.bf16.mxu0 0
      %3279 = vmatpush1.bf16.msra.mxu0 0
      %3280 = vmatprep.subr.bf16.mxu0 0
      %3281 = vmatpush1.bf16.msra.mxu0 0
      %3282 = vmatprep.subr.bf16.mxu0 0
      %3283 = vmatpush1.bf16.msra.mxu0 0
      %3284 = vmatprep.subr.bf16.mxu0 0
      %3285 = vmatpush1.bf16.msra.mxu0 0
      %3286 = vmatprep.subr.bf16.mxu0 0
      %3287 = vmatpush1.bf16.msra.mxu0 0
      %3288 = vmatprep.subr.bf16.mxu0 0
      %3289 = vmatpush1.bf16.msra.mxu0 0
      %3290 = vmatprep.subr.bf16.mxu0 0
      %3291 = vmatpush1.bf16.msra.mxu0 0
      %3292 = vmatprep.subr.bf16.mxu0 0
      %3293 = vmatpush1.bf16.msra.mxu0 0
      %3294 = vmatprep.subr.bf16.mxu0 0
      %3295 = vmatpush1.bf16.msra.mxu0 0
      %3296 = vmatprep.mubr.bf16.mxu0 0
      %3297 = vmatmul.mubr.bf16.gmra.mrb[0].mxu0 %v3241
      %v3298 = vpop.f32.mrb[0].mxu0
      %v3299 = vadd.f32 0.0, %v3298
      %v3300 = vpop.f32.mrb[0].mxu0
      %v3301 = vpop.f32.mrb[0].mxu0
      %v3302 = vadd.f32 0.0, %v3301
      %v3303 = vpop.f32.mrb[0].mxu0
      %3304 = vmatprep.mubr.bf16.mxu0 0
      %3305 = vmatmul.mubr.bf16.gmra.mrb[0].mxu0 %v3244
      %v3306 = vpop.f32.mrb[0].mxu0
      %v3307 = vadd.f32 0.0, %v3306
      %v3308 = vpop.f32.mrb[0].mxu0
      %v3309 = vpop.f32.mrb[0].mxu0
      %v3310 = vadd.f32 0.0, %v3309
      %v3311 = vpop.f32.mrb[0].mxu0
      %3312 = vmatprep.mubr.bf16.mxu0 0
      %3313 = vmatmul.mubr.bf16.gmra.mrb[0].mxu0 %v3247
      %v3314 = vpop.f32.mrb[0].mxu0
      %v3315 = vadd.f32 0.0, %v3314
      %v3316 = vpop.f32.mrb[0].mxu0
      %v3317 = vpop.f32.mrb[0].mxu0
      %v3318 = vadd.f32 0.0, %v3317
      %v3319 = vpop.f32.mrb[0].mxu0
      %3320 = vmatprep.mubr.bf16.mxu0 0
      %3321 = vmatmul.mubr.bf16.gmra.mrb[0].mxu0 %v3250
      %v3322 = vpop.f32.mrb[0].mxu0
      %v3323 = vadd.f32 0.0, %v3322
      %v3324 = vpop.f32.mrb[0].mxu0
      %v3325 = vpop.f32.mrb[0].mxu0
      %v3326 = vadd.f32 0.0, %v3325
      %v3327 = vpop.f32.mrb[0].mxu0
      %3328 = vmatprep.mubr.bf16.mxu0 0
      %3329 = vmatmul.mubr.bf16.gmra.mrb[0].mxu0 %v3253
      %v3330 = vpop.f32.mrb[0].mxu0
      %v3331 = vadd.f32 0.0, %v3330
      %v3332 = vpop.f32.mrb[0].mxu0
      %v3333 = vpop.f32.mrb[0].mxu0
      %v3334 = vadd.f32 0.0, %v3333
      %v3335 = vpop.f32.mrb[0].mxu0
      %3336 = vmatprep.mubr.bf16.mxu0 0
      %3337 = vmatmul.mubr.bf16.gmra.mrb[0].mxu0 %v3256
      %v3338 = vpop.f32.mrb[0].mxu0
      %v3339 = vadd.f32 0.0, %v3338
      %v3340 = vpop.f32.mrb[0].mxu0
      %v3341 = vpop.f32.mrb[0].mxu0
      %v3342 = vadd.f32 0.0, %v3341
      %v3343 = vpop.f32.mrb[0].mxu0
      %3344 = vmatprep.mubr.bf16.mxu0 0
      %3345 = vmatmul.mubr.bf16.gmra.mrb[0].mxu0 %v3259
      %v3346 = vpop.f32.mrb[0].mxu0
      %v3347 = vadd.f32 0.0, %v3346
      %v3348 = vpop.f32.mrb[0].mxu0
      %v3349 = vpop.f32.mrb[0].mxu0
      %v3350 = vadd.f32 0.0, %v3349
      %v3351 = vpop.f32.mrb[0].mxu0
      %3352 = vmatprep.mubr.bf16.mxu0 0
      %3353 = vmatmul.mubr.bf16.gmra.mrb[0].mxu0 %v3262
      %v3354 = vpop.f32.mrb[0].mxu0
      %v3355 = vadd.f32 0.0, %v3354
      %v3356 = vpop.f32.mrb[0].mxu0
      %v3357 = vpop.f32.mrb[0].mxu0
      %v3358 = vadd.f32 0.0, %v3357
      %v3359 = vpop.f32.mrb[0].mxu0
      %3360 = vdwg.mxu0
      %v3361 = vadd.f32 %v3150, %v3299
      %v3362 = vadd.f32 %v3151, %v3302
      %v3363 = vadd.f32 %v3152, %v3307
      %v3364 = vadd.f32 %v3153, %v3310
      %v3365 = vadd.f32 %v3154, %v3315
      %v3366 = vadd.f32 %v3155, %v3318
      %v3367 = vadd.f32 %v3156, %v3323
      %v3368 = vadd.f32 %v3157, %v3326
      %v3369 = vadd.f32 %v3158, %v3331
      %v3370 = vadd.f32 %v3159, %v3334
      %v3371 = vadd.f32 %v3160, %v3339
      %v3372 = vadd.f32 %v3161, %v3342
      %v3373 = vadd.f32 %v3162, %v3347
      %v3374 = vadd.f32 %v3163, %v3350
      %v3375 = vadd.f32 %v3164, %v3355
      %v3376 = vadd.f32 %v3165, %v3358
      %v3377 = vld [vmem:[%s3166] sm:$0xf]
      %v3378 = vld [vmem:[%s3166 + $0x4] sm:$0x1]
      %v3379 = vld [vmem:[%s3166 + $0x8] sm:$0xf]
      %v3380 = vld [vmem:[%s3166 + $0xc] sm:$0x1]
      %v3381 = vld [vmem:[%s3166 + $0x10] sm:$0xf]
      %v3382 = vld [vmem:[%s3166 + $0x14] sm:$0x1]
      %v3383 = vld [vmem:[%s3166 + $0x18] sm:$0xf]
      %v3384 = vld [vmem:[%s3166 + $0x1c] sm:$0x1]
      %v3385 = vld [vmem:[%s3166 + $0x20] sm:$0xf]
      %v3386 = vld [vmem:[%s3166 + $0x24] sm:$0x1]
      %v3387 = vld [vmem:[%s3166 + $0x28] sm:$0xf]
      %v3388 = vld [vmem:[%s3166 + $0x2c] sm:$0x1]
      %v3389 = vld [vmem:[%s3166 + $0x30] sm:$0xf]
      %v3390 = vld [vmem:[%s3166 + $0x34] sm:$0x1]
      %v3391 = vld [vmem:[%s3166 + $0x38] sm:$0xf]
      %v3392 = vld [vmem:[%s3166 + $0x3c] sm:$0x1]
      %v3393 = vld [vmem:[%s3166 + $0x40] sm:$0xf]
      %v3394 = vld [vmem:[%s3166 + $0x44] sm:$0x1]
      %v3395 = vld [vmem:[%s3166 + $0x48] sm:$0xf]
      %v3396 = vld [vmem:[%s3166 + $0x4c] sm:$0x1]
      %v3397 = vld [vmem:[%s3166 + $0x50] sm:$0xf]
      %v3398 = vld [vmem:[%s3166 + $0x54] sm:$0x1]
      %v3399 = vld [vmem:[%s3166 + $0x58] sm:$0xf]
      %v3400 = vld [vmem:[%s3166 + $0x5c] sm:$0x1]
      %v3401 = vld [vmem:[%s3166 + $0x60] sm:$0xf]
      %v3402 = vld [vmem:[%s3166 + $0x64] sm:$0x1]
      %v3403 = vld [vmem:[%s3166 + $0x68] sm:$0xf]
      %v3404 = vld [vmem:[%s3166 + $0x6c] sm:$0x1]
      %v3405 = vld [vmem:[%s3166 + $0x70] sm:$0xf]
      %v3406 = vld [vmem:[%s3166 + $0x74] sm:$0x1]
      %v3407 = vld [vmem:[%s3166 + $0x78] sm:$0xf]
      %v3408 = vld [vmem:[%s3166 + $0x7c] sm:$0x1]
      %v3410 = vshrl.u32 %v3377, 16
      %v3412 = vrot.slane %v3410, 4
      %v3413 = vshll.u32 %v3377, 16
      %v3415 = vrot.slane %v3413, 5
      %v3416 = vor.u32 %v3412, %v3415
      %v3417 = vrot.slane %v3416, 4
      %v3419 = vshll.u32 %v3378, 16
      %v3421 = vrot.slane %v3419, 5
      %v3422 = vsel %vm1378, %v3417, %v3421
      %v3424 = vshrl.u32 %v3379, 16
      %v3426 = vrot.slane %v3424, 4
      %v3427 = vshll.u32 %v3379, 16
      %v3429 = vrot.slane %v3427, 5
      %v3430 = vor.u32 %v3426, %v3429
      %v3431 = vrot.slane %v3430, 4
      %v3433 = vshll.u32 %v3380, 16
      %v3435 = vrot.slane %v3433, 5
      %v3436 = vsel %vm1378, %v3431, %v3435
      %v3438 = vshrl.u32 %v3381, 16
      %v3440 = vrot.slane %v3438, 4
      %v3441 = vshll.u32 %v3381, 16
      %v3443 = vrot.slane %v3441, 5
      %v3444 = vor.u32 %v3440, %v3443
      %v3445 = vrot.slane %v3444, 4
      %v3447 = vshll.u32 %v3382, 16
      %v3449 = vrot.slane %v3447, 5
      %v3450 = vsel %vm1378, %v3445, %v3449
      %v3452 = vshrl.u32 %v3383, 16
      %v3454 = vrot.slane %v3452, 4
      %v3455 = vshll.u32 %v3383, 16
      %v3457 = vrot.slane %v3455, 5
      %v3458 = vor.u32 %v3454, %v3457
      %v3459 = vrot.slane %v3458, 4
      %v3461 = vshll.u32 %v3384, 16
      %v3463 = vrot.slane %v3461, 5
      %v3464 = vsel %vm1378, %v3459, %v3463
      %v3466 = vshrl.u32 %v3385, 16
      %v3468 = vrot.slane %v3466, 4
      %v3469 = vshll.u32 %v3385, 16
      %v3471 = vrot.slane %v3469, 5
      %v3472 = vor.u32 %v3468, %v3471
      %v3473 = vrot.slane %v3472, 4
      %v3475 = vshll.u32 %v3386, 16
      %v3477 = vrot.slane %v3475, 5
      %v3478 = vsel %vm1378, %v3473, %v3477
      %v3480 = vshrl.u32 %v3387, 16
      %v3482 = vrot.slane %v3480, 4
      %v3483 = vshll.u32 %v3387, 16
      %v3485 = vrot.slane %v3483, 5
      %v3486 = vor.u32 %v3482, %v3485
      %v3487 = vrot.slane %v3486, 4
      %v3489 = vshll.u32 %v3388, 16
      %v3491 = vrot.slane %v3489, 5
      %v3492 = vsel %vm1378, %v3487, %v3491
      %v3494 = vshrl.u32 %v3389, 16
      %v3496 = vrot.slane %v3494, 4
      %v3497 = vshll.u32 %v3389, 16
      %v3499 = vrot.slane %v3497, 5
      %v3500 = vor.u32 %v3496, %v3499
      %v3501 = vrot.slane %v3500, 4
      %v3503 = vshll.u32 %v3390, 16
      %v3505 = vrot.slane %v3503, 5
      %v3506 = vsel %vm1378, %v3501, %v3505
      %v3508 = vshrl.u32 %v3391, 16
      %v3510 = vrot.slane %v3508, 4
      %v3511 = vshll.u32 %v3391, 16
      %v3513 = vrot.slane %v3511, 5
      %v3514 = vor.u32 %v3510, %v3513
      %v3515 = vrot.slane %v3514, 4
      %v3517 = vshll.u32 %v3392, 16
      %v3519 = vrot.slane %v3517, 5
      %v3520 = vsel %vm1378, %v3515, %v3519
      %v3522 = vshrl.u32 %v3393, 16
      %v3524 = vrot.slane %v3522, 4
      %v3525 = vshll.u32 %v3393, 16
      %v3527 = vrot.slane %v3525, 5
      %v3528 = vor.u32 %v3524, %v3527
      %v3529 = vrot.slane %v3528, 4
      %v3531 = vshll.u32 %v3394, 16
      %v3533 = vrot.slane %v3531, 5
      %v3534 = vsel %vm1378, %v3529, %v3533
      %v3536 = vshrl.u32 %v3395, 16
      %v3538 = vrot.slane %v3536, 4
      %v3539 = vshll.u32 %v3395, 16
      %v3541 = vrot.slane %v3539, 5
      %v3542 = vor.u32 %v3538, %v3541
      %v3543 = vrot.slane %v3542, 4
      %v3545 = vshll.u32 %v3396, 16
      %v3547 = vrot.slane %v3545, 5
      %v3548 = vsel %vm1378, %v3543, %v3547
      %v3550 = vshrl.u32 %v3397, 16
      %v3552 = vrot.slane %v3550, 4
      %v3553 = vshll.u32 %v3397, 16
      %v3555 = vrot.slane %v3553, 5
      %v3556 = vor.u32 %v3552, %v3555
      %v3557 = vrot.slane %v3556, 4
      %v3559 = vshll.u32 %v3398, 16
      %v3561 = vrot.slane %v3559, 5
      %v3562 = vsel %vm1378, %v3557, %v3561
      %v3564 = vshrl.u32 %v3399, 16
      %v3566 = vrot.slane %v3564, 4
      %v3567 = vshll.u32 %v3399, 16
      %v3569 = vrot.slane %v3567, 5
      %v3570 = vor.u32 %v3566, %v3569
      %v3571 = vrot.slane %v3570, 4
      %v3573 = vshll.u32 %v3400, 16
      %v3575 = vrot.slane %v3573, 5
      %v3576 = vsel %vm1378, %v3571, %v3575
      %v3578 = vshrl.u32 %v3401, 16
      %v3580 = vrot.slane %v3578, 4
      %v3581 = vshll.u32 %v3401, 16
      %v3583 = vrot.slane %v3581, 5
      %v3584 = vor.u32 %v3580, %v3583
      %v3585 = vrot.slane %v3584, 4
      %v3587 = vshll.u32 %v3402, 16
      %v3589 = vrot.slane %v3587, 5
      %v3590 = vsel %vm1378, %v3585, %v3589
      %v3592 = vshrl.u32 %v3403, 16
      %v3594 = vrot.slane %v3592, 4
      %v3595 = vshll.u32 %v3403, 16
      %v3597 = vrot.slane %v3595, 5
      %v3598 = vor.u32 %v3594, %v3597
      %v3599 = vrot.slane %v3598, 4
      %v3601 = vshll.u32 %v3404, 16
      %v3603 = vrot.slane %v3601, 5
      %v3604 = vsel %vm1378, %v3599, %v3603
      %v3606 = vshrl.u32 %v3405, 16
      %v3608 = vrot.slane %v3606, 4
      %v3609 = vshll.u32 %v3405, 16
      %v3611 = vrot.slane %v3609, 5
      %v3612 = vor.u32 %v3608, %v3611
      %v3613 = vrot.slane %v3612, 4
      %v3615 = vshll.u32 %v3406, 16
      %v3617 = vrot.slane %v3615, 5
      %v3618 = vsel %vm1378, %v3613, %v3617
      %v3620 = vshrl.u32 %v3407, 16
      %v3622 = vrot.slane %v3620, 4
      %v3623 = vshll.u32 %v3407, 16
      %v3625 = vrot.slane %v3623, 5
      %v3626 = vor.u32 %v3622, %v3625
      %v3627 = vrot.slane %v3626, 4
      %v3629 = vshll.u32 %v3408, 16
      %v3631 = vrot.slane %v3629, 5
      %v3632 = vsel %vm1378, %v3627, %v3631
      %s3633 = scalar_lea.vmem %s4, 112
      %v3634 = vld [vmem:[%s3633] sm:$0xf]
      %v3635 = vld [vmem:[%s3633 + $0x4] sm:$0xf]
      %v3636 = vld [vmem:[%s3633 + $0x8] sm:$0xf]
      %v3637 = vld [vmem:[%s3633 + $0xc] sm:$0xf]
      %v3638 = vunpack.c.l.b16 %v3422
      %v3639 = vunpack.c.l.b16 %v3436
      %v3640 = vunpack.c.l.b16 %v3450
      %v3641 = vunpack.c.l.b16 %v3464
      %v3642 = vunpack.c.l.b16 %v3478
      %v3643 = vunpack.c.l.b16 %v3492
      %v3644 = vunpack.c.l.b16 %v3506
      %v3645 = vunpack.c.l.b16 %v3520
      %v3646 = vunpack.c.l.b16 %v3534
      %v3647 = vunpack.c.l.b16 %v3548
      %v3648 = vunpack.c.l.b16 %v3562
      %v3649 = vunpack.c.l.b16 %v3576
      %v3650 = vunpack.c.l.b16 %v3590
      %v3651 = vunpack.c.l.b16 %v3604
      %v3652 = vunpack.c.l.b16 %v3618
      %v3653 = vunpack.c.l.b16 %v3632
      %v3654 = vpack.c.b16 %v3639, %v3638
      %v3655 = vpack.c.b16 %v3641, %v3640
      %v3656 = vpack.c.b16 %v3643, %v3642
      %v3657 = vpack.c.b16 %v3645, %v3644
      %v3658 = vpack.c.b16 %v3647, %v3646
      %v3659 = vpack.c.b16 %v3649, %v3648
      %v3660 = vpack.c.b16 %v3651, %v3650
      %v3661 = vpack.c.b16 %v3653, %v3652
      %v3666 = vunpack.c.l.b16 %v3634
      %v3667 = vunpack.c.l.b16 %v3635
      %v3668 = vunpack.c.l.b16 %v3636
      %v3669 = vunpack.c.l.b16 %v3637
      %v3670 = vpack.c.b16 %v3667, %v3666
      %v3671 = vpack.c.b16 %v3669, %v3668
      %v3675 = vsel %vm1644, %v3654, 0
      %v3678 = vsel %vm1644, %v3655, 0
      %v3681 = vsel %vm1644, %v3656, 0
      %v3684 = vsel %vm1644, %v3657, 0
      %v3687 = vsel %vm1644, %v3658, 0
      %v3690 = vsel %vm1644, %v3659, 0
      %v3693 = vsel %vm1644, %v3660, 0
      %v3696 = vsel %vm1644, %v3661, 0
      %3698 = vmatprep.subr.bf16.mxu0 0
      %3699 = vmatpush1.bf16.msra.mxu0 %v3670
      %3700 = vmatprep.subr.bf16.mxu0 0
      %3701 = vmatpush1.bf16.msra.mxu0 %v3671
      %3702 = vmatprep.subr.bf16.mxu0 0
      %3703 = vmatpush1.bf16.msra.mxu0 0
      %3704 = vmatprep.subr.bf16.mxu0 0
      %3705 = vmatpush1.bf16.msra.mxu0 0
      %3706 = vmatprep.subr.bf16.mxu0 0
      %3707 = vmatpush1.bf16.msra.mxu0 0
      %3708 = vmatprep.subr.bf16.mxu0 0
      %3709 = vmatpush1.bf16.msra.mxu0 0
      %3710 = vmatprep.subr.bf16.mxu0 0
      %3711 = vmatpush1.bf16.msra.mxu0 0
      %3712 = vmatprep.subr.bf16.mxu0 0
      %3713 = vmatpush1.bf16.msra.mxu0 0
      %3714 = vmatprep.subr.bf16.mxu0 0
      %3715 = vmatpush1.bf16.msra.mxu0 0
      %3716 = vmatprep.subr.bf16.mxu0 0
      %3717 = vmatpush1.bf16.msra.mxu0 0
      %3718 = vmatprep.subr.bf16.mxu0 0
      %3719 = vmatpush1.bf16.msra.mxu0 0
      %3720 = vmatprep.subr.bf16.mxu0 0
      %3721 = vmatpush1.bf16.msra.mxu0 0
      %3722 = vmatprep.subr.bf16.mxu0 0
      %3723 = vmatpush1.bf16.msra.mxu0 0
      %3724 = vmatprep.subr.bf16.mxu0 0
      %3725 = vmatpush1.bf16.msra.mxu0 0
      %3726 = vmatprep.subr.bf16.mxu0 0
      %3727 = vmatpush1.bf16.msra.mxu0 0
      %3728 = vmatprep.subr.bf16.mxu0 0
      %3729 = vmatpush1.bf16.msra.mxu0 0
      %3730 = vmatprep.mubr.bf16.mxu0 0
      %3731 = vmatmul.mubr.bf16.gmra.mrb[0].mxu0 %v3675
      %v3732 = vpop.f32.mrb[0].mxu0
      %v3733 = vadd.f32 0.0, %v3732
      %v3734 = vpop.f32.mrb[0].mxu0
      %v3735 = vpop.f32.mrb[0].mxu0
      %v3736 = vadd.f32 0.0, %v3735
      %v3737 = vpop.f32.mrb[0].mxu0
      %3738 = vmatprep.mubr.bf16.mxu0 0
      %3739 = vmatmul.mubr.bf16.gmra.mrb[0].mxu0 %v3678
      %v3740 = vpop.f32.mrb[0].mxu0
      %v3741 = vadd.f32 0.0, %v3740
      %v3742 = vpop.f32.mrb[0].mxu0
      %v3743 = vpop.f32.mrb[0].mxu0
      %v3744 = vadd.f32 0.0, %v3743
      %v3745 = vpop.f32.mrb[0].mxu0
      %3746 = vmatprep.mubr.bf16.mxu0 0
      %3747 = vmatmul.mubr.bf16.gmra.mrb[0].mxu0 %v3681
      %v3748 = vpop.f32.mrb[0].mxu0
      %v3749 = vadd.f32 0.0, %v3748
      %v3750 = vpop.f32.mrb[0].mxu0
      %v3751 = vpop.f32.mrb[0].mxu0
      %v3752 = vadd.f32 0.0, %v3751
      %v3753 = vpop.f32.mrb[0].mxu0
      %3754 = vmatprep.mubr.bf16.mxu0 0
      %3755 = vmatmul.mubr.bf16.gmra.mrb[0].mxu0 %v3684
      %v3756 = vpop.f32.mrb[0].mxu0
      %v3757 = vadd.f32 0.0, %v3756
      %v3758 = vpop.f32.mrb[0].mxu0
      %v3759 = vpop.f32.mrb[0].mxu0
      %v3760 = vadd.f32 0.0, %v3759
      %v3761 = vpop.f32.mrb[0].mxu0
      %3762 = vmatprep.mubr.bf16.mxu0 0
      %3763 = vmatmul.mubr.bf16.gmra.mrb[0].mxu0 %v3687
      %v3764 = vpop.f32.mrb[0].mxu0
      %v3765 = vadd.f32 0.0, %v3764
      %v3766 = vpop.f32.mrb[0].mxu0
      %v3767 = vpop.f32.mrb[0].mxu0
      %v3768 = vadd.f32 0.0, %v3767
      %v3769 = vpop.f32.mrb[0].mxu0
      %3770 = vmatprep.mubr.bf16.mxu0 0
      %3771 = vmatmul.mubr.bf16.gmra.mrb[0].mxu0 %v3690
      %v3772 = vpop.f32.mrb[0].mxu0
      %v3773 = vadd.f32 0.0, %v3772
      %v3774 = vpop.f32.mrb[0].mxu0
      %v3775 = vpop.f32.mrb[0].mxu0
      %v3776 = vadd.f32 0.0, %v3775
      %v3777 = vpop.f32.mrb[0].mxu0
      %3778 = vmatprep.mubr.bf16.mxu0 0
      %3779 = vmatmul.mubr.bf16.gmra.mrb[0].mxu0 %v3693
      %v3780 = vpop.f32.mrb[0].mxu0
      %v3781 = vadd.f32 0.0, %v3780
      %v3782 = vpop.f32.mrb[0].mxu0
      %v3783 = vpop.f32.mrb[0].mxu0
      %v3784 = vadd.f32 0.0, %v3783
      %v3785 = vpop.f32.mrb[0].mxu0
      %3786 = vmatprep.mubr.bf16.mxu0 0
      %3787 = vmatmul.mubr.bf16.gmra.mrb[0].mxu0 %v3696
      %v3788 = vpop.f32.mrb[0].mxu0
      %v3789 = vadd.f32 0.0, %v3788
      %v3790 = vpop.f32.mrb[0].mxu0
      %v3791 = vpop.f32.mrb[0].mxu0
      %v3792 = vadd.f32 0.0, %v3791
      %v3793 = vpop.f32.mrb[0].mxu0
      %3794 = vdwg.mxu0
      %v3795 = vadd.f32 %v3361, %v3733
      %v3796 = vadd.f32 %v3362, %v3736
      %v3797 = vadd.f32 %v3363, %v3741
      %v3798 = vadd.f32 %v3364, %v3744
      %v3799 = vadd.f32 %v3365, %v3749
      %v3800 = vadd.f32 %v3366, %v3752
      %v3801 = vadd.f32 %v3367, %v3757
      %v3802 = vadd.f32 %v3368, %v3760
      %v3803 = vadd.f32 %v3369, %v3765
      %v3804 = vadd.f32 %v3370, %v3768
      %v3805 = vadd.f32 %v3371, %v3773
      %v3806 = vadd.f32 %v3372, %v3776
      %v3807 = vadd.f32 %v3373, %v3781
      %v3808 = vadd.f32 %v3374, %v3784
      %v3809 = vadd.f32 %v3375, %v3789
      %v3810 = vadd.f32 %v3376, %v3792
      %v3811 = vld [vmem:[%s3166] sm:$0xe]
      %v3812 = vld [vmem:[%s3166 + $0x8] sm:$0xe]
      %v3813 = vld [vmem:[%s3166 + $0x10] sm:$0xe]
      %v3814 = vld [vmem:[%s3166 + $0x18] sm:$0xe]
      %v3815 = vld [vmem:[%s3166 + $0x20] sm:$0xe]
      %v3816 = vld [vmem:[%s3166 + $0x28] sm:$0xe]
      %v3817 = vld [vmem:[%s3166 + $0x30] sm:$0xe]
      %v3818 = vld [vmem:[%s3166 + $0x38] sm:$0xe]
      %v3819 = vld [vmem:[%s3166 + $0x40] sm:$0xe]
      %v3820 = vld [vmem:[%s3166 + $0x48] sm:$0xe]
      %v3821 = vld [vmem:[%s3166 + $0x50] sm:$0xe]
      %v3822 = vld [vmem:[%s3166 + $0x58] sm:$0xe]
      %v3823 = vld [vmem:[%s3166 + $0x60] sm:$0xe]
      %v3824 = vld [vmem:[%s3166 + $0x68] sm:$0xe]
      %v3825 = vld [vmem:[%s3166 + $0x70] sm:$0xe]
      %v3826 = vld [vmem:[%s3166 + $0x78] sm:$0xe]
      %v3859 = vrot.slane %v3811, 5
      %v3860 = vrot.slane %v3859, 4
      %v3861 = vrot.slane %v3378, 5
      %v3862 = vsel %vm1989, %v3860, %v3861
      %v3863 = vrot.slane %v3812, 5
      %v3864 = vrot.slane %v3863, 4
      %v3865 = vrot.slane %v3380, 5
      %v3866 = vsel %vm1989, %v3864, %v3865
      %v3867 = vrot.slane %v3813, 5
      %v3868 = vrot.slane %v3867, 4
      %v3869 = vrot.slane %v3382, 5
      %v3870 = vsel %vm1989, %v3868, %v3869
      %v3871 = vrot.slane %v3814, 5
      %v3872 = vrot.slane %v3871, 4
      %v3873 = vrot.slane %v3384, 5
      %v3874 = vsel %vm1989, %v3872, %v3873
      %v3875 = vrot.slane %v3815, 5
      %v3876 = vrot.slane %v3875, 4
      %v3877 = vrot.slane %v3386, 5
      %v3878 = vsel %vm1989, %v3876, %v3877
      %v3879 = vrot.slane %v3816, 5
      %v3880 = vrot.slane %v3879, 4
      %v3881 = vrot.slane %v3388, 5
      %v3882 = vsel %vm1989, %v3880, %v3881
      %v3883 = vrot.slane %v3817, 5
      %v3884 = vrot.slane %v3883, 4
      %v3885 = vrot.slane %v3390, 5
      %v3886 = vsel %vm1989, %v3884, %v3885
      %v3887 = vrot.slane %v3818, 5
      %v3888 = vrot.slane %v3887, 4
      %v3889 = vrot.slane %v3392, 5
      %v3890 = vsel %vm1989, %v3888, %v3889
      %v3891 = vrot.slane %v3819, 5
      %v3892 = vrot.slane %v3891, 4
      %v3893 = vrot.slane %v3394, 5
      %v3894 = vsel %vm1989, %v3892, %v3893
      %v3895 = vrot.slane %v3820, 5
      %v3896 = vrot.slane %v3895, 4
      %v3897 = vrot.slane %v3396, 5
      %v3898 = vsel %vm1989, %v3896, %v3897
      %v3899 = vrot.slane %v3821, 5
      %v3900 = vrot.slane %v3899, 4
      %v3901 = vrot.slane %v3398, 5
      %v3902 = vsel %vm1989, %v3900, %v3901
      %v3903 = vrot.slane %v3822, 5
      %v3904 = vrot.slane %v3903, 4
      %v3905 = vrot.slane %v3400, 5
      %v3906 = vsel %vm1989, %v3904, %v3905
      %v3907 = vrot.slane %v3823, 5
      %v3908 = vrot.slane %v3907, 4
      %v3909 = vrot.slane %v3402, 5
      %v3910 = vsel %vm1989, %v3908, %v3909
      %v3911 = vrot.slane %v3824, 5
      %v3912 = vrot.slane %v3911, 4
      %v3913 = vrot.slane %v3404, 5
      %v3914 = vsel %vm1989, %v3912, %v3913
      %v3915 = vrot.slane %v3825, 5
      %v3916 = vrot.slane %v3915, 4
      %v3917 = vrot.slane %v3406, 5
      %v3918 = vsel %vm1989, %v3916, %v3917
      %v3919 = vrot.slane %v3826, 5
      %v3920 = vrot.slane %v3919, 4
      %v3921 = vrot.slane %v3408, 5
      %v3922 = vsel %vm1989, %v3920, %v3921
      %s3923 = scalar_lea.vmem %s4, 128
      %v3924 = vld [vmem:[%s3923] sm:$0xf]
      %v3925 = vld [vmem:[%s3923 + $0x4] sm:$0xf]
      %v3926 = vld [vmem:[%s3923 + $0x8] sm:$0xf]
      %v3927 = vld [vmem:[%s3923 + $0xc] sm:$0xf]
      %v3928 = vunpack.c.l.b16 %v3862
      %v3929 = vunpack.c.l.b16 %v3866
      %v3930 = vunpack.c.l.b16 %v3870
      %v3931 = vunpack.c.l.b16 %v3874
      %v3932 = vunpack.c.l.b16 %v3878
      %v3933 = vunpack.c.l.b16 %v3882
      %v3934 = vunpack.c.l.b16 %v3886
      %v3935 = vunpack.c.l.b16 %v3890
      %v3936 = vunpack.c.l.b16 %v3894
      %v3937 = vunpack.c.l.b16 %v3898
      %v3938 = vunpack.c.l.b16 %v3902
      %v3939 = vunpack.c.l.b16 %v3906
      %v3940 = vunpack.c.l.b16 %v3910
      %v3941 = vunpack.c.l.b16 %v3914
      %v3942 = vunpack.c.l.b16 %v3918
      %v3943 = vunpack.c.l.b16 %v3922
      %v3944 = vpack.c.b16 %v3929, %v3928
      %v3945 = vpack.c.b16 %v3931, %v3930
      %v3946 = vpack.c.b16 %v3933, %v3932
      %v3947 = vpack.c.b16 %v3935, %v3934
      %v3948 = vpack.c.b16 %v3937, %v3936
      %v3949 = vpack.c.b16 %v3939, %v3938
      %v3950 = vpack.c.b16 %v3941, %v3940
      %v3951 = vpack.c.b16 %v3943, %v3942
      %v3956 = vunpack.c.l.b16 %v3924
      %v3957 = vunpack.c.l.b16 %v3925
      %v3958 = vunpack.c.l.b16 %v3926
      %v3959 = vunpack.c.l.b16 %v3927
      %v3960 = vpack.c.b16 %v3957, %v3956
      %v3961 = vpack.c.b16 %v3959, %v3958
      %v3965 = vsel %vm1644, %v3944, 0
      %v3968 = vsel %vm1644, %v3945, 0
      %v3971 = vsel %vm1644, %v3946, 0
      %v3974 = vsel %vm1644, %v3947, 0
      %v3977 = vsel %vm1644, %v3948, 0
      %v3980 = vsel %vm1644, %v3949, 0
      %v3983 = vsel %vm1644, %v3950, 0
      %v3986 = vsel %vm1644, %v3951, 0
      %3988 = vmatprep.subr.bf16.mxu0 0
      %3989 = vmatpush1.bf16.msra.mxu0 %v3960
      %3990 = vmatprep.subr.bf16.mxu0 0
      %3991 = vmatpush1.bf16.msra.mxu0 %v3961
      %3992 = vmatprep.subr.bf16.mxu0 0
      %3993 = vmatpush1.bf16.msra.mxu0 0
      %3994 = vmatprep.subr.bf16.mxu0 0
      %3995 = vmatpush1.bf16.msra.mxu0 0
      %3996 = vmatprep.subr.bf16.mxu0 0
      %3997 = vmatpush1.bf16.msra.mxu0 0
      %3998 = vmatprep.subr.bf16.mxu0 0
      %3999 = vmatpush1.bf16.msra.mxu0 0
      %4000 = vmatprep.subr.bf16.mxu0 0
      %4001 = vmatpush1.bf16.msra.mxu0 0
      %4002 = vmatprep.subr.bf16.mxu0 0
      %4003 = vmatpush1.bf16.msra.mxu0 0
      %4004 = vmatprep.subr.bf16.mxu0 0
      %4005 = vmatpush1.bf16.msra.mxu0 0
      %4006 = vmatprep.subr.bf16.mxu0 0
      %4007 = vmatpush1.bf16.msra.mxu0 0
      %4008 = vmatprep.subr.bf16.mxu0 0
      %4009 = vmatpush1.bf16.msra.mxu0 0
      %4010 = vmatprep.subr.bf16.mxu0 0
      %4011 = vmatpush1.bf16.msra.mxu0 0
      %4012 = vmatprep.subr.bf16.mxu0 0
      %4013 = vmatpush1.bf16.msra.mxu0 0
      %4014 = vmatprep.subr.bf16.mxu0 0
      %4015 = vmatpush1.bf16.msra.mxu0 0
      %4016 = vmatprep.subr.bf16.mxu0 0
      %4017 = vmatpush1.bf16.msra.mxu0 0
      %4018 = vmatprep.subr.bf16.mxu0 0
      %4019 = vmatpush1.bf16.msra.mxu0 0
      %4020 = vmatprep.mubr.bf16.mxu0 0
      %4021 = vmatmul.mubr.bf16.gmra.mrb[0].mxu0 %v3965
      %v4022 = vpop.f32.mrb[0].mxu0
      %v4023 = vadd.f32 0.0, %v4022
      %v4024 = vpop.f32.mrb[0].mxu0
      %v4025 = vpop.f32.mrb[0].mxu0
      %v4026 = vadd.f32 0.0, %v4025
      %v4027 = vpop.f32.mrb[0].mxu0
      %4028 = vmatprep.mubr.bf16.mxu0 0
      %4029 = vmatmul.mubr.bf16.gmra.mrb[0].mxu0 %v3968
      %v4030 = vpop.f32.mrb[0].mxu0
      %v4031 = vadd.f32 0.0, %v4030
      %v4032 = vpop.f32.mrb[0].mxu0
      %v4033 = vpop.f32.mrb[0].mxu0
      %v4034 = vadd.f32 0.0, %v4033
      %v4035 = vpop.f32.mrb[0].mxu0
      %4036 = vmatprep.mubr.bf16.mxu0 0
      %4037 = vmatmul.mubr.bf16.gmra.mrb[0].mxu0 %v3971
      %v4038 = vpop.f32.mrb[0].mxu0
      %v4039 = vadd.f32 0.0, %v4038
      %v4040 = vpop.f32.mrb[0].mxu0
      %v4041 = vpop.f32.mrb[0].mxu0
      %v4042 = vadd.f32 0.0, %v4041
      %v4043 = vpop.f32.mrb[0].mxu0
      %4044 = vmatprep.mubr.bf16.mxu0 0
      %4045 = vmatmul.mubr.bf16.gmra.mrb[0].mxu0 %v3974
      %v4046 = vpop.f32.mrb[0].mxu0
      %v4047 = vadd.f32 0.0, %v4046
      %v4048 = vpop.f32.mrb[0].mxu0
      %v4049 = vpop.f32.mrb[0].mxu0
      %v4050 = vadd.f32 0.0, %v4049
      %v4051 = vpop.f32.mrb[0].mxu0
      %4052 = vmatprep.mubr.bf16.mxu0 0
      %4053 = vmatmul.mubr.bf16.gmra.mrb[0].mxu0 %v3977
      %v4054 = vpop.f32.mrb[0].mxu0
      %v4055 = vadd.f32 0.0, %v4054
      %v4056 = vpop.f32.mrb[0].mxu0
      %v4057 = vpop.f32.mrb[0].mxu0
      %v4058 = vadd.f32 0.0, %v4057
      %v4059 = vpop.f32.mrb[0].mxu0
      %4060 = vmatprep.mubr.bf16.mxu0 0
      %4061 = vmatmul.mubr.bf16.gmra.mrb[0].mxu0 %v3980
      %v4062 = vpop.f32.mrb[0].mxu0
      %v4063 = vadd.f32 0.0, %v4062
      %v4064 = vpop.f32.mrb[0].mxu0
      %v4065 = vpop.f32.mrb[0].mxu0
      %v4066 = vadd.f32 0.0, %v4065
      %v4067 = vpop.f32.mrb[0].mxu0
      %4068 = vmatprep.mubr.bf16.mxu0 0
      %4069 = vmatmul.mubr.bf16.gmra.mrb[0].mxu0 %v3983
      %v4070 = vpop.f32.mrb[0].mxu0
      %v4071 = vadd.f32 0.0, %v4070
      %v4072 = vpop.f32.mrb[0].mxu0
      %v4073 = vpop.f32.mrb[0].mxu0
      %v4074 = vadd.f32 0.0, %v4073
      %v4075 = vpop.f32.mrb[0].mxu0
      %4076 = vmatprep.mubr.bf16.mxu0 0
      %4077 = vmatmul.mubr.bf16.gmra.mrb[0].mxu0 %v3986
      %v4078 = vpop.f32.mrb[0].mxu0
      %v4079 = vadd.f32 0.0, %v4078
      %v4080 = vpop.f32.mrb[0].mxu0
      %v4081 = vpop.f32.mrb[0].mxu0
      %v4082 = vadd.f32 0.0, %v4081
      %v4083 = vpop.f32.mrb[0].mxu0
      %4084 = vdwg.mxu0
      %v4085 = vadd.f32 %v3795, %v4023
      %v4086 = vadd.f32 %v3796, %v4026
      %v4087 = vadd.f32 %v3797, %v4031
      %v4088 = vadd.f32 %v3798, %v4034
      %v4089 = vadd.f32 %v3799, %v4039
      %v4090 = vadd.f32 %v3800, %v4042
      %v4091 = vadd.f32 %v3801, %v4047
      %v4092 = vadd.f32 %v3802, %v4050
      %v4093 = vadd.f32 %v3803, %v4055
      %v4094 = vadd.f32 %v3804, %v4058
      %v4095 = vadd.f32 %v3805, %v4063
      %v4096 = vadd.f32 %v3806, %v4066
      %v4097 = vadd.f32 %v3807, %v4071
      %v4098 = vadd.f32 %v3808, %v4074
      %v4099 = vadd.f32 %v3809, %v4079
      %v4100 = vadd.f32 %v3810, %v4082
      %v4101 = vld [vmem:[%s5] sm:$0x1]
      %v4103 = vlaneseq
      %v4104 = vshrl.u32 %v4103, 7
      %v4105 = vsub.s32 0, %v4104
      %v4106 = vrot.slane %v4101, %v4105
      %v4108 = vadd.f32 %v4085, %v4106
      %v4109 = vadd.f32 %v4086, %v4106
      %v4110 = vadd.f32 %v4087, %v4106
      %v4111 = vadd.f32 %v4088, %v4106
      %v4112 = vadd.f32 %v4089, %v4106
      %v4113 = vadd.f32 %v4090, %v4106
      %v4114 = vadd.f32 %v4091, %v4106
      %v4115 = vadd.f32 %v4092, %v4106
      %v4116 = vadd.f32 %v4093, %v4106
      %v4117 = vadd.f32 %v4094, %v4106
      %v4118 = vadd.f32 %v4095, %v4106
      %v4119 = vadd.f32 %v4096, %v4106
      %v4120 = vadd.f32 %v4097, %v4106
      %v4121 = vadd.f32 %v4098, %v4106
      %v4122 = vadd.f32 %v4099, %v4106
      %v4123 = vadd.f32 %v4100, %v4106
      %v4124 = vpack.c.bf16 %v4108, %v4108
      %v4125 = vpack.c.bf16 %v4109, %v4109
      %v4126 = vpack.c.bf16 %v4110, %v4110
      %v4127 = vpack.c.bf16 %v4111, %v4111
      %v4128 = vpack.c.bf16 %v4112, %v4112
      %v4129 = vpack.c.bf16 %v4113, %v4113
      %v4130 = vpack.c.bf16 %v4114, %v4114
      %v4131 = vpack.c.bf16 %v4115, %v4115
      %v4132 = vpack.c.bf16 %v4116, %v4116
      %v4133 = vpack.c.bf16 %v4117, %v4117
      %v4134 = vpack.c.bf16 %v4118, %v4118
      %v4135 = vpack.c.bf16 %v4119, %v4119
      %v4136 = vpack.c.bf16 %v4120, %v4120
      %v4137 = vpack.c.bf16 %v4121, %v4121
      %v4138 = vpack.c.bf16 %v4122, %v4122
      %v4139 = vpack.c.bf16 %v4123, %v4123
      %vm4140 = vcmask 125952
      %4141 = vst.msk [vmem:[%s336] sm:$0xf] %vm4140, %v4124
      %4142 = vst.msk [vmem:[%s336 + $0x4] sm:$0xf] %vm4140, %v4125
      %4143 = vst.msk [vmem:[%s336 + $0x8] sm:$0xf] %vm4140, %v4126
      %4144 = vst.msk [vmem:[%s336 + $0xc] sm:$0xf] %vm4140, %v4127
      %4145 = vst.msk [vmem:[%s336 + $0x10] sm:$0xf] %vm4140, %v4128
      %4146 = vst.msk [vmem:[%s336 + $0x14] sm:$0xf] %vm4140, %v4129
      %4147 = vst.msk [vmem:[%s336 + $0x18] sm:$0xf] %vm4140, %v4130
      %4148 = vst.msk [vmem:[%s336 + $0x1c] sm:$0xf] %vm4140, %v4131
      %4149 = vst.msk [vmem:[%s336 + $0x20] sm:$0xf] %vm4140, %v4132
      %4150 = vst.msk [vmem:[%s336 + $0x24] sm:$0xf] %vm4140, %v4133
      %4151 = vst.msk [vmem:[%s336 + $0x28] sm:$0xf] %vm4140, %v4134
      %4152 = vst.msk [vmem:[%s336 + $0x2c] sm:$0xf] %vm4140, %v4135
      %4153 = vst.msk [vmem:[%s336 + $0x30] sm:$0xf] %vm4140, %v4136
      %4154 = vst.msk [vmem:[%s336 + $0x34] sm:$0xf] %vm4140, %v4137
      %4155 = vst.msk [vmem:[%s336 + $0x38] sm:$0xf] %vm4140, %v4138
      %4156 = vst.msk [vmem:[%s336 + $0x3c] sm:$0xf] %vm4140, %v4139
      %v4157 = vsel %vm500, %v4108, 0.0
      %v4158 = vsel %vm500, %v4109, 0.0
      %v4159 = vadd.f32 %v4157, %v4158
      %v4160 = vsel %vm500, %v4110, 0.0
      %v4161 = vadd.f32 %v4159, %v4160
      %v4162 = vsel %vm500, %v4111, 0.0
      %v4163 = vadd.f32 %v4161, %v4162
      %v4164 = vsel %vm500, %v4112, 0.0
      %v4165 = vadd.f32 %v4163, %v4164
      %v4166 = vsel %vm500, %v4113, 0.0
      %v4167 = vadd.f32 %v4165, %v4166
      %v4168 = vsel %vm500, %v4114, 0.0
      %v4169 = vadd.f32 %v4167, %v4168
      %v4170 = vsel %vm500, %v4115, 0.0
      %v4171 = vadd.f32 %v4169, %v4170
      %v4172 = vsel %vm500, %v4116, 0.0
      %v4173 = vadd.f32 %v4171, %v4172
      %v4174 = vsel %vm500, %v4117, 0.0
      %v4175 = vadd.f32 %v4173, %v4174
      %v4176 = vsel %vm500, %v4118, 0.0
      %v4177 = vadd.f32 %v4175, %v4176
      %v4178 = vsel %vm500, %v4119, 0.0
      %v4179 = vadd.f32 %v4177, %v4178
      %v4180 = vsel %vm500, %v4120, 0.0
      %v4181 = vadd.f32 %v4179, %v4180
      %v4182 = vsel %vm500, %v4121, 0.0
      %v4183 = vadd.f32 %v4181, %v4182
      %v4184 = vsel %vm500, %v4122, 0.0
      %v4185 = vadd.f32 %v4183, %v4184
      %v4186 = vsel %vm500, %v4123, 0.0
      %v4187 = vadd.f32 %v4185, %v4186
      %v4188 = vrot.slane %v4187, 4
      %v4189 = vadd.f32 %v4187, %v4188
      %v4190 = vrot.slane %v4189, 2
      %v4191 = vadd.f32 %v4189, %v4190
      %v4192 = vrot.slane %v4191, 1
      %v4193 = vadd.f32 %v4191, %v4192
      %vm4194 = vcmask 122880
      %4195 = vst.msk [vmem:[%s339] sm:$0x1] %vm4194, %v4193
      %v4196 = vmul.f32 %v4108, %v4108
      %v4197 = vmul.f32 %v4109, %v4109
      %v4198 = vmul.f32 %v4110, %v4110
      %v4199 = vmul.f32 %v4111, %v4111
      %v4200 = vmul.f32 %v4112, %v4112
      %v4201 = vmul.f32 %v4113, %v4113
      %v4202 = vmul.f32 %v4114, %v4114
      %v4203 = vmul.f32 %v4115, %v4115
      %v4204 = vmul.f32 %v4116, %v4116
      %v4205 = vmul.f32 %v4117, %v4117
      %v4206 = vmul.f32 %v4118, %v4118
      %v4207 = vmul.f32 %v4119, %v4119
      %v4208 = vmul.f32 %v4120, %v4120
      %v4209 = vmul.f32 %v4121, %v4121
      %v4210 = vmul.f32 %v4122, %v4122
      %v4211 = vmul.f32 %v4123, %v4123
      %v4212 = vsel %vm500, %v4196, 0.0
      %v4213 = vsel %vm500, %v4197, 0.0
      %v4214 = vadd.f32 %v4212, %v4213
      %v4215 = vsel %vm500, %v4198, 0.0
      %v4216 = vadd.f32 %v4214, %v4215
      %v4217 = vsel %vm500, %v4199, 0.0
      %v4218 = vadd.f32 %v4216, %v4217
      %v4219 = vsel %vm500, %v4200, 0.0
      %v4220 = vadd.f32 %v4218, %v4219
      %v4221 = vsel %vm500, %v4201, 0.0
      %v4222 = vadd.f32 %v4220, %v4221
      %v4223 = vsel %vm500, %v4202, 0.0
      %v4224 = vadd.f32 %v4222, %v4223
      %v4225 = vsel %vm500, %v4203, 0.0
      %v4226 = vadd.f32 %v4224, %v4225
      %v4227 = vsel %vm500, %v4204, 0.0
      %v4228 = vadd.f32 %v4226, %v4227
      %v4229 = vsel %vm500, %v4205, 0.0
      %v4230 = vadd.f32 %v4228, %v4229
      %v4231 = vsel %vm500, %v4206, 0.0
      %v4232 = vadd.f32 %v4230, %v4231
      %v4233 = vsel %vm500, %v4207, 0.0
      %v4234 = vadd.f32 %v4232, %v4233
      %v4235 = vsel %vm500, %v4208, 0.0
      %v4236 = vadd.f32 %v4234, %v4235
      %v4237 = vsel %vm500, %v4209, 0.0
      %v4238 = vadd.f32 %v4236, %v4237
      %v4239 = vsel %vm500, %v4210, 0.0
      %v4240 = vadd.f32 %v4238, %v4239
      %v4241 = vsel %vm500, %v4211, 0.0
      %v4242 = vadd.f32 %v4240, %v4241
      %v4243 = vrot.slane %v4242, 4
      %v4244 = vadd.f32 %v4242, %v4243
      %v4245 = vrot.slane %v4244, 2
      %v4246 = vadd.f32 %v4244, %v4245
      %v4247 = vrot.slane %v4246, 1
      %v4248 = vadd.f32 %v4246, %v4247
      %4249 = vst.msk [vmem:[%s342] sm:$0x1] %vm4194, %v4248
      %p4250 = scmp.lt.s32.totalorder %s20, 1
      %s4251 = scalar_select %p4250, %s20, 1
      %s4252 = smul.addr %s4251, 16
      %s4253 = smul.addr %s4252, 4
      %s4254 = scalar_lea.vmem %s6, %s4253
      %p4255 = scmp.lt.s32.totalorder %s20, 1
      %s4256 = scalar_select %p4255, %s20, 1
      %s4257 = scalar_lea.vmem %s7, %s4256
      %p4258 = scmp.lt.s32.totalorder %s20, 1
      %s4259 = scalar_select %p4258, %s20, 1
      %s4260 = scalar_lea.vmem %s8, %s4259
      // Predicated region
      $region45: #{_decoder_block_impl.2} parent=43 // pred_check
        %p4261 = pneg %p174
      $region46: #{_decoder_block_impl.2} parent=43 // pred_check_branch
        %4263 = sbr.rel (%p4261) target = $region48
      $region47: #{_decoder_block_impl.2} parent=43 // pred_region
        _
      $region48: #{_decoder_block_impl.2} parent=43 // pred_fallthru
        _
      // Predicated region
      $region49: #{_decoder_block_impl.2} parent=43 // pred_check
        %p4264 = pneg %p200
      $region50: #{_decoder_block_impl.2} parent=43 // pred_check_branch
        %4266 = sbr.rel (%p4264) target = $region52
      $region51: #{_decoder_block_impl.2} parent=43 // pred_region
        _
      $region52: #{_decoder_block_impl.2} parent=43 // pred_fallthru
        _
      // Predicated region
      $region53: #{_decoder_block_impl.2} parent=43 // pred_check
        %p4267 = pneg %p226
      $region54: #{_decoder_block_impl.2} parent=43 // pred_check_branch
        %4269 = sbr.rel (%p4267) target = $region56
      $region55: #{_decoder_block_impl.2} parent=43 // pred_region
        _
      $region56: #{_decoder_block_impl.2} parent=43 // pred_fallthru
        _
    $region44: #{_decoder_block_impl.2} parent=5 // pred_fallthru
      _
    %p4270 = scmp.le.s32.totalorder 2, %s15
    // Predicated region
    $region57: #{_decoder_block_impl.2} parent=5 // pred_check
      %p4271 = pneg %p4270
    $region58: #{_decoder_block_impl.2} parent=5 // pred_check_branch
      %4273 = sbr.rel (%p4271) target = $region60
    $region59: #{_decoder_block_impl.2} parent=5 // pred_region
      %s4274 = ssub.s32 %s15, 2
      // Predicated region
      $region61: #{_decoder_block_impl.2} parent=59 // pred_check
        %p4275 = pneg %p180
      $region62: #{_decoder_block_impl.2} parent=59 // pred_check_branch
        %4277 = sbr.rel (%p4275) target = $region64
      $region63: #{_decoder_block_impl.2} parent=59 // pred_region
        %p4278 = scmp.lt.s32.totalorder %s21, 1
        %s4279 = scalar_select %p4278, %s21, 1
        %s4280 = smul.addr %s4279, 16
        %s4281 = smul.addr %s4280, 4
        %s4282 = scalar_lea.vmem %s6, %s4281
      $region64: #{_decoder_block_impl.2} parent=59 // pred_fallthru
        _
      // Predicated region
      $region65: #{_decoder_block_impl.2} parent=59 // pred_check
        %p4283 = pneg %p206
      $region66: #{_decoder_block_impl.2} parent=59 // pred_check_branch
        %4285 = sbr.rel (%p4283) target = $region68
      $region67: #{_decoder_block_impl.2} parent=59 // pred_region
        %p4286 = scmp.lt.s32.totalorder %s21, 1
        %s4287 = scalar_select %p4286, %s21, 1
        %s4288 = scalar_lea.vmem %s7, %s4287
      $region68: #{_decoder_block_impl.2} parent=59 // pred_fallthru
        _
      // Predicated region
      $region69: #{_decoder_block_impl.2} parent=59 // pred_check
        %p4289 = pneg %p232
      $region70: #{_decoder_block_impl.2} parent=59 // pred_check_branch
        %4291 = sbr.rel (%p4289) target = $region72
      $region71: #{_decoder_block_impl.2} parent=59 // pred_region
        %p4292 = scmp.lt.s32.totalorder %s21, 1
        %s4293 = scalar_select %p4292, %s21, 1
        %s4294 = scalar_lea.vmem %s8, %s4293
      $region72: #{_decoder_block_impl.2} parent=59 // pred_fallthru
        _
    $region60: #{_decoder_block_impl.2} parent=5 // pred_fallthru
      _
  $region6: #{_decoder_block_impl.2} parent=0 // loop_footer
    %s19 = sadd.s32 1, %s15
  $region7: #{_decoder_block_impl.2} parent=0 // loop_footer_branch
    %14 = sbr.rel target = $region3
  $region8: #{_decoder_block_impl.2} parent=0 // loop_exit
    _

// kernel: _decoder_block_impl.3
$region0: #{_decoder_block_impl.3}
  #allocation0 [shape = 'u32[]', space=smem, size = 0x4, offset = 0x4, fixed_abs, tag = 'smem constant byte address 0x4 - core index']
  #allocation1 [shape = 'u32[144,128]{1,0:T(1,128)}', space=vmem, size = 0x12000, scoped, tag = 'internal scratch']
  #allocation2 [shape = 'bf16[18,10,16]{2,1,0:T(8,128)(2,1)}', space=vmem, size = 0x12000, scoped, tag = 'scratch operand']
  %s0 = inlined_call_operand.vmem [shape: bf16[2,16,8,16], index: 0, kind: input, shape index: {}]
  %s1 = inlined_call_operand.vmem [shape: f32[1,16], index: 1, kind: input, shape index: {}]
  %s2 = inlined_call_operand.vmem [shape: f32[1,16], index: 2, kind: input, shape index: {}]
  %s3 = inlined_call_operand.vmem [shape: bf16[9,16,16], index: 3, kind: input, shape index: {}]
  %s4 = inlined_call_operand.vmem [shape: f32[1,16], index: 4, kind: input, shape index: {}]
  %s5 = inlined_call_operand.vmem [shape: bf16[2,16,8,16], index: 5, kind: output, shape index: {0}]
  %s6 = inlined_call_operand.vmem [shape: f32[2,1,16], index: 6, kind: output, shape index: {1}]
  %s7 = inlined_call_operand.vmem [shape: f32[2,1,16], index: 7, kind: output, shape index: {2}]
  %8 = xla_tuple %s5, %s6, %s7
  %s9 = sld [smem:[#allocation0]]
  $region69: #{_decoder_block_impl.3} parent=0
    _
  %s11 = ssub.s32 1, %s9
  %s12 = scalar_select 0, %s11, %s9
  loop: start=0, step=1, limit=4
  $region2: #{_decoder_block_impl.3} parent=0 // loop_pre_header
    _
  $region3: #{_decoder_block_impl.3} parent=0 // loop_header
    %s14 = sphi 0, %s18
    %p15 = scmp.ge.s32.totalorder %s14, 4
    %s24 = sphi 0, %s26
    %s27 = sphi 0, %s24
    %s28 = sphi 0, %s27
    %s44 = sphi 0, %s28
    %s48 = sphi 0, %s48
    %s50 = sphi 0, %s48
    %s51 = sphi 0, %s50
    %s65 = sphi 0, %s51
    %s69 = sphi 0, %s69
    %s71 = sphi 0, %s69
    %s72 = sphi 0, %s71
    %s86 = sphi 0, %s72
    %s90 = sphi 0, %s90
    %s92 = sphi 0, %s90
    %s93 = sphi 0, %s92
    %s107 = sphi 0, %s93
    %s111 = sphi 0, %s111
    %s113 = sphi 0, %s111
    %s114 = sphi 0, %s113
    %s128 = sphi 0, %s114
    %s134 = sphi 0, %s136
    %s137 = sphi 0, %s134
    %s138 = sphi 0, %s137
    %s154 = sphi 0, %s138
    %s160 = sphi 0, %s162
    %s163 = sphi 0, %s160
    %s164 = sphi 0, %s163
    %s180 = sphi 0, %s164
    %s186 = sphi 0, %s188
    %s189 = sphi 0, %s186
    %s190 = sphi 0, %s189
    %s206 = sphi 0, %s190
  $region4: #{_decoder_block_impl.3} parent=0 // loop_header_branch
    %17 = sbr.rel (%p15) target = $region8
  $region5: #{_decoder_block_impl.3} parent=0 // loop_body
    %s19 = ssub.s32 %s14, 1
    %s20 = ssub.s32 %s14, 2
    %s21 = sadd.s32 %s14, 1
    %s22 = ssub.s32 %s14, %s21
    %p23 = scmp.eq.s32.totalorder %s22, 0
    %s25 = sadd.s32 %s24, 1
    %s26 = scalar_select %p23, %s24, %s25
    %p29 = pneg %p23
    %p30 = scmp.eq.s32.totalorder %s14, 1
    %p31 = por %p29, %p30
    %p32 = scmp.ne.s32.totalorder %s24, %s27
    %p33 = scmp.eq.s32.totalorder %s14, 0
    %p34 = por %p32, %p33
    %p35 = scmp.ne.s32.totalorder %s24, %s27
    %p36 = scmp.eq.s32.totalorder %s19, 1
    %p37 = por %p35, %p36
    %p38 = scmp.ne.s32.totalorder %s27, %s28
    %p39 = scmp.eq.s32.totalorder %s19, 0
    %p40 = por %p38, %p39
    %p41 = scmp.ne.s32.totalorder %s27, %s28
    %p42 = scmp.eq.s32.totalorder %s20, 1
    %p43 = por %p41, %p42
    %p45 = scmp.ne.s32.totalorder %s28, %s44
    %p46 = scmp.eq.s32.totalorder %s20, 0
    %p47 = por %p45, %p46
    %s49 = sadd.s32 %s48, 1
    %p52 = scmp.eq.s32.totalorder %s14, 1
    %p53 = scmp.ne.s32.totalorder %s48, %s50
    %p54 = scmp.eq.s32.totalorder %s14, 0
    %p55 = por %p53, %p54
    %p56 = scmp.ne.s32.totalorder %s48, %s50
    %p57 = scmp.eq.s32.totalorder %s19, 1
    %p58 = por %p56, %p57
    %p59 = scmp.ne.s32.totalorder %s50, %s51
    %p60 = scmp.eq.s32.totalorder %s19, 0
    %p61 = por %p59, %p60
    %p62 = scmp.ne.s32.totalorder %s50, %s51
    %p63 = scmp.eq.s32.totalorder %s20, 1
    %p64 = por %p62, %p63
    %p66 = scmp.ne.s32.totalorder %s51, %s65
    %p67 = scmp.eq.s32.totalorder %s20, 0
    %p68 = por %p66, %p67
    %s70 = sadd.s32 %s69, 1
    %p73 = scmp.eq.s32.totalorder %s14, 1
    %p74 = scmp.ne.s32.totalorder %s69, %s71
    %p75 = scmp.eq.s32.totalorder %s14, 0
    %p76 = por %p74, %p75
    %p77 = scmp.ne.s32.totalorder %s69, %s71
    %p78 = scmp.eq.s32.totalorder %s19, 1
    %p79 = por %p77, %p78
    %p80 = scmp.ne.s32.totalorder %s71, %s72
    %p81 = scmp.eq.s32.totalorder %s19, 0
    %p82 = por %p80, %p81
    %p83 = scmp.ne.s32.totalorder %s71, %s72
    %p84 = scmp.eq.s32.totalorder %s20, 1
    %p85 = por %p83, %p84
    %p87 = scmp.ne.s32.totalorder %s72, %s86
    %p88 = scmp.eq.s32.totalorder %s20, 0
    %p89 = por %p87, %p88
    %s91 = sadd.s32 %s90, 1
    %p94 = scmp.eq.s32.totalorder %s14, 1
    %p95 = scmp.ne.s32.totalorder %s90, %s92
    %p96 = scmp.eq.s32.totalorder %s14, 0
    %p97 = por %p95, %p96
    %p98 = scmp.ne.s32.totalorder %s90, %s92
    %p99 = scmp.eq.s32.totalorder %s19, 1
    %p100 = por %p98, %p99
    %p101 = scmp.ne.s32.totalorder %s92, %s93
    %p102 = scmp.eq.s32.totalorder %s19, 0
    %p103 = por %p101, %p102
    %p104 = scmp.ne.s32.totalorder %s92, %s93
    %p105 = scmp.eq.s32.totalorder %s20, 1
    %p106 = por %p104, %p105
    %p108 = scmp.ne.s32.totalorder %s93, %s107
    %p109 = scmp.eq.s32.totalorder %s20, 0
    %p110 = por %p108, %p109
    %s112 = sadd.s32 %s111, 1
    %p115 = scmp.eq.s32.totalorder %s14, 1
    %p116 = scmp.ne.s32.totalorder %s111, %s113
    %p117 = scmp.eq.s32.totalorder %s14, 0
    %p118 = por %p116, %p117
    %p119 = scmp.ne.s32.totalorder %s111, %s113
    %p120 = scmp.eq.s32.totalorder %s19, 1
    %p121 = por %p119, %p120
    %p122 = scmp.ne.s32.totalorder %s113, %s114
    %p123 = scmp.eq.s32.totalorder %s19, 0
    %p124 = por %p122, %p123
    %p125 = scmp.ne.s32.totalorder %s113, %s114
    %p126 = scmp.eq.s32.totalorder %s20, 1
    %p127 = por %p125, %p126
    %p129 = scmp.ne.s32.totalorder %s114, %s128
    %p130 = scmp.eq.s32.totalorder %s20, 0
    %p131 = por %p129, %p130
    %s132 = ssub.s32 %s14, %s21
    %p133 = scmp.eq.s32.totalorder %s132, 0
    %s135 = sadd.s32 %s134, 1
    %s136 = scalar_select %p133, %s134, %s135
    %p139 = pneg %p133
    %p140 = scmp.eq.s32.totalorder %s14, 1
    %p141 = por %p139, %p140
    %p142 = scmp.ne.s32.totalorder %s134, %s137
    %p143 = scmp.eq.s32.totalorder %s14, 0
    %p144 = por %p142, %p143
    %p145 = scmp.ne.s32.totalorder %s134, %s137
    %p146 = scmp.eq.s32.totalorder %s19, 1
    %p147 = por %p145, %p146
    %p148 = scmp.ne.s32.totalorder %s137, %s138
    %p149 = scmp.eq.s32.totalorder %s19, 0
    %p150 = por %p148, %p149
    %p151 = scmp.ne.s32.totalorder %s137, %s138
    %p152 = scmp.eq.s32.totalorder %s20, 1
    %p153 = por %p151, %p152
    %p155 = scmp.ne.s32.totalorder %s138, %s154
    %p156 = scmp.eq.s32.totalorder %s20, 0
    %p157 = por %p155, %p156
    %s158 = ssub.s32 %s14, %s21
    %p159 = scmp.eq.s32.totalorder %s158, 0
    %s161 = sadd.s32 %s160, 1
    %s162 = scalar_select %p159, %s160, %s161
    %p165 = pneg %p159
    %p166 = scmp.eq.s32.totalorder %s14, 1
    %p167 = por %p165, %p166
    %p168 = scmp.ne.s32.totalorder %s160, %s163
    %p169 = scmp.eq.s32.totalorder %s14, 0
    %p170 = por %p168, %p169
    %p171 = scmp.ne.s32.totalorder %s160, %s163
    %p172 = scmp.eq.s32.totalorder %s19, 1
    %p173 = por %p171, %p172
    %p174 = scmp.ne.s32.totalorder %s163, %s164
    %p175 = scmp.eq.s32.totalorder %s19, 0
    %p176 = por %p174, %p175
    %p177 = scmp.ne.s32.totalorder %s163, %s164
    %p178 = scmp.eq.s32.totalorder %s20, 1
    %p179 = por %p177, %p178
    %p181 = scmp.ne.s32.totalorder %s164, %s180
    %p182 = scmp.eq.s32.totalorder %s20, 0
    %p183 = por %p181, %p182
    %s184 = ssub.s32 %s14, %s21
    %p185 = scmp.eq.s32.totalorder %s184, 0
    %s187 = sadd.s32 %s186, 1
    %s188 = scalar_select %p185, %s186, %s187
    %p191 = pneg %p185
    %p192 = scmp.eq.s32.totalorder %s14, 1
    %p193 = por %p191, %p192
    %p194 = scmp.ne.s32.totalorder %s186, %s189
    %p195 = scmp.eq.s32.totalorder %s14, 0
    %p196 = por %p194, %p195
    %p197 = scmp.ne.s32.totalorder %s186, %s189
    %p198 = scmp.eq.s32.totalorder %s19, 1
    %p199 = por %p197, %p198
    %p200 = scmp.ne.s32.totalorder %s189, %s190
    %p201 = scmp.eq.s32.totalorder %s19, 0
    %p202 = por %p200, %p201
    %p203 = scmp.ne.s32.totalorder %s189, %s190
    %p204 = scmp.eq.s32.totalorder %s20, 1
    %p205 = por %p203, %p204
    %p207 = scmp.ne.s32.totalorder %s190, %s206
    %p208 = scmp.eq.s32.totalorder %s20, 0
    %p209 = por %p207, %p208
    %p210 = scmp.le.s32.totalorder 1, %s14
    %p211 = scmp.lt.s32.totalorder %s14, 3
    %p212 = pnand %p210, %p211
    %p213 = pneg %p212
    // Predicated region
    $region9: #{_decoder_block_impl.3} parent=5 // pred_check
      _
    $region10: #{_decoder_block_impl.3} parent=5 // pred_check_branch
      %215 = sbr.rel (%p212) target = $region12
    $region11: #{_decoder_block_impl.3} parent=5 // pred_region
      %s216 = ssub.s32 %s14, 1
      // Predicated region
      $region13: #{_decoder_block_impl.3} parent=11 // pred_check
        %p217 = pneg %p61
      $region14: #{_decoder_block_impl.3} parent=11 // pred_check_branch
        %219 = sbr.rel (%p217) target = $region16
      $region15: #{_decoder_block_impl.3} parent=11 // pred_region
        _
      $region16: #{_decoder_block_impl.3} parent=11 // pred_fallthru
        _
      // Predicated region
      $region17: #{_decoder_block_impl.3} parent=11 // pred_check
        %p220 = pneg %p82
      $region18: #{_decoder_block_impl.3} parent=11 // pred_check_branch
        %222 = sbr.rel (%p220) target = $region20
      $region19: #{_decoder_block_impl.3} parent=11 // pred_region
        _
      $region20: #{_decoder_block_impl.3} parent=11 // pred_fallthru
        _
      // Predicated region
      $region21: #{_decoder_block_impl.3} parent=11 // pred_check
        %p223 = pneg %p103
      $region22: #{_decoder_block_impl.3} parent=11 // pred_check_branch
        %225 = sbr.rel (%p223) target = $region24
      $region23: #{_decoder_block_impl.3} parent=11 // pred_region
        _
      $region24: #{_decoder_block_impl.3} parent=11 // pred_fallthru
        _
      // Predicated region
      $region25: #{_decoder_block_impl.3} parent=11 // pred_check
        %p226 = pneg %p124
      $region26: #{_decoder_block_impl.3} parent=11 // pred_check_branch
        %228 = sbr.rel (%p226) target = $region28
      $region27: #{_decoder_block_impl.3} parent=11 // pred_region
        _
      $region28: #{_decoder_block_impl.3} parent=11 // pred_fallthru
        _
    $region12: #{_decoder_block_impl.3} parent=5 // pred_fallthru
      _
    %p229 = scmp.lt.s32.totalorder %s14, 2
    // Predicated region
    $region29: #{_decoder_block_impl.3} parent=5 // pred_check
      %p230 = pneg %p229
    $region30: #{_decoder_block_impl.3} parent=5 // pred_check_branch
      %232 = sbr.rel (%p230) target = $region32
    $region31: #{_decoder_block_impl.3} parent=5 // pred_region
      // Predicated region
      $region33: #{_decoder_block_impl.3} parent=31 // pred_check
        %p233 = pneg %p34
      $region34: #{_decoder_block_impl.3} parent=31 // pred_check_branch
        %235 = sbr.rel (%p233) target = $region36
      $region35: #{_decoder_block_impl.3} parent=31 // pred_region
        %p236 = scmp.lt.s32.totalorder %s14, 1
        %s237 = scalar_select %p236, %s14, 1
        %s238 = smul.addr %s237, 16
        %s239 = smul.addr %s238, 4
        %s240 = scalar_lea.vmem %s0, %s239
      $region36: #{_decoder_block_impl.3} parent=31 // pred_fallthru
        _
    $region32: #{_decoder_block_impl.3} parent=5 // pred_fallthru
      _
    %p241 = scmp.le.s32.totalorder 1, %s14
    %p242 = scmp.lt.s32.totalorder %s14, 3
    %p243 = pnand %p241, %p242
    %p244 = pneg %p243
    // Predicated region
    $region37: #{_decoder_block_impl.3} parent=5 // pred_check
      _
    $region38: #{_decoder_block_impl.3} parent=5 // pred_check_branch
      %246 = sbr.rel (%p243) target = $region40
    $region39: #{_decoder_block_impl.3} parent=5 // pred_region
      %s247 = ssub.s32 %s14, 1
      %p248 = scmp.lt.s32.totalorder %s19, 1
      %s249 = scalar_select %p248, %s19, 1
      %s250 = smul.addr %s249, 16
      %s251 = smul.addr %s250, 4
      %s252 = scalar_lea.vmem %s0, %s251
      %p253 = pneg %p40
      %p254 = pneg %p37
      %p255 = pneg %p61
      %p256 = pneg %p58
      %p257 = pneg %p82
      %p258 = pneg %p79
      %p259 = pneg %p103
      %p260 = pneg %p100
      %p261 = pneg %p124
      %p262 = pneg %p121
      %p263 = pneg %p150
      %p264 = pneg %p147
      %p265 = scmp.lt.s32.totalorder %s19, 1
      %s266 = scalar_select %p265, %s19, 1
      %s267 = smul.addr %s266, 16
      %s268 = smul.addr %s267, 4
      %s269 = scalar_lea.vmem %s5, %s268
      %p270 = pneg %p176
      %p271 = pneg %p173
      %p272 = scmp.lt.s32.totalorder %s19, 1
      %s273 = scalar_select %p272, %s19, 1
      %s274 = scalar_lea.vmem %s6, %s273
      %p275 = pneg %p202
      %p276 = pneg %p199
      %p277 = scmp.lt.s32.totalorder %s19, 1
      %s278 = scalar_select %p277, %s19, 1
      %s279 = scalar_lea.vmem %s7, %s278
      %p280 = scmp.lt.s32.totalorder %s19, 1
      %s281 = scalar_select %p280, %s19, 1
      %s282 = smul.addr %s281, 16
      %s283 = smul.addr %s282, 4
      %s284 = scalar_lea.vmem %s0, %s283
      %p285 = scmp.lt.s32.totalorder %s19, 1
      %s286 = scalar_select %p285, %s19, 1
      %s287 = smul.addr %s286, 16
      %s288 = smul.addr %s287, 4
      %s289 = scalar_lea.vmem %s5, %s288
      %p290 = scmp.lt.s32.totalorder %s19, 1
      %s291 = scalar_select %p290, %s19, 1
      %s292 = scalar_lea.vmem %s6, %s291
      %p293 = scmp.lt.s32.totalorder %s19, 1
      %s294 = scalar_select %p293, %s19, 1
      %s295 = scalar_lea.vmem %s7, %s294
      %vm297 = vcmask 125952
      %298 = vst.msk [vmem:[#allocation2] sm:$0xf] %vm297, 0
      %vm299 = vcmask 122880
      %300 = vst.msk [vmem:[#allocation2 + $0x4] sm:$0x1] %vm299, 0
      %s301 = scalar_lea.vmem [#allocation2], 136
      %302 = vst.msk [vmem:[%s301] sm:$0xf] %vm297, 0
      %303 = vst.msk [vmem:[%s301 + $0x4] sm:$0x1] %vm299, 0
      %vm304 = vcmask 122880
      %vm305 = vsmask.f32 256
      %vm306 = vmand %vm304, %vm305
      %v307 = vld [vmem:[#allocation2] sm:$0x1]
      %v308 = vsel %vm306, 0, %v307
      %309 = vst [vmem:[#allocation2] sm:$0x1] %v308
      %v310 = vld [vmem:[#allocation2 + $0x8] sm:$0x1]
      %v311 = vsel %vm306, 0, %v310
      %312 = vst [vmem:[#allocation2 + $0x8] sm:$0x1] %v311
      %v313 = vld [vmem:[#allocation2 + $0x10] sm:$0x1]
      %v314 = vsel %vm306, 0, %v313
      %315 = vst [vmem:[#allocation2 + $0x10] sm:$0x1] %v314
      %v316 = vld [vmem:[#allocation2 + $0x18] sm:$0x1]
      %v317 = vsel %vm306, 0, %v316
      %318 = vst [vmem:[#allocation2 + $0x18] sm:$0x1] %v317
      %v319 = vld [vmem:[#allocation2 + $0x20] sm:$0x1]
      %v320 = vsel %vm306, 0, %v319
      %321 = vst [vmem:[#allocation2 + $0x20] sm:$0x1] %v320
      %v322 = vld [vmem:[#allocation2 + $0x28] sm:$0x1]
      %v323 = vsel %vm306, 0, %v322
      %324 = vst [vmem:[#allocation2 + $0x28] sm:$0x1] %v323
      %v325 = vld [vmem:[#allocation2 + $0x30] sm:$0x1]
      %v326 = vsel %vm306, 0, %v325
      %327 = vst [vmem:[#allocation2 + $0x30] sm:$0x1] %v326
      %v328 = vld [vmem:[#allocation2 + $0x38] sm:$0x1]
      %v329 = vsel %vm306, 0, %v328
      %330 = vst [vmem:[#allocation2 + $0x38] sm:$0x1] %v329
      %v331 = vld [vmem:[#allocation2 + $0x40] sm:$0x1]
      %v332 = vsel %vm306, 0, %v331
      %333 = vst [vmem:[#allocation2 + $0x40] sm:$0x1] %v332
      %v334 = vld [vmem:[#allocation2 + $0x48] sm:$0x1]
      %v335 = vsel %vm306, 0, %v334
      %336 = vst [vmem:[#allocation2 + $0x48] sm:$0x1] %v335
      %v337 = vld [vmem:[#allocation2 + $0x50] sm:$0x1]
      %v338 = vsel %vm306, 0, %v337
      %339 = vst [vmem:[#allocation2 + $0x50] sm:$0x1] %v338
      %v340 = vld [vmem:[#allocation2 + $0x58] sm:$0x1]
      %v341 = vsel %vm306, 0, %v340
      %342 = vst [vmem:[#allocation2 + $0x58] sm:$0x1] %v341
      %v343 = vld [vmem:[#allocation2 + $0x60] sm:$0x1]
      %v344 = vsel %vm306, 0, %v343
      %345 = vst [vmem:[#allocation2 + $0x60] sm:$0x1] %v344
      %v346 = vld [vmem:[#allocation2 + $0x68] sm:$0x1]
      %v347 = vsel %vm306, 0, %v346
      %348 = vst [vmem:[#allocation2 + $0x68] sm:$0x1] %v347
      %v349 = vld [vmem:[#allocation2 + $0x70] sm:$0x1]
      %v350 = vsel %vm306, 0, %v349
      %351 = vst [vmem:[#allocation2 + $0x70] sm:$0x1] %v350
      %v352 = vld [vmem:[#allocation2 + $0x78] sm:$0x1]
      %v353 = vsel %vm306, 0, %v352
      %354 = vst [vmem:[#allocation2 + $0x78] sm:$0x1] %v353
      %v355 = vld [vmem:[#allocation2 + $0x80] sm:$0x1]
      %v356 = vsel %vm306, 0, %v355
      %357 = vst [vmem:[#allocation2 + $0x80] sm:$0x1] %v356
      %v358 = vld [vmem:[#allocation2 + $0x88] sm:$0x1]
      %v359 = vsel %vm306, 0, %v358
      %360 = vst [vmem:[#allocation2 + $0x88] sm:$0x1] %v359
      %vm361 = vsmask.f32 7938
      %vm362 = vmand %vm304, %vm361
      %v363 = vld [vmem:[#allocation2 + $0x4] sm:$0x1]
      %v364 = vsel %vm362, 0, %v363
      %365 = vst [vmem:[#allocation2 + $0x4] sm:$0x1] %v364
      %v366 = vld [vmem:[#allocation2 + $0xc] sm:$0x1]
      %v367 = vsel %vm362, 0, %v366
      %368 = vst [vmem:[#allocation2 + $0xc] sm:$0x1] %v367
      %v369 = vld [vmem:[#allocation2 + $0x14] sm:$0x1]
      %v370 = vsel %vm362, 0, %v369
      %371 = vst [vmem:[#allocation2 + $0x14] sm:$0x1] %v370
      %v372 = vld [vmem:[#allocation2 + $0x1c] sm:$0x1]
      %v373 = vsel %vm362, 0, %v372
      %374 = vst [vmem:[#allocation2 + $0x1c] sm:$0x1] %v373
      %v375 = vld [vmem:[#allocation2 + $0x24] sm:$0x1]
      %v376 = vsel %vm362, 0, %v375
      %377 = vst [vmem:[#allocation2 + $0x24] sm:$0x1] %v376
      %v378 = vld [vmem:[#allocation2 + $0x2c] sm:$0x1]
      %v379 = vsel %vm362, 0, %v378
      %380 = vst [vmem:[#allocation2 + $0x2c] sm:$0x1] %v379
      %v381 = vld [vmem:[#allocation2 + $0x34] sm:$0x1]
      %v382 = vsel %vm362, 0, %v381
      %383 = vst [vmem:[#allocation2 + $0x34] sm:$0x1] %v382
      %v384 = vld [vmem:[#allocation2 + $0x3c] sm:$0x1]
      %v385 = vsel %vm362, 0, %v384
      %386 = vst [vmem:[#allocation2 + $0x3c] sm:$0x1] %v385
      %v387 = vld [vmem:[#allocation2 + $0x44] sm:$0x1]
      %v388 = vsel %vm362, 0, %v387
      %389 = vst [vmem:[#allocation2 + $0x44] sm:$0x1] %v388
      %v390 = vld [vmem:[#allocation2 + $0x4c] sm:$0x1]
      %v391 = vsel %vm362, 0, %v390
      %392 = vst [vmem:[#allocation2 + $0x4c] sm:$0x1] %v391
      %v393 = vld [vmem:[#allocation2 + $0x54] sm:$0x1]
      %v394 = vsel %vm362, 0, %v393
      %395 = vst [vmem:[#allocation2 + $0x54] sm:$0x1] %v394
      %v396 = vld [vmem:[#allocation2 + $0x5c] sm:$0x1]
      %v397 = vsel %vm362, 0, %v396
      %398 = vst [vmem:[#allocation2 + $0x5c] sm:$0x1] %v397
      %v399 = vld [vmem:[#allocation2 + $0x64] sm:$0x1]
      %v400 = vsel %vm362, 0, %v399
      %401 = vst [vmem:[#allocation2 + $0x64] sm:$0x1] %v400
      %v402 = vld [vmem:[#allocation2 + $0x6c] sm:$0x1]
      %v403 = vsel %vm362, 0, %v402
      %404 = vst [vmem:[#allocation2 + $0x6c] sm:$0x1] %v403
      %v405 = vld [vmem:[#allocation2 + $0x74] sm:$0x1]
      %v406 = vsel %vm362, 0, %v405
      %407 = vst [vmem:[#allocation2 + $0x74] sm:$0x1] %v406
      %v408 = vld [vmem:[#allocation2 + $0x7c] sm:$0x1]
      %v409 = vsel %vm362, 0, %v408
      %410 = vst [vmem:[#allocation2 + $0x7c] sm:$0x1] %v409
      %v411 = vld [vmem:[#allocation2 + $0x84] sm:$0x1]
      %v412 = vsel %vm362, 0, %v411
      %413 = vst [vmem:[#allocation2 + $0x84] sm:$0x1] %v412
      %v414 = vld [vmem:[#allocation2 + $0x8c] sm:$0x1]
      %v415 = vsel %vm362, 0, %v414
      %416 = vst [vmem:[#allocation2 + $0x8c] sm:$0x1] %v415
      %v417 = vld [vmem:[%s284] sm:$0xf]
      %v418 = vld [vmem:[%s284 + $0x4] sm:$0xf]
      %v419 = vld [vmem:[%s284 + $0x8] sm:$0xf]
      %v420 = vld [vmem:[%s284 + $0xc] sm:$0xf]
      %v421 = vld [vmem:[%s284 + $0x10] sm:$0xf]
      %v422 = vld [vmem:[%s284 + $0x14] sm:$0xf]
      %v423 = vld [vmem:[%s284 + $0x18] sm:$0xf]
      %v424 = vld [vmem:[%s284 + $0x1c] sm:$0xf]
      %v425 = vld [vmem:[%s284 + $0x20] sm:$0xf]
      %v426 = vld [vmem:[%s284 + $0x24] sm:$0xf]
      %v427 = vld [vmem:[%s284 + $0x28] sm:$0xf]
      %v428 = vld [vmem:[%s284 + $0x2c] sm:$0xf]
      %v429 = vld [vmem:[%s284 + $0x30] sm:$0xf]
      %v430 = vld [vmem:[%s284 + $0x34] sm:$0xf]
      %v431 = vld [vmem:[%s284 + $0x38] sm:$0xf]
      %v432 = vld [vmem:[%s284 + $0x3c] sm:$0xf]
      %v433 = vunpack.c.l.bf16 %v417
      %v434 = vunpack.c.l.bf16 %v418
      %v435 = vunpack.c.l.bf16 %v419
      %v436 = vunpack.c.l.bf16 %v420
      %v437 = vunpack.c.l.bf16 %v421
      %v438 = vunpack.c.l.bf16 %v422
      %v439 = vunpack.c.l.bf16 %v423
      %v440 = vunpack.c.l.bf16 %v424
      %v441 = vunpack.c.l.bf16 %v425
      %v442 = vunpack.c.l.bf16 %v426
      %v443 = vunpack.c.l.bf16 %v427
      %v444 = vunpack.c.l.bf16 %v428
      %v445 = vunpack.c.l.bf16 %v429
      %v446 = vunpack.c.l.bf16 %v430
      %v447 = vunpack.c.l.bf16 %v431
      %v448 = vunpack.c.l.bf16 %v432
      %v449 = vld [vmem:[%s1] sm:$0x1]
      %v451 = vlaneseq
      %v452 = vshrl.u32 %v451, 7
      %v453 = vsub.s32 0, %v452
      %v454 = vrot.slane %v449, %v453
      %v456 = vmul.f32 %v433, %v454
      %v457 = vmul.f32 %v434, %v454
      %v458 = vmul.f32 %v435, %v454
      %v459 = vmul.f32 %v436, %v454
      %v460 = vmul.f32 %v437, %v454
      %v461 = vmul.f32 %v438, %v454
      %v462 = vmul.f32 %v439, %v454
      %v463 = vmul.f32 %v440, %v454
      %v464 = vmul.f32 %v441, %v454
      %v465 = vmul.f32 %v442, %v454
      %v466 = vmul.f32 %v443, %v454
      %v467 = vmul.f32 %v444, %v454
      %v468 = vmul.f32 %v445, %v454
      %v469 = vmul.f32 %v446, %v454
      %v470 = vmul.f32 %v447, %v454
      %v471 = vmul.f32 %v448, %v454
      %v472 = vld [vmem:[%s2] sm:$0x1]
      %v474 = vlaneseq
      %v475 = vshrl.u32 %v474, 7
      %v476 = vsub.s32 0, %v475
      %v477 = vrot.slane %v472, %v476
      %v479 = vadd.f32 %v456, %v477
      %v480 = vadd.f32 %v457, %v477
      %v481 = vadd.f32 %v458, %v477
      %v482 = vadd.f32 %v459, %v477
      %v483 = vadd.f32 %v460, %v477
      %v484 = vadd.f32 %v461, %v477
      %v485 = vadd.f32 %v462, %v477
      %v486 = vadd.f32 %v463, %v477
      %v487 = vadd.f32 %v464, %v477
      %v488 = vadd.f32 %v465, %v477
      %v489 = vadd.f32 %v466, %v477
      %v490 = vadd.f32 %v467, %v477
      %v491 = vadd.f32 %v468, %v477
      %v492 = vadd.f32 %v469, %v477
      %v493 = vadd.f32 %v470, %v477
      %v494 = vadd.f32 %v471, %v477
      %v495 = vmax.f32 %v479, 0.0
      %v496 = vmax.f32 %v480, 0.0
      %v497 = vmax.f32 %v481, 0.0
      %v498 = vmax.f32 %v482, 0.0
      %v499 = vmax.f32 %v483, 0.0
      %v500 = vmax.f32 %v484, 0.0
      %v501 = vmax.f32 %v485, 0.0
      %v502 = vmax.f32 %v486, 0.0
      %v503 = vmax.f32 %v487, 0.0
      %v504 = vmax.f32 %v488, 0.0
      %v505 = vmax.f32 %v489, 0.0
      %v506 = vmax.f32 %v490, 0.0
      %v507 = vmax.f32 %v491, 0.0
      %v508 = vmax.f32 %v492, 0.0
      %v509 = vmax.f32 %v493, 0.0
      %v510 = vmax.f32 %v494, 0.0
      %v511 = vpack.c.bf16 %v495, %v495
      %v512 = vpack.c.bf16 %v496, %v496
      %v513 = vpack.c.bf16 %v497, %v497
      %v514 = vpack.c.bf16 %v498, %v498
      %v515 = vpack.c.bf16 %v499, %v499
      %v516 = vpack.c.bf16 %v500, %v500
      %v517 = vpack.c.bf16 %v501, %v501
      %v518 = vpack.c.bf16 %v502, %v502
      %v519 = vpack.c.bf16 %v503, %v503
      %v520 = vpack.c.bf16 %v504, %v504
      %v521 = vpack.c.bf16 %v505, %v505
      %v522 = vpack.c.bf16 %v506, %v506
      %v523 = vpack.c.bf16 %v507, %v507
      %v524 = vpack.c.bf16 %v508, %v508
      %v525 = vpack.c.bf16 %v509, %v509
      %v526 = vpack.c.bf16 %v510, %v510
      %v543 = vunpack.c.l.b16 %v511
      %v544 = vunpack.c.l.b16 %v512
      %v545 = vunpack.c.l.b16 %v513
      %v546 = vunpack.c.l.b16 %v514
      %v547 = vunpack.c.l.b16 %v515
      %v548 = vunpack.c.l.b16 %v516
      %v549 = vunpack.c.l.b16 %v517
      %v550 = vunpack.c.l.b16 %v518
      %v551 = vunpack.c.l.b16 %v519
      %v552 = vunpack.c.l.b16 %v520
      %v553 = vunpack.c.l.b16 %v521
      %v554 = vunpack.c.l.b16 %v522
      %v555 = vunpack.c.l.b16 %v523
      %v556 = vunpack.c.l.b16 %v524
      %v557 = vunpack.c.l.b16 %v525
      %v558 = vunpack.c.l.b16 %v526
      %v559 = vpack.c.b16 %v543, %v543
      %v560 = vpack.c.b16 %v544, %v544
      %v561 = vpack.c.b16 %v545, %v545
      %v562 = vpack.c.b16 %v546, %v546
      %v563 = vpack.c.b16 %v547, %v547
      %v564 = vpack.c.b16 %v548, %v548
      %v565 = vpack.c.b16 %v549, %v549
      %v566 = vpack.c.b16 %v550, %v550
      %v567 = vpack.c.b16 %v551, %v551
      %v568 = vpack.c.b16 %v552, %v552
      %v569 = vpack.c.b16 %v553, %v553
      %v570 = vpack.c.b16 %v554, %v554
      %v571 = vpack.c.b16 %v555, %v555
      %v572 = vpack.c.b16 %v556, %v556
      %v573 = vpack.c.b16 %v557, %v557
      %v574 = vpack.c.b16 %v558, %v558
      %v576 = vshrl.u32 %v559, 16
      %v578 = vrot.slane %v576, 7
      %v579 = vshll.u32 %v559, 16
      %v581 = vor.u32 %v578, %v579
      %v582 = vrot.slane %v578, 4
      %v584 = vshrl.u32 %v560, 16
      %v586 = vrot.slane %v584, 7
      %v587 = vshll.u32 %v560, 16
      %v589 = vor.u32 %v586, %v587
      %v590 = vrot.slane %v586, 4
      %v592 = vshrl.u32 %v561, 16
      %v594 = vrot.slane %v592, 7
      %v595 = vshll.u32 %v561, 16
      %v597 = vor.u32 %v594, %v595
      %v598 = vrot.slane %v594, 4
      %v600 = vshrl.u32 %v562, 16
      %v602 = vrot.slane %v600, 7
      %v603 = vshll.u32 %v562, 16
      %v605 = vor.u32 %v602, %v603
      %v606 = vrot.slane %v602, 4
      %v608 = vshrl.u32 %v563, 16
      %v610 = vrot.slane %v608, 7
      %v611 = vshll.u32 %v563, 16
      %v613 = vor.u32 %v610, %v611
      %v614 = vrot.slane %v610, 4
      %v616 = vshrl.u32 %v564, 16
      %v618 = vrot.slane %v616, 7
      %v619 = vshll.u32 %v564, 16
      %v621 = vor.u32 %v618, %v619
      %v622 = vrot.slane %v618, 4
      %v624 = vshrl.u32 %v565, 16
      %v626 = vrot.slane %v624, 7
      %v627 = vshll.u32 %v565, 16
      %v629 = vor.u32 %v626, %v627
      %v630 = vrot.slane %v626, 4
      %v632 = vshrl.u32 %v566, 16
      %v634 = vrot.slane %v632, 7
      %v635 = vshll.u32 %v566, 16
      %v637 = vor.u32 %v634, %v635
      %v638 = vrot.slane %v634, 4
      %v640 = vshrl.u32 %v567, 16
      %v642 = vrot.slane %v640, 7
      %v643 = vshll.u32 %v567, 16
      %v645 = vor.u32 %v642, %v643
      %v646 = vrot.slane %v642, 4
      %v648 = vshrl.u32 %v568, 16
      %v650 = vrot.slane %v648, 7
      %v651 = vshll.u32 %v568, 16
      %v653 = vor.u32 %v650, %v651
      %v654 = vrot.slane %v650, 4
      %v656 = vshrl.u32 %v569, 16
      %v658 = vrot.slane %v656, 7
      %v659 = vshll.u32 %v569, 16
      %v661 = vor.u32 %v658, %v659
      %v662 = vrot.slane %v658, 4
      %v664 = vshrl.u32 %v570, 16
      %v666 = vrot.slane %v664, 7
      %v667 = vshll.u32 %v570, 16
      %v669 = vor.u32 %v666, %v667
      %v670 = vrot.slane %v666, 4
      %v672 = vshrl.u32 %v571, 16
      %v674 = vrot.slane %v672, 7
      %v675 = vshll.u32 %v571, 16
      %v677 = vor.u32 %v674, %v675
      %v678 = vrot.slane %v674, 4
      %v680 = vshrl.u32 %v572, 16
      %v682 = vrot.slane %v680, 7
      %v683 = vshll.u32 %v572, 16
      %v685 = vor.u32 %v682, %v683
      %v686 = vrot.slane %v682, 4
      %v688 = vshrl.u32 %v573, 16
      %v690 = vrot.slane %v688, 7
      %v691 = vshll.u32 %v573, 16
      %v693 = vor.u32 %v690, %v691
      %v694 = vrot.slane %v690, 4
      %v696 = vshrl.u32 %v574, 16
      %v698 = vrot.slane %v696, 7
      %v699 = vshll.u32 %v574, 16
      %v701 = vor.u32 %v698, %v699
      %v702 = vrot.slane %v698, 4
      %s735 = scalar_lea.vmem [#allocation2], 8
      %vm736 = vcmask 125952
      %vm737 = vmand %vm736, %vm361
      %v738 = vld [vmem:[%s735] sm:$0xf]
      %v739 = vsel %vm737, %v581, %v738
      %740 = vst [vmem:[%s735] sm:$0xf] %v739
      %v741 = vld [vmem:[%s735 + $0x4] sm:$0x1]
      %v742 = vsel %vm306, %v582, %v741
      %743 = vst [vmem:[%s735 + $0x4] sm:$0x1] %v742
      %v744 = vld [vmem:[%s735 + $0x8] sm:$0xf]
      %v745 = vsel %vm737, %v589, %v744
      %746 = vst [vmem:[%s735 + $0x8] sm:$0xf] %v745
      %v747 = vld [vmem:[%s735 + $0xc] sm:$0x1]
      %v748 = vsel %vm306, %v590, %v747
      %749 = vst [vmem:[%s735 + $0xc] sm:$0x1] %v748
      %v750 = vld [vmem:[%s735 + $0x10] sm:$0xf]
      %v751 = vsel %vm737, %v597, %v750
      %752 = vst [vmem:[%s735 + $0x10] sm:$0xf] %v751
      %v753 = vld [vmem:[%s735 + $0x14] sm:$0x1]
      %v754 = vsel %vm306, %v598, %v753
      %755 = vst [vmem:[%s735 + $0x14] sm:$0x1] %v754
      %v756 = vld [vmem:[%s735 + $0x18] sm:$0xf]
      %v757 = vsel %vm737, %v605, %v756
      %758 = vst [vmem:[%s735 + $0x18] sm:$0xf] %v757
      %v759 = vld [vmem:[%s735 + $0x1c] sm:$0x1]
      %v760 = vsel %vm306, %v606, %v759
      %761 = vst [vmem:[%s735 + $0x1c] sm:$0x1] %v760
      %v762 = vld [vmem:[%s735 + $0x20] sm:$0xf]
      %v763 = vsel %vm737, %v613, %v762
      %764 = vst [vmem:[%s735 + $0x20] sm:$0xf] %v763
      %v765 = vld [vmem:[%s735 + $0x24] sm:$0x1]
      %v766 = vsel %vm306, %v614, %v765
      %767 = vst [vmem:[%s735 + $0x24] sm:$0x1] %v766
      %v768 = vld [vmem:[%s735 + $0x28] sm:$0xf]
      %v769 = vsel %vm737, %v621, %v768
      %770 = vst [vmem:[%s735 + $0x28] sm:$0xf] %v769
      %v771 = vld [vmem:[%s735 + $0x2c] sm:$0x1]
      %v772 = vsel %vm306, %v622, %v771
      %773 = vst [vmem:[%s735 + $0x2c] sm:$0x1] %v772
      %v774 = vld [vmem:[%s735 + $0x30] sm:$0xf]
      %v775 = vsel %vm737, %v629, %v774
      %776 = vst [vmem:[%s735 + $0x30] sm:$0xf] %v775
      %v777 = vld [vmem:[%s735 + $0x34] sm:$0x1]
      %v778 = vsel %vm306, %v630, %v777
      %779 = vst [vmem:[%s735 + $0x34] sm:$0x1] %v778
      %v780 = vld [vmem:[%s735 + $0x38] sm:$0xf]
      %v781 = vsel %vm737, %v637, %v780
      %782 = vst [vmem:[%s735 + $0x38] sm:$0xf] %v781
      %v783 = vld [vmem:[%s735 + $0x3c] sm:$0x1]
      %v784 = vsel %vm306, %v638, %v783
      %785 = vst [vmem:[%s735 + $0x3c] sm:$0x1] %v784
      %v786 = vld [vmem:[%s735 + $0x40] sm:$0xf]
      %v787 = vsel %vm737, %v645, %v786
      %788 = vst [vmem:[%s735 + $0x40] sm:$0xf] %v787
      %v789 = vld [vmem:[%s735 + $0x44] sm:$0x1]
      %v790 = vsel %vm306, %v646, %v789
      %791 = vst [vmem:[%s735 + $0x44] sm:$0x1] %v790
      %v792 = vld [vmem:[%s735 + $0x48] sm:$0xf]
      %v793 = vsel %vm737, %v653, %v792
      %794 = vst [vmem:[%s735 + $0x48] sm:$0xf] %v793
      %v795 = vld [vmem:[%s735 + $0x4c] sm:$0x1]
      %v796 = vsel %vm306, %v654, %v795
      %797 = vst [vmem:[%s735 + $0x4c] sm:$0x1] %v796
      %v798 = vld [vmem:[%s735 + $0x50] sm:$0xf]
      %v799 = vsel %vm737, %v661, %v798
      %800 = vst [vmem:[%s735 + $0x50] sm:$0xf] %v799
      %v801 = vld [vmem:[%s735 + $0x54] sm:$0x1]
      %v802 = vsel %vm306, %v662, %v801
      %803 = vst [vmem:[%s735 + $0x54] sm:$0x1] %v802
      %v804 = vld [vmem:[%s735 + $0x58] sm:$0xf]
      %v805 = vsel %vm737, %v669, %v804
      %806 = vst [vmem:[%s735 + $0x58] sm:$0xf] %v805
      %v807 = vld [vmem:[%s735 + $0x5c] sm:$0x1]
      %v808 = vsel %vm306, %v670, %v807
      %809 = vst [vmem:[%s735 + $0x5c] sm:$0x1] %v808
      %v810 = vld [vmem:[%s735 + $0x60] sm:$0xf]
      %v811 = vsel %vm737, %v677, %v810
      %812 = vst [vmem:[%s735 + $0x60] sm:$0xf] %v811
      %v813 = vld [vmem:[%s735 + $0x64] sm:$0x1]
      %v814 = vsel %vm306, %v678, %v813
      %815 = vst [vmem:[%s735 + $0x64] sm:$0x1] %v814
      %v816 = vld [vmem:[%s735 + $0x68] sm:$0xf]
      %v817 = vsel %vm737, %v685, %v816
      %818 = vst [vmem:[%s735 + $0x68] sm:$0xf] %v817
      %v819 = vld [vmem:[%s735 + $0x6c] sm:$0x1]
      %v820 = vsel %vm306, %v686, %v819
      %821 = vst [vmem:[%s735 + $0x6c] sm:$0x1] %v820
      %v822 = vld [vmem:[%s735 + $0x70] sm:$0xf]
      %v823 = vsel %vm737, %v693, %v822
      %824 = vst [vmem:[%s735 + $0x70] sm:$0xf] %v823
      %v825 = vld [vmem:[%s735 + $0x74] sm:$0x1]
      %v826 = vsel %vm306, %v694, %v825
      %827 = vst [vmem:[%s735 + $0x74] sm:$0x1] %v826
      %v828 = vld [vmem:[%s735 + $0x78] sm:$0xf]
      %v829 = vsel %vm737, %v701, %v828
      %830 = vst [vmem:[%s735 + $0x78] sm:$0xf] %v829
      %v831 = vld [vmem:[%s735 + $0x7c] sm:$0x1]
      %v832 = vsel %vm306, %v702, %v831
      %833 = vst [vmem:[%s735 + $0x7c] sm:$0x1] %v832
      %v834 = vld [vmem:[#allocation2] sm:$0xf]
      %v835 = vld [vmem:[#allocation2 + $0x8] sm:$0xf]
      %v836 = vld [vmem:[#allocation2 + $0x10] sm:$0xf]
      %v837 = vld [vmem:[#allocation2 + $0x18] sm:$0xf]
      %v838 = vld [vmem:[#allocation2 + $0x20] sm:$0xf]
      %v839 = vld [vmem:[#allocation2 + $0x28] sm:$0xf]
      %v840 = vld [vmem:[#allocation2 + $0x30] sm:$0xf]
      %v841 = vld [vmem:[#allocation2 + $0x38] sm:$0xf]
      %v842 = vld [vmem:[#allocation2 + $0x40] sm:$0xf]
      %v843 = vld [vmem:[#allocation2 + $0x48] sm:$0xf]
      %v844 = vld [vmem:[#allocation2 + $0x50] sm:$0xf]
      %v845 = vld [vmem:[#allocation2 + $0x58] sm:$0xf]
      %v846 = vld [vmem:[#allocation2 + $0x60] sm:$0xf]
      %v847 = vld [vmem:[#allocation2 + $0x68] sm:$0xf]
      %v848 = vld [vmem:[#allocation2 + $0x70] sm:$0xf]
      %v849 = vld [vmem:[#allocation2 + $0x78] sm:$0xf]
      %v850 = vld [vmem:[%s3] sm:$0xf]
      %v851 = vld [vmem:[%s3 + $0x4] sm:$0xf]
      %v852 = vld [vmem:[#allocation2 + $0x4] sm:$0x1]
      %v853 = vld [vmem:[#allocation2 + $0xc] sm:$0x1]
      %v854 = vld [vmem:[#allocation2 + $0x14] sm:$0x1]
      %v855 = vld [vmem:[#allocation2 + $0x1c] sm:$0x1]
      %v856 = vld [vmem:[#allocation2 + $0x24] sm:$0x1]
      %v857 = vld [vmem:[#allocation2 + $0x2c] sm:$0x1]
      %v858 = vld [vmem:[#allocation2 + $0x34] sm:$0x1]
      %v859 = vld [vmem:[#allocation2 + $0x3c] sm:$0x1]
      %v860 = vld [vmem:[#allocation2 + $0x44] sm:$0x1]
      %v861 = vld [vmem:[#allocation2 + $0x4c] sm:$0x1]
      %v862 = vld [vmem:[#allocation2 + $0x54] sm:$0x1]
      %v863 = vld [vmem:[#allocation2 + $0x5c] sm:$0x1]
      %v864 = vld [vmem:[#allocation2 + $0x64] sm:$0x1]
      %v865 = vld [vmem:[#allocation2 + $0x6c] sm:$0x1]
      %v866 = vld [vmem:[#allocation2 + $0x74] sm:$0x1]
      %v867 = vld [vmem:[#allocation2 + $0x7c] sm:$0x1]
      %vm868 = vsmask.f32 3328
      %vm869 = vsmask.f32 7440
      %vm870 = vmor %vm868, %vm869
      %v872 = vshrl.u32 %v834, 16
      %v874 = vrot.slane %v872, 4
      %v875 = vshll.u32 %v834, 16
      %v877 = vrot.slane %v875, 5
      %v878 = vor.u32 %v874, %v877
      %v879 = vrot.slane %v878, 4
      %v881 = vshll.u32 %v852, 16
      %v883 = vrot.slane %v881, 5
      %v884 = vsel %vm870, %v879, %v883
      %v886 = vshrl.u32 %v835, 16
      %v888 = vrot.slane %v886, 4
      %v889 = vshll.u32 %v835, 16
      %v891 = vrot.slane %v889, 5
      %v892 = vor.u32 %v888, %v891
      %v893 = vrot.slane %v892, 4
      %v895 = vshll.u32 %v853, 16
      %v897 = vrot.slane %v895, 5
      %v898 = vsel %vm870, %v893, %v897
      %v900 = vshrl.u32 %v836, 16
      %v902 = vrot.slane %v900, 4
      %v903 = vshll.u32 %v836, 16
      %v905 = vrot.slane %v903, 5
      %v906 = vor.u32 %v902, %v905
      %v907 = vrot.slane %v906, 4
      %v909 = vshll.u32 %v854, 16
      %v911 = vrot.slane %v909, 5
      %v912 = vsel %vm870, %v907, %v911
      %v914 = vshrl.u32 %v837, 16
      %v916 = vrot.slane %v914, 4
      %v917 = vshll.u32 %v837, 16
      %v919 = vrot.slane %v917, 5
      %v920 = vor.u32 %v916, %v919
      %v921 = vrot.slane %v920, 4
      %v923 = vshll.u32 %v855, 16
      %v925 = vrot.slane %v923, 5
      %v926 = vsel %vm870, %v921, %v925
      %v928 = vshrl.u32 %v838, 16
      %v930 = vrot.slane %v928, 4
      %v931 = vshll.u32 %v838, 16
      %v933 = vrot.slane %v931, 5
      %v934 = vor.u32 %v930, %v933
      %v935 = vrot.slane %v934, 4
      %v937 = vshll.u32 %v856, 16
      %v939 = vrot.slane %v937, 5
      %v940 = vsel %vm870, %v935, %v939
      %v942 = vshrl.u32 %v839, 16
      %v944 = vrot.slane %v942, 4
      %v945 = vshll.u32 %v839, 16
      %v947 = vrot.slane %v945, 5
      %v948 = vor.u32 %v944, %v947
      %v949 = vrot.slane %v948, 4
      %v951 = vshll.u32 %v857, 16
      %v953 = vrot.slane %v951, 5
      %v954 = vsel %vm870, %v949, %v953
      %v956 = vshrl.u32 %v840, 16
      %v958 = vrot.slane %v956, 4
      %v959 = vshll.u32 %v840, 16
      %v961 = vrot.slane %v959, 5
      %v962 = vor.u32 %v958, %v961
      %v963 = vrot.slane %v962, 4
      %v965 = vshll.u32 %v858, 16
      %v967 = vrot.slane %v965, 5
      %v968 = vsel %vm870, %v963, %v967
      %v970 = vshrl.u32 %v841, 16
      %v972 = vrot.slane %v970, 4
      %v973 = vshll.u32 %v841, 16
      %v975 = vrot.slane %v973, 5
      %v976 = vor.u32 %v972, %v975
      %v977 = vrot.slane %v976, 4
      %v979 = vshll.u32 %v859, 16
      %v981 = vrot.slane %v979, 5
      %v982 = vsel %vm870, %v977, %v981
      %v984 = vshrl.u32 %v842, 16
      %v986 = vrot.slane %v984, 4
      %v987 = vshll.u32 %v842, 16
      %v989 = vrot.slane %v987, 5
      %v990 = vor.u32 %v986, %v989
      %v991 = vrot.slane %v990, 4
      %v993 = vshll.u32 %v860, 16
      %v995 = vrot.slane %v993, 5
      %v996 = vsel %vm870, %v991, %v995
      %v998 = vshrl.u32 %v843, 16
      %v1000 = vrot.slane %v998, 4
      %v1001 = vshll.u32 %v843, 16
      %v1003 = vrot.slane %v1001, 5
      %v1004 = vor.u32 %v1000, %v1003
      %v1005 = vrot.slane %v1004, 4
      %v1007 = vshll.u32 %v861, 16
      %v1009 = vrot.slane %v1007, 5
      %v1010 = vsel %vm870, %v1005, %v1009
      %v1012 = vshrl.u32 %v844, 16
      %v1014 = vrot.slane %v1012, 4
      %v1015 = vshll.u32 %v844, 16
      %v1017 = vrot.slane %v1015, 5
      %v1018 = vor.u32 %v1014, %v1017
      %v1019 = vrot.slane %v1018, 4
      %v1021 = vshll.u32 %v862, 16
      %v1023 = vrot.slane %v1021, 5
      %v1024 = vsel %vm870, %v1019, %v1023
      %v1026 = vshrl.u32 %v845, 16
      %v1028 = vrot.slane %v1026, 4
      %v1029 = vshll.u32 %v845, 16
      %v1031 = vrot.slane %v1029, 5
      %v1032 = vor.u32 %v1028, %v1031
      %v1033 = vrot.slane %v1032, 4
      %v1035 = vshll.u32 %v863, 16
      %v1037 = vrot.slane %v1035, 5
      %v1038 = vsel %vm870, %v1033, %v1037
      %v1040 = vshrl.u32 %v846, 16
      %v1042 = vrot.slane %v1040, 4
      %v1043 = vshll.u32 %v846, 16
      %v1045 = vrot.slane %v1043, 5
      %v1046 = vor.u32 %v1042, %v1045
      %v1047 = vrot.slane %v1046, 4
      %v1049 = vshll.u32 %v864, 16
      %v1051 = vrot.slane %v1049, 5
      %v1052 = vsel %vm870, %v1047, %v1051
      %v1054 = vshrl.u32 %v847, 16
      %v1056 = vrot.slane %v1054, 4
      %v1057 = vshll.u32 %v847, 16
      %v1059 = vrot.slane %v1057, 5
      %v1060 = vor.u32 %v1056, %v1059
      %v1061 = vrot.slane %v1060, 4
      %v1063 = vshll.u32 %v865, 16
      %v1065 = vrot.slane %v1063, 5
      %v1066 = vsel %vm870, %v1061, %v1065
      %v1068 = vshrl.u32 %v848, 16
      %v1070 = vrot.slane %v1068, 4
      %v1071 = vshll.u32 %v848, 16
      %v1073 = vrot.slane %v1071, 5
      %v1074 = vor.u32 %v1070, %v1073
      %v1075 = vrot.slane %v1074, 4
      %v1077 = vshll.u32 %v866, 16
      %v1079 = vrot.slane %v1077, 5
      %v1080 = vsel %vm870, %v1075, %v1079
      %v1082 = vshrl.u32 %v849, 16
      %v1084 = vrot.slane %v1082, 4
      %v1085 = vshll.u32 %v849, 16
      %v1087 = vrot.slane %v1085, 5
      %v1088 = vor.u32 %v1084, %v1087
      %v1089 = vrot.slane %v1088, 4
      %v1091 = vshll.u32 %v867, 16
      %v1093 = vrot.slane %v1091, 5
      %v1094 = vsel %vm870, %v1089, %v1093
      %s1095 = scalar_lea.vmem %s3, 8
      %v1096 = vld [vmem:[%s1095] sm:$0xf]
      %v1097 = vld [vmem:[%s1095 + $0x4] sm:$0xf]
      %v1098 = vunpack.c.l.b16 %v884
      %v1099 = vunpack.c.l.b16 %v898
      %v1100 = vunpack.c.l.b16 %v912
      %v1101 = vunpack.c.l.b16 %v926
      %v1102 = vunpack.c.l.b16 %v940
      %v1103 = vunpack.c.l.b16 %v954
      %v1104 = vunpack.c.l.b16 %v968
      %v1105 = vunpack.c.l.b16 %v982
      %v1106 = vunpack.c.l.b16 %v996
      %v1107 = vunpack.c.l.b16 %v1010
      %v1108 = vunpack.c.l.b16 %v1024
      %v1109 = vunpack.c.l.b16 %v1038
      %v1110 = vunpack.c.l.b16 %v1052
      %v1111 = vunpack.c.l.b16 %v1066
      %v1112 = vunpack.c.l.b16 %v1080
      %v1113 = vunpack.c.l.b16 %v1094
      %v1114 = vpack.c.b16 %v1099, %v1098
      %v1115 = vpack.c.b16 %v1101, %v1100
      %v1116 = vpack.c.b16 %v1103, %v1102
      %v1117 = vpack.c.b16 %v1105, %v1104
      %v1118 = vpack.c.b16 %v1107, %v1106
      %v1119 = vpack.c.b16 %v1109, %v1108
      %v1120 = vpack.c.b16 %v1111, %v1110
      %v1121 = vpack.c.b16 %v1113, %v1112
      %v1124 = vunpack.c.l.b16 %v1096
      %v1125 = vunpack.c.l.b16 %v1097
      %v1126 = vpack.c.b16 %v1125, %v1124
      %vm1128 = vcmask 130048
      %v1130 = vsel %vm1128, %v1114, 0
      %v1133 = vsel %vm1128, %v1115, 0
      %v1136 = vsel %vm1128, %v1116, 0
      %v1139 = vsel %vm1128, %v1117, 0
      %v1142 = vsel %vm1128, %v1118, 0
      %v1145 = vsel %vm1128, %v1119, 0
      %v1148 = vsel %vm1128, %v1120, 0
      %v1151 = vsel %vm1128, %v1121, 0
      %1153 = vmatprep.subr.bf16.mxu0 0
      %1154 = vmatpush1.bf16.msra.mxu0 %v1126
      %1155 = vmatprep.subr.bf16.mxu0 0
      %1156 = vmatpush1.bf16.msra.mxu0 0
      %1157 = vmatprep.subr.bf16.mxu0 0
      %1158 = vmatpush1.bf16.msra.mxu0 0
      %1159 = vmatprep.subr.bf16.mxu0 0
      %1160 = vmatpush1.bf16.msra.mxu0 0
      %1161 = vmatprep.subr.bf16.mxu0 0
      %1162 = vmatpush1.bf16.msra.mxu0 0
      %1163 = vmatprep.subr.bf16.mxu0 0
      %1164 = vmatpush1.bf16.msra.mxu0 0
      %1165 = vmatprep.subr.bf16.mxu0 0
      %1166 = vmatpush1.bf16.msra.mxu0 0
      %1167 = vmatprep.subr.bf16.mxu0 0
      %1168 = vmatpush1.bf16.msra.mxu0 0
      %1169 = vmatprep.subr.bf16.mxu0 0
      %1170 = vmatpush1.bf16.msra.mxu0 0
      %1171 = vmatprep.subr.bf16.mxu0 0
      %1172 = vmatpush1.bf16.msra.mxu0 0
      %1173 = vmatprep.subr.bf16.mxu0 0
      %1174 = vmatpush1.bf16.msra.mxu0 0
      %1175 = vmatprep.subr.bf16.mxu0 0
      %1176 = vmatpush1.bf16.msra.mxu0 0
      %1177 = vmatprep.subr.bf16.mxu0 0
      %1178 = vmatpush1.bf16.msra.mxu0 0
      %1179 = vmatprep.subr.bf16.mxu0 0
      %1180 = vmatpush1.bf16.msra.mxu0 0
      %1181 = vmatprep.subr.bf16.mxu0 0
      %1182 = vmatpush1.bf16.msra.mxu0 0
      %1183 = vmatprep.subr.bf16.mxu0 0
      %1184 = vmatpush1.bf16.msra.mxu0 0
      %1185 = vmatprep.mubr.bf16.mxu0 0
      %1186 = vmatmul.mubr.bf16.gmra.mrb[0].mxu0 %v1130
      %v1187 = vpop.f32.mrb[0].mxu0
      %v1188 = vadd.f32 0.0, %v1187
      %v1189 = vpop.f32.mrb[0].mxu0
      %v1190 = vpop.f32.mrb[0].mxu0
      %v1191 = vadd.f32 0.0, %v1190
      %v1192 = vpop.f32.mrb[0].mxu0
      %1193 = vmatprep.mubr.bf16.mxu0 0
      %1194 = vmatmul.mubr.bf16.gmra.mrb[0].mxu0 %v1133
      %v1195 = vpop.f32.mrb[0].mxu0
      %v1196 = vadd.f32 0.0, %v1195
      %v1197 = vpop.f32.mrb[0].mxu0
      %v1198 = vpop.f32.mrb[0].mxu0
      %v1199 = vadd.f32 0.0, %v1198
      %v1200 = vpop.f32.mrb[0].mxu0
      %1201 = vmatprep.mubr.bf16.mxu0 0
      %1202 = vmatmul.mubr.bf16.gmra.mrb[0].mxu0 %v1136
      %v1203 = vpop.f32.mrb[0].mxu0
      %v1204 = vadd.f32 0.0, %v1203
      %v1205 = vpop.f32.mrb[0].mxu0
      %v1206 = vpop.f32.mrb[0].mxu0
      %v1207 = vadd.f32 0.0, %v1206
      %v1208 = vpop.f32.mrb[0].mxu0
      %1209 = vmatprep.mubr.bf16.mxu0 0
      %1210 = vmatmul.mubr.bf16.gmra.mrb[0].mxu0 %v1139
      %v1211 = vpop.f32.mrb[0].mxu0
      %v1212 = vadd.f32 0.0, %v1211
      %v1213 = vpop.f32.mrb[0].mxu0
      %v1214 = vpop.f32.mrb[0].mxu0
      %v1215 = vadd.f32 0.0, %v1214
      %v1216 = vpop.f32.mrb[0].mxu0
      %1217 = vmatprep.mubr.bf16.mxu0 0
      %1218 = vmatmul.mubr.bf16.gmra.mrb[0].mxu0 %v1142
      %v1219 = vpop.f32.mrb[0].mxu0
      %v1220 = vadd.f32 0.0, %v1219
      %v1221 = vpop.f32.mrb[0].mxu0
      %v1222 = vpop.f32.mrb[0].mxu0
      %v1223 = vadd.f32 0.0, %v1222
      %v1224 = vpop.f32.mrb[0].mxu0
      %1225 = vmatprep.mubr.bf16.mxu0 0
      %1226 = vmatmul.mubr.bf16.gmra.mrb[0].mxu0 %v1145
      %v1227 = vpop.f32.mrb[0].mxu0
      %v1228 = vadd.f32 0.0, %v1227
      %v1229 = vpop.f32.mrb[0].mxu0
      %v1230 = vpop.f32.mrb[0].mxu0
      %v1231 = vadd.f32 0.0, %v1230
      %v1232 = vpop.f32.mrb[0].mxu0
      %1233 = vmatprep.mubr.bf16.mxu0 0
      %1234 = vmatmul.mubr.bf16.gmra.mrb[0].mxu0 %v1148
      %v1235 = vpop.f32.mrb[0].mxu0
      %v1236 = vadd.f32 0.0, %v1235
      %v1237 = vpop.f32.mrb[0].mxu0
      %v1238 = vpop.f32.mrb[0].mxu0
      %v1239 = vadd.f32 0.0, %v1238
      %v1240 = vpop.f32.mrb[0].mxu0
      %1241 = vmatprep.mubr.bf16.mxu0 0
      %1242 = vmatmul.mubr.bf16.gmra.mrb[0].mxu0 %v1151
      %v1243 = vpop.f32.mrb[0].mxu0
      %v1244 = vadd.f32 0.0, %v1243
      %v1245 = vpop.f32.mrb[0].mxu0
      %v1246 = vpop.f32.mrb[0].mxu0
      %v1247 = vadd.f32 0.0, %v1246
      %v1248 = vpop.f32.mrb[0].mxu0
      %1249 = vdwg.mxu0
      %v1266 = vunpack.c.l.b16 %v834
      %v1267 = vunpack.c.l.b16 %v835
      %v1268 = vunpack.c.l.b16 %v836
      %v1269 = vunpack.c.l.b16 %v837
      %v1270 = vunpack.c.l.b16 %v838
      %v1271 = vunpack.c.l.b16 %v839
      %v1272 = vunpack.c.l.b16 %v840
      %v1273 = vunpack.c.l.b16 %v841
      %v1274 = vunpack.c.l.b16 %v842
      %v1275 = vunpack.c.l.b16 %v843
      %v1276 = vunpack.c.l.b16 %v844
      %v1277 = vunpack.c.l.b16 %v845
      %v1278 = vunpack.c.l.b16 %v846
      %v1279 = vunpack.c.l.b16 %v847
      %v1280 = vunpack.c.l.b16 %v848
      %v1281 = vunpack.c.l.b16 %v849
      %v1282 = vpack.c.b16 %v1267, %v1266
      %v1283 = vpack.c.b16 %v1269, %v1268
      %v1284 = vpack.c.b16 %v1271, %v1270
      %v1285 = vpack.c.b16 %v1273, %v1272
      %v1286 = vpack.c.b16 %v1275, %v1274
      %v1287 = vpack.c.b16 %v1277, %v1276
      %v1288 = vpack.c.b16 %v1279, %v1278
      %v1289 = vpack.c.b16 %v1281, %v1280
      %v1292 = vunpack.c.l.b16 %v850
      %v1293 = vunpack.c.l.b16 %v851
      %v1294 = vpack.c.b16 %v1293, %v1292
      %v1297 = vsel %vm1128, %v1282, 0
      %v1300 = vsel %vm1128, %v1283, 0
      %v1303 = vsel %vm1128, %v1284, 0
      %v1306 = vsel %vm1128, %v1285, 0
      %v1309 = vsel %vm1128, %v1286, 0
      %v1312 = vsel %vm1128, %v1287, 0
      %v1315 = vsel %vm1128, %v1288, 0
      %v1318 = vsel %vm1128, %v1289, 0
      %1320 = vmatprep.subr.bf16.mxu0 0
      %1321 = vmatpush1.bf16.msra.mxu0 %v1294
      %1322 = vmatprep.subr.bf16.mxu0 0
      %1323 = vmatpush1.bf16.msra.mxu0 0
      %1324 = vmatprep.subr.bf16.mxu0 0
      %1325 = vmatpush1.bf16.msra.mxu0 0
      %1326 = vmatprep.subr.bf16.mxu0 0
      %1327 = vmatpush1.bf16.msra.mxu0 0
      %1328 = vmatprep.subr.bf16.mxu0 0
      %1329 = vmatpush1.bf16.msra.mxu0 0
      %1330 = vmatprep.subr.bf16.mxu0 0
      %1331 = vmatpush1.bf16.msra.mxu0 0
      %1332 = vmatprep.subr.bf16.mxu0 0
      %1333 = vmatpush1.bf16.msra.mxu0 0
      %1334 = vmatprep.subr.bf16.mxu0 0
      %1335 = vmatpush1.bf16.msra.mxu0 0
      %1336 = vmatprep.subr.bf16.mxu0 0
      %1337 = vmatpush1.bf16.msra.mxu0 0
      %1338 = vmatprep.subr.bf16.mxu0 0
      %1339 = vmatpush1.bf16.msra.mxu0 0
      %1340 = vmatprep.subr.bf16.mxu0 0
      %1341 = vmatpush1.bf16.msra.mxu0 0
      %1342 = vmatprep.subr.bf16.mxu0 0
      %1343 = vmatpush1.bf16.msra.mxu0 0
      %1344 = vmatprep.subr.bf16.mxu0 0
      %1345 = vmatpush1.bf16.msra.mxu0 0
      %1346 = vmatprep.subr.bf16.mxu0 0
      %1347 = vmatpush1.bf16.msra.mxu0 0
      %1348 = vmatprep.subr.bf16.mxu0 0
      %1349 = vmatpush1.bf16.msra.mxu0 0
      %1350 = vmatprep.subr.bf16.mxu0 0
      %1351 = vmatpush1.bf16.msra.mxu0 0
      %1352 = vmatprep.mubr.bf16.mxu0 0
      %1353 = vmatmul.mubr.bf16.gmra.mrb[0].mxu0 %v1297
      %v1354 = vpop.f32.mrb[0].mxu0
      %v1355 = vadd.f32 %v1188, %v1354
      %v1356 = vpop.f32.mrb[0].mxu0
      %v1357 = vpop.f32.mrb[0].mxu0
      %v1358 = vadd.f32 %v1191, %v1357
      %v1359 = vpop.f32.mrb[0].mxu0
      %1360 = vmatprep.mubr.bf16.mxu0 0
      %1361 = vmatmul.mubr.bf16.gmra.mrb[0].mxu0 %v1300
      %v1362 = vpop.f32.mrb[0].mxu0
      %v1363 = vadd.f32 %v1196, %v1362
      %v1364 = vpop.f32.mrb[0].mxu0
      %v1365 = vpop.f32.mrb[0].mxu0
      %v1366 = vadd.f32 %v1199, %v1365
      %v1367 = vpop.f32.mrb[0].mxu0
      %1368 = vmatprep.mubr.bf16.mxu0 0
      %1369 = vmatmul.mubr.bf16.gmra.mrb[0].mxu0 %v1303
      %v1370 = vpop.f32.mrb[0].mxu0
      %v1371 = vadd.f32 %v1204, %v1370
      %v1372 = vpop.f32.mrb[0].mxu0
      %v1373 = vpop.f32.mrb[0].mxu0
      %v1374 = vadd.f32 %v1207, %v1373
      %v1375 = vpop.f32.mrb[0].mxu0
      %1376 = vmatprep.mubr.bf16.mxu0 0
      %1377 = vmatmul.mubr.bf16.gmra.mrb[0].mxu0 %v1306
      %v1378 = vpop.f32.mrb[0].mxu0
      %v1379 = vadd.f32 %v1212, %v1378
      %v1380 = vpop.f32.mrb[0].mxu0
      %v1381 = vpop.f32.mrb[0].mxu0
      %v1382 = vadd.f32 %v1215, %v1381
      %v1383 = vpop.f32.mrb[0].mxu0
      %1384 = vmatprep.mubr.bf16.mxu0 0
      %1385 = vmatmul.mubr.bf16.gmra.mrb[0].mxu0 %v1309
      %v1386 = vpop.f32.mrb[0].mxu0
      %v1387 = vadd.f32 %v1220, %v1386
      %v1388 = vpop.f32.mrb[0].mxu0
      %v1389 = vpop.f32.mrb[0].mxu0
      %v1390 = vadd.f32 %v1223, %v1389
      %v1391 = vpop.f32.mrb[0].mxu0
      %1392 = vmatprep.mubr.bf16.mxu0 0
      %1393 = vmatmul.mubr.bf16.gmra.mrb[0].mxu0 %v1312
      %v1394 = vpop.f32.mrb[0].mxu0
      %v1395 = vadd.f32 %v1228, %v1394
      %v1396 = vpop.f32.mrb[0].mxu0
      %v1397 = vpop.f32.mrb[0].mxu0
      %v1398 = vadd.f32 %v1231, %v1397
      %v1399 = vpop.f32.mrb[0].mxu0
      %1400 = vmatprep.mubr.bf16.mxu0 0
      %1401 = vmatmul.mubr.bf16.gmra.mrb[0].mxu0 %v1315
      %v1402 = vpop.f32.mrb[0].mxu0
      %v1403 = vadd.f32 %v1236, %v1402
      %v1404 = vpop.f32.mrb[0].mxu0
      %v1405 = vpop.f32.mrb[0].mxu0
      %v1406 = vadd.f32 %v1239, %v1405
      %v1407 = vpop.f32.mrb[0].mxu0
      %1408 = vmatprep.mubr.bf16.mxu0 0
      %1409 = vmatmul.mubr.bf16.gmra.mrb[0].mxu0 %v1318
      %v1410 = vpop.f32.mrb[0].mxu0
      %v1411 = vadd.f32 %v1244, %v1410
      %v1412 = vpop.f32.mrb[0].mxu0
      %v1413 = vpop.f32.mrb[0].mxu0
      %v1414 = vadd.f32 %v1247, %v1413
      %v1415 = vpop.f32.mrb[0].mxu0
      %1416 = vdwg.mxu0
      %v1417 = vld [vmem:[#allocation2] sm:$0xe]
      %v1418 = vld [vmem:[#allocation2 + $0x8] sm:$0xe]
      %v1419 = vld [vmem:[#allocation2 + $0x10] sm:$0xe]
      %v1420 = vld [vmem:[#allocation2 + $0x18] sm:$0xe]
      %v1421 = vld [vmem:[#allocation2 + $0x20] sm:$0xe]
      %v1422 = vld [vmem:[#allocation2 + $0x28] sm:$0xe]
      %v1423 = vld [vmem:[#allocation2 + $0x30] sm:$0xe]
      %v1424 = vld [vmem:[#allocation2 + $0x38] sm:$0xe]
      %v1425 = vld [vmem:[#allocation2 + $0x40] sm:$0xe]
      %v1426 = vld [vmem:[#allocation2 + $0x48] sm:$0xe]
      %v1427 = vld [vmem:[#allocation2 + $0x50] sm:$0xe]
      %v1428 = vld [vmem:[#allocation2 + $0x58] sm:$0xe]
      %v1429 = vld [vmem:[#allocation2 + $0x60] sm:$0xe]
      %v1430 = vld [vmem:[#allocation2 + $0x68] sm:$0xe]
      %v1431 = vld [vmem:[#allocation2 + $0x70] sm:$0xe]
      %v1432 = vld [vmem:[#allocation2 + $0x78] sm:$0xe]
      %vm1465 = vcmask 1042432
      %vm1466 = vcmask 1046532
      %vm1467 = vmor %vm1465, %vm1466
      %v1468 = vrot.slane %v1417, 5
      %v1469 = vrot.slane %v1468, 4
      %v1470 = vrot.slane %v852, 5
      %v1471 = vsel %vm1467, %v1469, %v1470
      %v1472 = vrot.slane %v1418, 5
      %v1473 = vrot.slane %v1472, 4
      %v1474 = vrot.slane %v853, 5
      %v1475 = vsel %vm1467, %v1473, %v1474
      %v1476 = vrot.slane %v1419, 5
      %v1477 = vrot.slane %v1476, 4
      %v1478 = vrot.slane %v854, 5
      %v1479 = vsel %vm1467, %v1477, %v1478
      %v1480 = vrot.slane %v1420, 5
      %v1481 = vrot.slane %v1480, 4
      %v1482 = vrot.slane %v855, 5
      %v1483 = vsel %vm1467, %v1481, %v1482
      %v1484 = vrot.slane %v1421, 5
      %v1485 = vrot.slane %v1484, 4
      %v1486 = vrot.slane %v856, 5
      %v1487 = vsel %vm1467, %v1485, %v1486
      %v1488 = vrot.slane %v1422, 5
      %v1489 = vrot.slane %v1488, 4
      %v1490 = vrot.slane %v857, 5
      %v1491 = vsel %vm1467, %v1489, %v1490
      %v1492 = vrot.slane %v1423, 5
      %v1493 = vrot.slane %v1492, 4
      %v1494 = vrot.slane %v858, 5
      %v1495 = vsel %vm1467, %v1493, %v1494
      %v1496 = vrot.slane %v1424, 5
      %v1497 = vrot.slane %v1496, 4
      %v1498 = vrot.slane %v859, 5
      %v1499 = vsel %vm1467, %v1497, %v1498
      %v1500 = vrot.slane %v1425, 5
      %v1501 = vrot.slane %v1500, 4
      %v1502 = vrot.slane %v860, 5
      %v1503 = vsel %vm1467, %v1501, %v1502
      %v1504 = vrot.slane %v1426, 5
      %v1505 = vrot.slane %v1504, 4
      %v1506 = vrot.slane %v861, 5
      %v1507 = vsel %vm1467, %v1505, %v1506
      %v1508 = vrot.slane %v1427, 5
      %v1509 = vrot.slane %v1508, 4
      %v1510 = vrot.slane %v862, 5
      %v1511 = vsel %vm1467, %v1509, %v1510
      %v1512 = vrot.slane %v1428, 5
      %v1513 = vrot.slane %v1512, 4
      %v1514 = vrot.slane %v863, 5
      %v1515 = vsel %vm1467, %v1513, %v1514
      %v1516 = vrot.slane %v1429, 5
      %v1517 = vrot.slane %v1516, 4
      %v1518 = vrot.slane %v864, 5
      %v1519 = vsel %vm1467, %v1517, %v1518
      %v1520 = vrot.slane %v1430, 5
      %v1521 = vrot.slane %v1520, 4
      %v1522 = vrot.slane %v865, 5
      %v1523 = vsel %vm1467, %v1521, %v1522
      %v1524 = vrot.slane %v1431, 5
      %v1525 = vrot.slane %v1524, 4
      %v1526 = vrot.slane %v866, 5
      %v1527 = vsel %vm1467, %v1525, %v1526
      %v1528 = vrot.slane %v1432, 5
      %v1529 = vrot.slane %v1528, 4
      %v1530 = vrot.slane %v867, 5
      %v1531 = vsel %vm1467, %v1529, %v1530
      %s1532 = scalar_lea.vmem %s3, 16
      %v1533 = vld [vmem:[%s1532] sm:$0xf]
      %v1534 = vld [vmem:[%s1532 + $0x4] sm:$0xf]
      %v1535 = vunpack.c.l.b16 %v1471
      %v1536 = vunpack.c.l.b16 %v1475
      %v1537 = vunpack.c.l.b16 %v1479
      %v1538 = vunpack.c.l.b16 %v1483
      %v1539 = vunpack.c.l.b16 %v1487
      %v1540 = vunpack.c.l.b16 %v1491
      %v1541 = vunpack.c.l.b16 %v1495
      %v1542 = vunpack.c.l.b16 %v1499
      %v1543 = vunpack.c.l.b16 %v1503
      %v1544 = vunpack.c.l.b16 %v1507
      %v1545 = vunpack.c.l.b16 %v1511
      %v1546 = vunpack.c.l.b16 %v1515
      %v1547 = vunpack.c.l.b16 %v1519
      %v1548 = vunpack.c.l.b16 %v1523
      %v1549 = vunpack.c.l.b16 %v1527
      %v1550 = vunpack.c.l.b16 %v1531
      %v1551 = vpack.c.b16 %v1536, %v1535
      %v1552 = vpack.c.b16 %v1538, %v1537
      %v1553 = vpack.c.b16 %v1540, %v1539
      %v1554 = vpack.c.b16 %v1542, %v1541
      %v1555 = vpack.c.b16 %v1544, %v1543
      %v1556 = vpack.c.b16 %v1546, %v1545
      %v1557 = vpack.c.b16 %v1548, %v1547
      %v1558 = vpack.c.b16 %v1550, %v1549
      %v1561 = vunpack.c.l.b16 %v1533
      %v1562 = vunpack.c.l.b16 %v1534
      %v1563 = vpack.c.b16 %v1562, %v1561
      %v1566 = vsel %vm1128, %v1551, 0
      %v1569 = vsel %vm1128, %v1552, 0
      %v1572 = vsel %vm1128, %v1553, 0
      %v1575 = vsel %vm1128, %v1554, 0
      %v1578 = vsel %vm1128, %v1555, 0
      %v1581 = vsel %vm1128, %v1556, 0
      %v1584 = vsel %vm1128, %v1557, 0
      %v1587 = vsel %vm1128, %v1558, 0
      %1589 = vmatprep.subr.bf16.mxu0 0
      %1590 = vmatpush1.bf16.msra.mxu0 %v1563
      %1591 = vmatprep.subr.bf16.mxu0 0
      %1592 = vmatpush1.bf16.msra.mxu0 0
      %1593 = vmatprep.subr.bf16.mxu0 0
      %1594 = vmatpush1.bf16.msra.mxu0 0
      %1595 = vmatprep.subr.bf16.mxu0 0
      %1596 = vmatpush1.bf16.msra.mxu0 0
      %1597 = vmatprep.subr.bf16.mxu0 0
      %1598 = vmatpush1.bf16.msra.mxu0 0
      %1599 = vmatprep.subr.bf16.mxu0 0
      %1600 = vmatpush1.bf16.msra.mxu0 0
      %1601 = vmatprep.subr.bf16.mxu0 0
      %1602 = vmatpush1.bf16.msra.mxu0 0
      %1603 = vmatprep.subr.bf16.mxu0 0
      %1604 = vmatpush1.bf16.msra.mxu0 0
      %1605 = vmatprep.subr.bf16.mxu0 0
      %1606 = vmatpush1.bf16.msra.mxu0 0
      %1607 = vmatprep.subr.bf16.mxu0 0
      %1608 = vmatpush1.bf16.msra.mxu0 0
      %1609 = vmatprep.subr.bf16.mxu0 0
      %1610 = vmatpush1.bf16.msra.mxu0 0
      %1611 = vmatprep.subr.bf16.mxu0 0
      %1612 = vmatpush1.bf16.msra.mxu0 0
      %1613 = vmatprep.subr.bf16.mxu0 0
      %1614 = vmatpush1.bf16.msra.mxu0 0
      %1615 = vmatprep.subr.bf16.mxu0 0
      %1616 = vmatpush1.bf16.msra.mxu0 0
      %1617 = vmatprep.subr.bf16.mxu0 0
      %1618 = vmatpush1.bf16.msra.mxu0 0
      %1619 = vmatprep.subr.bf16.mxu0 0
      %1620 = vmatpush1.bf16.msra.mxu0 0
      %1621 = vmatprep.mubr.bf16.mxu0 0
      %1622 = vmatmul.mubr.bf16.gmra.mrb[0].mxu0 %v1566
      %v1623 = vpop.f32.mrb[0].mxu0
      %v1624 = vadd.f32 0.0, %v1623
      %v1625 = vpop.f32.mrb[0].mxu0
      %v1626 = vpop.f32.mrb[0].mxu0
      %v1627 = vadd.f32 0.0, %v1626
      %v1628 = vpop.f32.mrb[0].mxu0
      %1629 = vmatprep.mubr.bf16.mxu0 0
      %1630 = vmatmul.mubr.bf16.gmra.mrb[0].mxu0 %v1569
      %v1631 = vpop.f32.mrb[0].mxu0
      %v1632 = vadd.f32 0.0, %v1631
      %v1633 = vpop.f32.mrb[0].mxu0
      %v1634 = vpop.f32.mrb[0].mxu0
      %v1635 = vadd.f32 0.0, %v1634
      %v1636 = vpop.f32.mrb[0].mxu0
      %1637 = vmatprep.mubr.bf16.mxu0 0
      %1638 = vmatmul.mubr.bf16.gmra.mrb[0].mxu0 %v1572
      %v1639 = vpop.f32.mrb[0].mxu0
      %v1640 = vadd.f32 0.0, %v1639
      %v1641 = vpop.f32.mrb[0].mxu0
      %v1642 = vpop.f32.mrb[0].mxu0
      %v1643 = vadd.f32 0.0, %v1642
      %v1644 = vpop.f32.mrb[0].mxu0
      %1645 = vmatprep.mubr.bf16.mxu0 0
      %1646 = vmatmul.mubr.bf16.gmra.mrb[0].mxu0 %v1575
      %v1647 = vpop.f32.mrb[0].mxu0
      %v1648 = vadd.f32 0.0, %v1647
      %v1649 = vpop.f32.mrb[0].mxu0
      %v1650 = vpop.f32.mrb[0].mxu0
      %v1651 = vadd.f32 0.0, %v1650
      %v1652 = vpop.f32.mrb[0].mxu0
      %1653 = vmatprep.mubr.bf16.mxu0 0
      %1654 = vmatmul.mubr.bf16.gmra.mrb[0].mxu0 %v1578
      %v1655 = vpop.f32.mrb[0].mxu0
      %v1656 = vadd.f32 0.0, %v1655
      %v1657 = vpop.f32.mrb[0].mxu0
      %v1658 = vpop.f32.mrb[0].mxu0
      %v1659 = vadd.f32 0.0, %v1658
      %v1660 = vpop.f32.mrb[0].mxu0
      %1661 = vmatprep.mubr.bf16.mxu0 0
      %1662 = vmatmul.mubr.bf16.gmra.mrb[0].mxu0 %v1581
      %v1663 = vpop.f32.mrb[0].mxu0
      %v1664 = vadd.f32 0.0, %v1663
      %v1665 = vpop.f32.mrb[0].mxu0
      %v1666 = vpop.f32.mrb[0].mxu0
      %v1667 = vadd.f32 0.0, %v1666
      %v1668 = vpop.f32.mrb[0].mxu0
      %1669 = vmatprep.mubr.bf16.mxu0 0
      %1670 = vmatmul.mubr.bf16.gmra.mrb[0].mxu0 %v1584
      %v1671 = vpop.f32.mrb[0].mxu0
      %v1672 = vadd.f32 0.0, %v1671
      %v1673 = vpop.f32.mrb[0].mxu0
      %v1674 = vpop.f32.mrb[0].mxu0
      %v1675 = vadd.f32 0.0, %v1674
      %v1676 = vpop.f32.mrb[0].mxu0
      %1677 = vmatprep.mubr.bf16.mxu0 0
      %1678 = vmatmul.mubr.bf16.gmra.mrb[0].mxu0 %v1587
      %v1679 = vpop.f32.mrb[0].mxu0
      %v1680 = vadd.f32 0.0, %v1679
      %v1681 = vpop.f32.mrb[0].mxu0
      %v1682 = vpop.f32.mrb[0].mxu0
      %v1683 = vadd.f32 0.0, %v1682
      %v1684 = vpop.f32.mrb[0].mxu0
      %1685 = vdwg.mxu0
      %v1686 = vadd.f32 %v1355, %v1624
      %v1687 = vadd.f32 %v1358, %v1627
      %v1688 = vadd.f32 %v1363, %v1632
      %v1689 = vadd.f32 %v1366, %v1635
      %v1690 = vadd.f32 %v1371, %v1640
      %v1691 = vadd.f32 %v1374, %v1643
      %v1692 = vadd.f32 %v1379, %v1648
      %v1693 = vadd.f32 %v1382, %v1651
      %v1694 = vadd.f32 %v1387, %v1656
      %v1695 = vadd.f32 %v1390, %v1659
      %v1696 = vadd.f32 %v1395, %v1664
      %v1697 = vadd.f32 %v1398, %v1667
      %v1698 = vadd.f32 %v1403, %v1672
      %v1699 = vadd.f32 %v1406, %v1675
      %v1700 = vadd.f32 %v1411, %v1680
      %v1701 = vadd.f32 %v1414, %v1683
      %v1702 = vld [vmem:[%s735] sm:$0xf]
      %v1703 = vld [vmem:[%s735 + $0x8] sm:$0xf]
      %v1704 = vld [vmem:[%s735 + $0x10] sm:$0xf]
      %v1705 = vld [vmem:[%s735 + $0x18] sm:$0xf]
      %v1706 = vld [vmem:[%s735 + $0x20] sm:$0xf]
      %v1707 = vld [vmem:[%s735 + $0x28] sm:$0xf]
      %v1708 = vld [vmem:[%s735 + $0x30] sm:$0xf]
      %v1709 = vld [vmem:[%s735 + $0x38] sm:$0xf]
      %v1710 = vld [vmem:[%s735 + $0x40] sm:$0xf]
      %v1711 = vld [vmem:[%s735 + $0x48] sm:$0xf]
      %v1712 = vld [vmem:[%s735 + $0x50] sm:$0xf]
      %v1713 = vld [vmem:[%s735 + $0x58] sm:$0xf]
      %v1714 = vld [vmem:[%s735 + $0x60] sm:$0xf]
      %v1715 = vld [vmem:[%s735 + $0x68] sm:$0xf]
      %v1716 = vld [vmem:[%s735 + $0x70] sm:$0xf]
      %v1717 = vld [vmem:[%s735 + $0x78] sm:$0xf]
      %s1718 = scalar_lea.vmem %s3, 24
      %v1719 = vld [vmem:[%s1718] sm:$0xf]
      %v1720 = vld [vmem:[%s1718 + $0x4] sm:$0xf]
      %v1737 = vunpack.c.l.b16 %v1702
      %v1738 = vunpack.c.l.b16 %v1703
      %v1739 = vunpack.c.l.b16 %v1704
      %v1740 = vunpack.c.l.b16 %v1705
      %v1741 = vunpack.c.l.b16 %v1706
      %v1742 = vunpack.c.l.b16 %v1707
      %v1743 = vunpack.c.l.b16 %v1708
      %v1744 = vunpack.c.l.b16 %v1709
      %v1745 = vunpack.c.l.b16 %v1710
      %v1746 = vunpack.c.l.b16 %v1711
      %v1747 = vunpack.c.l.b16 %v1712
      %v1748 = vunpack.c.l.b16 %v1713
      %v1749 = vunpack.c.l.b16 %v1714
      %v1750 = vunpack.c.l.b16 %v1715
      %v1751 = vunpack.c.l.b16 %v1716
      %v1752 = vunpack.c.l.b16 %v1717
      %v1753 = vpack.c.b16 %v1738, %v1737
      %v1754 = vpack.c.b16 %v1740, %v1739
      %v1755 = vpack.c.b16 %v1742, %v1741
      %v1756 = vpack.c.b16 %v1744, %v1743
      %v1757 = vpack.c.b16 %v1746, %v1745
      %v1758 = vpack.c.b16 %v1748, %v1747
      %v1759 = vpack.c.b16 %v1750, %v1749
      %v1760 = vpack.c.b16 %v1752, %v1751
      %v1763 = vunpack.c.l.b16 %v1719
      %v1764 = vunpack.c.l.b16 %v1720
      %v1765 = vpack.c.b16 %v1764, %v1763
      %v1768 = vsel %vm1128, %v1753, 0
      %v1771 = vsel %vm1128, %v1754, 0
      %v1774 = vsel %vm1128, %v1755, 0
      %v1777 = vsel %vm1128, %v1756, 0
      %v1780 = vsel %vm1128, %v1757, 0
      %v1783 = vsel %vm1128, %v1758, 0
      %v1786 = vsel %vm1128, %v1759, 0
      %v1789 = vsel %vm1128, %v1760, 0
      %1791 = vmatprep.subr.bf16.mxu0 0
      %1792 = vmatpush1.bf16.msra.mxu0 %v1765
      %1793 = vmatprep.subr.bf16.mxu0 0
      %1794 = vmatpush1.bf16.msra.mxu0 0
      %1795 = vmatprep.subr.bf16.mxu0 0
      %1796 = vmatpush1.bf16.msra.mxu0 0
      %1797 = vmatprep.subr.bf16.mxu0 0
      %1798 = vmatpush1.bf16.msra.mxu0 0
      %1799 = vmatprep.subr.bf16.mxu0 0
      %1800 = vmatpush1.bf16.msra.mxu0 0
      %1801 = vmatprep.subr.bf16.mxu0 0
      %1802 = vmatpush1.bf16.msra.mxu0 0
      %1803 = vmatprep.subr.bf16.mxu0 0
      %1804 = vmatpush1.bf16.msra.mxu0 0
      %1805 = vmatprep.subr.bf16.mxu0 0
      %1806 = vmatpush1.bf16.msra.mxu0 0
      %1807 = vmatprep.subr.bf16.mxu0 0
      %1808 = vmatpush1.bf16.msra.mxu0 0
      %1809 = vmatprep.subr.bf16.mxu0 0
      %1810 = vmatpush1.bf16.msra.mxu0 0
      %1811 = vmatprep.subr.bf16.mxu0 0
      %1812 = vmatpush1.bf16.msra.mxu0 0
      %1813 = vmatprep.subr.bf16.mxu0 0
      %1814 = vmatpush1.bf16.msra.mxu0 0
      %1815 = vmatprep.subr.bf16.mxu0 0
      %1816 = vmatpush1.bf16.msra.mxu0 0
      %1817 = vmatprep.subr.bf16.mxu0 0
      %1818 = vmatpush1.bf16.msra.mxu0 0
      %1819 = vmatprep.subr.bf16.mxu0 0
      %1820 = vmatpush1.bf16.msra.mxu0 0
      %1821 = vmatprep.subr.bf16.mxu0 0
      %1822 = vmatpush1.bf16.msra.mxu0 0
      %1823 = vmatprep.mubr.bf16.mxu0 0
      %1824 = vmatmul.mubr.bf16.gmra.mrb[0].mxu0 %v1768
      %v1825 = vpop.f32.mrb[0].mxu0
      %v1826 = vadd.f32 0.0, %v1825
      %v1827 = vpop.f32.mrb[0].mxu0
      %v1828 = vpop.f32.mrb[0].mxu0
      %v1829 = vadd.f32 0.0, %v1828
      %v1830 = vpop.f32.mrb[0].mxu0
      %1831 = vmatprep.mubr.bf16.mxu0 0
      %1832 = vmatmul.mubr.bf16.gmra.mrb[0].mxu0 %v1771
      %v1833 = vpop.f32.mrb[0].mxu0
      %v1834 = vadd.f32 0.0, %v1833
      %v1835 = vpop.f32.mrb[0].mxu0
      %v1836 = vpop.f32.mrb[0].mxu0
      %v1837 = vadd.f32 0.0, %v1836
      %v1838 = vpop.f32.mrb[0].mxu0
      %1839 = vmatprep.mubr.bf16.mxu0 0
      %1840 = vmatmul.mubr.bf16.gmra.mrb[0].mxu0 %v1774
      %v1841 = vpop.f32.mrb[0].mxu0
      %v1842 = vadd.f32 0.0, %v1841
      %v1843 = vpop.f32.mrb[0].mxu0
      %v1844 = vpop.f32.mrb[0].mxu0
      %v1845 = vadd.f32 0.0, %v1844
      %v1846 = vpop.f32.mrb[0].mxu0
      %1847 = vmatprep.mubr.bf16.mxu0 0
      %1848 = vmatmul.mubr.bf16.gmra.mrb[0].mxu0 %v1777
      %v1849 = vpop.f32.mrb[0].mxu0
      %v1850 = vadd.f32 0.0, %v1849
      %v1851 = vpop.f32.mrb[0].mxu0
      %v1852 = vpop.f32.mrb[0].mxu0
      %v1853 = vadd.f32 0.0, %v1852
      %v1854 = vpop.f32.mrb[0].mxu0
      %1855 = vmatprep.mubr.bf16.mxu0 0
      %1856 = vmatmul.mubr.bf16.gmra.mrb[0].mxu0 %v1780
      %v1857 = vpop.f32.mrb[0].mxu0
      %v1858 = vadd.f32 0.0, %v1857
      %v1859 = vpop.f32.mrb[0].mxu0
      %v1860 = vpop.f32.mrb[0].mxu0
      %v1861 = vadd.f32 0.0, %v1860
      %v1862 = vpop.f32.mrb[0].mxu0
      %1863 = vmatprep.mubr.bf16.mxu0 0
      %1864 = vmatmul.mubr.bf16.gmra.mrb[0].mxu0 %v1783
      %v1865 = vpop.f32.mrb[0].mxu0
      %v1866 = vadd.f32 0.0, %v1865
      %v1867 = vpop.f32.mrb[0].mxu0
      %v1868 = vpop.f32.mrb[0].mxu0
      %v1869 = vadd.f32 0.0, %v1868
      %v1870 = vpop.f32.mrb[0].mxu0
      %1871 = vmatprep.mubr.bf16.mxu0 0
      %1872 = vmatmul.mubr.bf16.gmra.mrb[0].mxu0 %v1786
      %v1873 = vpop.f32.mrb[0].mxu0
      %v1874 = vadd.f32 0.0, %v1873
      %v1875 = vpop.f32.mrb[0].mxu0
      %v1876 = vpop.f32.mrb[0].mxu0
      %v1877 = vadd.f32 0.0, %v1876
      %v1878 = vpop.f32.mrb[0].mxu0
      %1879 = vmatprep.mubr.bf16.mxu0 0
      %1880 = vmatmul.mubr.bf16.gmra.mrb[0].mxu0 %v1789
      %v1881 = vpop.f32.mrb[0].mxu0
      %v1882 = vadd.f32 0.0, %v1881
      %v1883 = vpop.f32.mrb[0].mxu0
      %v1884 = vpop.f32.mrb[0].mxu0
      %v1885 = vadd.f32 0.0, %v1884
      %v1886 = vpop.f32.mrb[0].mxu0
      %1887 = vdwg.mxu0
      %v1888 = vadd.f32 %v1686, %v1826
      %v1889 = vadd.f32 %v1687, %v1829
      %v1890 = vadd.f32 %v1688, %v1834
      %v1891 = vadd.f32 %v1689, %v1837
      %v1892 = vadd.f32 %v1690, %v1842
      %v1893 = vadd.f32 %v1691, %v1845
      %v1894 = vadd.f32 %v1692, %v1850
      %v1895 = vadd.f32 %v1693, %v1853
      %v1896 = vadd.f32 %v1694, %v1858
      %v1897 = vadd.f32 %v1695, %v1861
      %v1898 = vadd.f32 %v1696, %v1866
      %v1899 = vadd.f32 %v1697, %v1869
      %v1900 = vadd.f32 %v1698, %v1874
      %v1901 = vadd.f32 %v1699, %v1877
      %v1902 = vadd.f32 %v1700, %v1882
      %v1903 = vadd.f32 %v1701, %v1885
      %v1904 = vld [vmem:[%s735] sm:$0xf]
      %v1905 = vld [vmem:[%s735 + $0x4] sm:$0x1]
      %v1906 = vld [vmem:[%s735 + $0x8] sm:$0xf]
      %v1907 = vld [vmem:[%s735 + $0xc] sm:$0x1]
      %v1908 = vld [vmem:[%s735 + $0x10] sm:$0xf]
      %v1909 = vld [vmem:[%s735 + $0x14] sm:$0x1]
      %v1910 = vld [vmem:[%s735 + $0x18] sm:$0xf]
      %v1911 = vld [vmem:[%s735 + $0x1c] sm:$0x1]
      %v1912 = vld [vmem:[%s735 + $0x20] sm:$0xf]
      %v1913 = vld [vmem:[%s735 + $0x24] sm:$0x1]
      %v1914 = vld [vmem:[%s735 + $0x28] sm:$0xf]
      %v1915 = vld [vmem:[%s735 + $0x2c] sm:$0x1]
      %v1916 = vld [vmem:[%s735 + $0x30] sm:$0xf]
      %v1917 = vld [vmem:[%s735 + $0x34] sm:$0x1]
      %v1918 = vld [vmem:[%s735 + $0x38] sm:$0xf]
      %v1919 = vld [vmem:[%s735 + $0x3c] sm:$0x1]
      %v1920 = vld [vmem:[%s735 + $0x40] sm:$0xf]
      %v1921 = vld [vmem:[%s735 + $0x44] sm:$0x1]
      %v1922 = vld [vmem:[%s735 + $0x48] sm:$0xf]
      %v1923 = vld [vmem:[%s735 + $0x4c] sm:$0x1]
      %v1924 = vld [vmem:[%s735 + $0x50] sm:$0xf]
      %v1925 = vld [vmem:[%s735 + $0x54] sm:$0x1]
      %v1926 = vld [vmem:[%s735 + $0x58] sm:$0xf]
      %v1927 = vld [vmem:[%s735 + $0x5c] sm:$0x1]
      %v1928 = vld [vmem:[%s735 + $0x60] sm:$0xf]
      %v1929 = vld [vmem:[%s735 + $0x64] sm:$0x1]
      %v1930 = vld [vmem:[%s735 + $0x68] sm:$0xf]
      %v1931 = vld [vmem:[%s735 + $0x6c] sm:$0x1]
      %v1932 = vld [vmem:[%s735 + $0x70] sm:$0xf]
      %v1933 = vld [vmem:[%s735 + $0x74] sm:$0x1]
      %v1934 = vld [vmem:[%s735 + $0x78] sm:$0xf]
      %v1935 = vld [vmem:[%s735 + $0x7c] sm:$0x1]
      %v1937 = vshrl.u32 %v1904, 16
      %v1939 = vrot.slane %v1937, 4
      %v1940 = vshll.u32 %v1904, 16
      %v1942 = vrot.slane %v1940, 5
      %v1943 = vor.u32 %v1939, %v1942
      %v1944 = vrot.slane %v1943, 4
      %v1946 = vshll.u32 %v1905, 16
      %v1948 = vrot.slane %v1946, 5
      %v1949 = vsel %vm870, %v1944, %v1948
      %v1951 = vshrl.u32 %v1906, 16
      %v1953 = vrot.slane %v1951, 4
      %v1954 = vshll.u32 %v1906, 16
      %v1956 = vrot.slane %v1954, 5
      %v1957 = vor.u32 %v1953, %v1956
      %v1958 = vrot.slane %v1957, 4
      %v1960 = vshll.u32 %v1907, 16
      %v1962 = vrot.slane %v1960, 5
      %v1963 = vsel %vm870, %v1958, %v1962
      %v1965 = vshrl.u32 %v1908, 16
      %v1967 = vrot.slane %v1965, 4
      %v1968 = vshll.u32 %v1908, 16
      %v1970 = vrot.slane %v1968, 5
      %v1971 = vor.u32 %v1967, %v1970
      %v1972 = vrot.slane %v1971, 4
      %v1974 = vshll.u32 %v1909, 16
      %v1976 = vrot.slane %v1974, 5
      %v1977 = vsel %vm870, %v1972, %v1976
      %v1979 = vshrl.u32 %v1910, 16
      %v1981 = vrot.slane %v1979, 4
      %v1982 = vshll.u32 %v1910, 16
      %v1984 = vrot.slane %v1982, 5
      %v1985 = vor.u32 %v1981, %v1984
      %v1986 = vrot.slane %v1985, 4
      %v1988 = vshll.u32 %v1911, 16
      %v1990 = vrot.slane %v1988, 5
      %v1991 = vsel %vm870, %v1986, %v1990
      %v1993 = vshrl.u32 %v1912, 16
      %v1995 = vrot.slane %v1993, 4
      %v1996 = vshll.u32 %v1912, 16
      %v1998 = vrot.slane %v1996, 5
      %v1999 = vor.u32 %v1995, %v1998
      %v2000 = vrot.slane %v1999, 4
      %v2002 = vshll.u32 %v1913, 16
      %v2004 = vrot.slane %v2002, 5
      %v2005 = vsel %vm870, %v2000, %v2004
      %v2007 = vshrl.u32 %v1914, 16
      %v2009 = vrot.slane %v2007, 4
      %v2010 = vshll.u32 %v1914, 16
      %v2012 = vrot.slane %v2010, 5
      %v2013 = vor.u32 %v2009, %v2012
      %v2014 = vrot.slane %v2013, 4
      %v2016 = vshll.u32 %v1915, 16
      %v2018 = vrot.slane %v2016, 5
      %v2019 = vsel %vm870, %v2014, %v2018
      %v2021 = vshrl.u32 %v1916, 16
      %v2023 = vrot.slane %v2021, 4
      %v2024 = vshll.u32 %v1916, 16
      %v2026 = vrot.slane %v2024, 5
      %v2027 = vor.u32 %v2023, %v2026
      %v2028 = vrot.slane %v2027, 4
      %v2030 = vshll.u32 %v1917, 16
      %v2032 = vrot.slane %v2030, 5
      %v2033 = vsel %vm870, %v2028, %v2032
      %v2035 = vshrl.u32 %v1918, 16
      %v2037 = vrot.slane %v2035, 4
      %v2038 = vshll.u32 %v1918, 16
      %v2040 = vrot.slane %v2038, 5
      %v2041 = vor.u32 %v2037, %v2040
      %v2042 = vrot.slane %v2041, 4
      %v2044 = vshll.u32 %v1919, 16
      %v2046 = vrot.slane %v2044, 5
      %v2047 = vsel %vm870, %v2042, %v2046
      %v2049 = vshrl.u32 %v1920, 16
      %v2051 = vrot.slane %v2049, 4
      %v2052 = vshll.u32 %v1920, 16
      %v2054 = vrot.slane %v2052, 5
      %v2055 = vor.u32 %v2051, %v2054
      %v2056 = vrot.slane %v2055, 4
      %v2058 = vshll.u32 %v1921, 16
      %v2060 = vrot.slane %v2058, 5
      %v2061 = vsel %vm870, %v2056, %v2060
      %v2063 = vshrl.u32 %v1922, 16
      %v2065 = vrot.slane %v2063, 4
      %v2066 = vshll.u32 %v1922, 16
      %v2068 = vrot.slane %v2066, 5
      %v2069 = vor.u32 %v2065, %v2068
      %v2070 = vrot.slane %v2069, 4
      %v2072 = vshll.u32 %v1923, 16
      %v2074 = vrot.slane %v2072, 5
      %v2075 = vsel %vm870, %v2070, %v2074
      %v2077 = vshrl.u32 %v1924, 16
      %v2079 = vrot.slane %v2077, 4
      %v2080 = vshll.u32 %v1924, 16
      %v2082 = vrot.slane %v2080, 5
      %v2083 = vor.u32 %v2079, %v2082
      %v2084 = vrot.slane %v2083, 4
      %v2086 = vshll.u32 %v1925, 16
      %v2088 = vrot.slane %v2086, 5
      %v2089 = vsel %vm870, %v2084, %v2088
      %v2091 = vshrl.u32 %v1926, 16
      %v2093 = vrot.slane %v2091, 4
      %v2094 = vshll.u32 %v1926, 16
      %v2096 = vrot.slane %v2094, 5
      %v2097 = vor.u32 %v2093, %v2096
      %v2098 = vrot.slane %v2097, 4
      %v2100 = vshll.u32 %v1927, 16
      %v2102 = vrot.slane %v2100, 5
      %v2103 = vsel %vm870, %v2098, %v2102
      %v2105 = vshrl.u32 %v1928, 16
      %v2107 = vrot.slane %v2105, 4
      %v2108 = vshll.u32 %v1928, 16
      %v2110 = vrot.slane %v2108, 5
      %v2111 = vor.u32 %v2107, %v2110
      %v2112 = vrot.slane %v2111, 4
      %v2114 = vshll.u32 %v1929, 16
      %v2116 = vrot.slane %v2114, 5
      %v2117 = vsel %vm870, %v2112, %v2116
      %v2119 = vshrl.u32 %v1930, 16
      %v2121 = vrot.slane %v2119, 4
      %v2122 = vshll.u32 %v1930, 16
      %v2124 = vrot.slane %v2122, 5
      %v2125 = vor.u32 %v2121, %v2124
      %v2126 = vrot.slane %v2125, 4
      %v2128 = vshll.u32 %v1931, 16
      %v2130 = vrot.slane %v2128, 5
      %v2131 = vsel %vm870, %v2126, %v2130
      %v2133 = vshrl.u32 %v1932, 16
      %v2135 = vrot.slane %v2133, 4
      %v2136 = vshll.u32 %v1932, 16
      %v2138 = vrot.slane %v2136, 5
      %v2139 = vor.u32 %v2135, %v2138
      %v2140 = vrot.slane %v2139, 4
      %v2142 = vshll.u32 %v1933, 16
      %v2144 = vrot.slane %v2142, 5
      %v2145 = vsel %vm870, %v2140, %v2144
      %v2147 = vshrl.u32 %v1934, 16
      %v2149 = vrot.slane %v2147, 4
      %v2150 = vshll.u32 %v1934, 16
      %v2152 = vrot.slane %v2150, 5
      %v2153 = vor.u32 %v2149, %v2152
      %v2154 = vrot.slane %v2153, 4
      %v2156 = vshll.u32 %v1935, 16
      %v2158 = vrot.slane %v2156, 5
      %v2159 = vsel %vm870, %v2154, %v2158
      %s2160 = scalar_lea.vmem %s3, 32
      %v2161 = vld [vmem:[%s2160] sm:$0xf]
      %v2162 = vld [vmem:[%s2160 + $0x4] sm:$0xf]
      %v2163 = vunpack.c.l.b16 %v1949
      %v2164 = vunpack.c.l.b16 %v1963
      %v2165 = vunpack.c.l.b16 %v1977
      %v2166 = vunpack.c.l.b16 %v1991
      %v2167 = vunpack.c.l.b16 %v2005
      %v2168 = vunpack.c.l.b16 %v2019
      %v2169 = vunpack.c.l.b16 %v2033
      %v2170 = vunpack.c.l.b16 %v2047
      %v2171 = vunpack.c.l.b16 %v2061
      %v2172 = vunpack.c.l.b16 %v2075
      %v2173 = vunpack.c.l.b16 %v2089
      %v2174 = vunpack.c.l.b16 %v2103
      %v2175 = vunpack.c.l.b16 %v2117
      %v2176 = vunpack.c.l.b16 %v2131
      %v2177 = vunpack.c.l.b16 %v2145
      %v2178 = vunpack.c.l.b16 %v2159
      %v2179 = vpack.c.b16 %v2164, %v2163
      %v2180 = vpack.c.b16 %v2166, %v2165
      %v2181 = vpack.c.b16 %v2168, %v2167
      %v2182 = vpack.c.b16 %v2170, %v2169
      %v2183 = vpack.c.b16 %v2172, %v2171
      %v2184 = vpack.c.b16 %v2174, %v2173
      %v2185 = vpack.c.b16 %v2176, %v2175
      %v2186 = vpack.c.b16 %v2178, %v2177
      %v2189 = vunpack.c.l.b16 %v2161
      %v2190 = vunpack.c.l.b16 %v2162
      %v2191 = vpack.c.b16 %v2190, %v2189
      %v2194 = vsel %vm1128, %v2179, 0
      %v2197 = vsel %vm1128, %v2180, 0
      %v2200 = vsel %vm1128, %v2181, 0
      %v2203 = vsel %vm1128, %v2182, 0
      %v2206 = vsel %vm1128, %v2183, 0
      %v2209 = vsel %vm1128, %v2184, 0
      %v2212 = vsel %vm1128, %v2185, 0
      %v2215 = vsel %vm1128, %v2186, 0
      %2217 = vmatprep.subr.bf16.mxu0 0
      %2218 = vmatpush1.bf16.msra.mxu0 %v2191
      %2219 = vmatprep.subr.bf16.mxu0 0
      %2220 = vmatpush1.bf16.msra.mxu0 0
      %2221 = vmatprep.subr.bf16.mxu0 0
      %2222 = vmatpush1.bf16.msra.mxu0 0
      %2223 = vmatprep.subr.bf16.mxu0 0
      %2224 = vmatpush1.bf16.msra.mxu0 0
      %2225 = vmatprep.subr.bf16.mxu0 0
      %2226 = vmatpush1.bf16.msra.mxu0 0
      %2227 = vmatprep.subr.bf16.mxu0 0
      %2228 = vmatpush1.bf16.msra.mxu0 0
      %2229 = vmatprep.subr.bf16.mxu0 0
      %2230 = vmatpush1.bf16.msra.mxu0 0
      %2231 = vmatprep.subr.bf16.mxu0 0
      %2232 = vmatpush1.bf16.msra.mxu0 0
      %2233 = vmatprep.subr.bf16.mxu0 0
      %2234 = vmatpush1.bf16.msra.mxu0 0
      %2235 = vmatprep.subr.bf16.mxu0 0
      %2236 = vmatpush1.bf16.msra.mxu0 0
      %2237 = vmatprep.subr.bf16.mxu0 0
      %2238 = vmatpush1.bf16.msra.mxu0 0
      %2239 = vmatprep.subr.bf16.mxu0 0
      %2240 = vmatpush1.bf16.msra.mxu0 0
      %2241 = vmatprep.subr.bf16.mxu0 0
      %2242 = vmatpush1.bf16.msra.mxu0 0
      %2243 = vmatprep.subr.bf16.mxu0 0
      %2244 = vmatpush1.bf16.msra.mxu0 0
      %2245 = vmatprep.subr.bf16.mxu0 0
      %2246 = vmatpush1.bf16.msra.mxu0 0
      %2247 = vmatprep.subr.bf16.mxu0 0
      %2248 = vmatpush1.bf16.msra.mxu0 0
      %2249 = vmatprep.mubr.bf16.mxu0 0
      %2250 = vmatmul.mubr.bf16.gmra.mrb[0].mxu0 %v2194
      %v2251 = vpop.f32.mrb[0].mxu0
      %v2252 = vadd.f32 0.0, %v2251
      %v2253 = vpop.f32.mrb[0].mxu0
      %v2254 = vpop.f32.mrb[0].mxu0
      %v2255 = vadd.f32 0.0, %v2254
      %v2256 = vpop.f32.mrb[0].mxu0
      %2257 = vmatprep.mubr.bf16.mxu0 0
      %2258 = vmatmul.mubr.bf16.gmra.mrb[0].mxu0 %v2197
      %v2259 = vpop.f32.mrb[0].mxu0
      %v2260 = vadd.f32 0.0, %v2259
      %v2261 = vpop.f32.mrb[0].mxu0
      %v2262 = vpop.f32.mrb[0].mxu0
      %v2263 = vadd.f32 0.0, %v2262
      %v2264 = vpop.f32.mrb[0].mxu0
      %2265 = vmatprep.mubr.bf16.mxu0 0
      %2266 = vmatmul.mubr.bf16.gmra.mrb[0].mxu0 %v2200
      %v2267 = vpop.f32.mrb[0].mxu0
      %v2268 = vadd.f32 0.0, %v2267
      %v2269 = vpop.f32.mrb[0].mxu0
      %v2270 = vpop.f32.mrb[0].mxu0
      %v2271 = vadd.f32 0.0, %v2270
      %v2272 = vpop.f32.mrb[0].mxu0
      %2273 = vmatprep.mubr.bf16.mxu0 0
      %2274 = vmatmul.mubr.bf16.gmra.mrb[0].mxu0 %v2203
      %v2275 = vpop.f32.mrb[0].mxu0
      %v2276 = vadd.f32 0.0, %v2275
      %v2277 = vpop.f32.mrb[0].mxu0
      %v2278 = vpop.f32.mrb[0].mxu0
      %v2279 = vadd.f32 0.0, %v2278
      %v2280 = vpop.f32.mrb[0].mxu0
      %2281 = vmatprep.mubr.bf16.mxu0 0
      %2282 = vmatmul.mubr.bf16.gmra.mrb[0].mxu0 %v2206
      %v2283 = vpop.f32.mrb[0].mxu0
      %v2284 = vadd.f32 0.0, %v2283
      %v2285 = vpop.f32.mrb[0].mxu0
      %v2286 = vpop.f32.mrb[0].mxu0
      %v2287 = vadd.f32 0.0, %v2286
      %v2288 = vpop.f32.mrb[0].mxu0
      %2289 = vmatprep.mubr.bf16.mxu0 0
      %2290 = vmatmul.mubr.bf16.gmra.mrb[0].mxu0 %v2209
      %v2291 = vpop.f32.mrb[0].mxu0
      %v2292 = vadd.f32 0.0, %v2291
      %v2293 = vpop.f32.mrb[0].mxu0
      %v2294 = vpop.f32.mrb[0].mxu0
      %v2295 = vadd.f32 0.0, %v2294
      %v2296 = vpop.f32.mrb[0].mxu0
      %2297 = vmatprep.mubr.bf16.mxu0 0
      %2298 = vmatmul.mubr.bf16.gmra.mrb[0].mxu0 %v2212
      %v2299 = vpop.f32.mrb[0].mxu0
      %v2300 = vadd.f32 0.0, %v2299
      %v2301 = vpop.f32.mrb[0].mxu0
      %v2302 = vpop.f32.mrb[0].mxu0
      %v2303 = vadd.f32 0.0, %v2302
      %v2304 = vpop.f32.mrb[0].mxu0
      %2305 = vmatprep.mubr.bf16.mxu0 0
      %2306 = vmatmul.mubr.bf16.gmra.mrb[0].mxu0 %v2215
      %v2307 = vpop.f32.mrb[0].mxu0
      %v2308 = vadd.f32 0.0, %v2307
      %v2309 = vpop.f32.mrb[0].mxu0
      %v2310 = vpop.f32.mrb[0].mxu0
      %v2311 = vadd.f32 0.0, %v2310
      %v2312 = vpop.f32.mrb[0].mxu0
      %2313 = vdwg.mxu0
      %v2314 = vadd.f32 %v1888, %v2252
      %v2315 = vadd.f32 %v1889, %v2255
      %v2316 = vadd.f32 %v1890, %v2260
      %v2317 = vadd.f32 %v1891, %v2263
      %v2318 = vadd.f32 %v1892, %v2268
      %v2319 = vadd.f32 %v1893, %v2271
      %v2320 = vadd.f32 %v1894, %v2276
      %v2321 = vadd.f32 %v1895, %v2279
      %v2322 = vadd.f32 %v1896, %v2284
      %v2323 = vadd.f32 %v1897, %v2287
      %v2324 = vadd.f32 %v1898, %v2292
      %v2325 = vadd.f32 %v1899, %v2295
      %v2326 = vadd.f32 %v1900, %v2300
      %v2327 = vadd.f32 %v1901, %v2303
      %v2328 = vadd.f32 %v1902, %v2308
      %v2329 = vadd.f32 %v1903, %v2311
      %v2330 = vld [vmem:[%s735] sm:$0xe]
      %v2331 = vld [vmem:[%s735 + $0x8] sm:$0xe]
      %v2332 = vld [vmem:[%s735 + $0x10] sm:$0xe]
      %v2333 = vld [vmem:[%s735 + $0x18] sm:$0xe]
      %v2334 = vld [vmem:[%s735 + $0x20] sm:$0xe]
      %v2335 = vld [vmem:[%s735 + $0x28] sm:$0xe]
      %v2336 = vld [vmem:[%s735 + $0x30] sm:$0xe]
      %v2337 = vld [vmem:[%s735 + $0x38] sm:$0xe]
      %v2338 = vld [vmem:[%s735 + $0x40] sm:$0xe]
      %v2339 = vld [vmem:[%s735 + $0x48] sm:$0xe]
      %v2340 = vld [vmem:[%s735 + $0x50] sm:$0xe]
      %v2341 = vld [vmem:[%s735 + $0x58] sm:$0xe]
      %v2342 = vld [vmem:[%s735 + $0x60] sm:$0xe]
      %v2343 = vld [vmem:[%s735 + $0x68] sm:$0xe]
      %v2344 = vld [vmem:[%s735 + $0x70] sm:$0xe]
      %v2345 = vld [vmem:[%s735 + $0x78] sm:$0xe]
      %v2378 = vrot.slane %v2330, 5
      %v2379 = vrot.slane %v2378, 4
      %v2380 = vrot.slane %v1905, 5
      %v2381 = vsel %vm1467, %v2379, %v2380
      %v2382 = vrot.slane %v2331, 5
      %v2383 = vrot.slane %v2382, 4
      %v2384 = vrot.slane %v1907, 5
      %v2385 = vsel %vm1467, %v2383, %v2384
      %v2386 = vrot.slane %v2332, 5
      %v2387 = vrot.slane %v2386, 4
      %v2388 = vrot.slane %v1909, 5
      %v2389 = vsel %vm1467, %v2387, %v2388
      %v2390 = vrot.slane %v2333, 5
      %v2391 = vrot.slane %v2390, 4
      %v2392 = vrot.slane %v1911, 5
      %v2393 = vsel %vm1467, %v2391, %v2392
      %v2394 = vrot.slane %v2334, 5
      %v2395 = vrot.slane %v2394, 4
      %v2396 = vrot.slane %v1913, 5
      %v2397 = vsel %vm1467, %v2395, %v2396
      %v2398 = vrot.slane %v2335, 5
      %v2399 = vrot.slane %v2398, 4
      %v2400 = vrot.slane %v1915, 5
      %v2401 = vsel %vm1467, %v2399, %v2400
      %v2402 = vrot.slane %v2336, 5
      %v2403 = vrot.slane %v2402, 4
      %v2404 = vrot.slane %v1917, 5
      %v2405 = vsel %vm1467, %v2403, %v2404
      %v2406 = vrot.slane %v2337, 5
      %v2407 = vrot.slane %v2406, 4
      %v2408 = vrot.slane %v1919, 5
      %v2409 = vsel %vm1467, %v2407, %v2408
      %v2410 = vrot.slane %v2338, 5
      %v2411 = vrot.slane %v2410, 4
      %v2412 = vrot.slane %v1921, 5
      %v2413 = vsel %vm1467, %v2411, %v2412
      %v2414 = vrot.slane %v2339, 5
      %v2415 = vrot.slane %v2414, 4
      %v2416 = vrot.slane %v1923, 5
      %v2417 = vsel %vm1467, %v2415, %v2416
      %v2418 = vrot.slane %v2340, 5
      %v2419 = vrot.slane %v2418, 4
      %v2420 = vrot.slane %v1925, 5
      %v2421 = vsel %vm1467, %v2419, %v2420
      %v2422 = vrot.slane %v2341, 5
      %v2423 = vrot.slane %v2422, 4
      %v2424 = vrot.slane %v1927, 5
      %v2425 = vsel %vm1467, %v2423, %v2424
      %v2426 = vrot.slane %v2342, 5
      %v2427 = vrot.slane %v2426, 4
      %v2428 = vrot.slane %v1929, 5
      %v2429 = vsel %vm1467, %v2427, %v2428
      %v2430 = vrot.slane %v2343, 5
      %v2431 = vrot.slane %v2430, 4
      %v2432 = vrot.slane %v1931, 5
      %v2433 = vsel %vm1467, %v2431, %v2432
      %v2434 = vrot.slane %v2344, 5
      %v2435 = vrot.slane %v2434, 4
      %v2436 = vrot.slane %v1933, 5
      %v2437 = vsel %vm1467, %v2435, %v2436
      %v2438 = vrot.slane %v2345, 5
      %v2439 = vrot.slane %v2438, 4
      %v2440 = vrot.slane %v1935, 5
      %v2441 = vsel %vm1467, %v2439, %v2440
      %s2442 = scalar_lea.vmem %s3, 40
      %v2443 = vld [vmem:[%s2442] sm:$0xf]
      %v2444 = vld [vmem:[%s2442 + $0x4] sm:$0xf]
      %v2445 = vunpack.c.l.b16 %v2381
      %v2446 = vunpack.c.l.b16 %v2385
      %v2447 = vunpack.c.l.b16 %v2389
      %v2448 = vunpack.c.l.b16 %v2393
      %v2449 = vunpack.c.l.b16 %v2397
      %v2450 = vunpack.c.l.b16 %v2401
      %v2451 = vunpack.c.l.b16 %v2405
      %v2452 = vunpack.c.l.b16 %v2409
      %v2453 = vunpack.c.l.b16 %v2413
      %v2454 = vunpack.c.l.b16 %v2417
      %v2455 = vunpack.c.l.b16 %v2421
      %v2456 = vunpack.c.l.b16 %v2425
      %v2457 = vunpack.c.l.b16 %v2429
      %v2458 = vunpack.c.l.b16 %v2433
      %v2459 = vunpack.c.l.b16 %v2437
      %v2460 = vunpack.c.l.b16 %v2441
      %v2461 = vpack.c.b16 %v2446, %v2445
      %v2462 = vpack.c.b16 %v2448, %v2447
      %v2463 = vpack.c.b16 %v2450, %v2449
      %v2464 = vpack.c.b16 %v2452, %v2451
      %v2465 = vpack.c.b16 %v2454, %v2453
      %v2466 = vpack.c.b16 %v2456, %v2455
      %v2467 = vpack.c.b16 %v2458, %v2457
      %v2468 = vpack.c.b16 %v2460, %v2459
      %v2471 = vunpack.c.l.b16 %v2443
      %v2472 = vunpack.c.l.b16 %v2444
      %v2473 = vpack.c.b16 %v2472, %v2471
      %v2476 = vsel %vm1128, %v2461, 0
      %v2479 = vsel %vm1128, %v2462, 0
      %v2482 = vsel %vm1128, %v2463, 0
      %v2485 = vsel %vm1128, %v2464, 0
      %v2488 = vsel %vm1128, %v2465, 0
      %v2491 = vsel %vm1128, %v2466, 0
      %v2494 = vsel %vm1128, %v2467, 0
      %v2497 = vsel %vm1128, %v2468, 0
      %2499 = vmatprep.subr.bf16.mxu0 0
      %2500 = vmatpush1.bf16.msra.mxu0 %v2473
      %2501 = vmatprep.subr.bf16.mxu0 0
      %2502 = vmatpush1.bf16.msra.mxu0 0
      %2503 = vmatprep.subr.bf16.mxu0 0
      %2504 = vmatpush1.bf16.msra.mxu0 0
      %2505 = vmatprep.subr.bf16.mxu0 0
      %2506 = vmatpush1.bf16.msra.mxu0 0
      %2507 = vmatprep.subr.bf16.mxu0 0
      %2508 = vmatpush1.bf16.msra.mxu0 0
      %2509 = vmatprep.subr.bf16.mxu0 0
      %2510 = vmatpush1.bf16.msra.mxu0 0
      %2511 = vmatprep.subr.bf16.mxu0 0
      %2512 = vmatpush1.bf16.msra.mxu0 0
      %2513 = vmatprep.subr.bf16.mxu0 0
      %2514 = vmatpush1.bf16.msra.mxu0 0
      %2515 = vmatprep.subr.bf16.mxu0 0
      %2516 = vmatpush1.bf16.msra.mxu0 0
      %2517 = vmatprep.subr.bf16.mxu0 0
      %2518 = vmatpush1.bf16.msra.mxu0 0
      %2519 = vmatprep.subr.bf16.mxu0 0
      %2520 = vmatpush1.bf16.msra.mxu0 0
      %2521 = vmatprep.subr.bf16.mxu0 0
      %2522 = vmatpush1.bf16.msra.mxu0 0
      %2523 = vmatprep.subr.bf16.mxu0 0
      %2524 = vmatpush1.bf16.msra.mxu0 0
      %2525 = vmatprep.subr.bf16.mxu0 0
      %2526 = vmatpush1.bf16.msra.mxu0 0
      %2527 = vmatprep.subr.bf16.mxu0 0
      %2528 = vmatpush1.bf16.msra.mxu0 0
      %2529 = vmatprep.subr.bf16.mxu0 0
      %2530 = vmatpush1.bf16.msra.mxu0 0
      %2531 = vmatprep.mubr.bf16.mxu0 0
      %2532 = vmatmul.mubr.bf16.gmra.mrb[0].mxu0 %v2476
      %v2533 = vpop.f32.mrb[0].mxu0
      %v2534 = vadd.f32 0.0, %v2533
      %v2535 = vpop.f32.mrb[0].mxu0
      %v2536 = vpop.f32.mrb[0].mxu0
      %v2537 = vadd.f32 0.0, %v2536
      %v2538 = vpop.f32.mrb[0].mxu0
      %2539 = vmatprep.mubr.bf16.mxu0 0
      %2540 = vmatmul.mubr.bf16.gmra.mrb[0].mxu0 %v2479
      %v2541 = vpop.f32.mrb[0].mxu0
      %v2542 = vadd.f32 0.0, %v2541
      %v2543 = vpop.f32.mrb[0].mxu0
      %v2544 = vpop.f32.mrb[0].mxu0
      %v2545 = vadd.f32 0.0, %v2544
      %v2546 = vpop.f32.mrb[0].mxu0
      %2547 = vmatprep.mubr.bf16.mxu0 0
      %2548 = vmatmul.mubr.bf16.gmra.mrb[0].mxu0 %v2482
      %v2549 = vpop.f32.mrb[0].mxu0
      %v2550 = vadd.f32 0.0, %v2549
      %v2551 = vpop.f32.mrb[0].mxu0
      %v2552 = vpop.f32.mrb[0].mxu0
      %v2553 = vadd.f32 0.0, %v2552
      %v2554 = vpop.f32.mrb[0].mxu0
      %2555 = vmatprep.mubr.bf16.mxu0 0
      %2556 = vmatmul.mubr.bf16.gmra.mrb[0].mxu0 %v2485
      %v2557 = vpop.f32.mrb[0].mxu0
      %v2558 = vadd.f32 0.0, %v2557
      %v2559 = vpop.f32.mrb[0].mxu0
      %v2560 = vpop.f32.mrb[0].mxu0
      %v2561 = vadd.f32 0.0, %v2560
      %v2562 = vpop.f32.mrb[0].mxu0
      %2563 = vmatprep.mubr.bf16.mxu0 0
      %2564 = vmatmul.mubr.bf16.gmra.mrb[0].mxu0 %v2488
      %v2565 = vpop.f32.mrb[0].mxu0
      %v2566 = vadd.f32 0.0, %v2565
      %v2567 = vpop.f32.mrb[0].mxu0
      %v2568 = vpop.f32.mrb[0].mxu0
      %v2569 = vadd.f32 0.0, %v2568
      %v2570 = vpop.f32.mrb[0].mxu0
      %2571 = vmatprep.mubr.bf16.mxu0 0
      %2572 = vmatmul.mubr.bf16.gmra.mrb[0].mxu0 %v2491
      %v2573 = vpop.f32.mrb[0].mxu0
      %v2574 = vadd.f32 0.0, %v2573
      %v2575 = vpop.f32.mrb[0].mxu0
      %v2576 = vpop.f32.mrb[0].mxu0
      %v2577 = vadd.f32 0.0, %v2576
      %v2578 = vpop.f32.mrb[0].mxu0
      %2579 = vmatprep.mubr.bf16.mxu0 0
      %2580 = vmatmul.mubr.bf16.gmra.mrb[0].mxu0 %v2494
      %v2581 = vpop.f32.mrb[0].mxu0
      %v2582 = vadd.f32 0.0, %v2581
      %v2583 = vpop.f32.mrb[0].mxu0
      %v2584 = vpop.f32.mrb[0].mxu0
      %v2585 = vadd.f32 0.0, %v2584
      %v2586 = vpop.f32.mrb[0].mxu0
      %2587 = vmatprep.mubr.bf16.mxu0 0
      %2588 = vmatmul.mubr.bf16.gmra.mrb[0].mxu0 %v2497
      %v2589 = vpop.f32.mrb[0].mxu0
      %v2590 = vadd.f32 0.0, %v2589
      %v2591 = vpop.f32.mrb[0].mxu0
      %v2592 = vpop.f32.mrb[0].mxu0
      %v2593 = vadd.f32 0.0, %v2592
      %v2594 = vpop.f32.mrb[0].mxu0
      %2595 = vdwg.mxu0
      %v2596 = vadd.f32 %v2314, %v2534
      %v2597 = vadd.f32 %v2315, %v2537
      %v2598 = vadd.f32 %v2316, %v2542
      %v2599 = vadd.f32 %v2317, %v2545
      %v2600 = vadd.f32 %v2318, %v2550
      %v2601 = vadd.f32 %v2319, %v2553
      %v2602 = vadd.f32 %v2320, %v2558
      %v2603 = vadd.f32 %v2321, %v2561
      %v2604 = vadd.f32 %v2322, %v2566
      %v2605 = vadd.f32 %v2323, %v2569
      %v2606 = vadd.f32 %v2324, %v2574
      %v2607 = vadd.f32 %v2325, %v2577
      %v2608 = vadd.f32 %v2326, %v2582
      %v2609 = vadd.f32 %v2327, %v2585
      %v2610 = vadd.f32 %v2328, %v2590
      %v2611 = vadd.f32 %v2329, %v2593
      %s2612 = scalar_lea.vmem [#allocation2], 16
      %v2613 = vld [vmem:[%s2612] sm:$0xf]
      %v2614 = vld [vmem:[%s2612 + $0x8] sm:$0xf]
      %v2615 = vld [vmem:[%s2612 + $0x10] sm:$0xf]
      %v2616 = vld [vmem:[%s2612 + $0x18] sm:$0xf]
      %v2617 = vld [vmem:[%s2612 + $0x20] sm:$0xf]
      %v2618 = vld [vmem:[%s2612 + $0x28] sm:$0xf]
      %v2619 = vld [vmem:[%s2612 + $0x30] sm:$0xf]
      %v2620 = vld [vmem:[%s2612 + $0x38] sm:$0xf]
      %v2621 = vld [vmem:[%s2612 + $0x40] sm:$0xf]
      %v2622 = vld [vmem:[%s2612 + $0x48] sm:$0xf]
      %v2623 = vld [vmem:[%s2612 + $0x50] sm:$0xf]
      %v2624 = vld [vmem:[%s2612 + $0x58] sm:$0xf]
      %v2625 = vld [vmem:[%s2612 + $0x60] sm:$0xf]
      %v2626 = vld [vmem:[%s2612 + $0x68] sm:$0xf]
      %v2627 = vld [vmem:[%s2612 + $0x70] sm:$0xf]
      %v2628 = vld [vmem:[%s2612 + $0x78] sm:$0xf]
      %s2629 = scalar_lea.vmem %s3, 48
      %v2630 = vld [vmem:[%s2629] sm:$0xf]
      %v2631 = vld [vmem:[%s2629 + $0x4] sm:$0xf]
      %v2648 = vunpack.c.l.b16 %v2613
      %v2649 = vunpack.c.l.b16 %v2614
      %v2650 = vunpack.c.l.b16 %v2615
      %v2651 = vunpack.c.l.b16 %v2616
      %v2652 = vunpack.c.l.b16 %v2617
      %v2653 = vunpack.c.l.b16 %v2618
      %v2654 = vunpack.c.l.b16 %v2619
      %v2655 = vunpack.c.l.b16 %v2620
      %v2656 = vunpack.c.l.b16 %v2621
      %v2657 = vunpack.c.l.b16 %v2622
      %v2658 = vunpack.c.l.b16 %v2623
      %v2659 = vunpack.c.l.b16 %v2624
      %v2660 = vunpack.c.l.b16 %v2625
      %v2661 = vunpack.c.l.b16 %v2626
      %v2662 = vunpack.c.l.b16 %v2627
      %v2663 = vunpack.c.l.b16 %v2628
      %v2664 = vpack.c.b16 %v2649, %v2648
      %v2665 = vpack.c.b16 %v2651, %v2650
      %v2666 = vpack.c.b16 %v2653, %v2652
      %v2667 = vpack.c.b16 %v2655, %v2654
      %v2668 = vpack.c.b16 %v2657, %v2656
      %v2669 = vpack.c.b16 %v2659, %v2658
      %v2670 = vpack.c.b16 %v2661, %v2660
      %v2671 = vpack.c.b16 %v2663, %v2662
      %v2674 = vunpack.c.l.b16 %v2630
      %v2675 = vunpack.c.l.b16 %v2631
      %v2676 = vpack.c.b16 %v2675, %v2674
      %v2679 = vsel %vm1128, %v2664, 0
      %v2682 = vsel %vm1128, %v2665, 0
      %v2685 = vsel %vm1128, %v2666, 0
      %v2688 = vsel %vm1128, %v2667, 0
      %v2691 = vsel %vm1128, %v2668, 0
      %v2694 = vsel %vm1128, %v2669, 0
      %v2697 = vsel %vm1128, %v2670, 0
      %v2700 = vsel %vm1128, %v2671, 0
      %2702 = vmatprep.subr.bf16.mxu0 0
      %2703 = vmatpush1.bf16.msra.mxu0 %v2676
      %2704 = vmatprep.subr.bf16.mxu0 0
      %2705 = vmatpush1.bf16.msra.mxu0 0
      %2706 = vmatprep.subr.bf16.mxu0 0
      %2707 = vmatpush1.bf16.msra.mxu0 0
      %2708 = vmatprep.subr.bf16.mxu0 0
      %2709 = vmatpush1.bf16.msra.mxu0 0
      %2710 = vmatprep.subr.bf16.mxu0 0
      %2711 = vmatpush1.bf16.msra.mxu0 0
      %2712 = vmatprep.subr.bf16.mxu0 0
      %2713 = vmatpush1.bf16.msra.mxu0 0
      %2714 = vmatprep.subr.bf16.mxu0 0
      %2715 = vmatpush1.bf16.msra.mxu0 0
      %2716 = vmatprep.subr.bf16.mxu0 0
      %2717 = vmatpush1.bf16.msra.mxu0 0
      %2718 = vmatprep.subr.bf16.mxu0 0
      %2719 = vmatpush1.bf16.msra.mxu0 0
      %2720 = vmatprep.subr.bf16.mxu0 0
      %2721 = vmatpush1.bf16.msra.mxu0 0
      %2722 = vmatprep.subr.bf16.mxu0 0
      %2723 = vmatpush1.bf16.msra.mxu0 0
      %2724 = vmatprep.subr.bf16.mxu0 0
      %2725 = vmatpush1.bf16.msra.mxu0 0
      %2726 = vmatprep.subr.bf16.mxu0 0
      %2727 = vmatpush1.bf16.msra.mxu0 0
      %2728 = vmatprep.subr.bf16.mxu0 0
      %2729 = vmatpush1.bf16.msra.mxu0 0
      %2730 = vmatprep.subr.bf16.mxu0 0
      %2731 = vmatpush1.bf16.msra.mxu0 0
      %2732 = vmatprep.subr.bf16.mxu0 0
      %2733 = vmatpush1.bf16.msra.mxu0 0
      %2734 = vmatprep.mubr.bf16.mxu0 0
      %2735 = vmatmul.mubr.bf16.gmra.mrb[0].mxu0 %v2679
      %v2736 = vpop.f32.mrb[0].mxu0
      %v2737 = vadd.f32 0.0, %v2736
      %v2738 = vpop.f32.mrb[0].mxu0
      %v2739 = vpop.f32.mrb[0].mxu0
      %v2740 = vadd.f32 0.0, %v2739
      %v2741 = vpop.f32.mrb[0].mxu0
      %2742 = vmatprep.mubr.bf16.mxu0 0
      %2743 = vmatmul.mubr.bf16.gmra.mrb[0].mxu0 %v2682
      %v2744 = vpop.f32.mrb[0].mxu0
      %v2745 = vadd.f32 0.0, %v2744
      %v2746 = vpop.f32.mrb[0].mxu0
      %v2747 = vpop.f32.mrb[0].mxu0
      %v2748 = vadd.f32 0.0, %v2747
      %v2749 = vpop.f32.mrb[0].mxu0
      %2750 = vmatprep.mubr.bf16.mxu0 0
      %2751 = vmatmul.mubr.bf16.gmra.mrb[0].mxu0 %v2685
      %v2752 = vpop.f32.mrb[0].mxu0
      %v2753 = vadd.f32 0.0, %v2752
      %v2754 = vpop.f32.mrb[0].mxu0
      %v2755 = vpop.f32.mrb[0].mxu0
      %v2756 = vadd.f32 0.0, %v2755
      %v2757 = vpop.f32.mrb[0].mxu0
      %2758 = vmatprep.mubr.bf16.mxu0 0
      %2759 = vmatmul.mubr.bf16.gmra.mrb[0].mxu0 %v2688
      %v2760 = vpop.f32.mrb[0].mxu0
      %v2761 = vadd.f32 0.0, %v2760
      %v2762 = vpop.f32.mrb[0].mxu0
      %v2763 = vpop.f32.mrb[0].mxu0
      %v2764 = vadd.f32 0.0, %v2763
      %v2765 = vpop.f32.mrb[0].mxu0
      %2766 = vmatprep.mubr.bf16.mxu0 0
      %2767 = vmatmul.mubr.bf16.gmra.mrb[0].mxu0 %v2691
      %v2768 = vpop.f32.mrb[0].mxu0
      %v2769 = vadd.f32 0.0, %v2768
      %v2770 = vpop.f32.mrb[0].mxu0
      %v2771 = vpop.f32.mrb[0].mxu0
      %v2772 = vadd.f32 0.0, %v2771
      %v2773 = vpop.f32.mrb[0].mxu0
      %2774 = vmatprep.mubr.bf16.mxu0 0
      %2775 = vmatmul.mubr.bf16.gmra.mrb[0].mxu0 %v2694
      %v2776 = vpop.f32.mrb[0].mxu0
      %v2777 = vadd.f32 0.0, %v2776
      %v2778 = vpop.f32.mrb[0].mxu0
      %v2779 = vpop.f32.mrb[0].mxu0
      %v2780 = vadd.f32 0.0, %v2779
      %v2781 = vpop.f32.mrb[0].mxu0
      %2782 = vmatprep.mubr.bf16.mxu0 0
      %2783 = vmatmul.mubr.bf16.gmra.mrb[0].mxu0 %v2697
      %v2784 = vpop.f32.mrb[0].mxu0
      %v2785 = vadd.f32 0.0, %v2784
      %v2786 = vpop.f32.mrb[0].mxu0
      %v2787 = vpop.f32.mrb[0].mxu0
      %v2788 = vadd.f32 0.0, %v2787
      %v2789 = vpop.f32.mrb[0].mxu0
      %2790 = vmatprep.mubr.bf16.mxu0 0
      %2791 = vmatmul.mubr.bf16.gmra.mrb[0].mxu0 %v2700
      %v2792 = vpop.f32.mrb[0].mxu0
      %v2793 = vadd.f32 0.0, %v2792
      %v2794 = vpop.f32.mrb[0].mxu0
      %v2795 = vpop.f32.mrb[0].mxu0
      %v2796 = vadd.f32 0.0, %v2795
      %v2797 = vpop.f32.mrb[0].mxu0
      %2798 = vdwg.mxu0
      %v2799 = vadd.f32 %v2596, %v2737
      %v2800 = vadd.f32 %v2597, %v2740
      %v2801 = vadd.f32 %v2598, %v2745
      %v2802 = vadd.f32 %v2599, %v2748
      %v2803 = vadd.f32 %v2600, %v2753
      %v2804 = vadd.f32 %v2601, %v2756
      %v2805 = vadd.f32 %v2602, %v2761
      %v2806 = vadd.f32 %v2603, %v2764
      %v2807 = vadd.f32 %v2604, %v2769
      %v2808 = vadd.f32 %v2605, %v2772
      %v2809 = vadd.f32 %v2606, %v2777
      %v2810 = vadd.f32 %v2607, %v2780
      %v2811 = vadd.f32 %v2608, %v2785
      %v2812 = vadd.f32 %v2609, %v2788
      %v2813 = vadd.f32 %v2610, %v2793
      %v2814 = vadd.f32 %v2611, %v2796
      %v2815 = vld [vmem:[%s2612] sm:$0xf]
      %v2816 = vld [vmem:[%s2612 + $0x4] sm:$0x1]
      %v2817 = vld [vmem:[%s2612 + $0x8] sm:$0xf]
      %v2818 = vld [vmem:[%s2612 + $0xc] sm:$0x1]
      %v2819 = vld [vmem:[%s2612 + $0x10] sm:$0xf]
      %v2820 = vld [vmem:[%s2612 + $0x14] sm:$0x1]
      %v2821 = vld [vmem:[%s2612 + $0x18] sm:$0xf]
      %v2822 = vld [vmem:[%s2612 + $0x1c] sm:$0x1]
      %v2823 = vld [vmem:[%s2612 + $0x20] sm:$0xf]
      %v2824 = vld [vmem:[%s2612 + $0x24] sm:$0x1]
      %v2825 = vld [vmem:[%s2612 + $0x28] sm:$0xf]
      %v2826 = vld [vmem:[%s2612 + $0x2c] sm:$0x1]
      %v2827 = vld [vmem:[%s2612 + $0x30] sm:$0xf]
      %v2828 = vld [vmem:[%s2612 + $0x34] sm:$0x1]
      %v2829 = vld [vmem:[%s2612 + $0x38] sm:$0xf]
      %v2830 = vld [vmem:[%s2612 + $0x3c] sm:$0x1]
      %v2831 = vld [vmem:[%s2612 + $0x40] sm:$0xf]
      %v2832 = vld [vmem:[%s2612 + $0x44] sm:$0x1]
      %v2833 = vld [vmem:[%s2612 + $0x48] sm:$0xf]
      %v2834 = vld [vmem:[%s2612 + $0x4c] sm:$0x1]
      %v2835 = vld [vmem:[%s2612 + $0x50] sm:$0xf]
      %v2836 = vld [vmem:[%s2612 + $0x54] sm:$0x1]
      %v2837 = vld [vmem:[%s2612 + $0x58] sm:$0xf]
      %v2838 = vld [vmem:[%s2612 + $0x5c] sm:$0x1]
      %v2839 = vld [vmem:[%s2612 + $0x60] sm:$0xf]
      %v2840 = vld [vmem:[%s2612 + $0x64] sm:$0x1]
      %v2841 = vld [vmem:[%s2612 + $0x68] sm:$0xf]
      %v2842 = vld [vmem:[%s2612 + $0x6c] sm:$0x1]
      %v2843 = vld [vmem:[%s2612 + $0x70] sm:$0xf]
      %v2844 = vld [vmem:[%s2612 + $0x74] sm:$0x1]
      %v2845 = vld [vmem:[%s2612 + $0x78] sm:$0xf]
      %v2846 = vld [vmem:[%s2612 + $0x7c] sm:$0x1]
      %v2848 = vshrl.u32 %v2815, 16
      %v2850 = vrot.slane %v2848, 4
      %v2851 = vshll.u32 %v2815, 16
      %v2853 = vrot.slane %v2851, 5
      %v2854 = vor.u32 %v2850, %v2853
      %v2855 = vrot.slane %v2854, 4
      %v2857 = vshll.u32 %v2816, 16
      %v2859 = vrot.slane %v2857, 5
      %v2860 = vsel %vm870, %v2855, %v2859
      %v2862 = vshrl.u32 %v2817, 16
      %v2864 = vrot.slane %v2862, 4
      %v2865 = vshll.u32 %v2817, 16
      %v2867 = vrot.slane %v2865, 5
      %v2868 = vor.u32 %v2864, %v2867
      %v2869 = vrot.slane %v2868, 4
      %v2871 = vshll.u32 %v2818, 16
      %v2873 = vrot.slane %v2871, 5
      %v2874 = vsel %vm870, %v2869, %v2873
      %v2876 = vshrl.u32 %v2819, 16
      %v2878 = vrot.slane %v2876, 4
      %v2879 = vshll.u32 %v2819, 16
      %v2881 = vrot.slane %v2879, 5
      %v2882 = vor.u32 %v2878, %v2881
      %v2883 = vrot.slane %v2882, 4
      %v2885 = vshll.u32 %v2820, 16
      %v2887 = vrot.slane %v2885, 5
      %v2888 = vsel %vm870, %v2883, %v2887
      %v2890 = vshrl.u32 %v2821, 16
      %v2892 = vrot.slane %v2890, 4
      %v2893 = vshll.u32 %v2821, 16
      %v2895 = vrot.slane %v2893, 5
      %v2896 = vor.u32 %v2892, %v2895
      %v2897 = vrot.slane %v2896, 4
      %v2899 = vshll.u32 %v2822, 16
      %v2901 = vrot.slane %v2899, 5
      %v2902 = vsel %vm870, %v2897, %v2901
      %v2904 = vshrl.u32 %v2823, 16
      %v2906 = vrot.slane %v2904, 4
      %v2907 = vshll.u32 %v2823, 16
      %v2909 = vrot.slane %v2907, 5
      %v2910 = vor.u32 %v2906, %v2909
      %v2911 = vrot.slane %v2910, 4
      %v2913 = vshll.u32 %v2824, 16
      %v2915 = vrot.slane %v2913, 5
      %v2916 = vsel %vm870, %v2911, %v2915
      %v2918 = vshrl.u32 %v2825, 16
      %v2920 = vrot.slane %v2918, 4
      %v2921 = vshll.u32 %v2825, 16
      %v2923 = vrot.slane %v2921, 5
      %v2924 = vor.u32 %v2920, %v2923
      %v2925 = vrot.slane %v2924, 4
      %v2927 = vshll.u32 %v2826, 16
      %v2929 = vrot.slane %v2927, 5
      %v2930 = vsel %vm870, %v2925, %v2929
      %v2932 = vshrl.u32 %v2827, 16
      %v2934 = vrot.slane %v2932, 4
      %v2935 = vshll.u32 %v2827, 16
      %v2937 = vrot.slane %v2935, 5
      %v2938 = vor.u32 %v2934, %v2937
      %v2939 = vrot.slane %v2938, 4
      %v2941 = vshll.u32 %v2828, 16
      %v2943 = vrot.slane %v2941, 5
      %v2944 = vsel %vm870, %v2939, %v2943
      %v2946 = vshrl.u32 %v2829, 16
      %v2948 = vrot.slane %v2946, 4
      %v2949 = vshll.u32 %v2829, 16
      %v2951 = vrot.slane %v2949, 5
      %v2952 = vor.u32 %v2948, %v2951
      %v2953 = vrot.slane %v2952, 4
      %v2955 = vshll.u32 %v2830, 16
      %v2957 = vrot.slane %v2955, 5
      %v2958 = vsel %vm870, %v2953, %v2957
      %v2960 = vshrl.u32 %v2831, 16
      %v2962 = vrot.slane %v2960, 4
      %v2963 = vshll.u32 %v2831, 16
      %v2965 = vrot.slane %v2963, 5
      %v2966 = vor.u32 %v2962, %v2965
      %v2967 = vrot.slane %v2966, 4
      %v2969 = vshll.u32 %v2832, 16
      %v2971 = vrot.slane %v2969, 5
      %v2972 = vsel %vm870, %v2967, %v2971
      %v2974 = vshrl.u32 %v2833, 16
      %v2976 = vrot.slane %v2974, 4
      %v2977 = vshll.u32 %v2833, 16
      %v2979 = vrot.slane %v2977, 5
      %v2980 = vor.u32 %v2976, %v2979
      %v2981 = vrot.slane %v2980, 4
      %v2983 = vshll.u32 %v2834, 16
      %v2985 = vrot.slane %v2983, 5
      %v2986 = vsel %vm870, %v2981, %v2985
      %v2988 = vshrl.u32 %v2835, 16
      %v2990 = vrot.slane %v2988, 4
      %v2991 = vshll.u32 %v2835, 16
      %v2993 = vrot.slane %v2991, 5
      %v2994 = vor.u32 %v2990, %v2993
      %v2995 = vrot.slane %v2994, 4
      %v2997 = vshll.u32 %v2836, 16
      %v2999 = vrot.slane %v2997, 5
      %v3000 = vsel %vm870, %v2995, %v2999
      %v3002 = vshrl.u32 %v2837, 16
      %v3004 = vrot.slane %v3002, 4
      %v3005 = vshll.u32 %v2837, 16
      %v3007 = vrot.slane %v3005, 5
      %v3008 = vor.u32 %v3004, %v3007
      %v3009 = vrot.slane %v3008, 4
      %v3011 = vshll.u32 %v2838, 16
      %v3013 = vrot.slane %v3011, 5
      %v3014 = vsel %vm870, %v3009, %v3013
      %v3016 = vshrl.u32 %v2839, 16
      %v3018 = vrot.slane %v3016, 4
      %v3019 = vshll.u32 %v2839, 16
      %v3021 = vrot.slane %v3019, 5
      %v3022 = vor.u32 %v3018, %v3021
      %v3023 = vrot.slane %v3022, 4
      %v3025 = vshll.u32 %v2840, 16
      %v3027 = vrot.slane %v3025, 5
      %v3028 = vsel %vm870, %v3023, %v3027
      %v3030 = vshrl.u32 %v2841, 16
      %v3032 = vrot.slane %v3030, 4
      %v3033 = vshll.u32 %v2841, 16
      %v3035 = vrot.slane %v3033, 5
      %v3036 = vor.u32 %v3032, %v3035
      %v3037 = vrot.slane %v3036, 4
      %v3039 = vshll.u32 %v2842, 16
      %v3041 = vrot.slane %v3039, 5
      %v3042 = vsel %vm870, %v3037, %v3041
      %v3044 = vshrl.u32 %v2843, 16
      %v3046 = vrot.slane %v3044, 4
      %v3047 = vshll.u32 %v2843, 16
      %v3049 = vrot.slane %v3047, 5
      %v3050 = vor.u32 %v3046, %v3049
      %v3051 = vrot.slane %v3050, 4
      %v3053 = vshll.u32 %v2844, 16
      %v3055 = vrot.slane %v3053, 5
      %v3056 = vsel %vm870, %v3051, %v3055
      %v3058 = vshrl.u32 %v2845, 16
      %v3060 = vrot.slane %v3058, 4
      %v3061 = vshll.u32 %v2845, 16
      %v3063 = vrot.slane %v3061, 5
      %v3064 = vor.u32 %v3060, %v3063
      %v3065 = vrot.slane %v3064, 4
      %v3067 = vshll.u32 %v2846, 16
      %v3069 = vrot.slane %v3067, 5
      %v3070 = vsel %vm870, %v3065, %v3069
      %s3071 = scalar_lea.vmem %s3, 56
      %v3072 = vld [vmem:[%s3071] sm:$0xf]
      %v3073 = vld [vmem:[%s3071 + $0x4] sm:$0xf]
      %v3074 = vunpack.c.l.b16 %v2860
      %v3075 = vunpack.c.l.b16 %v2874
      %v3076 = vunpack.c.l.b16 %v2888
      %v3077 = vunpack.c.l.b16 %v2902
      %v3078 = vunpack.c.l.b16 %v2916
      %v3079 = vunpack.c.l.b16 %v2930
      %v3080 = vunpack.c.l.b16 %v2944
      %v3081 = vunpack.c.l.b16 %v2958
      %v3082 = vunpack.c.l.b16 %v2972
      %v3083 = vunpack.c.l.b16 %v2986
      %v3084 = vunpack.c.l.b16 %v3000
      %v3085 = vunpack.c.l.b16 %v3014
      %v3086 = vunpack.c.l.b16 %v3028
      %v3087 = vunpack.c.l.b16 %v3042
      %v3088 = vunpack.c.l.b16 %v3056
      %v3089 = vunpack.c.l.b16 %v3070
      %v3090 = vpack.c.b16 %v3075, %v3074
      %v3091 = vpack.c.b16 %v3077, %v3076
      %v3092 = vpack.c.b16 %v3079, %v3078
      %v3093 = vpack.c.b16 %v3081, %v3080
      %v3094 = vpack.c.b16 %v3083, %v3082
      %v3095 = vpack.c.b16 %v3085, %v3084
      %v3096 = vpack.c.b16 %v3087, %v3086
      %v3097 = vpack.c.b16 %v3089, %v3088
      %v3100 = vunpack.c.l.b16 %v3072
      %v3101 = vunpack.c.l.b16 %v3073
      %v3102 = vpack.c.b16 %v3101, %v3100
      %v3105 = vsel %vm1128, %v3090, 0
      %v3108 = vsel %vm1128, %v3091, 0
      %v3111 = vsel %vm1128, %v3092, 0
      %v3114 = vsel %vm1128, %v3093, 0
      %v3117 = vsel %vm1128, %v3094, 0
      %v3120 = vsel %vm1128, %v3095, 0
      %v3123 = vsel %vm1128, %v3096, 0
      %v3126 = vsel %vm1128, %v3097, 0
      %3128 = vmatprep.subr.bf16.mxu0 0
      %3129 = vmatpush1.bf16.msra.mxu0 %v3102
      %3130 = vmatprep.subr.bf16.mxu0 0
      %3131 = vmatpush1.bf16.msra.mxu0 0
      %3132 = vmatprep.subr.bf16.mxu0 0
      %3133 = vmatpush1.bf16.msra.mxu0 0
      %3134 = vmatprep.subr.bf16.mxu0 0
      %3135 = vmatpush1.bf16.msra.mxu0 0
      %3136 = vmatprep.subr.bf16.mxu0 0
      %3137 = vmatpush1.bf16.msra.mxu0 0
      %3138 = vmatprep.subr.bf16.mxu0 0
      %3139 = vmatpush1.bf16.msra.mxu0 0
      %3140 = vmatprep.subr.bf16.mxu0 0
      %3141 = vmatpush1.bf16.msra.mxu0 0
      %3142 = vmatprep.subr.bf16.mxu0 0
      %3143 = vmatpush1.bf16.msra.mxu0 0
      %3144 = vmatprep.subr.bf16.mxu0 0
      %3145 = vmatpush1.bf16.msra.mxu0 0
      %3146 = vmatprep.subr.bf16.mxu0 0
      %3147 = vmatpush1.bf16.msra.mxu0 0
      %3148 = vmatprep.subr.bf16.mxu0 0
      %3149 = vmatpush1.bf16.msra.mxu0 0
      %3150 = vmatprep.subr.bf16.mxu0 0
      %3151 = vmatpush1.bf16.msra.mxu0 0
      %3152 = vmatprep.subr.bf16.mxu0 0
      %3153 = vmatpush1.bf16.msra.mxu0 0
      %3154 = vmatprep.subr.bf16.mxu0 0
      %3155 = vmatpush1.bf16.msra.mxu0 0
      %3156 = vmatprep.subr.bf16.mxu0 0
      %3157 = vmatpush1.bf16.msra.mxu0 0
      %3158 = vmatprep.subr.bf16.mxu0 0
      %3159 = vmatpush1.bf16.msra.mxu0 0
      %3160 = vmatprep.mubr.bf16.mxu0 0
      %3161 = vmatmul.mubr.bf16.gmra.mrb[0].mxu0 %v3105
      %v3162 = vpop.f32.mrb[0].mxu0
      %v3163 = vadd.f32 0.0, %v3162
      %v3164 = vpop.f32.mrb[0].mxu0
      %v3165 = vpop.f32.mrb[0].mxu0
      %v3166 = vadd.f32 0.0, %v3165
      %v3167 = vpop.f32.mrb[0].mxu0
      %3168 = vmatprep.mubr.bf16.mxu0 0
      %3169 = vmatmul.mubr.bf16.gmra.mrb[0].mxu0 %v3108
      %v3170 = vpop.f32.mrb[0].mxu0
      %v3171 = vadd.f32 0.0, %v3170
      %v3172 = vpop.f32.mrb[0].mxu0
      %v3173 = vpop.f32.mrb[0].mxu0
      %v3174 = vadd.f32 0.0, %v3173
      %v3175 = vpop.f32.mrb[0].mxu0
      %3176 = vmatprep.mubr.bf16.mxu0 0
      %3177 = vmatmul.mubr.bf16.gmra.mrb[0].mxu0 %v3111
      %v3178 = vpop.f32.mrb[0].mxu0
      %v3179 = vadd.f32 0.0, %v3178
      %v3180 = vpop.f32.mrb[0].mxu0
      %v3181 = vpop.f32.mrb[0].mxu0
      %v3182 = vadd.f32 0.0, %v3181
      %v3183 = vpop.f32.mrb[0].mxu0
      %3184 = vmatprep.mubr.bf16.mxu0 0
      %3185 = vmatmul.mubr.bf16.gmra.mrb[0].mxu0 %v3114
      %v3186 = vpop.f32.mrb[0].mxu0
      %v3187 = vadd.f32 0.0, %v3186
      %v3188 = vpop.f32.mrb[0].mxu0
      %v3189 = vpop.f32.mrb[0].mxu0
      %v3190 = vadd.f32 0.0, %v3189
      %v3191 = vpop.f32.mrb[0].mxu0
      %3192 = vmatprep.mubr.bf16.mxu0 0
      %3193 = vmatmul.mubr.bf16.gmra.mrb[0].mxu0 %v3117
      %v3194 = vpop.f32.mrb[0].mxu0
      %v3195 = vadd.f32 0.0, %v3194
      %v3196 = vpop.f32.mrb[0].mxu0
      %v3197 = vpop.f32.mrb[0].mxu0
      %v3198 = vadd.f32 0.0, %v3197
      %v3199 = vpop.f32.mrb[0].mxu0
      %3200 = vmatprep.mubr.bf16.mxu0 0
      %3201 = vmatmul.mubr.bf16.gmra.mrb[0].mxu0 %v3120
      %v3202 = vpop.f32.mrb[0].mxu0
      %v3203 = vadd.f32 0.0, %v3202
      %v3204 = vpop.f32.mrb[0].mxu0
      %v3205 = vpop.f32.mrb[0].mxu0
      %v3206 = vadd.f32 0.0, %v3205
      %v3207 = vpop.f32.mrb[0].mxu0
      %3208 = vmatprep.mubr.bf16.mxu0 0
      %3209 = vmatmul.mubr.bf16.gmra.mrb[0].mxu0 %v3123
      %v3210 = vpop.f32.mrb[0].mxu0
      %v3211 = vadd.f32 0.0, %v3210
      %v3212 = vpop.f32.mrb[0].mxu0
      %v3213 = vpop.f32.mrb[0].mxu0
      %v3214 = vadd.f32 0.0, %v3213
      %v3215 = vpop.f32.mrb[0].mxu0
      %3216 = vmatprep.mubr.bf16.mxu0 0
      %3217 = vmatmul.mubr.bf16.gmra.mrb[0].mxu0 %v3126
      %v3218 = vpop.f32.mrb[0].mxu0
      %v3219 = vadd.f32 0.0, %v3218
      %v3220 = vpop.f32.mrb[0].mxu0
      %v3221 = vpop.f32.mrb[0].mxu0
      %v3222 = vadd.f32 0.0, %v3221
      %v3223 = vpop.f32.mrb[0].mxu0
      %3224 = vdwg.mxu0
      %v3225 = vadd.f32 %v2799, %v3163
      %v3226 = vadd.f32 %v2800, %v3166
      %v3227 = vadd.f32 %v2801, %v3171
      %v3228 = vadd.f32 %v2802, %v3174
      %v3229 = vadd.f32 %v2803, %v3179
      %v3230 = vadd.f32 %v2804, %v3182
      %v3231 = vadd.f32 %v2805, %v3187
      %v3232 = vadd.f32 %v2806, %v3190
      %v3233 = vadd.f32 %v2807, %v3195
      %v3234 = vadd.f32 %v2808, %v3198
      %v3235 = vadd.f32 %v2809, %v3203
      %v3236 = vadd.f32 %v2810, %v3206
      %v3237 = vadd.f32 %v2811, %v3211
      %v3238 = vadd.f32 %v2812, %v3214
      %v3239 = vadd.f32 %v2813, %v3219
      %v3240 = vadd.f32 %v2814, %v3222
      %v3241 = vld [vmem:[%s2612] sm:$0xe]
      %v3242 = vld [vmem:[%s2612 + $0x8] sm:$0xe]
      %v3243 = vld [vmem:[%s2612 + $0x10] sm:$0xe]
      %v3244 = vld [vmem:[%s2612 + $0x18] sm:$0xe]
      %v3245 = vld [vmem:[%s2612 + $0x20] sm:$0xe]
      %v3246 = vld [vmem:[%s2612 + $0x28] sm:$0xe]
      %v3247 = vld [vmem:[%s2612 + $0x30] sm:$0xe]
      %v3248 = vld [vmem:[%s2612 + $0x38] sm:$0xe]
      %v3249 = vld [vmem:[%s2612 + $0x40] sm:$0xe]
      %v3250 = vld [vmem:[%s2612 + $0x48] sm:$0xe]
      %v3251 = vld [vmem:[%s2612 + $0x50] sm:$0xe]
      %v3252 = vld [vmem:[%s2612 + $0x58] sm:$0xe]
      %v3253 = vld [vmem:[%s2612 + $0x60] sm:$0xe]
      %v3254 = vld [vmem:[%s2612 + $0x68] sm:$0xe]
      %v3255 = vld [vmem:[%s2612 + $0x70] sm:$0xe]
      %v3256 = vld [vmem:[%s2612 + $0x78] sm:$0xe]
      %v3289 = vrot.slane %v3241, 5
      %v3290 = vrot.slane %v3289, 4
      %v3291 = vrot.slane %v2816, 5
      %v3292 = vsel %vm1467, %v3290, %v3291
      %v3293 = vrot.slane %v3242, 5
      %v3294 = vrot.slane %v3293, 4
      %v3295 = vrot.slane %v2818, 5
      %v3296 = vsel %vm1467, %v3294, %v3295
      %v3297 = vrot.slane %v3243, 5
      %v3298 = vrot.slane %v3297, 4
      %v3299 = vrot.slane %v2820, 5
      %v3300 = vsel %vm1467, %v3298, %v3299
      %v3301 = vrot.slane %v3244, 5
      %v3302 = vrot.slane %v3301, 4
      %v3303 = vrot.slane %v2822, 5
      %v3304 = vsel %vm1467, %v3302, %v3303
      %v3305 = vrot.slane %v3245, 5
      %v3306 = vrot.slane %v3305, 4
      %v3307 = vrot.slane %v2824, 5
      %v3308 = vsel %vm1467, %v3306, %v3307
      %v3309 = vrot.slane %v3246, 5
      %v3310 = vrot.slane %v3309, 4
      %v3311 = vrot.slane %v2826, 5
      %v3312 = vsel %vm1467, %v3310, %v3311
      %v3313 = vrot.slane %v3247, 5
      %v3314 = vrot.slane %v3313, 4
      %v3315 = vrot.slane %v2828, 5
      %v3316 = vsel %vm1467, %v3314, %v3315
      %v3317 = vrot.slane %v3248, 5
      %v3318 = vrot.slane %v3317, 4
      %v3319 = vrot.slane %v2830, 5
      %v3320 = vsel %vm1467, %v3318, %v3319
      %v3321 = vrot.slane %v3249, 5
      %v3322 = vrot.slane %v3321, 4
      %v3323 = vrot.slane %v2832, 5
      %v3324 = vsel %vm1467, %v3322, %v3323
      %v3325 = vrot.slane %v3250, 5
      %v3326 = vrot.slane %v3325, 4
      %v3327 = vrot.slane %v2834, 5
      %v3328 = vsel %vm1467, %v3326, %v3327
      %v3329 = vrot.slane %v3251, 5
      %v3330 = vrot.slane %v3329, 4
      %v3331 = vrot.slane %v2836, 5
      %v3332 = vsel %vm1467, %v3330, %v3331
      %v3333 = vrot.slane %v3252, 5
      %v3334 = vrot.slane %v3333, 4
      %v3335 = vrot.slane %v2838, 5
      %v3336 = vsel %vm1467, %v3334, %v3335
      %v3337 = vrot.slane %v3253, 5
      %v3338 = vrot.slane %v3337, 4
      %v3339 = vrot.slane %v2840, 5
      %v3340 = vsel %vm1467, %v3338, %v3339
      %v3341 = vrot.slane %v3254, 5
      %v3342 = vrot.slane %v3341, 4
      %v3343 = vrot.slane %v2842, 5
      %v3344 = vsel %vm1467, %v3342, %v3343
      %v3345 = vrot.slane %v3255, 5
      %v3346 = vrot.slane %v3345, 4
      %v3347 = vrot.slane %v2844, 5
      %v3348 = vsel %vm1467, %v3346, %v3347
      %v3349 = vrot.slane %v3256, 5
      %v3350 = vrot.slane %v3349, 4
      %v3351 = vrot.slane %v2846, 5
      %v3352 = vsel %vm1467, %v3350, %v3351
      %s3353 = scalar_lea.vmem %s3, 64
      %v3354 = vld [vmem:[%s3353] sm:$0xf]
      %v3355 = vld [vmem:[%s3353 + $0x4] sm:$0xf]
      %v3356 = vunpack.c.l.b16 %v3292
      %v3357 = vunpack.c.l.b16 %v3296
      %v3358 = vunpack.c.l.b16 %v3300
      %v3359 = vunpack.c.l.b16 %v3304
      %v3360 = vunpack.c.l.b16 %v3308
      %v3361 = vunpack.c.l.b16 %v3312
      %v3362 = vunpack.c.l.b16 %v3316
      %v3363 = vunpack.c.l.b16 %v3320
      %v3364 = vunpack.c.l.b16 %v3324
      %v3365 = vunpack.c.l.b16 %v3328
      %v3366 = vunpack.c.l.b16 %v3332
      %v3367 = vunpack.c.l.b16 %v3336
      %v3368 = vunpack.c.l.b16 %v3340
      %v3369 = vunpack.c.l.b16 %v3344
      %v3370 = vunpack.c.l.b16 %v3348
      %v3371 = vunpack.c.l.b16 %v3352
      %v3372 = vpack.c.b16 %v3357, %v3356
      %v3373 = vpack.c.b16 %v3359, %v3358
      %v3374 = vpack.c.b16 %v3361, %v3360
      %v3375 = vpack.c.b16 %v3363, %v3362
      %v3376 = vpack.c.b16 %v3365, %v3364
      %v3377 = vpack.c.b16 %v3367, %v3366
      %v3378 = vpack.c.b16 %v3369, %v3368
      %v3379 = vpack.c.b16 %v3371, %v3370
      %v3382 = vunpack.c.l.b16 %v3354
      %v3383 = vunpack.c.l.b16 %v3355
      %v3384 = vpack.c.b16 %v3383, %v3382
      %v3387 = vsel %vm1128, %v3372, 0
      %v3390 = vsel %vm1128, %v3373, 0
      %v3393 = vsel %vm1128, %v3374, 0
      %v3396 = vsel %vm1128, %v3375, 0
      %v3399 = vsel %vm1128, %v3376, 0
      %v3402 = vsel %vm1128, %v3377, 0
      %v3405 = vsel %vm1128, %v3378, 0
      %v3408 = vsel %vm1128, %v3379, 0
      %3410 = vmatprep.subr.bf16.mxu0 0
      %3411 = vmatpush1.bf16.msra.mxu0 %v3384
      %3412 = vmatprep.subr.bf16.mxu0 0
      %3413 = vmatpush1.bf16.msra.mxu0 0
      %3414 = vmatprep.subr.bf16.mxu0 0
      %3415 = vmatpush1.bf16.msra.mxu0 0
      %3416 = vmatprep.subr.bf16.mxu0 0
      %3417 = vmatpush1.bf16.msra.mxu0 0
      %3418 = vmatprep.subr.bf16.mxu0 0
      %3419 = vmatpush1.bf16.msra.mxu0 0
      %3420 = vmatprep.subr.bf16.mxu0 0
      %3421 = vmatpush1.bf16.msra.mxu0 0
      %3422 = vmatprep.subr.bf16.mxu0 0
      %3423 = vmatpush1.bf16.msra.mxu0 0
      %3424 = vmatprep.subr.bf16.mxu0 0
      %3425 = vmatpush1.bf16.msra.mxu0 0
      %3426 = vmatprep.subr.bf16.mxu0 0
      %3427 = vmatpush1.bf16.msra.mxu0 0
      %3428 = vmatprep.subr.bf16.mxu0 0
      %3429 = vmatpush1.bf16.msra.mxu0 0
      %3430 = vmatprep.subr.bf16.mxu0 0
      %3431 = vmatpush1.bf16.msra.mxu0 0
      %3432 = vmatprep.subr.bf16.mxu0 0
      %3433 = vmatpush1.bf16.msra.mxu0 0
      %3434 = vmatprep.subr.bf16.mxu0 0
      %3435 = vmatpush1.bf16.msra.mxu0 0
      %3436 = vmatprep.subr.bf16.mxu0 0
      %3437 = vmatpush1.bf16.msra.mxu0 0
      %3438 = vmatprep.subr.bf16.mxu0 0
      %3439 = vmatpush1.bf16.msra.mxu0 0
      %3440 = vmatprep.subr.bf16.mxu0 0
      %3441 = vmatpush1.bf16.msra.mxu0 0
      %3442 = vmatprep.mubr.bf16.mxu0 0
      %3443 = vmatmul.mubr.bf16.gmra.mrb[0].mxu0 %v3387
      %v3444 = vpop.f32.mrb[0].mxu0
      %v3445 = vadd.f32 0.0, %v3444
      %v3446 = vpop.f32.mrb[0].mxu0
      %v3447 = vpop.f32.mrb[0].mxu0
      %v3448 = vadd.f32 0.0, %v3447
      %v3449 = vpop.f32.mrb[0].mxu0
      %3450 = vmatprep.mubr.bf16.mxu0 0
      %3451 = vmatmul.mubr.bf16.gmra.mrb[0].mxu0 %v3390
      %v3452 = vpop.f32.mrb[0].mxu0
      %v3453 = vadd.f32 0.0, %v3452
      %v3454 = vpop.f32.mrb[0].mxu0
      %v3455 = vpop.f32.mrb[0].mxu0
      %v3456 = vadd.f32 0.0, %v3455
      %v3457 = vpop.f32.mrb[0].mxu0
      %3458 = vmatprep.mubr.bf16.mxu0 0
      %3459 = vmatmul.mubr.bf16.gmra.mrb[0].mxu0 %v3393
      %v3460 = vpop.f32.mrb[0].mxu0
      %v3461 = vadd.f32 0.0, %v3460
      %v3462 = vpop.f32.mrb[0].mxu0
      %v3463 = vpop.f32.mrb[0].mxu0
      %v3464 = vadd.f32 0.0, %v3463
      %v3465 = vpop.f32.mrb[0].mxu0
      %3466 = vmatprep.mubr.bf16.mxu0 0
      %3467 = vmatmul.mubr.bf16.gmra.mrb[0].mxu0 %v3396
      %v3468 = vpop.f32.mrb[0].mxu0
      %v3469 = vadd.f32 0.0, %v3468
      %v3470 = vpop.f32.mrb[0].mxu0
      %v3471 = vpop.f32.mrb[0].mxu0
      %v3472 = vadd.f32 0.0, %v3471
      %v3473 = vpop.f32.mrb[0].mxu0
      %3474 = vmatprep.mubr.bf16.mxu0 0
      %3475 = vmatmul.mubr.bf16.gmra.mrb[0].mxu0 %v3399
      %v3476 = vpop.f32.mrb[0].mxu0
      %v3477 = vadd.f32 0.0, %v3476
      %v3478 = vpop.f32.mrb[0].mxu0
      %v3479 = vpop.f32.mrb[0].mxu0
      %v3480 = vadd.f32 0.0, %v3479
      %v3481 = vpop.f32.mrb[0].mxu0
      %3482 = vmatprep.mubr.bf16.mxu0 0
      %3483 = vmatmul.mubr.bf16.gmra.mrb[0].mxu0 %v3402
      %v3484 = vpop.f32.mrb[0].mxu0
      %v3485 = vadd.f32 0.0, %v3484
      %v3486 = vpop.f32.mrb[0].mxu0
      %v3487 = vpop.f32.mrb[0].mxu0
      %v3488 = vadd.f32 0.0, %v3487
      %v3489 = vpop.f32.mrb[0].mxu0
      %3490 = vmatprep.mubr.bf16.mxu0 0
      %3491 = vmatmul.mubr.bf16.gmra.mrb[0].mxu0 %v3405
      %v3492 = vpop.f32.mrb[0].mxu0
      %v3493 = vadd.f32 0.0, %v3492
      %v3494 = vpop.f32.mrb[0].mxu0
      %v3495 = vpop.f32.mrb[0].mxu0
      %v3496 = vadd.f32 0.0, %v3495
      %v3497 = vpop.f32.mrb[0].mxu0
      %3498 = vmatprep.mubr.bf16.mxu0 0
      %3499 = vmatmul.mubr.bf16.gmra.mrb[0].mxu0 %v3408
      %v3500 = vpop.f32.mrb[0].mxu0
      %v3501 = vadd.f32 0.0, %v3500
      %v3502 = vpop.f32.mrb[0].mxu0
      %v3503 = vpop.f32.mrb[0].mxu0
      %v3504 = vadd.f32 0.0, %v3503
      %v3505 = vpop.f32.mrb[0].mxu0
      %3506 = vdwg.mxu0
      %v3507 = vadd.f32 %v3225, %v3445
      %v3508 = vadd.f32 %v3226, %v3448
      %v3509 = vadd.f32 %v3227, %v3453
      %v3510 = vadd.f32 %v3228, %v3456
      %v3511 = vadd.f32 %v3229, %v3461
      %v3512 = vadd.f32 %v3230, %v3464
      %v3513 = vadd.f32 %v3231, %v3469
      %v3514 = vadd.f32 %v3232, %v3472
      %v3515 = vadd.f32 %v3233, %v3477
      %v3516 = vadd.f32 %v3234, %v3480
      %v3517 = vadd.f32 %v3235, %v3485
      %v3518 = vadd.f32 %v3236, %v3488
      %v3519 = vadd.f32 %v3237, %v3493
      %v3520 = vadd.f32 %v3238, %v3496
      %v3521 = vadd.f32 %v3239, %v3501
      %v3522 = vadd.f32 %v3240, %v3504
      %v3523 = vld [vmem:[%s4] sm:$0x1]
      %v3525 = vlaneseq
      %v3526 = vshrl.u32 %v3525, 7
      %v3527 = vsub.s32 0, %v3526
      %v3528 = vrot.slane %v3523, %v3527
      %v3530 = vadd.f32 %v3507, %v3528
      %v3531 = vadd.f32 %v3508, %v3528
      %v3532 = vadd.f32 %v3509, %v3528
      %v3533 = vadd.f32 %v3510, %v3528
      %v3534 = vadd.f32 %v3511, %v3528
      %v3535 = vadd.f32 %v3512, %v3528
      %v3536 = vadd.f32 %v3513, %v3528
      %v3537 = vadd.f32 %v3514, %v3528
      %v3538 = vadd.f32 %v3515, %v3528
      %v3539 = vadd.f32 %v3516, %v3528
      %v3540 = vadd.f32 %v3517, %v3528
      %v3541 = vadd.f32 %v3518, %v3528
      %v3542 = vadd.f32 %v3519, %v3528
      %v3543 = vadd.f32 %v3520, %v3528
      %v3544 = vadd.f32 %v3521, %v3528
      %v3545 = vadd.f32 %v3522, %v3528
      %v3546 = vpack.c.bf16 %v3530, %v3530
      %v3547 = vpack.c.bf16 %v3531, %v3531
      %v3548 = vpack.c.bf16 %v3532, %v3532
      %v3549 = vpack.c.bf16 %v3533, %v3533
      %v3550 = vpack.c.bf16 %v3534, %v3534
      %v3551 = vpack.c.bf16 %v3535, %v3535
      %v3552 = vpack.c.bf16 %v3536, %v3536
      %v3553 = vpack.c.bf16 %v3537, %v3537
      %v3554 = vpack.c.bf16 %v3538, %v3538
      %v3555 = vpack.c.bf16 %v3539, %v3539
      %v3556 = vpack.c.bf16 %v3540, %v3540
      %v3557 = vpack.c.bf16 %v3541, %v3541
      %v3558 = vpack.c.bf16 %v3542, %v3542
      %v3559 = vpack.c.bf16 %v3543, %v3543
      %v3560 = vpack.c.bf16 %v3544, %v3544
      %v3561 = vpack.c.bf16 %v3545, %v3545
      %3562 = vst.msk [vmem:[%s289] sm:$0xf] %vm297, %v3546
      %3563 = vst.msk [vmem:[%s289 + $0x4] sm:$0xf] %vm297, %v3547
      %3564 = vst.msk [vmem:[%s289 + $0x8] sm:$0xf] %vm297, %v3548
      %3565 = vst.msk [vmem:[%s289 + $0xc] sm:$0xf] %vm297, %v3549
      %3566 = vst.msk [vmem:[%s289 + $0x10] sm:$0xf] %vm297, %v3550
      %3567 = vst.msk [vmem:[%s289 + $0x14] sm:$0xf] %vm297, %v3551
      %3568 = vst.msk [vmem:[%s289 + $0x18] sm:$0xf] %vm297, %v3552
      %3569 = vst.msk [vmem:[%s289 + $0x1c] sm:$0xf] %vm297, %v3553
      %3570 = vst.msk [vmem:[%s289 + $0x20] sm:$0xf] %vm297, %v3554
      %3571 = vst.msk [vmem:[%s289 + $0x24] sm:$0xf] %vm297, %v3555
      %3572 = vst.msk [vmem:[%s289 + $0x28] sm:$0xf] %vm297, %v3556
      %3573 = vst.msk [vmem:[%s289 + $0x2c] sm:$0xf] %vm297, %v3557
      %3574 = vst.msk [vmem:[%s289 + $0x30] sm:$0xf] %vm297, %v3558
      %3575 = vst.msk [vmem:[%s289 + $0x34] sm:$0xf] %vm297, %v3559
      %3576 = vst.msk [vmem:[%s289 + $0x38] sm:$0xf] %vm297, %v3560
      %3577 = vst.msk [vmem:[%s289 + $0x3c] sm:$0xf] %vm297, %v3561
      %v3578 = vsel %vm1128, %v3530, 0.0
      %v3579 = vsel %vm1128, %v3531, 0.0
      %v3580 = vadd.f32 %v3578, %v3579
      %v3581 = vsel %vm1128, %v3532, 0.0
      %v3582 = vadd.f32 %v3580, %v3581
      %v3583 = vsel %vm1128, %v3533, 0.0
      %v3584 = vadd.f32 %v3582, %v3583
      %v3585 = vsel %vm1128, %v3534, 0.0
      %v3586 = vadd.f32 %v3584, %v3585
      %v3587 = vsel %vm1128, %v3535, 0.0
      %v3588 = vadd.f32 %v3586, %v3587
      %v3589 = vsel %vm1128, %v3536, 0.0
      %v3590 = vadd.f32 %v3588, %v3589
      %v3591 = vsel %vm1128, %v3537, 0.0
      %v3592 = vadd.f32 %v3590, %v3591
      %v3593 = vsel %vm1128, %v3538, 0.0
      %v3594 = vadd.f32 %v3592, %v3593
      %v3595 = vsel %vm1128, %v3539, 0.0
      %v3596 = vadd.f32 %v3594, %v3595
      %v3597 = vsel %vm1128, %v3540, 0.0
      %v3598 = vadd.f32 %v3596, %v3597
      %v3599 = vsel %vm1128, %v3541, 0.0
      %v3600 = vadd.f32 %v3598, %v3599
      %v3601 = vsel %vm1128, %v3542, 0.0
      %v3602 = vadd.f32 %v3600, %v3601
      %v3603 = vsel %vm1128, %v3543, 0.0
      %v3604 = vadd.f32 %v3602, %v3603
      %v3605 = vsel %vm1128, %v3544, 0.0
      %v3606 = vadd.f32 %v3604, %v3605
      %v3607 = vsel %vm1128, %v3545, 0.0
      %v3608 = vadd.f32 %v3606, %v3607
      %v3609 = vrot.slane %v3608, 4
      %v3610 = vadd.f32 %v3608, %v3609
      %v3611 = vrot.slane %v3610, 2
      %v3612 = vadd.f32 %v3610, %v3611
      %v3613 = vrot.slane %v3612, 1
      %v3614 = vadd.f32 %v3612, %v3613
      %3615 = vst.msk [vmem:[%s292] sm:$0x1] %vm299, %v3614
      %v3616 = vmul.f32 %v3530, %v3530
      %v3617 = vmul.f32 %v3531, %v3531
      %v3618 = vmul.f32 %v3532, %v3532
      %v3619 = vmul.f32 %v3533, %v3533
      %v3620 = vmul.f32 %v3534, %v3534
      %v3621 = vmul.f32 %v3535, %v3535
      %v3622 = vmul.f32 %v3536, %v3536
      %v3623 = vmul.f32 %v3537, %v3537
      %v3624 = vmul.f32 %v3538, %v3538
      %v3625 = vmul.f32 %v3539, %v3539
      %v3626 = vmul.f32 %v3540, %v3540
      %v3627 = vmul.f32 %v3541, %v3541
      %v3628 = vmul.f32 %v3542, %v3542
      %v3629 = vmul.f32 %v3543, %v3543
      %v3630 = vmul.f32 %v3544, %v3544
      %v3631 = vmul.f32 %v3545, %v3545
      %v3632 = vsel %vm1128, %v3616, 0.0
      %v3633 = vsel %vm1128, %v3617, 0.0
      %v3634 = vadd.f32 %v3632, %v3633
      %v3635 = vsel %vm1128, %v3618, 0.0
      %v3636 = vadd.f32 %v3634, %v3635
      %v3637 = vsel %vm1128, %v3619, 0.0
      %v3638 = vadd.f32 %v3636, %v3637
      %v3639 = vsel %vm1128, %v3620, 0.0
      %v3640 = vadd.f32 %v3638, %v3639
      %v3641 = vsel %vm1128, %v3621, 0.0
      %v3642 = vadd.f32 %v3640, %v3641
      %v3643 = vsel %vm1128, %v3622, 0.0
      %v3644 = vadd.f32 %v3642, %v3643
      %v3645 = vsel %vm1128, %v3623, 0.0
      %v3646 = vadd.f32 %v3644, %v3645
      %v3647 = vsel %vm1128, %v3624, 0.0
      %v3648 = vadd.f32 %v3646, %v3647
      %v3649 = vsel %vm1128, %v3625, 0.0
      %v3650 = vadd.f32 %v3648, %v3649
      %v3651 = vsel %vm1128, %v3626, 0.0
      %v3652 = vadd.f32 %v3650, %v3651
      %v3653 = vsel %vm1128, %v3627, 0.0
      %v3654 = vadd.f32 %v3652, %v3653
      %v3655 = vsel %vm1128, %v3628, 0.0
      %v3656 = vadd.f32 %v3654, %v3655
      %v3657 = vsel %vm1128, %v3629, 0.0
      %v3658 = vadd.f32 %v3656, %v3657
      %v3659 = vsel %vm1128, %v3630, 0.0
      %v3660 = vadd.f32 %v3658, %v3659
      %v3661 = vsel %vm1128, %v3631, 0.0
      %v3662 = vadd.f32 %v3660, %v3661
      %v3663 = vrot.slane %v3662, 4
      %v3664 = vadd.f32 %v3662, %v3663
      %v3665 = vrot.slane %v3664, 2
      %v3666 = vadd.f32 %v3664, %v3665
      %v3667 = vrot.slane %v3666, 1
      %v3668 = vadd.f32 %v3666, %v3667
      %3669 = vst.msk [vmem:[%s295] sm:$0x1] %vm299, %v3668
      %p3670 = scmp.lt.s32.totalorder %s19, 1
      %s3671 = scalar_select %p3670, %s19, 1
      %s3672 = smul.addr %s3671, 16
      %s3673 = smul.addr %s3672, 4
      %s3674 = scalar_lea.vmem %s5, %s3673
      %p3675 = scmp.lt.s32.totalorder %s19, 1
      %s3676 = scalar_select %p3675, %s19, 1
      %s3677 = scalar_lea.vmem %s6, %s3676
      %p3678 = scmp.lt.s32.totalorder %s19, 1
      %s3679 = scalar_select %p3678, %s19, 1
      %s3680 = scalar_lea.vmem %s7, %s3679
      // Predicated region
      $region41: #{_decoder_block_impl.3} parent=39 // pred_check
        %p3681 = pneg %p147
      $region42: #{_decoder_block_impl.3} parent=39 // pred_check_branch
        %3683 = sbr.rel (%p3681) target = $region44
      $region43: #{_decoder_block_impl.3} parent=39 // pred_region
        _
      $region44: #{_decoder_block_impl.3} parent=39 // pred_fallthru
        _
      // Predicated region
      $region45: #{_decoder_block_impl.3} parent=39 // pred_check
        %p3684 = pneg %p173
      $region46: #{_decoder_block_impl.3} parent=39 // pred_check_branch
        %3686 = sbr.rel (%p3684) target = $region48
      $region47: #{_decoder_block_impl.3} parent=39 // pred_region
        _
      $region48: #{_decoder_block_impl.3} parent=39 // pred_fallthru
        _
      // Predicated region
      $region49: #{_decoder_block_impl.3} parent=39 // pred_check
        %p3687 = pneg %p199
      $region50: #{_decoder_block_impl.3} parent=39 // pred_check_branch
        %3689 = sbr.rel (%p3687) target = $region52
      $region51: #{_decoder_block_impl.3} parent=39 // pred_region
        _
      $region52: #{_decoder_block_impl.3} parent=39 // pred_fallthru
        _
    $region40: #{_decoder_block_impl.3} parent=5 // pred_fallthru
      _
    %p3690 = scmp.le.s32.totalorder 2, %s14
    // Predicated region
    $region53: #{_decoder_block_impl.3} parent=5 // pred_check
      %p3691 = pneg %p3690
    $region54: #{_decoder_block_impl.3} parent=5 // pred_check_branch
      %3693 = sbr.rel (%p3691) target = $region56
    $region55: #{_decoder_block_impl.3} parent=5 // pred_region
      %s3694 = ssub.s32 %s14, 2
      // Predicated region
      $region57: #{_decoder_block_impl.3} parent=55 // pred_check
        %p3695 = pneg %p153
      $region58: #{_decoder_block_impl.3} parent=55 // pred_check_branch
        %3697 = sbr.rel (%p3695) target = $region60
      $region59: #{_decoder_block_impl.3} parent=55 // pred_region
        %p3698 = scmp.lt.s32.totalorder %s20, 1
        %s3699 = scalar_select %p3698, %s20, 1
        %s3700 = smul.addr %s3699, 16
        %s3701 = smul.addr %s3700, 4
        %s3702 = scalar_lea.vmem %s5, %s3701
      $region60: #{_decoder_block_impl.3} parent=55 // pred_fallthru
        _
      // Predicated region
      $region61: #{_decoder_block_impl.3} parent=55 // pred_check
        %p3703 = pneg %p179
      $region62: #{_decoder_block_impl.3} parent=55 // pred_check_branch
        %3705 = sbr.rel (%p3703) target = $region64
      $region63: #{_decoder_block_impl.3} parent=55 // pred_region
        %p3706 = scmp.lt.s32.totalorder %s20, 1
        %s3707 = scalar_select %p3706, %s20, 1
        %s3708 = scalar_lea.vmem %s6, %s3707
      $region64: #{_decoder_block_impl.3} parent=55 // pred_fallthru
        _
      // Predicated region
      $region65: #{_decoder_block_impl.3} parent=55 // pred_check
        %p3709 = pneg %p205
      $region66: #{_decoder_block_impl.3} parent=55 // pred_check_branch
        %3711 = sbr.rel (%p3709) target = $region68
      $region67: #{_decoder_block_impl.3} parent=55 // pred_region
        %p3712 = scmp.lt.s32.totalorder %s20, 1
        %s3713 = scalar_select %p3712, %s20, 1
        %s3714 = scalar_lea.vmem %s7, %s3713
      $region68: #{_decoder_block_impl.3} parent=55 // pred_fallthru
        _
    $region56: #{_decoder_block_impl.3} parent=5 // pred_fallthru
      _
  $region6: #{_decoder_block_impl.3} parent=0 // loop_footer
    %s18 = sadd.s32 1, %s14
  $region7: #{_decoder_block_impl.3} parent=0 // loop_footer_branch
    %13 = sbr.rel target = $region3
  $region8: #{_decoder_block_impl.3} parent=0 // loop_exit
    _

</llo_original>
